<compile_context>
chip_gen: v5e
topology: v5e:2x2
jax: 0.10.0
libtpu: 0.0.40
codegen_flags: <defaults>
</compile_context>

<pallas_src>
import functools
import math

import jax
import jax.numpy as jnp
from jax import lax
from jax.experimental import pallas as pl
from jax.experimental.pallas import tpu as pltpu


_BF16 = jnp.bfloat16
_F32 = jnp.float32
# A @ B.T without materializing a transpose (MXU consumes the transposed RHS directly).
_TRANS_B_DIMS = (((1,), (1,)), ((), ()))


# --------------------------------------------------------------------------------------
# In-kernel helpers (operate on loaded f32/bf16 arrays, not refs)
# --------------------------------------------------------------------------------------

def _layernorm(x, g, b, eps=1e-5):
    """LayerNorm over the last dim, f32 statistics (matches nn.LayerNorm)."""
    mu = jnp.mean(x, axis=-1, keepdims=True)
    xc = x - mu
    var = jnp.mean(xc * xc, axis=-1, keepdims=True)
    return xc * lax.rsqrt(var + eps) * g + b


def _attention(q_in, k_in, v_in, wq, bq, wk, bk, wv, bv, wo, bo, num_heads):
    """QuantAttention.forward for one batch element.

    q_in: (Nq, C) f32;  k_in, v_in: (Nk, C) f32.
    wq/wk/wv: (C, D) bf16;  wo: (D, C) bf16;  biases f32.
    Returns (Nq, C) f32.
    """
    # Input projections: bf16 operands, f32 accumulation on the MXU.
    q = jnp.dot(q_in.astype(_BF16), wq, preferred_element_type=_F32) + bq    # (Nq, D)
    k = jnp.dot(k_in.astype(_BF16), wk, preferred_element_type=_F32) + bk    # (Nk, D)
    v = jnp.dot(v_in.astype(_BF16), wv, preferred_element_type=_F32) + bv    # (Nk, D)

    d = q.shape[-1]
    c = d // num_heads
    # Fold the 1/sqrt(c) attention scale into Q once (f32) rather than scaling every
    # per-head (Nq, Nk) score block.
    q = q * (1.0 / math.sqrt(c))

    q16 = q.astype(_BF16)
    k16 = k.astype(_BF16)
    v16 = v.astype(_BF16)

    out = None
    # Static per-head loop: static lane slices instead of reshape+transpose (no XLU
    # transposes, no VMEM re-layout copies from splitting the lane axis into heads).
    for h in range(num_heads):
        sl = slice(h * c, (h + 1) * c)
        # scores = (Q_h / sqrt(c)) @ K_h^T   (f32 accumulation)
        s = lax.dot_general(q16[:, sl], k16[:, sl], _TRANS_B_DIMS,
                            preferred_element_type=_F32)                     # (Nq, Nk)
        # softmax over keys, f32 statistics; reciprocal on the EUP slot.
        s = s - jnp.max(s, axis=-1, keepdims=True)
        p = jnp.exp(s)
        p = p * pl.reciprocal(jnp.sum(p, axis=-1, keepdims=True), approx=True)
        # out_h = P @ V_h
        oh = jnp.dot(p.astype(_BF16), v16[:, sl], preferred_element_type=_F32)  # (Nq, c)
        # Distribute the output projection over heads (== concat(heads) @ Wo),
        # avoiding a lane-axis concatenation of the per-head outputs.
        contrib = jnp.dot(oh.astype(_BF16), wo[sl, :], preferred_element_type=_F32)  # (Nq, C)
        out = contrib if out is None else out + contrib
    return out + bo


# --------------------------------------------------------------------------------------
# Fused two-way attention block kernel (one batch element per grid step)
# --------------------------------------------------------------------------------------

def _two_way_block_kernel(num_heads, skip_first_layer_pe,
                          q_ref, k_ref, qpe_ref, kpe_ref,
                          sa_wq, sa_bq, sa_wk, sa_bk, sa_wv, sa_bv, sa_wo, sa_bo,
                          t_wq, t_bq, t_wk, t_bk, t_wv, t_bv, t_wo, t_bo,
                          i_wq, i_bq, i_wk, i_bk, i_wv, i_bv, i_wo, i_bo,
                          m_w1, m_b1, m_w2, m_b2,
                          n1_g, n1_b, n2_g, n2_b, n3_g, n3_b, n4_g, n4_b,
                          out_q_ref, out_k_ref):
    # Activations resident in registers/VMEM for the whole block.
    qs = q_ref[0].astype(_F32)      # (Nq, C)
    ks = k_ref[0].astype(_F32)      # (Nk, C)
    qpe = qpe_ref[0].astype(_F32)   # (Nq, C)
    kpe = kpe_ref[0].astype(_F32)   # (Nk, C)

    def attn(q_in, k_in, v_in, wq, bq, wk, bk, wv, bv, wo, bo):
        # Each stage's weights/biases are loaded exactly once here.
        return _attention(q_in, k_in, v_in,
                          wq[...], bq[...], wk[...], bk[...],
                          wv[...], bv[...], wo[...], bo[...], num_heads)

    # ---- stage 1: self attention + norm1 ----------------------------------------------
    if skip_first_layer_pe:
        a = attn(qs, qs, qs, sa_wq, sa_bq, sa_wk, sa_bk, sa_wv, sa_bv, sa_wo, sa_bo)
        qs = _layernorm(a, n1_g[...], n1_b[...])          # no residual in this branch
    else:
        qp = qs + qpe
        a = attn(qp, qp, qs, sa_wq, sa_bq, sa_wk, sa_bk, sa_wv, sa_bv, sa_wo, sa_bo)
        qs = _layernorm(qs + a, n1_g[...], n1_b[...])

    # keys are only updated at the very end (stage 4), so keys + key_pe is shared by
    # both cross-attention stages; compute it once.
    kp = ks + kpe

    # ---- stage 2: cross attention, tokens -> image + norm2 ----------------------------
    qp = qs + qpe
    a = attn(qp, kp, ks, t_wq, t_bq, t_wk, t_bk, t_wv, t_bv, t_wo, t_bo)
    qs = _layernorm(qs + a, n2_g[...], n2_b[...])

    # ---- stage 3: MLP (Linear -> ReLU -> Linear) + norm3 ------------------------------
    h = jnp.dot(qs.astype(_BF16), m_w1[...], preferred_element_type=_F32) + m_b1[...]
    h = jnp.maximum(h, 0.0)
    m = jnp.dot(h.astype(_BF16), m_w2[...], preferred_element_type=_F32) + m_b2[...]
    qs = _layernorm(qs + m, n3_g[...], n3_b[...])

    # ---- stage 4: cross attention, image -> tokens + norm4 ----------------------------
    qp = qs + qpe
    a = attn(kp, qp, qs, i_wq, i_bq, i_wk, i_bk, i_wv, i_bv, i_wo, i_bo)
    ks = _layernorm(ks + a, n4_g[...], n4_b[...])

    out_q_ref[0] = qs.astype(out_q_ref.dtype)
    out_k_ref[0] = ks.astype(out_k_ref.dtype)


# --------------------------------------------------------------------------------------
# Wrapper around pallas_call
# --------------------------------------------------------------------------------------

def two_way_attention_block(queries, keys, query_pe, key_pe, params,
                            num_heads, skip_first_layer_pe=False):
    """QuantTwoWayAttentionBlock.forward -> (queries, keys).  One fused kernel, grid=(B,)."""
    B, Nq, C = queries.shape
    Nk = keys.shape[1]

    def wcast(w):  # matmul weights in bf16; biases / LN params stay f32
        return w.astype(_BF16)

    sa, t2i, i2t, mlp = (params['self_attn'], params['cross_t2i'],
                         params['cross_i2t'], params['mlp'])

    weight_args = [
        wcast(sa['wq']), sa['bq'], wcast(sa['wk']), sa['bk'],
        wcast(sa['wv']), sa['bv'], wcast(sa['wo']), sa['bo'],
        wcast(t2i['wq']), t2i['bq'], wcast(t2i['wk']), t2i['bk'],
        wcast(t2i['wv']), t2i['bv'], wcast(t2i['wo']), t2i['bo'],
        wcast(i2t['wq']), i2t['bq'], wcast(i2t['wk']), i2t['bk'],
        wcast(i2t['wv']), i2t['bv'], wcast(i2t['wo']), i2t['bo'],
        wcast(mlp['w1']), mlp['b1'], wcast(mlp['w2']), mlp['b2'],
        params['norm1_g'], params['norm1_b'], params['norm2_g'], params['norm2_b'],
        params['norm3_g'], params['norm3_b'], params['norm4_g'], params['norm4_b'],
    ]

    def full_spec(arr):
        # Grid-invariant (constant index map) full block: fetched once, reused each step.
        nd = arr.ndim
        return pl.BlockSpec(arr.shape, lambda b, _nd=nd: (0,) * _nd)

    in_specs = [
        pl.BlockSpec((1, Nq, C), lambda b: (b, 0, 0)),   # queries
        pl.BlockSpec((1, Nk, C), lambda b: (b, 0, 0)),   # keys
        pl.BlockSpec((1, Nq, C), lambda b: (b, 0, 0)),   # query_pe
        pl.BlockSpec((1, Nk, C), lambda b: (b, 0, 0)),   # key_pe
    ] + [full_spec(a) for a in weight_args]

    out_specs = (
        pl.BlockSpec((1, Nq, C), lambda b: (b, 0, 0)),
        pl.BlockSpec((1, Nk, C), lambda b: (b, 0, 0)),
    )

    # Explicit VMEM budget: double-buffered activation blocks + weights (+ headroom for
    # in-kernel intermediates).  Kept <= 64 MiB so it is valid on v7x as well.
    act_bytes = 4 * 2 * (Nq * C + Nk * C + Nq * C + Nk * C + Nq * C + Nk * C)
    w_bytes = sum(int(a.size) * jnp.dtype(a.dtype).itemsize for a in weight_args)
    vmem_limit = int(min(64 * 2**20, max(16 * 2**20, 8 * (act_bytes + w_bytes))))

    kernel = functools.partial(_two_way_block_kernel, num_heads, skip_first_layer_pe)
    out_q, out_k = pl.pallas_call(
        kernel,
        out_shape=(jax.ShapeDtypeStruct((B, Nq, C), queries.dtype),
                   jax.ShapeDtypeStruct((B, Nk, C), keys.dtype)),
        grid=(B,),
        in_specs=in_specs,
        out_specs=out_specs,
        compiler_params=pltpu.CompilerParams(
            dimension_semantics=("parallel",),        # split batch across v7x's 2 TCs
            vmem_limit_bytes=vmem_limit),
    )(queries, keys, query_pe, key_pe, *weight_args)
    return out_q, out_k


# --------------------------------------------------------------------------------------
# Pure-JAX f32 reference (mirrors the PyTorch float semantics) for verification
# --------------------------------------------------------------------------------------

def _ref_attention(q, k, v, p, num_heads):
    q = q @ p['wq'] + p['bq'][0]
    k = k @ p['wk'] + p['bk'][0]
    v = v @ p['wv'] + p['bv'][0]
    B, Nq, D = q.shape
    Nk = k.shape[1]
    c = D // num_heads
    qh = q.reshape(B, Nq, num_heads, c).transpose(0, 2, 1, 3)
    kh = k.reshape(B, Nk, num_heads, c).transpose(0, 2, 1, 3)
    vh = v.reshape(B, Nk, num_heads, c).transpose(0, 2, 1, 3)
    attn = jnp.einsum('bhnc,bhmc->bhnm', qh, kh) / math.sqrt(c)
    attn = jax.nn.softmax(attn, axis=-1)
    o = jnp.einsum('bhnm,bhmc->bhnc', attn, vh)
    o = o.transpose(0, 2, 1, 3).reshape(B, Nq, D)
    return o @ p['wo'] + p['bo'][0]


def _ref_ln(x, g, b):
    mu = x.mean(-1, keepdims=True)
    var = ((x - mu) ** 2).mean(-1, keepdims=True)
    return (x - mu) / jnp.sqrt(var + 1e-5) * g[0] + b[0]


def _ref_block(queries, keys, query_pe, key_pe, params, num_heads,
               skip_first_layer_pe=False):
    if skip_first_layer_pe:
        queries = _ref_ln(_ref_attention(queries, queries, queries,
                                         params['self_attn'], num_heads),
                          params['norm1_g'], params['norm1_b'])
    else:
        q = queries + query_pe
        queries = _ref_ln(queries + _ref_attention(q, q, queries,
                                                   params['self_attn'], num_heads),
                          params['norm1_g'], params['norm1_b'])
    q = queries + query_pe
    k = keys + key_pe
    queries = _ref_ln(queries + _ref_attention(q, k, keys, params['cross_t2i'], num_heads),
                      params['norm2_g'], params['norm2_b'])
    mp = params['mlp']
    mlp_out = jnp.maximum(queries @ mp['w1'] + mp['b1'][0], 0.0) @ mp['w2'] + mp['b2'][0]
    queries = _ref_ln(queries + mlp_out, params['norm3_g'], params['norm3_b'])
    q = queries + query_pe
    k = keys + key_pe
    keys = _ref_ln(keys + _ref_attention(k, q, queries, params['cross_i2t'], num_heads),
                   params['norm4_g'], params['norm4_b'])
    return queries, keys


# --------------------------------------------------------------------------------------
# Deterministic parameter construction
# --------------------------------------------------------------------------------------

def _make_attn_params(key, embedding_dim, internal_dim):
    ks = jax.random.split(key, 4)
    s = 0.05
    return {
        'wq': (jax.random.normal(ks[0], (embedding_dim, internal_dim)) * s).astype(_F32),
        'bq': jnp.zeros((1, internal_dim), _F32),
        'wk': (jax.random.normal(ks[1], (embedding_dim, internal_dim)) * s).astype(_F32),
        'bk': jnp.zeros((1, internal_dim), _F32),
        'wv': (jax.random.normal(ks[2], (embedding_dim, internal_dim)) * s).astype(_F32),
        'bv': jnp.zeros((1, internal_dim), _F32),
        'wo': (jax.random.normal(ks[3], (internal_dim, embedding_dim)) * s).astype(_F32),
        'bo': jnp.zeros((1, embedding_dim), _F32),
    }


def make_params(key, embedding_dim, mlp_dim, attention_downsample_rate=2):
    ks = jax.random.split(key, 6)
    internal_cross = embedding_dim // attention_downsample_rate
    s = 0.05
    return {
        'self_attn': _make_attn_params(ks[0], embedding_dim, embedding_dim),
        'cross_t2i': _make_attn_params(ks[1], embedding_dim, internal_cross),
        'cross_i2t': _make_attn_params(ks[2], embedding_dim, internal_cross),
        'mlp': {
            'w1': (jax.random.normal(ks[3], (embedding_dim, mlp_dim)) * s).astype(_F32),
            'b1': jnp.zeros((1, mlp_dim), _F32),
            'w2': (jax.random.normal(ks[4], (mlp_dim, embedding_dim)) * s).astype(_F32),
            'b2': jnp.zeros((1, embedding_dim), _F32),
        },
        'norm1_g': jnp.ones((1, embedding_dim), _F32),
        'norm1_b': jnp.zeros((1, embedding_dim), _F32),
        'norm2_g': jnp.ones((1, embedding_dim), _F32),
        'norm2_b': jnp.zeros((1, embedding_dim), _F32),
        'norm3_g': jnp.ones((1, embedding_dim), _F32),
        'norm3_b': jnp.zeros((1, embedding_dim), _F32),
        'norm4_g': jnp.ones((1, embedding_dim), _F32),
        'norm4_b': jnp.zeros((1, embedding_dim), _F32),
    }


# --------------------------------------------------------------------------------------
# Main
# --------------------------------------------------------------------------------------

if __name__ == "__main__":
    B = 2            # batch
    Nq = 8           # prompt tokens
    Nk = 128         # image tokens (lane-dense key axis)
    C = 128          # embedding_dim (full 128-lane vregs)
    num_heads = 4
    mlp_dim = 256
    downsample = 2   # attention_downsample_rate

    key = jax.random.PRNGKey(0)
    k_in, k_par = jax.random.split(key)
    kq, kk, kqp, kkp = jax.random.split(k_in, 4)

    queries = jax.random.normal(kq, (B, Nq, C), _F32)
    keys = jax.random.normal(kk, (B, Nk, C), _F32)
    query_pe = jax.random.normal(kqp, (B, Nq, C), _F32)
    key_pe = jax.random.normal(kkp, (B, Nk, C), _F32)

    params = make_params(k_par, C, mlp_dim, downsample)

    ok = True
    for skip in (False, True):
        out_q, out_k = two_way_attention_block(
            queries, keys, query_pe, key_pe, params,
            num_heads=num_heads, skip_first_layer_pe=skip)
        out_q = jax.block_until_ready(out_q)
        out_k = jax.block_until_ready(out_k)

        ref_q, ref_k = _ref_block(queries, keys, query_pe, key_pe, params, num_heads,
                                  skip_first_layer_pe=skip)
        assert out_q.shape == (B, Nq, C) and out_k.shape == (B, Nk, C)
        # bf16 matmuls (f32 accumulation) vs pure-f32 reference -> loosened tolerance.
        ok &= bool(jnp.allclose(out_q, ref_q, atol=5e-2, rtol=5e-2))
        ok &= bool(jnp.allclose(out_k, ref_k, atol=5e-2, rtol=5e-2))

    assert ok, "mismatch vs f32 reference"
    print("KERNEL_OK")
</pallas_src>

<mosaic_0001>
module attributes {stable_mosaic.version = 11 : i64} {
  func.func @_two_way_block_kernel(%arg0: i32, %arg1: memref<1x8x128xf32, #tpu.memory_space<vmem>>, %arg2: memref<1x128x128xf32, #tpu.memory_space<vmem>>, %arg3: memref<1x8x128xf32, #tpu.memory_space<vmem>>, %arg4: memref<1x128x128xf32, #tpu.memory_space<vmem>>, %arg5: memref<128x128xbf16, #tpu.memory_space<vmem>>, %arg6: memref<1x128xf32, #tpu.memory_space<vmem>>, %arg7: memref<128x128xbf16, #tpu.memory_space<vmem>>, %arg8: memref<1x128xf32, #tpu.memory_space<vmem>>, %arg9: memref<128x128xbf16, #tpu.memory_space<vmem>>, %arg10: memref<1x128xf32, #tpu.memory_space<vmem>>, %arg11: memref<128x128xbf16, #tpu.memory_space<vmem>>, %arg12: memref<1x128xf32, #tpu.memory_space<vmem>>, %arg13: memref<128x64xbf16, #tpu.memory_space<vmem>>, %arg14: memref<1x64xf32, #tpu.memory_space<vmem>>, %arg15: memref<128x64xbf16, #tpu.memory_space<vmem>>, %arg16: memref<1x64xf32, #tpu.memory_space<vmem>>, %arg17: memref<128x64xbf16, #tpu.memory_space<vmem>>, %arg18: memref<1x64xf32, #tpu.memory_space<vmem>>, %arg19: memref<64x128xbf16, #tpu.memory_space<vmem>>, %arg20: memref<1x128xf32, #tpu.memory_space<vmem>>, %arg21: memref<128x64xbf16, #tpu.memory_space<vmem>>, %arg22: memref<1x64xf32, #tpu.memory_space<vmem>>, %arg23: memref<128x64xbf16, #tpu.memory_space<vmem>>, %arg24: memref<1x64xf32, #tpu.memory_space<vmem>>, %arg25: memref<128x64xbf16, #tpu.memory_space<vmem>>, %arg26: memref<1x64xf32, #tpu.memory_space<vmem>>, %arg27: memref<64x128xbf16, #tpu.memory_space<vmem>>, %arg28: memref<1x128xf32, #tpu.memory_space<vmem>>, %arg29: memref<128x256xbf16, #tpu.memory_space<vmem>>, %arg30: memref<1x256xf32, #tpu.memory_space<vmem>>, %arg31: memref<256x128xbf16, #tpu.memory_space<vmem>>, %arg32: memref<1x128xf32, #tpu.memory_space<vmem>>, %arg33: memref<1x128xf32, #tpu.memory_space<vmem>>, %arg34: memref<1x128xf32, #tpu.memory_space<vmem>>, %arg35: memref<1x128xf32, #tpu.memory_space<vmem>>, %arg36: memref<1x128xf32, #tpu.memory_space<vmem>>, %arg37: memref<1x128xf32, #tpu.memory_space<vmem>>, %arg38: memref<1x128xf32, #tpu.memory_space<vmem>>, %arg39: memref<1x128xf32, #tpu.memory_space<vmem>>, %arg40: memref<1x128xf32, #tpu.memory_space<vmem>>, %arg41: memref<1x8x128xf32, #tpu.memory_space<vmem>>, %arg42: memref<1x128x128xf32, #tpu.memory_space<vmem>>) attributes {dimension_semantics = [#tpu.dimension_semantics<parallel>], iteration_bounds = array<i64: 2>, scalar_prefetch = 0 : i64, scratch_operands = 0 : i64, tpu.core_type = #tpu.core_type<tc>, window_params = [{transform_indices = @transform_0, window_bounds = array<i64: 1, 8, 128>}, {transform_indices = @transform_1, window_bounds = array<i64: 1, 128, 128>}, {transform_indices = @transform_2, window_bounds = array<i64: 1, 8, 128>}, {transform_indices = @transform_3, window_bounds = array<i64: 1, 128, 128>}, {pipeline_mode = #tpu.pipeline_mode<synchronous>, transform_indices = @transform_4, window_bounds = array<i64: 128, 128>}, {pipeline_mode = #tpu.pipeline_mode<synchronous>, transform_indices = @transform_5, window_bounds = array<i64: 1, 128>}, {pipeline_mode = #tpu.pipeline_mode<synchronous>, transform_indices = @transform_6, window_bounds = array<i64: 128, 128>}, {pipeline_mode = #tpu.pipeline_mode<synchronous>, transform_indices = @transform_7, window_bounds = array<i64: 1, 128>}, {pipeline_mode = #tpu.pipeline_mode<synchronous>, transform_indices = @transform_8, window_bounds = array<i64: 128, 128>}, {pipeline_mode = #tpu.pipeline_mode<synchronous>, transform_indices = @transform_9, window_bounds = array<i64: 1, 128>}, {pipeline_mode = #tpu.pipeline_mode<synchronous>, transform_indices = @transform_10, window_bounds = array<i64: 128, 128>}, {pipeline_mode = #tpu.pipeline_mode<synchronous>, transform_indices = @transform_11, window_bounds = array<i64: 1, 128>}, {pipeline_mode = #tpu.pipeline_mode<synchronous>, transform_indices = @transform_12, window_bounds = array<i64: 128, 64>}, {pipeline_mode = #tpu.pipeline_mode<synchronous>, transform_indices = @transform_13, window_bounds = array<i64: 1, 64>}, {pipeline_mode = #tpu.pipeline_mode<synchronous>, transform_indices = @transform_14, window_bounds = array<i64: 128, 64>}, {pipeline_mode = #tpu.pipeline_mode<synchronous>, transform_indices = @transform_15, window_bounds = array<i64: 1, 64>}, {pipeline_mode = #tpu.pipeline_mode<synchronous>, transform_indices = @transform_16, window_bounds = array<i64: 128, 64>}, {pipeline_mode = #tpu.pipeline_mode<synchronous>, transform_indices = @transform_17, window_bounds = array<i64: 1, 64>}, {pipeline_mode = #tpu.pipeline_mode<synchronous>, transform_indices = @transform_18, window_bounds = array<i64: 64, 128>}, {pipeline_mode = #tpu.pipeline_mode<synchronous>, transform_indices = @transform_19, window_bounds = array<i64: 1, 128>}, {pipeline_mode = #tpu.pipeline_mode<synchronous>, transform_indices = @transform_20, window_bounds = array<i64: 128, 64>}, {pipeline_mode = #tpu.pipeline_mode<synchronous>, transform_indices = @transform_21, window_bounds = array<i64: 1, 64>}, {pipeline_mode = #tpu.pipeline_mode<synchronous>, transform_indices = @transform_22, window_bounds = array<i64: 128, 64>}, {pipeline_mode = #tpu.pipeline_mode<synchronous>, transform_indices = @transform_23, window_bounds = array<i64: 1, 64>}, {pipeline_mode = #tpu.pipeline_mode<synchronous>, transform_indices = @transform_24, window_bounds = array<i64: 128, 64>}, {pipeline_mode = #tpu.pipeline_mode<synchronous>, transform_indices = @transform_25, window_bounds = array<i64: 1, 64>}, {pipeline_mode = #tpu.pipeline_mode<synchronous>, transform_indices = @transform_26, window_bounds = array<i64: 64, 128>}, {pipeline_mode = #tpu.pipeline_mode<synchronous>, transform_indices = @transform_27, window_bounds = array<i64: 1, 128>}, {pipeline_mode = #tpu.pipeline_mode<synchronous>, transform_indices = @transform_28, window_bounds = array<i64: 128, 256>}, {pipeline_mode = #tpu.pipeline_mode<synchronous>, transform_indices = @transform_29, window_bounds = array<i64: 1, 256>}, {pipeline_mode = #tpu.pipeline_mode<synchronous>, transform_indices = @transform_30, window_bounds = array<i64: 256, 128>}, {pipeline_mode = #tpu.pipeline_mode<synchronous>, transform_indices = @transform_31, window_bounds = array<i64: 1, 128>}, {pipeline_mode = #tpu.pipeline_mode<synchronous>, transform_indices = @transform_32, window_bounds = array<i64: 1, 128>}, {pipeline_mode = #tpu.pipeline_mode<synchronous>, transform_indices = @transform_33, window_bounds = array<i64: 1, 128>}, {pipeline_mode = #tpu.pipeline_mode<synchronous>, transform_indices = @transform_34, window_bounds = array<i64: 1, 128>}, {pipeline_mode = #tpu.pipeline_mode<synchronous>, transform_indices = @transform_35, window_bounds = array<i64: 1, 128>}, {pipeline_mode = #tpu.pipeline_mode<synchronous>, transform_indices = @transform_36, window_bounds = array<i64: 1, 128>}, {pipeline_mode = #tpu.pipeline_mode<synchronous>, transform_indices = @transform_37, window_bounds = array<i64: 1, 128>}, {pipeline_mode = #tpu.pipeline_mode<synchronous>, transform_indices = @transform_38, window_bounds = array<i64: 1, 128>}, {pipeline_mode = #tpu.pipeline_mode<synchronous>, transform_indices = @transform_39, window_bounds = array<i64: 1, 128>}, {transform_indices = @transform_40, window_bounds = array<i64: 1, 8, 128>}, {transform_indices = @transform_41, window_bounds = array<i64: 1, 128, 128>}]} {
    %c0 = arith.constant 0 : index
    %c0_0 = arith.constant 0 : index
    %c0_1 = arith.constant 0 : index
    %0 = vector.load %arg1[%c0, %c0_0, %c0_1] : memref<1x8x128xf32, #tpu.memory_space<vmem>>, vector<1x8x128xf32>
    %1 = vector.shape_cast %0 : vector<1x8x128xf32> to vector<8x128xf32>
    %c0_2 = arith.constant 0 : index
    %c0_3 = arith.constant 0 : index
    %c0_4 = arith.constant 0 : index
    %2 = vector.load %arg2[%c0_2, %c0_3, %c0_4] : memref<1x128x128xf32, #tpu.memory_space<vmem>>, vector<1x128x128xf32>
    %3 = vector.shape_cast %2 : vector<1x128x128xf32> to vector<128x128xf32>
    %c0_5 = arith.constant 0 : index
    %c0_6 = arith.constant 0 : index
    %c0_7 = arith.constant 0 : index
    %4 = vector.load %arg3[%c0_5, %c0_6, %c0_7] : memref<1x8x128xf32, #tpu.memory_space<vmem>>, vector<1x8x128xf32>
    %5 = vector.shape_cast %4 : vector<1x8x128xf32> to vector<8x128xf32>
    %c0_8 = arith.constant 0 : index
    %c0_9 = arith.constant 0 : index
    %c0_10 = arith.constant 0 : index
    %6 = vector.load %arg4[%c0_8, %c0_9, %c0_10] : memref<1x128x128xf32, #tpu.memory_space<vmem>>, vector<1x128x128xf32>
    %7 = vector.shape_cast %6 : vector<1x128x128xf32> to vector<128x128xf32>
    %8 = arith.addf %1, %5 : vector<8x128xf32>
    %c0_11 = arith.constant 0 : index
    %c0_12 = arith.constant 0 : index
    %9 = vector.load %arg5[%c0_11, %c0_12] : memref<128x128xbf16, #tpu.memory_space<vmem>>, vector<128x128xbf16>
    %c0_13 = arith.constant 0 : index
    %c0_14 = arith.constant 0 : index
    %10 = vector.load %arg6[%c0_13, %c0_14] : memref<1x128xf32, #tpu.memory_space<vmem>>, vector<1x128xf32>
    %c0_15 = arith.constant 0 : index
    %c0_16 = arith.constant 0 : index
    %11 = vector.load %arg7[%c0_15, %c0_16] : memref<128x128xbf16, #tpu.memory_space<vmem>>, vector<128x128xbf16>
    %c0_17 = arith.constant 0 : index
    %c0_18 = arith.constant 0 : index
    %12 = vector.load %arg8[%c0_17, %c0_18] : memref<1x128xf32, #tpu.memory_space<vmem>>, vector<1x128xf32>
    %c0_19 = arith.constant 0 : index
    %c0_20 = arith.constant 0 : index
    %13 = vector.load %arg9[%c0_19, %c0_20] : memref<128x128xbf16, #tpu.memory_space<vmem>>, vector<128x128xbf16>
    %c0_21 = arith.constant 0 : index
    %c0_22 = arith.constant 0 : index
    %14 = vector.load %arg10[%c0_21, %c0_22] : memref<1x128xf32, #tpu.memory_space<vmem>>, vector<1x128xf32>
    %c0_23 = arith.constant 0 : index
    %c0_24 = arith.constant 0 : index
    %15 = vector.load %arg11[%c0_23, %c0_24] : memref<128x128xbf16, #tpu.memory_space<vmem>>, vector<128x128xbf16>
    %c0_25 = arith.constant 0 : index
    %c0_26 = arith.constant 0 : index
    %16 = vector.load %arg12[%c0_25, %c0_26] : memref<1x128xf32, #tpu.memory_space<vmem>>, vector<1x128xf32>
    %17 = arith.truncf %8 : vector<8x128xf32> to vector<8x128xbf16>
    %cst = arith.constant dense<0.000000e+00> : vector<8x128xf32>
    %18 = tpu.matmul %17, %9, %cst {dimension_numbers = #tpu.dot_dimension_numbers<[1], [0], [0], [1], [0, 0, 1, 1], [], []>} : vector<8x128xbf16>, vector<128x128xbf16>, vector<8x128xf32> -> vector<8x128xf32>
    %19 = vector.broadcast %10 : vector<1x128xf32> to vector<8x128xf32>
    %20 = arith.addf %18, %19 : vector<8x128xf32>
    %21 = arith.truncf %8 : vector<8x128xf32> to vector<8x128xbf16>
    %cst_27 = arith.constant dense<0.000000e+00> : vector<8x128xf32>
    %22 = tpu.matmul %21, %11, %cst_27 {dimension_numbers = #tpu.dot_dimension_numbers<[1], [0], [0], [1], [0, 0, 1, 1], [], []>} : vector<8x128xbf16>, vector<128x128xbf16>, vector<8x128xf32> -> vector<8x128xf32>
    %23 = vector.broadcast %12 : vector<1x128xf32> to vector<8x128xf32>
    %24 = arith.addf %22, %23 : vector<8x128xf32>
    %25 = arith.truncf %1 : vector<8x128xf32> to vector<8x128xbf16>
    %cst_28 = arith.constant dense<0.000000e+00> : vector<8x128xf32>
    %26 = tpu.matmul %25, %13, %cst_28 {dimension_numbers = #tpu.dot_dimension_numbers<[1], [0], [0], [1], [0, 0, 1, 1], [], []>} : vector<8x128xbf16>, vector<128x128xbf16>, vector<8x128xf32> -> vector<8x128xf32>
    %27 = vector.broadcast %14 : vector<1x128xf32> to vector<8x128xf32>
    %28 = arith.addf %26, %27 : vector<8x128xf32>
    %cst_29 = arith.constant 0.176776692 : f32
    %29 = vector.broadcast %cst_29 : f32 to vector<8x128xf32>
    %30 = arith.mulf %20, %29 : vector<8x128xf32>
    %31 = arith.truncf %30 : vector<8x128xf32> to vector<8x128xbf16>
    %32 = arith.truncf %24 : vector<8x128xf32> to vector<8x128xbf16>
    %33 = arith.truncf %28 : vector<8x128xf32> to vector<8x128xbf16>
    %34 = vector.extract_strided_slice %31 {offsets = [0, 0], sizes = [8, 32], strides = [1, 1]} : vector<8x128xbf16> to vector<8x32xbf16>
    %35 = vector.extract_strided_slice %32 {offsets = [0, 0], sizes = [8, 32], strides = [1, 1]} : vector<8x128xbf16> to vector<8x32xbf16>
    %cst_30 = arith.constant dense<0.000000e+00> : vector<8x8xf32>
    %36 = tpu.matmul %34, %35, %cst_30 {dimension_numbers = #tpu.dot_dimension_numbers<[1], [1], [0], [0], [0, 0, 1, 0], [], []>} : vector<8x32xbf16>, vector<8x32xbf16>, vector<8x8xf32> -> vector<8x8xf32>
    %cst_31 = arith.constant dense<0xFF800000> : vector<8xf32>
    %37 = vector.multi_reduction <maximumf>, %36, %cst_31 [1] : vector<8x8xf32> to vector<8xf32>
    %38 = vector.shape_cast %37 : vector<8xf32> to vector<8x1xf32>
    %39 = vector.broadcast %38 : vector<8x1xf32> to vector<8x8xf32>
    %40 = arith.subf %36, %39 : vector<8x8xf32>
    %41 = math.exp %40 : vector<8x8xf32>
    %cst_32 = arith.constant dense<0.000000e+00> : vector<8xf32>
    %42 = vector.multi_reduction <add>, %41, %cst_32 [1] : vector<8x8xf32> to vector<8xf32>
    %43 = vector.shape_cast %42 : vector<8xf32> to vector<8x1xf32>
    %44 = tpu.reciprocal %43 {approx = true} : vector<8x1xf32> -> vector<8x1xf32>
    %45 = vector.broadcast %44 : vector<8x1xf32> to vector<8x8xf32>
    %46 = arith.mulf %41, %45 : vector<8x8xf32>
    %47 = arith.truncf %46 : vector<8x8xf32> to vector<8x8xbf16>
    %48 = vector.extract_strided_slice %33 {offsets = [0, 0], sizes = [8, 32], strides = [1, 1]} : vector<8x128xbf16> to vector<8x32xbf16>
    %cst_33 = arith.constant dense<0.000000e+00> : vector<8x32xf32>
    %49 = tpu.matmul %47, %48, %cst_33 {dimension_numbers = #tpu.dot_dimension_numbers<[1], [0], [0], [1], [0, 0, 1, 1], [], []>} : vector<8x8xbf16>, vector<8x32xbf16>, vector<8x32xf32> -> vector<8x32xf32>
    %50 = arith.truncf %49 : vector<8x32xf32> to vector<8x32xbf16>
    %51 = vector.extract_strided_slice %15 {offsets = [0, 0], sizes = [32, 128], strides = [1, 1]} : vector<128x128xbf16> to vector<32x128xbf16>
    %cst_34 = arith.constant dense<0.000000e+00> : vector<8x128xf32>
    %52 = tpu.matmul %50, %51, %cst_34 {dimension_numbers = #tpu.dot_dimension_numbers<[1], [0], [0], [1], [0, 0, 1, 1], [], []>} : vector<8x32xbf16>, vector<32x128xbf16>, vector<8x128xf32> -> vector<8x128xf32>
    %53 = vector.extract_strided_slice %31 {offsets = [0, 32], sizes = [8, 32], strides = [1, 1]} : vector<8x128xbf16> to vector<8x32xbf16>
    %54 = vector.extract_strided_slice %32 {offsets = [0, 32], sizes = [8, 32], strides = [1, 1]} : vector<8x128xbf16> to vector<8x32xbf16>
    %cst_35 = arith.constant dense<0.000000e+00> : vector<8x8xf32>
    %55 = tpu.matmul %53, %54, %cst_35 {dimension_numbers = #tpu.dot_dimension_numbers<[1], [1], [0], [0], [0, 0, 1, 0], [], []>} : vector<8x32xbf16>, vector<8x32xbf16>, vector<8x8xf32> -> vector<8x8xf32>
    %cst_36 = arith.constant dense<0xFF800000> : vector<8xf32>
    %56 = vector.multi_reduction <maximumf>, %55, %cst_36 [1] : vector<8x8xf32> to vector<8xf32>
    %57 = vector.shape_cast %56 : vector<8xf32> to vector<8x1xf32>
    %58 = vector.broadcast %57 : vector<8x1xf32> to vector<8x8xf32>
    %59 = arith.subf %55, %58 : vector<8x8xf32>
    %60 = math.exp %59 : vector<8x8xf32>
    %cst_37 = arith.constant dense<0.000000e+00> : vector<8xf32>
    %61 = vector.multi_reduction <add>, %60, %cst_37 [1] : vector<8x8xf32> to vector<8xf32>
    %62 = vector.shape_cast %61 : vector<8xf32> to vector<8x1xf32>
    %63 = tpu.reciprocal %62 {approx = true} : vector<8x1xf32> -> vector<8x1xf32>
    %64 = vector.broadcast %63 : vector<8x1xf32> to vector<8x8xf32>
    %65 = arith.mulf %60, %64 : vector<8x8xf32>
    %66 = arith.truncf %65 : vector<8x8xf32> to vector<8x8xbf16>
    %67 = vector.extract_strided_slice %33 {offsets = [0, 32], sizes = [8, 32], strides = [1, 1]} : vector<8x128xbf16> to vector<8x32xbf16>
    %cst_38 = arith.constant dense<0.000000e+00> : vector<8x32xf32>
    %68 = tpu.matmul %66, %67, %cst_38 {dimension_numbers = #tpu.dot_dimension_numbers<[1], [0], [0], [1], [0, 0, 1, 1], [], []>} : vector<8x8xbf16>, vector<8x32xbf16>, vector<8x32xf32> -> vector<8x32xf32>
    %69 = arith.truncf %68 : vector<8x32xf32> to vector<8x32xbf16>
    %70 = vector.extract_strided_slice %15 {offsets = [32, 0], sizes = [32, 128], strides = [1, 1]} : vector<128x128xbf16> to vector<32x128xbf16>
    %cst_39 = arith.constant dense<0.000000e+00> : vector<8x128xf32>
    %71 = tpu.matmul %69, %70, %cst_39 {dimension_numbers = #tpu.dot_dimension_numbers<[1], [0], [0], [1], [0, 0, 1, 1], [], []>} : vector<8x32xbf16>, vector<32x128xbf16>, vector<8x128xf32> -> vector<8x128xf32>
    %72 = arith.addf %52, %71 : vector<8x128xf32>
    %73 = vector.extract_strided_slice %31 {offsets = [0, 64], sizes = [8, 32], strides = [1, 1]} : vector<8x128xbf16> to vector<8x32xbf16>
    %74 = vector.extract_strided_slice %32 {offsets = [0, 64], sizes = [8, 32], strides = [1, 1]} : vector<8x128xbf16> to vector<8x32xbf16>
    %cst_40 = arith.constant dense<0.000000e+00> : vector<8x8xf32>
    %75 = tpu.matmul %73, %74, %cst_40 {dimension_numbers = #tpu.dot_dimension_numbers<[1], [1], [0], [0], [0, 0, 1, 0], [], []>} : vector<8x32xbf16>, vector<8x32xbf16>, vector<8x8xf32> -> vector<8x8xf32>
    %cst_41 = arith.constant dense<0xFF800000> : vector<8xf32>
    %76 = vector.multi_reduction <maximumf>, %75, %cst_41 [1] : vector<8x8xf32> to vector<8xf32>
    %77 = vector.shape_cast %76 : vector<8xf32> to vector<8x1xf32>
    %78 = vector.broadcast %77 : vector<8x1xf32> to vector<8x8xf32>
    %79 = arith.subf %75, %78 : vector<8x8xf32>
    %80 = math.exp %79 : vector<8x8xf32>
    %cst_42 = arith.constant dense<0.000000e+00> : vector<8xf32>
    %81 = vector.multi_reduction <add>, %80, %cst_42 [1] : vector<8x8xf32> to vector<8xf32>
    %82 = vector.shape_cast %81 : vector<8xf32> to vector<8x1xf32>
    %83 = tpu.reciprocal %82 {approx = true} : vector<8x1xf32> -> vector<8x1xf32>
    %84 = vector.broadcast %83 : vector<8x1xf32> to vector<8x8xf32>
    %85 = arith.mulf %80, %84 : vector<8x8xf32>
    %86 = arith.truncf %85 : vector<8x8xf32> to vector<8x8xbf16>
    %87 = vector.extract_strided_slice %33 {offsets = [0, 64], sizes = [8, 32], strides = [1, 1]} : vector<8x128xbf16> to vector<8x32xbf16>
    %cst_43 = arith.constant dense<0.000000e+00> : vector<8x32xf32>
    %88 = tpu.matmul %86, %87, %cst_43 {dimension_numbers = #tpu.dot_dimension_numbers<[1], [0], [0], [1], [0, 0, 1, 1], [], []>} : vector<8x8xbf16>, vector<8x32xbf16>, vector<8x32xf32> -> vector<8x32xf32>
    %89 = arith.truncf %88 : vector<8x32xf32> to vector<8x32xbf16>
    %90 = vector.extract_strided_slice %15 {offsets = [64, 0], sizes = [32, 128], strides = [1, 1]} : vector<128x128xbf16> to vector<32x128xbf16>
    %cst_44 = arith.constant dense<0.000000e+00> : vector<8x128xf32>
    %91 = tpu.matmul %89, %90, %cst_44 {dimension_numbers = #tpu.dot_dimension_numbers<[1], [0], [0], [1], [0, 0, 1, 1], [], []>} : vector<8x32xbf16>, vector<32x128xbf16>, vector<8x128xf32> -> vector<8x128xf32>
    %92 = arith.addf %72, %91 : vector<8x128xf32>
    %93 = vector.extract_strided_slice %31 {offsets = [0, 96], sizes = [8, 32], strides = [1, 1]} : vector<8x128xbf16> to vector<8x32xbf16>
    %94 = vector.extract_strided_slice %32 {offsets = [0, 96], sizes = [8, 32], strides = [1, 1]} : vector<8x128xbf16> to vector<8x32xbf16>
    %cst_45 = arith.constant dense<0.000000e+00> : vector<8x8xf32>
    %95 = tpu.matmul %93, %94, %cst_45 {dimension_numbers = #tpu.dot_dimension_numbers<[1], [1], [0], [0], [0, 0, 1, 0], [], []>} : vector<8x32xbf16>, vector<8x32xbf16>, vector<8x8xf32> -> vector<8x8xf32>
    %cst_46 = arith.constant dense<0xFF800000> : vector<8xf32>
    %96 = vector.multi_reduction <maximumf>, %95, %cst_46 [1] : vector<8x8xf32> to vector<8xf32>
    %97 = vector.shape_cast %96 : vector<8xf32> to vector<8x1xf32>
    %98 = vector.broadcast %97 : vector<8x1xf32> to vector<8x8xf32>
    %99 = arith.subf %95, %98 : vector<8x8xf32>
    %100 = math.exp %99 : vector<8x8xf32>
    %cst_47 = arith.constant dense<0.000000e+00> : vector<8xf32>
    %101 = vector.multi_reduction <add>, %100, %cst_47 [1] : vector<8x8xf32> to vector<8xf32>
    %102 = vector.shape_cast %101 : vector<8xf32> to vector<8x1xf32>
    %103 = tpu.reciprocal %102 {approx = true} : vector<8x1xf32> -> vector<8x1xf32>
    %104 = vector.broadcast %103 : vector<8x1xf32> to vector<8x8xf32>
    %105 = arith.mulf %100, %104 : vector<8x8xf32>
    %106 = arith.truncf %105 : vector<8x8xf32> to vector<8x8xbf16>
    %107 = vector.extract_strided_slice %33 {offsets = [0, 96], sizes = [8, 32], strides = [1, 1]} : vector<8x128xbf16> to vector<8x32xbf16>
    %cst_48 = arith.constant dense<0.000000e+00> : vector<8x32xf32>
    %108 = tpu.matmul %106, %107, %cst_48 {dimension_numbers = #tpu.dot_dimension_numbers<[1], [0], [0], [1], [0, 0, 1, 1], [], []>} : vector<8x8xbf16>, vector<8x32xbf16>, vector<8x32xf32> -> vector<8x32xf32>
    %109 = arith.truncf %108 : vector<8x32xf32> to vector<8x32xbf16>
    %110 = vector.extract_strided_slice %15 {offsets = [96, 0], sizes = [32, 128], strides = [1, 1]} : vector<128x128xbf16> to vector<32x128xbf16>
    %cst_49 = arith.constant dense<0.000000e+00> : vector<8x128xf32>
    %111 = tpu.matmul %109, %110, %cst_49 {dimension_numbers = #tpu.dot_dimension_numbers<[1], [0], [0], [1], [0, 0, 1, 1], [], []>} : vector<8x32xbf16>, vector<32x128xbf16>, vector<8x128xf32> -> vector<8x128xf32>
    %112 = arith.addf %92, %111 : vector<8x128xf32>
    %113 = vector.broadcast %16 : vector<1x128xf32> to vector<8x128xf32>
    %114 = arith.addf %112, %113 : vector<8x128xf32>
    %115 = arith.addf %1, %114 : vector<8x128xf32>
    %c0_50 = arith.constant 0 : index
    %c0_51 = arith.constant 0 : index
    %116 = vector.load %arg33[%c0_50, %c0_51] : memref<1x128xf32, #tpu.memory_space<vmem>>, vector<1x128xf32>
    %c0_52 = arith.constant 0 : index
    %c0_53 = arith.constant 0 : index
    %117 = vector.load %arg34[%c0_52, %c0_53] : memref<1x128xf32, #tpu.memory_space<vmem>>, vector<1x128xf32>
    %cst_54 = arith.constant dense<0.000000e+00> : vector<8xf32>
    %118 = vector.multi_reduction <add>, %115, %cst_54 [1] : vector<8x128xf32> to vector<8xf32>
    %119 = vector.shape_cast %118 : vector<8xf32> to vector<8x1xf32>
    %cst_55 = arith.constant 1.280000e+02 : f32
    %120 = vector.broadcast %cst_55 : f32 to vector<8x1xf32>
    %121 = arith.divf %119, %120 : vector<8x1xf32>
    %122 = vector.broadcast %121 : vector<8x1xf32> to vector<8x128xf32>
    %123 = arith.subf %115, %122 : vector<8x128xf32>
    %124 = arith.mulf %123, %123 : vector<8x128xf32>
    %cst_56 = arith.constant dense<0.000000e+00> : vector<8xf32>
    %125 = vector.multi_reduction <add>, %124, %cst_56 [1] : vector<8x128xf32> to vector<8xf32>
    %126 = vector.shape_cast %125 : vector<8xf32> to vector<8x1xf32>
    %cst_57 = arith.constant 1.280000e+02 : f32
    %127 = vector.broadcast %cst_57 : f32 to vector<8x1xf32>
    %128 = arith.divf %126, %127 : vector<8x1xf32>
    %cst_58 = arith.constant 9.99999974E-6 : f32
    %129 = vector.broadcast %cst_58 : f32 to vector<8x1xf32>
    %130 = arith.addf %128, %129 : vector<8x1xf32>
    %131 = math.rsqrt %130 : vector<8x1xf32>
    %132 = vector.broadcast %131 : vector<8x1xf32> to vector<8x128xf32>
    %133 = arith.mulf %123, %132 : vector<8x128xf32>
    %134 = vector.broadcast %116 : vector<1x128xf32> to vector<8x128xf32>
    %135 = arith.mulf %133, %134 : vector<8x128xf32>
    %136 = vector.broadcast %117 : vector<1x128xf32> to vector<8x128xf32>
    %137 = arith.addf %135, %136 : vector<8x128xf32>
    %138 = arith.addf %3, %7 : vector<128x128xf32>
    %139 = arith.addf %137, %5 : vector<8x128xf32>
    %c0_59 = arith.constant 0 : index
    %c0_60 = arith.constant 0 : index
    %140 = vector.load %arg13[%c0_59, %c0_60] : memref<128x64xbf16, #tpu.memory_space<vmem>>, vector<128x64xbf16>
    %c0_61 = arith.constant 0 : index
    %c0_62 = arith.constant 0 : index
    %141 = vector.load %arg14[%c0_61, %c0_62] : memref<1x64xf32, #tpu.memory_space<vmem>>, vector<1x64xf32>
    %c0_63 = arith.constant 0 : index
    %c0_64 = arith.constant 0 : index
    %142 = vector.load %arg15[%c0_63, %c0_64] : memref<128x64xbf16, #tpu.memory_space<vmem>>, vector<128x64xbf16>
    %c0_65 = arith.constant 0 : index
    %c0_66 = arith.constant 0 : index
    %143 = vector.load %arg16[%c0_65, %c0_66] : memref<1x64xf32, #tpu.memory_space<vmem>>, vector<1x64xf32>
    %c0_67 = arith.constant 0 : index
    %c0_68 = arith.constant 0 : index
    %144 = vector.load %arg17[%c0_67, %c0_68] : memref<128x64xbf16, #tpu.memory_space<vmem>>, vector<128x64xbf16>
    %c0_69 = arith.constant 0 : index
    %c0_70 = arith.constant 0 : index
    %145 = vector.load %arg18[%c0_69, %c0_70] : memref<1x64xf32, #tpu.memory_space<vmem>>, vector<1x64xf32>
    %c0_71 = arith.constant 0 : index
    %c0_72 = arith.constant 0 : index
    %146 = vector.load %arg19[%c0_71, %c0_72] : memref<64x128xbf16, #tpu.memory_space<vmem>>, vector<64x128xbf16>
    %c0_73 = arith.constant 0 : index
    %c0_74 = arith.constant 0 : index
    %147 = vector.load %arg20[%c0_73, %c0_74] : memref<1x128xf32, #tpu.memory_space<vmem>>, vector<1x128xf32>
    %148 = arith.truncf %139 : vector<8x128xf32> to vector<8x128xbf16>
    %cst_75 = arith.constant dense<0.000000e+00> : vector<8x64xf32>
    %149 = tpu.matmul %148, %140, %cst_75 {dimension_numbers = #tpu.dot_dimension_numbers<[1], [0], [0], [1], [0, 0, 1, 1], [], []>} : vector<8x128xbf16>, vector<128x64xbf16>, vector<8x64xf32> -> vector<8x64xf32>
    %150 = vector.broadcast %141 : vector<1x64xf32> to vector<8x64xf32>
    %151 = arith.addf %149, %150 : vector<8x64xf32>
    %152 = arith.truncf %138 : vector<128x128xf32> to vector<128x128xbf16>
    %cst_76 = arith.constant dense<0.000000e+00> : vector<128x64xf32>
    %153 = tpu.matmul %152, %142, %cst_76 {dimension_numbers = #tpu.dot_dimension_numbers<[1], [0], [0], [1], [0, 0, 1, 1], [], []>} : vector<128x128xbf16>, vector<128x64xbf16>, vector<128x64xf32> -> vector<128x64xf32>
    %154 = vector.broadcast %143 : vector<1x64xf32> to vector<128x64xf32>
    %155 = arith.addf %153, %154 : vector<128x64xf32>
    %156 = arith.truncf %3 : vector<128x128xf32> to vector<128x128xbf16>
    %cst_77 = arith.constant dense<0.000000e+00> : vector<128x64xf32>
    %157 = tpu.matmul %156, %144, %cst_77 {dimension_numbers = #tpu.dot_dimension_numbers<[1], [0], [0], [1], [0, 0, 1, 1], [], []>} : vector<128x128xbf16>, vector<128x64xbf16>, vector<128x64xf32> -> vector<128x64xf32>
    %158 = vector.broadcast %145 : vector<1x64xf32> to vector<128x64xf32>
    %159 = arith.addf %157, %158 : vector<128x64xf32>
    %cst_78 = arith.constant 2.500000e-01 : f32
    %160 = vector.broadcast %cst_78 : f32 to vector<8x64xf32>
    %161 = arith.mulf %151, %160 : vector<8x64xf32>
    %162 = arith.truncf %161 : vector<8x64xf32> to vector<8x64xbf16>
    %163 = arith.truncf %155 : vector<128x64xf32> to vector<128x64xbf16>
    %164 = arith.truncf %159 : vector<128x64xf32> to vector<128x64xbf16>
    %165 = vector.extract_strided_slice %162 {offsets = [0, 0], sizes = [8, 16], strides = [1, 1]} : vector<8x64xbf16> to vector<8x16xbf16>
    %166 = vector.extract_strided_slice %163 {offsets = [0, 0], sizes = [128, 16], strides = [1, 1]} : vector<128x64xbf16> to vector<128x16xbf16>
    %cst_79 = arith.constant dense<0.000000e+00> : vector<8x128xf32>
    %167 = tpu.matmul %165, %166, %cst_79 {dimension_numbers = #tpu.dot_dimension_numbers<[1], [1], [0], [0], [0, 0, 1, 0], [], []>} : vector<8x16xbf16>, vector<128x16xbf16>, vector<8x128xf32> -> vector<8x128xf32>
    %cst_80 = arith.constant dense<0xFF800000> : vector<8xf32>
    %168 = vector.multi_reduction <maximumf>, %167, %cst_80 [1] : vector<8x128xf32> to vector<8xf32>
    %169 = vector.shape_cast %168 : vector<8xf32> to vector<8x1xf32>
    %170 = vector.broadcast %169 : vector<8x1xf32> to vector<8x128xf32>
    %171 = arith.subf %167, %170 : vector<8x128xf32>
    %172 = math.exp %171 : vector<8x128xf32>
    %cst_81 = arith.constant dense<0.000000e+00> : vector<8xf32>
    %173 = vector.multi_reduction <add>, %172, %cst_81 [1] : vector<8x128xf32> to vector<8xf32>
    %174 = vector.shape_cast %173 : vector<8xf32> to vector<8x1xf32>
    %175 = tpu.reciprocal %174 {approx = true} : vector<8x1xf32> -> vector<8x1xf32>
    %176 = vector.broadcast %175 : vector<8x1xf32> to vector<8x128xf32>
    %177 = arith.mulf %172, %176 : vector<8x128xf32>
    %178 = arith.truncf %177 : vector<8x128xf32> to vector<8x128xbf16>
    %179 = vector.extract_strided_slice %164 {offsets = [0, 0], sizes = [128, 16], strides = [1, 1]} : vector<128x64xbf16> to vector<128x16xbf16>
    %cst_82 = arith.constant dense<0.000000e+00> : vector<8x16xf32>
    %180 = tpu.matmul %178, %179, %cst_82 {dimension_numbers = #tpu.dot_dimension_numbers<[1], [0], [0], [1], [0, 0, 1, 1], [], []>} : vector<8x128xbf16>, vector<128x16xbf16>, vector<8x16xf32> -> vector<8x16xf32>
    %181 = arith.truncf %180 : vector<8x16xf32> to vector<8x16xbf16>
    %182 = vector.extract_strided_slice %146 {offsets = [0, 0], sizes = [16, 128], strides = [1, 1]} : vector<64x128xbf16> to vector<16x128xbf16>
    %cst_83 = arith.constant dense<0.000000e+00> : vector<8x128xf32>
    %183 = tpu.matmul %181, %182, %cst_83 {dimension_numbers = #tpu.dot_dimension_numbers<[1], [0], [0], [1], [0, 0, 1, 1], [], []>} : vector<8x16xbf16>, vector<16x128xbf16>, vector<8x128xf32> -> vector<8x128xf32>
    %184 = vector.extract_strided_slice %162 {offsets = [0, 16], sizes = [8, 16], strides = [1, 1]} : vector<8x64xbf16> to vector<8x16xbf16>
    %185 = vector.extract_strided_slice %163 {offsets = [0, 16], sizes = [128, 16], strides = [1, 1]} : vector<128x64xbf16> to vector<128x16xbf16>
    %cst_84 = arith.constant dense<0.000000e+00> : vector<8x128xf32>
    %186 = tpu.matmul %184, %185, %cst_84 {dimension_numbers = #tpu.dot_dimension_numbers<[1], [1], [0], [0], [0, 0, 1, 0], [], []>} : vector<8x16xbf16>, vector<128x16xbf16>, vector<8x128xf32> -> vector<8x128xf32>
    %cst_85 = arith.constant dense<0xFF800000> : vector<8xf32>
    %187 = vector.multi_reduction <maximumf>, %186, %cst_85 [1] : vector<8x128xf32> to vector<8xf32>
    %188 = vector.shape_cast %187 : vector<8xf32> to vector<8x1xf32>
    %189 = vector.broadcast %188 : vector<8x1xf32> to vector<8x128xf32>
    %190 = arith.subf %186, %189 : vector<8x128xf32>
    %191 = math.exp %190 : vector<8x128xf32>
    %cst_86 = arith.constant dense<0.000000e+00> : vector<8xf32>
    %192 = vector.multi_reduction <add>, %191, %cst_86 [1] : vector<8x128xf32> to vector<8xf32>
    %193 = vector.shape_cast %192 : vector<8xf32> to vector<8x1xf32>
    %194 = tpu.reciprocal %193 {approx = true} : vector<8x1xf32> -> vector<8x1xf32>
    %195 = vector.broadcast %194 : vector<8x1xf32> to vector<8x128xf32>
    %196 = arith.mulf %191, %195 : vector<8x128xf32>
    %197 = arith.truncf %196 : vector<8x128xf32> to vector<8x128xbf16>
    %198 = vector.extract_strided_slice %164 {offsets = [0, 16], sizes = [128, 16], strides = [1, 1]} : vector<128x64xbf16> to vector<128x16xbf16>
    %cst_87 = arith.constant dense<0.000000e+00> : vector<8x16xf32>
    %199 = tpu.matmul %197, %198, %cst_87 {dimension_numbers = #tpu.dot_dimension_numbers<[1], [0], [0], [1], [0, 0, 1, 1], [], []>} : vector<8x128xbf16>, vector<128x16xbf16>, vector<8x16xf32> -> vector<8x16xf32>
    %200 = arith.truncf %199 : vector<8x16xf32> to vector<8x16xbf16>
    %201 = vector.extract_strided_slice %146 {offsets = [16, 0], sizes = [16, 128], strides = [1, 1]} : vector<64x128xbf16> to vector<16x128xbf16>
    %cst_88 = arith.constant dense<0.000000e+00> : vector<8x128xf32>
    %202 = tpu.matmul %200, %201, %cst_88 {dimension_numbers = #tpu.dot_dimension_numbers<[1], [0], [0], [1], [0, 0, 1, 1], [], []>} : vector<8x16xbf16>, vector<16x128xbf16>, vector<8x128xf32> -> vector<8x128xf32>
    %203 = arith.addf %183, %202 : vector<8x128xf32>
    %204 = vector.extract_strided_slice %162 {offsets = [0, 32], sizes = [8, 16], strides = [1, 1]} : vector<8x64xbf16> to vector<8x16xbf16>
    %205 = vector.extract_strided_slice %163 {offsets = [0, 32], sizes = [128, 16], strides = [1, 1]} : vector<128x64xbf16> to vector<128x16xbf16>
    %cst_89 = arith.constant dense<0.000000e+00> : vector<8x128xf32>
    %206 = tpu.matmul %204, %205, %cst_89 {dimension_numbers = #tpu.dot_dimension_numbers<[1], [1], [0], [0], [0, 0, 1, 0], [], []>} : vector<8x16xbf16>, vector<128x16xbf16>, vector<8x128xf32> -> vector<8x128xf32>
    %cst_90 = arith.constant dense<0xFF800000> : vector<8xf32>
    %207 = vector.multi_reduction <maximumf>, %206, %cst_90 [1] : vector<8x128xf32> to vector<8xf32>
    %208 = vector.shape_cast %207 : vector<8xf32> to vector<8x1xf32>
    %209 = vector.broadcast %208 : vector<8x1xf32> to vector<8x128xf32>
    %210 = arith.subf %206, %209 : vector<8x128xf32>
    %211 = math.exp %210 : vector<8x128xf32>
    %cst_91 = arith.constant dense<0.000000e+00> : vector<8xf32>
    %212 = vector.multi_reduction <add>, %211, %cst_91 [1] : vector<8x128xf32> to vector<8xf32>
    %213 = vector.shape_cast %212 : vector<8xf32> to vector<8x1xf32>
    %214 = tpu.reciprocal %213 {approx = true} : vector<8x1xf32> -> vector<8x1xf32>
    %215 = vector.broadcast %214 : vector<8x1xf32> to vector<8x128xf32>
    %216 = arith.mulf %211, %215 : vector<8x128xf32>
    %217 = arith.truncf %216 : vector<8x128xf32> to vector<8x128xbf16>
    %218 = vector.extract_strided_slice %164 {offsets = [0, 32], sizes = [128, 16], strides = [1, 1]} : vector<128x64xbf16> to vector<128x16xbf16>
    %cst_92 = arith.constant dense<0.000000e+00> : vector<8x16xf32>
    %219 = tpu.matmul %217, %218, %cst_92 {dimension_numbers = #tpu.dot_dimension_numbers<[1], [0], [0], [1], [0, 0, 1, 1], [], []>} : vector<8x128xbf16>, vector<128x16xbf16>, vector<8x16xf32> -> vector<8x16xf32>
    %220 = arith.truncf %219 : vector<8x16xf32> to vector<8x16xbf16>
    %221 = vector.extract_strided_slice %146 {offsets = [32, 0], sizes = [16, 128], strides = [1, 1]} : vector<64x128xbf16> to vector<16x128xbf16>
    %cst_93 = arith.constant dense<0.000000e+00> : vector<8x128xf32>
    %222 = tpu.matmul %220, %221, %cst_93 {dimension_numbers = #tpu.dot_dimension_numbers<[1], [0], [0], [1], [0, 0, 1, 1], [], []>} : vector<8x16xbf16>, vector<16x128xbf16>, vector<8x128xf32> -> vector<8x128xf32>
    %223 = arith.addf %203, %222 : vector<8x128xf32>
    %224 = vector.extract_strided_slice %162 {offsets = [0, 48], sizes = [8, 16], strides = [1, 1]} : vector<8x64xbf16> to vector<8x16xbf16>
    %225 = vector.extract_strided_slice %163 {offsets = [0, 48], sizes = [128, 16], strides = [1, 1]} : vector<128x64xbf16> to vector<128x16xbf16>
    %cst_94 = arith.constant dense<0.000000e+00> : vector<8x128xf32>
    %226 = tpu.matmul %224, %225, %cst_94 {dimension_numbers = #tpu.dot_dimension_numbers<[1], [1], [0], [0], [0, 0, 1, 0], [], []>} : vector<8x16xbf16>, vector<128x16xbf16>, vector<8x128xf32> -> vector<8x128xf32>
    %cst_95 = arith.constant dense<0xFF800000> : vector<8xf32>
    %227 = vector.multi_reduction <maximumf>, %226, %cst_95 [1] : vector<8x128xf32> to vector<8xf32>
    %228 = vector.shape_cast %227 : vector<8xf32> to vector<8x1xf32>
    %229 = vector.broadcast %228 : vector<8x1xf32> to vector<8x128xf32>
    %230 = arith.subf %226, %229 : vector<8x128xf32>
    %231 = math.exp %230 : vector<8x128xf32>
    %cst_96 = arith.constant dense<0.000000e+00> : vector<8xf32>
    %232 = vector.multi_reduction <add>, %231, %cst_96 [1] : vector<8x128xf32> to vector<8xf32>
    %233 = vector.shape_cast %232 : vector<8xf32> to vector<8x1xf32>
    %234 = tpu.reciprocal %233 {approx = true} : vector<8x1xf32> -> vector<8x1xf32>
    %235 = vector.broadcast %234 : vector<8x1xf32> to vector<8x128xf32>
    %236 = arith.mulf %231, %235 : vector<8x128xf32>
    %237 = arith.truncf %236 : vector<8x128xf32> to vector<8x128xbf16>
    %238 = vector.extract_strided_slice %164 {offsets = [0, 48], sizes = [128, 16], strides = [1, 1]} : vector<128x64xbf16> to vector<128x16xbf16>
    %cst_97 = arith.constant dense<0.000000e+00> : vector<8x16xf32>
    %239 = tpu.matmul %237, %238, %cst_97 {dimension_numbers = #tpu.dot_dimension_numbers<[1], [0], [0], [1], [0, 0, 1, 1], [], []>} : vector<8x128xbf16>, vector<128x16xbf16>, vector<8x16xf32> -> vector<8x16xf32>
    %240 = arith.truncf %239 : vector<8x16xf32> to vector<8x16xbf16>
    %241 = vector.extract_strided_slice %146 {offsets = [48, 0], sizes = [16, 128], strides = [1, 1]} : vector<64x128xbf16> to vector<16x128xbf16>
    %cst_98 = arith.constant dense<0.000000e+00> : vector<8x128xf32>
    %242 = tpu.matmul %240, %241, %cst_98 {dimension_numbers = #tpu.dot_dimension_numbers<[1], [0], [0], [1], [0, 0, 1, 1], [], []>} : vector<8x16xbf16>, vector<16x128xbf16>, vector<8x128xf32> -> vector<8x128xf32>
    %243 = arith.addf %223, %242 : vector<8x128xf32>
    %244 = vector.broadcast %147 : vector<1x128xf32> to vector<8x128xf32>
    %245 = arith.addf %243, %244 : vector<8x128xf32>
    %246 = arith.addf %137, %245 : vector<8x128xf32>
    %c0_99 = arith.constant 0 : index
    %c0_100 = arith.constant 0 : index
    %247 = vector.load %arg35[%c0_99, %c0_100] : memref<1x128xf32, #tpu.memory_space<vmem>>, vector<1x128xf32>
    %c0_101 = arith.constant 0 : index
    %c0_102 = arith.constant 0 : index
    %248 = vector.load %arg36[%c0_101, %c0_102] : memref<1x128xf32, #tpu.memory_space<vmem>>, vector<1x128xf32>
    %cst_103 = arith.constant dense<0.000000e+00> : vector<8xf32>
    %249 = vector.multi_reduction <add>, %246, %cst_103 [1] : vector<8x128xf32> to vector<8xf32>
    %250 = vector.shape_cast %249 : vector<8xf32> to vector<8x1xf32>
    %cst_104 = arith.constant 1.280000e+02 : f32
    %251 = vector.broadcast %cst_104 : f32 to vector<8x1xf32>
    %252 = arith.divf %250, %251 : vector<8x1xf32>
    %253 = vector.broadcast %252 : vector<8x1xf32> to vector<8x128xf32>
    %254 = arith.subf %246, %253 : vector<8x128xf32>
    %255 = arith.mulf %254, %254 : vector<8x128xf32>
    %cst_105 = arith.constant dense<0.000000e+00> : vector<8xf32>
    %256 = vector.multi_reduction <add>, %255, %cst_105 [1] : vector<8x128xf32> to vector<8xf32>
    %257 = vector.shape_cast %256 : vector<8xf32> to vector<8x1xf32>
    %cst_106 = arith.constant 1.280000e+02 : f32
    %258 = vector.broadcast %cst_106 : f32 to vector<8x1xf32>
    %259 = arith.divf %257, %258 : vector<8x1xf32>
    %cst_107 = arith.constant 9.99999974E-6 : f32
    %260 = vector.broadcast %cst_107 : f32 to vector<8x1xf32>
    %261 = arith.addf %259, %260 : vector<8x1xf32>
    %262 = math.rsqrt %261 : vector<8x1xf32>
    %263 = vector.broadcast %262 : vector<8x1xf32> to vector<8x128xf32>
    %264 = arith.mulf %254, %263 : vector<8x128xf32>
    %265 = vector.broadcast %247 : vector<1x128xf32> to vector<8x128xf32>
    %266 = arith.mulf %264, %265 : vector<8x128xf32>
    %267 = vector.broadcast %248 : vector<1x128xf32> to vector<8x128xf32>
    %268 = arith.addf %266, %267 : vector<8x128xf32>
    %269 = arith.truncf %268 : vector<8x128xf32> to vector<8x128xbf16>
    %c0_108 = arith.constant 0 : index
    %c0_109 = arith.constant 0 : index
    %270 = vector.load %arg29[%c0_108, %c0_109] : memref<128x256xbf16, #tpu.memory_space<vmem>>, vector<128x256xbf16>
    %cst_110 = arith.constant dense<0.000000e+00> : vector<8x256xf32>
    %271 = tpu.matmul %269, %270, %cst_110 {dimension_numbers = #tpu.dot_dimension_numbers<[1], [0], [0], [1], [0, 0, 1, 1], [], []>} : vector<8x128xbf16>, vector<128x256xbf16>, vector<8x256xf32> -> vector<8x256xf32>
    %c0_111 = arith.constant 0 : index
    %c0_112 = arith.constant 0 : index
    %272 = vector.load %arg30[%c0_111, %c0_112] : memref<1x256xf32, #tpu.memory_space<vmem>>, vector<1x256xf32>
    %273 = vector.broadcast %272 : vector<1x256xf32> to vector<8x256xf32>
    %274 = arith.addf %271, %273 : vector<8x256xf32>
    %cst_113 = arith.constant 0.000000e+00 : f32
    %275 = vector.broadcast %cst_113 : f32 to vector<8x256xf32>
    %276 = arith.maximumf %274, %275 : vector<8x256xf32>
    %277 = arith.truncf %276 : vector<8x256xf32> to vector<8x256xbf16>
    %c0_114 = arith.constant 0 : index
    %c0_115 = arith.constant 0 : index
    %278 = vector.load %arg31[%c0_114, %c0_115] : memref<256x128xbf16, #tpu.memory_space<vmem>>, vector<256x128xbf16>
    %cst_116 = arith.constant dense<0.000000e+00> : vector<8x128xf32>
    %279 = tpu.matmul %277, %278, %cst_116 {dimension_numbers = #tpu.dot_dimension_numbers<[1], [0], [0], [1], [0, 0, 1, 1], [], []>} : vector<8x256xbf16>, vector<256x128xbf16>, vector<8x128xf32> -> vector<8x128xf32>
    %c0_117 = arith.constant 0 : index
    %c0_118 = arith.constant 0 : index
    %280 = vector.load %arg32[%c0_117, %c0_118] : memref<1x128xf32, #tpu.memory_space<vmem>>, vector<1x128xf32>
    %281 = vector.broadcast %280 : vector<1x128xf32> to vector<8x128xf32>
    %282 = arith.addf %279, %281 : vector<8x128xf32>
    %283 = arith.addf %268, %282 : vector<8x128xf32>
    %c0_119 = arith.constant 0 : index
    %c0_120 = arith.constant 0 : index
    %284 = vector.load %arg37[%c0_119, %c0_120] : memref<1x128xf32, #tpu.memory_space<vmem>>, vector<1x128xf32>
    %c0_121 = arith.constant 0 : index
    %c0_122 = arith.constant 0 : index
    %285 = vector.load %arg38[%c0_121, %c0_122] : memref<1x128xf32, #tpu.memory_space<vmem>>, vector<1x128xf32>
    %cst_123 = arith.constant dense<0.000000e+00> : vector<8xf32>
    %286 = vector.multi_reduction <add>, %283, %cst_123 [1] : vector<8x128xf32> to vector<8xf32>
    %287 = vector.shape_cast %286 : vector<8xf32> to vector<8x1xf32>
    %cst_124 = arith.constant 1.280000e+02 : f32
    %288 = vector.broadcast %cst_124 : f32 to vector<8x1xf32>
    %289 = arith.divf %287, %288 : vector<8x1xf32>
    %290 = vector.broadcast %289 : vector<8x1xf32> to vector<8x128xf32>
    %291 = arith.subf %283, %290 : vector<8x128xf32>
    %292 = arith.mulf %291, %291 : vector<8x128xf32>
    %cst_125 = arith.constant dense<0.000000e+00> : vector<8xf32>
    %293 = vector.multi_reduction <add>, %292, %cst_125 [1] : vector<8x128xf32> to vector<8xf32>
    %294 = vector.shape_cast %293 : vector<8xf32> to vector<8x1xf32>
    %cst_126 = arith.constant 1.280000e+02 : f32
    %295 = vector.broadcast %cst_126 : f32 to vector<8x1xf32>
    %296 = arith.divf %294, %295 : vector<8x1xf32>
    %cst_127 = arith.constant 9.99999974E-6 : f32
    %297 = vector.broadcast %cst_127 : f32 to vector<8x1xf32>
    %298 = arith.addf %296, %297 : vector<8x1xf32>
    %299 = math.rsqrt %298 : vector<8x1xf32>
    %300 = vector.broadcast %299 : vector<8x1xf32> to vector<8x128xf32>
    %301 = arith.mulf %291, %300 : vector<8x128xf32>
    %302 = vector.broadcast %284 : vector<1x128xf32> to vector<8x128xf32>
    %303 = arith.mulf %301, %302 : vector<8x128xf32>
    %304 = vector.broadcast %285 : vector<1x128xf32> to vector<8x128xf32>
    %305 = arith.addf %303, %304 : vector<8x128xf32>
    %306 = arith.addf %305, %5 : vector<8x128xf32>
    %c0_128 = arith.constant 0 : index
    %c0_129 = arith.constant 0 : index
    %307 = vector.load %arg21[%c0_128, %c0_129] : memref<128x64xbf16, #tpu.memory_space<vmem>>, vector<128x64xbf16>
    %c0_130 = arith.constant 0 : index
    %c0_131 = arith.constant 0 : index
    %308 = vector.load %arg22[%c0_130, %c0_131] : memref<1x64xf32, #tpu.memory_space<vmem>>, vector<1x64xf32>
    %c0_132 = arith.constant 0 : index
    %c0_133 = arith.constant 0 : index
    %309 = vector.load %arg23[%c0_132, %c0_133] : memref<128x64xbf16, #tpu.memory_space<vmem>>, vector<128x64xbf16>
    %c0_134 = arith.constant 0 : index
    %c0_135 = arith.constant 0 : index
    %310 = vector.load %arg24[%c0_134, %c0_135] : memref<1x64xf32, #tpu.memory_space<vmem>>, vector<1x64xf32>
    %c0_136 = arith.constant 0 : index
    %c0_137 = arith.constant 0 : index
    %311 = vector.load %arg25[%c0_136, %c0_137] : memref<128x64xbf16, #tpu.memory_space<vmem>>, vector<128x64xbf16>
    %c0_138 = arith.constant 0 : index
    %c0_139 = arith.constant 0 : index
    %312 = vector.load %arg26[%c0_138, %c0_139] : memref<1x64xf32, #tpu.memory_space<vmem>>, vector<1x64xf32>
    %c0_140 = arith.constant 0 : index
    %c0_141 = arith.constant 0 : index
    %313 = vector.load %arg27[%c0_140, %c0_141] : memref<64x128xbf16, #tpu.memory_space<vmem>>, vector<64x128xbf16>
    %c0_142 = arith.constant 0 : index
    %c0_143 = arith.constant 0 : index
    %314 = vector.load %arg28[%c0_142, %c0_143] : memref<1x128xf32, #tpu.memory_space<vmem>>, vector<1x128xf32>
    %315 = arith.truncf %138 : vector<128x128xf32> to vector<128x128xbf16>
    %cst_144 = arith.constant dense<0.000000e+00> : vector<128x64xf32>
    %316 = tpu.matmul %315, %307, %cst_144 {dimension_numbers = #tpu.dot_dimension_numbers<[1], [0], [0], [1], [0, 0, 1, 1], [], []>} : vector<128x128xbf16>, vector<128x64xbf16>, vector<128x64xf32> -> vector<128x64xf32>
    %317 = vector.broadcast %308 : vector<1x64xf32> to vector<128x64xf32>
    %318 = arith.addf %316, %317 : vector<128x64xf32>
    %319 = arith.truncf %306 : vector<8x128xf32> to vector<8x128xbf16>
    %cst_145 = arith.constant dense<0.000000e+00> : vector<8x64xf32>
    %320 = tpu.matmul %319, %309, %cst_145 {dimension_numbers = #tpu.dot_dimension_numbers<[1], [0], [0], [1], [0, 0, 1, 1], [], []>} : vector<8x128xbf16>, vector<128x64xbf16>, vector<8x64xf32> -> vector<8x64xf32>
    %321 = vector.broadcast %310 : vector<1x64xf32> to vector<8x64xf32>
    %322 = arith.addf %320, %321 : vector<8x64xf32>
    %323 = arith.truncf %305 : vector<8x128xf32> to vector<8x128xbf16>
    %cst_146 = arith.constant dense<0.000000e+00> : vector<8x64xf32>
    %324 = tpu.matmul %323, %311, %cst_146 {dimension_numbers = #tpu.dot_dimension_numbers<[1], [0], [0], [1], [0, 0, 1, 1], [], []>} : vector<8x128xbf16>, vector<128x64xbf16>, vector<8x64xf32> -> vector<8x64xf32>
    %325 = vector.broadcast %312 : vector<1x64xf32> to vector<8x64xf32>
    %326 = arith.addf %324, %325 : vector<8x64xf32>
    %cst_147 = arith.constant 2.500000e-01 : f32
    %327 = vector.broadcast %cst_147 : f32 to vector<128x64xf32>
    %328 = arith.mulf %318, %327 : vector<128x64xf32>
    %329 = arith.truncf %328 : vector<128x64xf32> to vector<128x64xbf16>
    %330 = arith.truncf %322 : vector<8x64xf32> to vector<8x64xbf16>
    %331 = arith.truncf %326 : vector<8x64xf32> to vector<8x64xbf16>
    %332 = vector.extract_strided_slice %329 {offsets = [0, 0], sizes = [128, 16], strides = [1, 1]} : vector<128x64xbf16> to vector<128x16xbf16>
    %333 = vector.extract_strided_slice %330 {offsets = [0, 0], sizes = [8, 16], strides = [1, 1]} : vector<8x64xbf16> to vector<8x16xbf16>
    %cst_148 = arith.constant dense<0.000000e+00> : vector<128x8xf32>
    %334 = tpu.matmul %332, %333, %cst_148 {dimension_numbers = #tpu.dot_dimension_numbers<[1], [1], [0], [0], [0, 0, 1, 0], [], []>} : vector<128x16xbf16>, vector<8x16xbf16>, vector<128x8xf32> -> vector<128x8xf32>
    %cst_149 = arith.constant dense<0xFF800000> : vector<128xf32>
    %335 = vector.multi_reduction <maximumf>, %334, %cst_149 [1] : vector<128x8xf32> to vector<128xf32>
    %336 = vector.shape_cast %335 : vector<128xf32> to vector<128x1xf32>
    %337 = vector.broadcast %336 : vector<128x1xf32> to vector<128x8xf32>
    %338 = arith.subf %334, %337 : vector<128x8xf32>
    %339 = math.exp %338 : vector<128x8xf32>
    %cst_150 = arith.constant dense<0.000000e+00> : vector<128xf32>
    %340 = vector.multi_reduction <add>, %339, %cst_150 [1] : vector<128x8xf32> to vector<128xf32>
    %341 = vector.shape_cast %340 : vector<128xf32> to vector<128x1xf32>
    %342 = tpu.reciprocal %341 {approx = true} : vector<128x1xf32> -> vector<128x1xf32>
    %343 = vector.broadcast %342 : vector<128x1xf32> to vector<128x8xf32>
    %344 = arith.mulf %339, %343 : vector<128x8xf32>
    %345 = arith.truncf %344 : vector<128x8xf32> to vector<128x8xbf16>
    %346 = vector.extract_strided_slice %331 {offsets = [0, 0], sizes = [8, 16], strides = [1, 1]} : vector<8x64xbf16> to vector<8x16xbf16>
    %cst_151 = arith.constant dense<0.000000e+00> : vector<128x16xf32>
    %347 = tpu.matmul %345, %346, %cst_151 {dimension_numbers = #tpu.dot_dimension_numbers<[1], [0], [0], [1], [0, 0, 1, 1], [], []>} : vector<128x8xbf16>, vector<8x16xbf16>, vector<128x16xf32> -> vector<128x16xf32>
    %348 = arith.truncf %347 : vector<128x16xf32> to vector<128x16xbf16>
    %349 = vector.extract_strided_slice %313 {offsets = [0, 0], sizes = [16, 128], strides = [1, 1]} : vector<64x128xbf16> to vector<16x128xbf16>
    %cst_152 = arith.constant dense<0.000000e+00> : vector<128x128xf32>
    %350 = tpu.matmul %348, %349, %cst_152 {dimension_numbers = #tpu.dot_dimension_numbers<[1], [0], [0], [1], [0, 0, 1, 1], [], []>} : vector<128x16xbf16>, vector<16x128xbf16>, vector<128x128xf32> -> vector<128x128xf32>
    %351 = vector.extract_strided_slice %329 {offsets = [0, 16], sizes = [128, 16], strides = [1, 1]} : vector<128x64xbf16> to vector<128x16xbf16>
    %352 = vector.extract_strided_slice %330 {offsets = [0, 16], sizes = [8, 16], strides = [1, 1]} : vector<8x64xbf16> to vector<8x16xbf16>
    %cst_153 = arith.constant dense<0.000000e+00> : vector<128x8xf32>
    %353 = tpu.matmul %351, %352, %cst_153 {dimension_numbers = #tpu.dot_dimension_numbers<[1], [1], [0], [0], [0, 0, 1, 0], [], []>} : vector<128x16xbf16>, vector<8x16xbf16>, vector<128x8xf32> -> vector<128x8xf32>
    %cst_154 = arith.constant dense<0xFF800000> : vector<128xf32>
    %354 = vector.multi_reduction <maximumf>, %353, %cst_154 [1] : vector<128x8xf32> to vector<128xf32>
    %355 = vector.shape_cast %354 : vector<128xf32> to vector<128x1xf32>
    %356 = vector.broadcast %355 : vector<128x1xf32> to vector<128x8xf32>
    %357 = arith.subf %353, %356 : vector<128x8xf32>
    %358 = math.exp %357 : vector<128x8xf32>
    %cst_155 = arith.constant dense<0.000000e+00> : vector<128xf32>
    %359 = vector.multi_reduction <add>, %358, %cst_155 [1] : vector<128x8xf32> to vector<128xf32>
    %360 = vector.shape_cast %359 : vector<128xf32> to vector<128x1xf32>
    %361 = tpu.reciprocal %360 {approx = true} : vector<128x1xf32> -> vector<128x1xf32>
    %362 = vector.broadcast %361 : vector<128x1xf32> to vector<128x8xf32>
    %363 = arith.mulf %358, %362 : vector<128x8xf32>
    %364 = arith.truncf %363 : vector<128x8xf32> to vector<128x8xbf16>
    %365 = vector.extract_strided_slice %331 {offsets = [0, 16], sizes = [8, 16], strides = [1, 1]} : vector<8x64xbf16> to vector<8x16xbf16>
    %cst_156 = arith.constant dense<0.000000e+00> : vector<128x16xf32>
    %366 = tpu.matmul %364, %365, %cst_156 {dimension_numbers = #tpu.dot_dimension_numbers<[1], [0], [0], [1], [0, 0, 1, 1], [], []>} : vector<128x8xbf16>, vector<8x16xbf16>, vector<128x16xf32> -> vector<128x16xf32>
    %367 = arith.truncf %366 : vector<128x16xf32> to vector<128x16xbf16>
    %368 = vector.extract_strided_slice %313 {offsets = [16, 0], sizes = [16, 128], strides = [1, 1]} : vector<64x128xbf16> to vector<16x128xbf16>
    %cst_157 = arith.constant dense<0.000000e+00> : vector<128x128xf32>
    %369 = tpu.matmul %367, %368, %cst_157 {dimension_numbers = #tpu.dot_dimension_numbers<[1], [0], [0], [1], [0, 0, 1, 1], [], []>} : vector<128x16xbf16>, vector<16x128xbf16>, vector<128x128xf32> -> vector<128x128xf32>
    %370 = arith.addf %350, %369 : vector<128x128xf32>
    %371 = vector.extract_strided_slice %329 {offsets = [0, 32], sizes = [128, 16], strides = [1, 1]} : vector<128x64xbf16> to vector<128x16xbf16>
    %372 = vector.extract_strided_slice %330 {offsets = [0, 32], sizes = [8, 16], strides = [1, 1]} : vector<8x64xbf16> to vector<8x16xbf16>
    %cst_158 = arith.constant dense<0.000000e+00> : vector<128x8xf32>
    %373 = tpu.matmul %371, %372, %cst_158 {dimension_numbers = #tpu.dot_dimension_numbers<[1], [1], [0], [0], [0, 0, 1, 0], [], []>} : vector<128x16xbf16>, vector<8x16xbf16>, vector<128x8xf32> -> vector<128x8xf32>
    %cst_159 = arith.constant dense<0xFF800000> : vector<128xf32>
    %374 = vector.multi_reduction <maximumf>, %373, %cst_159 [1] : vector<128x8xf32> to vector<128xf32>
    %375 = vector.shape_cast %374 : vector<128xf32> to vector<128x1xf32>
    %376 = vector.broadcast %375 : vector<128x1xf32> to vector<128x8xf32>
    %377 = arith.subf %373, %376 : vector<128x8xf32>
    %378 = math.exp %377 : vector<128x8xf32>
    %cst_160 = arith.constant dense<0.000000e+00> : vector<128xf32>
    %379 = vector.multi_reduction <add>, %378, %cst_160 [1] : vector<128x8xf32> to vector<128xf32>
    %380 = vector.shape_cast %379 : vector<128xf32> to vector<128x1xf32>
    %381 = tpu.reciprocal %380 {approx = true} : vector<128x1xf32> -> vector<128x1xf32>
    %382 = vector.broadcast %381 : vector<128x1xf32> to vector<128x8xf32>
    %383 = arith.mulf %378, %382 : vector<128x8xf32>
    %384 = arith.truncf %383 : vector<128x8xf32> to vector<128x8xbf16>
    %385 = vector.extract_strided_slice %331 {offsets = [0, 32], sizes = [8, 16], strides = [1, 1]} : vector<8x64xbf16> to vector<8x16xbf16>
    %cst_161 = arith.constant dense<0.000000e+00> : vector<128x16xf32>
    %386 = tpu.matmul %384, %385, %cst_161 {dimension_numbers = #tpu.dot_dimension_numbers<[1], [0], [0], [1], [0, 0, 1, 1], [], []>} : vector<128x8xbf16>, vector<8x16xbf16>, vector<128x16xf32> -> vector<128x16xf32>
    %387 = arith.truncf %386 : vector<128x16xf32> to vector<128x16xbf16>
    %388 = vector.extract_strided_slice %313 {offsets = [32, 0], sizes = [16, 128], strides = [1, 1]} : vector<64x128xbf16> to vector<16x128xbf16>
    %cst_162 = arith.constant dense<0.000000e+00> : vector<128x128xf32>
    %389 = tpu.matmul %387, %388, %cst_162 {dimension_numbers = #tpu.dot_dimension_numbers<[1], [0], [0], [1], [0, 0, 1, 1], [], []>} : vector<128x16xbf16>, vector<16x128xbf16>, vector<128x128xf32> -> vector<128x128xf32>
    %390 = arith.addf %370, %389 : vector<128x128xf32>
    %391 = vector.extract_strided_slice %329 {offsets = [0, 48], sizes = [128, 16], strides = [1, 1]} : vector<128x64xbf16> to vector<128x16xbf16>
    %392 = vector.extract_strided_slice %330 {offsets = [0, 48], sizes = [8, 16], strides = [1, 1]} : vector<8x64xbf16> to vector<8x16xbf16>
    %cst_163 = arith.constant dense<0.000000e+00> : vector<128x8xf32>
    %393 = tpu.matmul %391, %392, %cst_163 {dimension_numbers = #tpu.dot_dimension_numbers<[1], [1], [0], [0], [0, 0, 1, 0], [], []>} : vector<128x16xbf16>, vector<8x16xbf16>, vector<128x8xf32> -> vector<128x8xf32>
    %cst_164 = arith.constant dense<0xFF800000> : vector<128xf32>
    %394 = vector.multi_reduction <maximumf>, %393, %cst_164 [1] : vector<128x8xf32> to vector<128xf32>
    %395 = vector.shape_cast %394 : vector<128xf32> to vector<128x1xf32>
    %396 = vector.broadcast %395 : vector<128x1xf32> to vector<128x8xf32>
    %397 = arith.subf %393, %396 : vector<128x8xf32>
    %398 = math.exp %397 : vector<128x8xf32>
    %cst_165 = arith.constant dense<0.000000e+00> : vector<128xf32>
    %399 = vector.multi_reduction <add>, %398, %cst_165 [1] : vector<128x8xf32> to vector<128xf32>
    %400 = vector.shape_cast %399 : vector<128xf32> to vector<128x1xf32>
    %401 = tpu.reciprocal %400 {approx = true} : vector<128x1xf32> -> vector<128x1xf32>
    %402 = vector.broadcast %401 : vector<128x1xf32> to vector<128x8xf32>
    %403 = arith.mulf %398, %402 : vector<128x8xf32>
    %404 = arith.truncf %403 : vector<128x8xf32> to vector<128x8xbf16>
    %405 = vector.extract_strided_slice %331 {offsets = [0, 48], sizes = [8, 16], strides = [1, 1]} : vector<8x64xbf16> to vector<8x16xbf16>
    %cst_166 = arith.constant dense<0.000000e+00> : vector<128x16xf32>
    %406 = tpu.matmul %404, %405, %cst_166 {dimension_numbers = #tpu.dot_dimension_numbers<[1], [0], [0], [1], [0, 0, 1, 1], [], []>} : vector<128x8xbf16>, vector<8x16xbf16>, vector<128x16xf32> -> vector<128x16xf32>
    %407 = arith.truncf %406 : vector<128x16xf32> to vector<128x16xbf16>
    %408 = vector.extract_strided_slice %313 {offsets = [48, 0], sizes = [16, 128], strides = [1, 1]} : vector<64x128xbf16> to vector<16x128xbf16>
    %cst_167 = arith.constant dense<0.000000e+00> : vector<128x128xf32>
    %409 = tpu.matmul %407, %408, %cst_167 {dimension_numbers = #tpu.dot_dimension_numbers<[1], [0], [0], [1], [0, 0, 1, 1], [], []>} : vector<128x16xbf16>, vector<16x128xbf16>, vector<128x128xf32> -> vector<128x128xf32>
    %410 = arith.addf %390, %409 : vector<128x128xf32>
    %411 = vector.broadcast %314 : vector<1x128xf32> to vector<128x128xf32>
    %412 = arith.addf %410, %411 : vector<128x128xf32>
    %413 = arith.addf %3, %412 : vector<128x128xf32>
    %c0_168 = arith.constant 0 : index
    %c0_169 = arith.constant 0 : index
    %414 = vector.load %arg39[%c0_168, %c0_169] : memref<1x128xf32, #tpu.memory_space<vmem>>, vector<1x128xf32>
    %c0_170 = arith.constant 0 : index
    %c0_171 = arith.constant 0 : index
    %415 = vector.load %arg40[%c0_170, %c0_171] : memref<1x128xf32, #tpu.memory_space<vmem>>, vector<1x128xf32>
    %cst_172 = arith.constant dense<0.000000e+00> : vector<128xf32>
    %416 = vector.multi_reduction <add>, %413, %cst_172 [1] : vector<128x128xf32> to vector<128xf32>
    %417 = vector.shape_cast %416 : vector<128xf32> to vector<128x1xf32>
    %cst_173 = arith.constant 1.280000e+02 : f32
    %418 = vector.broadcast %cst_173 : f32 to vector<128x1xf32>
    %419 = arith.divf %417, %418 : vector<128x1xf32>
    %420 = vector.broadcast %419 : vector<128x1xf32> to vector<128x128xf32>
    %421 = arith.subf %413, %420 : vector<128x128xf32>
    %422 = arith.mulf %421, %421 : vector<128x128xf32>
    %cst_174 = arith.constant dense<0.000000e+00> : vector<128xf32>
    %423 = vector.multi_reduction <add>, %422, %cst_174 [1] : vector<128x128xf32> to vector<128xf32>
    %424 = vector.shape_cast %423 : vector<128xf32> to vector<128x1xf32>
    %cst_175 = arith.constant 1.280000e+02 : f32
    %425 = vector.broadcast %cst_175 : f32 to vector<128x1xf32>
    %426 = arith.divf %424, %425 : vector<128x1xf32>
    %cst_176 = arith.constant 9.99999974E-6 : f32
    %427 = vector.broadcast %cst_176 : f32 to vector<128x1xf32>
    %428 = arith.addf %426, %427 : vector<128x1xf32>
    %429 = math.rsqrt %428 : vector<128x1xf32>
    %430 = vector.broadcast %429 : vector<128x1xf32> to vector<128x128xf32>
    %431 = arith.mulf %421, %430 : vector<128x128xf32>
    %432 = vector.broadcast %414 : vector<1x128xf32> to vector<128x128xf32>
    %433 = arith.mulf %431, %432 : vector<128x128xf32>
    %434 = vector.broadcast %415 : vector<1x128xf32> to vector<128x128xf32>
    %435 = arith.addf %433, %434 : vector<128x128xf32>
    %c0_177 = arith.constant 0 : index
    %c0_178 = arith.constant 0 : index
    %c0_179 = arith.constant 0 : index
    %436 = vector.load %arg41[%c0_177, %c0_178, %c0_179] : memref<1x8x128xf32, #tpu.memory_space<vmem>>, vector<1x8x128xf32>
    %437 = vector.shape_cast %436 : vector<1x8x128xf32> to vector<8x128xf32>
    %438 = vector.shape_cast %305 : vector<8x128xf32> to vector<1x8x128xf32>
    tpu.vector_store %arg41[%c0_177, %c0_178, %c0_179], %438 {strides = array<i32>} : memref<1x8x128xf32, #tpu.memory_space<vmem>>, vector<1x8x128xf32>,
    %c0_180 = arith.constant 0 : index
    %c0_181 = arith.constant 0 : index
    %c0_182 = arith.constant 0 : index
    %439 = vector.load %arg42[%c0_180, %c0_181, %c0_182] : memref<1x128x128xf32, #tpu.memory_space<vmem>>, vector<1x128x128xf32>
    %440 = vector.shape_cast %439 : vector<1x128x128xf32> to vector<128x128xf32>
    %441 = vector.shape_cast %435 : vector<128x128xf32> to vector<1x128x128xf32>
    tpu.vector_store %arg42[%c0_180, %c0_181, %c0_182], %441 {strides = array<i32>} : memref<1x128x128xf32, #tpu.memory_space<vmem>>, vector<1x128x128xf32>,
    return
  }
  func.func @transform_0(%arg0: i32) -> (i32, i32, i32) {
    %c0_i32 = arith.constant 0 : i32
    %c0_i32_0 = arith.constant 0 : i32
    %c0_i32_1 = arith.constant 0 : i32
    return %arg0, %c0_i32, %c0_i32_0 : i32, i32, i32
  }
  func.func @transform_1(%arg0: i32) -> (i32, i32, i32) {
    %c0_i32 = arith.constant 0 : i32
    %c0_i32_0 = arith.constant 0 : i32
    %c0_i32_1 = arith.constant 0 : i32
    return %arg0, %c0_i32, %c0_i32_0 : i32, i32, i32
  }
  func.func @transform_2(%arg0: i32) -> (i32, i32, i32) {
    %c0_i32 = arith.constant 0 : i32
    %c0_i32_0 = arith.constant 0 : i32
    %c0_i32_1 = arith.constant 0 : i32
    return %arg0, %c0_i32, %c0_i32_0 : i32, i32, i32
  }
  func.func @transform_3(%arg0: i32) -> (i32, i32, i32) {
    %c0_i32 = arith.constant 0 : i32
    %c0_i32_0 = arith.constant 0 : i32
    %c0_i32_1 = arith.constant 0 : i32
    return %arg0, %c0_i32, %c0_i32_0 : i32, i32, i32
  }
  func.func @transform_4(%arg0: i32) -> (i32, i32) {
    %c0_i32 = arith.constant 0 : i32
    %c0_i32_0 = arith.constant 0 : i32
    %c0_i32_1 = arith.constant 0 : i32
    return %c0_i32, %c0_i32_0 : i32, i32
  }
  func.func @transform_5(%arg0: i32) -> (i32, i32) {
    %c0_i32 = arith.constant 0 : i32
    %c0_i32_0 = arith.constant 0 : i32
    %c0_i32_1 = arith.constant 0 : i32
    return %c0_i32, %c0_i32_0 : i32, i32
  }
  func.func @transform_6(%arg0: i32) -> (i32, i32) {
    %c0_i32 = arith.constant 0 : i32
    %c0_i32_0 = arith.constant 0 : i32
    %c0_i32_1 = arith.constant 0 : i32
    return %c0_i32, %c0_i32_0 : i32, i32
  }
  func.func @transform_7(%arg0: i32) -> (i32, i32) {
    %c0_i32 = arith.constant 0 : i32
    %c0_i32_0 = arith.constant 0 : i32
    %c0_i32_1 = arith.constant 0 : i32
    return %c0_i32, %c0_i32_0 : i32, i32
  }
  func.func @transform_8(%arg0: i32) -> (i32, i32) {
    %c0_i32 = arith.constant 0 : i32
    %c0_i32_0 = arith.constant 0 : i32
    %c0_i32_1 = arith.constant 0 : i32
    return %c0_i32, %c0_i32_0 : i32, i32
  }
  func.func @transform_9(%arg0: i32) -> (i32, i32) {
    %c0_i32 = arith.constant 0 : i32
    %c0_i32_0 = arith.constant 0 : i32
    %c0_i32_1 = arith.constant 0 : i32
    return %c0_i32, %c0_i32_0 : i32, i32
  }
  func.func @transform_10(%arg0: i32) -> (i32, i32) {
    %c0_i32 = arith.constant 0 : i32
    %c0_i32_0 = arith.constant 0 : i32
    %c0_i32_1 = arith.constant 0 : i32
    return %c0_i32, %c0_i32_0 : i32, i32
  }
  func.func @transform_11(%arg0: i32) -> (i32, i32) {
    %c0_i32 = arith.constant 0 : i32
    %c0_i32_0 = arith.constant 0 : i32
    %c0_i32_1 = arith.constant 0 : i32
    return %c0_i32, %c0_i32_0 : i32, i32
  }
  func.func @transform_12(%arg0: i32) -> (i32, i32) {
    %c0_i32 = arith.constant 0 : i32
    %c0_i32_0 = arith.constant 0 : i32
    %c0_i32_1 = arith.constant 0 : i32
    return %c0_i32, %c0_i32_0 : i32, i32
  }
  func.func @transform_13(%arg0: i32) -> (i32, i32) {
    %c0_i32 = arith.constant 0 : i32
    %c0_i32_0 = arith.constant 0 : i32
    %c0_i32_1 = arith.constant 0 : i32
    return %c0_i32, %c0_i32_0 : i32, i32
  }
  func.func @transform_14(%arg0: i32) -> (i32, i32) {
    %c0_i32 = arith.constant 0 : i32
    %c0_i32_0 = arith.constant 0 : i32
    %c0_i32_1 = arith.constant 0 : i32
    return %c0_i32, %c0_i32_0 : i32, i32
  }
  func.func @transform_15(%arg0: i32) -> (i32, i32) {
    %c0_i32 = arith.constant 0 : i32
    %c0_i32_0 = arith.constant 0 : i32
    %c0_i32_1 = arith.constant 0 : i32
    return %c0_i32, %c0_i32_0 : i32, i32
  }
  func.func @transform_16(%arg0: i32) -> (i32, i32) {
    %c0_i32 = arith.constant 0 : i32
    %c0_i32_0 = arith.constant 0 : i32
    %c0_i32_1 = arith.constant 0 : i32
    return %c0_i32, %c0_i32_0 : i32, i32
  }
  func.func @transform_17(%arg0: i32) -> (i32, i32) {
    %c0_i32 = arith.constant 0 : i32
    %c0_i32_0 = arith.constant 0 : i32
    %c0_i32_1 = arith.constant 0 : i32
    return %c0_i32, %c0_i32_0 : i32, i32
  }
  func.func @transform_18(%arg0: i32) -> (i32, i32) {
    %c0_i32 = arith.constant 0 : i32
    %c0_i32_0 = arith.constant 0 : i32
    %c0_i32_1 = arith.constant 0 : i32
    return %c0_i32, %c0_i32_0 : i32, i32
  }
  func.func @transform_19(%arg0: i32) -> (i32, i32) {
    %c0_i32 = arith.constant 0 : i32
    %c0_i32_0 = arith.constant 0 : i32
    %c0_i32_1 = arith.constant 0 : i32
    return %c0_i32, %c0_i32_0 : i32, i32
  }
  func.func @transform_20(%arg0: i32) -> (i32, i32) {
    %c0_i32 = arith.constant 0 : i32
    %c0_i32_0 = arith.constant 0 : i32
    %c0_i32_1 = arith.constant 0 : i32
    return %c0_i32, %c0_i32_0 : i32, i32
  }
  func.func @transform_21(%arg0: i32) -> (i32, i32) {
    %c0_i32 = arith.constant 0 : i32
    %c0_i32_0 = arith.constant 0 : i32
    %c0_i32_1 = arith.constant 0 : i32
    return %c0_i32, %c0_i32_0 : i32, i32
  }
  func.func @transform_22(%arg0: i32) -> (i32, i32) {
    %c0_i32 = arith.constant 0 : i32
    %c0_i32_0 = arith.constant 0 : i32
    %c0_i32_1 = arith.constant 0 : i32
    return %c0_i32, %c0_i32_0 : i32, i32
  }
  func.func @transform_23(%arg0: i32) -> (i32, i32) {
    %c0_i32 = arith.constant 0 : i32
    %c0_i32_0 = arith.constant 0 : i32
    %c0_i32_1 = arith.constant 0 : i32
    return %c0_i32, %c0_i32_0 : i32, i32
  }
  func.func @transform_24(%arg0: i32) -> (i32, i32) {
    %c0_i32 = arith.constant 0 : i32
    %c0_i32_0 = arith.constant 0 : i32
    %c0_i32_1 = arith.constant 0 : i32
    return %c0_i32, %c0_i32_0 : i32, i32
  }
  func.func @transform_25(%arg0: i32) -> (i32, i32) {
    %c0_i32 = arith.constant 0 : i32
    %c0_i32_0 = arith.constant 0 : i32
    %c0_i32_1 = arith.constant 0 : i32
    return %c0_i32, %c0_i32_0 : i32, i32
  }
  func.func @transform_26(%arg0: i32) -> (i32, i32) {
    %c0_i32 = arith.constant 0 : i32
    %c0_i32_0 = arith.constant 0 : i32
    %c0_i32_1 = arith.constant 0 : i32
    return %c0_i32, %c0_i32_0 : i32, i32
  }
  func.func @transform_27(%arg0: i32) -> (i32, i32) {
    %c0_i32 = arith.constant 0 : i32
    %c0_i32_0 = arith.constant 0 : i32
    %c0_i32_1 = arith.constant 0 : i32
    return %c0_i32, %c0_i32_0 : i32, i32
  }
  func.func @transform_28(%arg0: i32) -> (i32, i32) {
    %c0_i32 = arith.constant 0 : i32
    %c0_i32_0 = arith.constant 0 : i32
    %c0_i32_1 = arith.constant 0 : i32
    return %c0_i32, %c0_i32_0 : i32, i32
  }
  func.func @transform_29(%arg0: i32) -> (i32, i32) {
    %c0_i32 = arith.constant 0 : i32
    %c0_i32_0 = arith.constant 0 : i32
    %c0_i32_1 = arith.constant 0 : i32
    return %c0_i32, %c0_i32_0 : i32, i32
  }
  func.func @transform_30(%arg0: i32) -> (i32, i32) {
    %c0_i32 = arith.constant 0 : i32
    %c0_i32_0 = arith.constant 0 : i32
    %c0_i32_1 = arith.constant 0 : i32
    return %c0_i32, %c0_i32_0 : i32, i32
  }
  func.func @transform_31(%arg0: i32) -> (i32, i32) {
    %c0_i32 = arith.constant 0 : i32
    %c0_i32_0 = arith.constant 0 : i32
    %c0_i32_1 = arith.constant 0 : i32
    return %c0_i32, %c0_i32_0 : i32, i32
  }
  func.func @transform_32(%arg0: i32) -> (i32, i32) {
    %c0_i32 = arith.constant 0 : i32
    %c0_i32_0 = arith.constant 0 : i32
    %c0_i32_1 = arith.constant 0 : i32
    return %c0_i32, %c0_i32_0 : i32, i32
  }
  func.func @transform_33(%arg0: i32) -> (i32, i32) {
    %c0_i32 = arith.constant 0 : i32
    %c0_i32_0 = arith.constant 0 : i32
    %c0_i32_1 = arith.constant 0 : i32
    return %c0_i32, %c0_i32_0 : i32, i32
  }
  func.func @transform_34(%arg0: i32) -> (i32, i32) {
    %c0_i32 = arith.constant 0 : i32
    %c0_i32_0 = arith.constant 0 : i32
    %c0_i32_1 = arith.constant 0 : i32
    return %c0_i32, %c0_i32_0 : i32, i32
  }
  func.func @transform_35(%arg0: i32) -> (i32, i32) {
    %c0_i32 = arith.constant 0 : i32
    %c0_i32_0 = arith.constant 0 : i32
    %c0_i32_1 = arith.constant 0 : i32
    return %c0_i32, %c0_i32_0 : i32, i32
  }
  func.func @transform_36(%arg0: i32) -> (i32, i32) {
    %c0_i32 = arith.constant 0 : i32
    %c0_i32_0 = arith.constant 0 : i32
    %c0_i32_1 = arith.constant 0 : i32
    return %c0_i32, %c0_i32_0 : i32, i32
  }
  func.func @transform_37(%arg0: i32) -> (i32, i32) {
    %c0_i32 = arith.constant 0 : i32
    %c0_i32_0 = arith.constant 0 : i32
    %c0_i32_1 = arith.constant 0 : i32
    return %c0_i32, %c0_i32_0 : i32, i32
  }
  func.func @transform_38(%arg0: i32) -> (i32, i32) {
    %c0_i32 = arith.constant 0 : i32
    %c0_i32_0 = arith.constant 0 : i32
    %c0_i32_1 = arith.constant 0 : i32
    return %c0_i32, %c0_i32_0 : i32, i32
  }
  func.func @transform_39(%arg0: i32) -> (i32, i32) {
    %c0_i32 = arith.constant 0 : i32
    %c0_i32_0 = arith.constant 0 : i32
    %c0_i32_1 = arith.constant 0 : i32
    return %c0_i32, %c0_i32_0 : i32, i32
  }
  func.func @transform_40(%arg0: i32) -> (i32, i32, i32) {
    %c0_i32 = arith.constant 0 : i32
    %c0_i32_0 = arith.constant 0 : i32
    %c0_i32_1 = arith.constant 0 : i32
    return %arg0, %c0_i32, %c0_i32_0 : i32, i32, i32
  }
  func.func @transform_41(%arg0: i32) -> (i32, i32, i32) {
    %c0_i32 = arith.constant 0 : i32
    %c0_i32_0 = arith.constant 0 : i32
    %c0_i32_1 = arith.constant 0 : i32
    return %arg0, %c0_i32, %c0_i32_0 : i32, i32, i32
  }
}

</mosaic_0001>

<llo_original>
// kernel: tpu_custom_call.1
$region0: #{tpu_custom_call.1}
  #allocation0 [shape = 'u32[]', space=smem, size = 0x4, offset = 0x4, fixed_abs, tag = 'smem constant byte address 0x4 - core index']
  #allocation1 [shape = 'u32[72,128]{1,0:T(1,128)}', space=vmem, size = 0x9000, scoped, tag = 'internal scratch']
  %s0 = inlined_call_operand.smem [shape: u32[42], index: -1, kind: input, shape index: {}]
  %s1 = sld [smem:[%s0]]
  %s2 = scalar_lea.smem %s0, 1
  %s3 = sld [smem:[%s2]]
  %s4 = scalar_lea.smem %s0, 2
  %s5 = sld [smem:[%s4]]
  %s6 = scalar_lea.smem %s0, 3
  %s7 = sld [smem:[%s6]]
  %s8 = scalar_lea.smem %s0, 4
  %s9 = sld [smem:[%s8]]
  %s10 = scalar_lea.smem %s0, 5
  %s11 = sld [smem:[%s10]]
  %s12 = scalar_lea.smem %s0, 6
  %s13 = sld [smem:[%s12]]
  %s14 = scalar_lea.smem %s0, 7
  %s15 = sld [smem:[%s14]]
  %s16 = scalar_lea.smem %s0, 8
  %s17 = sld [smem:[%s16]]
  %s18 = scalar_lea.smem %s0, 9
  %s19 = sld [smem:[%s18]]
  %s20 = scalar_lea.smem %s0, 10
  %s21 = sld [smem:[%s20]]
  %s22 = scalar_lea.smem %s0, 11
  %s23 = sld [smem:[%s22]]
  %s24 = scalar_lea.smem %s0, 12
  %s25 = sld [smem:[%s24]]
  %s26 = scalar_lea.smem %s0, 13
  %s27 = sld [smem:[%s26]]
  %s28 = scalar_lea.smem %s0, 14
  %s29 = sld [smem:[%s28]]
  %s30 = scalar_lea.smem %s0, 15
  %s31 = sld [smem:[%s30]]
  %s32 = scalar_lea.smem %s0, 16
  %s33 = sld [smem:[%s32]]
  %s34 = scalar_lea.smem %s0, 17
  %s35 = sld [smem:[%s34]]
  %s36 = scalar_lea.smem %s0, 18
  %s37 = sld [smem:[%s36]]
  %s38 = scalar_lea.smem %s0, 19
  %s39 = sld [smem:[%s38]]
  %s40 = scalar_lea.smem %s0, 20
  %s41 = sld [smem:[%s40]]
  %s42 = scalar_lea.smem %s0, 21
  %s43 = sld [smem:[%s42]]
  %s44 = scalar_lea.smem %s0, 22
  %s45 = sld [smem:[%s44]]
  %s46 = scalar_lea.smem %s0, 23
  %s47 = sld [smem:[%s46]]
  %s48 = scalar_lea.smem %s0, 24
  %s49 = sld [smem:[%s48]]
  %s50 = scalar_lea.smem %s0, 25
  %s51 = sld [smem:[%s50]]
  %s52 = scalar_lea.smem %s0, 26
  %s53 = sld [smem:[%s52]]
  %s54 = scalar_lea.smem %s0, 27
  %s55 = sld [smem:[%s54]]
  %s56 = scalar_lea.smem %s0, 28
  %s57 = sld [smem:[%s56]]
  %s58 = scalar_lea.smem %s0, 29
  %s59 = sld [smem:[%s58]]
  %s60 = scalar_lea.smem %s0, 30
  %s61 = sld [smem:[%s60]]
  %s62 = scalar_lea.smem %s0, 31
  %s63 = sld [smem:[%s62]]
  %s64 = scalar_lea.smem %s0, 32
  %s65 = sld [smem:[%s64]]
  %s66 = scalar_lea.smem %s0, 33
  %s67 = sld [smem:[%s66]]
  %s68 = scalar_lea.smem %s0, 34
  %s69 = sld [smem:[%s68]]
  %s70 = scalar_lea.smem %s0, 35
  %s71 = sld [smem:[%s70]]
  %s72 = scalar_lea.smem %s0, 36
  %s73 = sld [smem:[%s72]]
  %s74 = scalar_lea.smem %s0, 37
  %s75 = sld [smem:[%s74]]
  %s76 = scalar_lea.smem %s0, 38
  %s77 = sld [smem:[%s76]]
  %s78 = scalar_lea.smem %s0, 39
  %s79 = sld [smem:[%s78]]
  %s80 = scalar_lea.smem %s0, 40
  %s81 = sld [smem:[%s80]]
  %s82 = scalar_lea.smem %s0, 41
  %s83 = sld [smem:[%s82]]
  %84 = xla_tuple %s81, %s83
  %s85 = sld [smem:[#allocation0]]
  $region233: #{tpu_custom_call.1} parent=0
    _
  %s87 = ssub.s32 1, %s85
  %s88 = scalar_select 0, %s87, %s85
  $region1: #{tpu_custom_call.1} parent=0
    #allocation2 [shape = 'u8[8192]{0}', space=vmem, size = 0x2000, scoped, tag = 'input window, operand 0']
    #allocation3 [shape = 's32[2]{0}', space=sflag, size = 0x8, scoped, tag = 'scoped memory for tpu_custom_call.1']
    #allocation4 [shape = 's32[2]{0}', space=sflag, size = 0x8, scoped, tag = 'scoped memory for tpu_custom_call.1']
    #allocation5 [shape = 'u8[131072]{0}', space=vmem, size = 0x20000, scoped, tag = 'input window, operand 1']
    #allocation6 [shape = 's32[2]{0}', space=sflag, size = 0x8, scoped, tag = 'scoped memory for tpu_custom_call.1']
    #allocation7 [shape = 'u8[8192]{0}', space=vmem, size = 0x2000, scoped, tag = 'input window, operand 2']
    #allocation8 [shape = 'u8[131072]{0}', space=vmem, size = 0x20000, scoped, tag = 'input window, operand 3']
    #allocation9 [shape = 's32[2]{0}', space=sflag, size = 0x8, scoped, tag = 'scoped memory for tpu_custom_call.1']
    #allocation10 [shape = 'u8[512]{0}', space=vmem, size = 0x400, scoped, tag = 'input window, operand 5, single buffered']
    #allocation11 [shape = 'u8[32768]{0}', space=vmem, size = 0x8000, scoped, tag = 'input window, operand 8, single buffered']
    #allocation12 [shape = 's32[1]{0}', space=sflag, size = 0x4, scoped, tag = 'scoped memory for tpu_custom_call.1']
    #allocation13 [shape = 'u8[32768]{0}', space=vmem, size = 0x8000, scoped, tag = 'input window, operand 10, single buffered']
    #allocation14 [shape = 'u8[16384]{0}', space=vmem, size = 0x4000, scoped, tag = 'input window, operand 26, single buffered']
    #allocation15 [shape = 's32[1]{0}', space=sflag, size = 0x4, scoped, tag = 'scoped memory for tpu_custom_call.1']
    #allocation16 [shape = 'u8[8192]{0}', space=vmem, size = 0x2000, scoped, tag = 'output window, operand 0']
    #allocation17 [shape = 'u8[131072]{0}', space=vmem, size = 0x20000, scoped, tag = 'output window, operand 1']
    #allocation18 [shape = 's32[2]{0}', space=sflag, size = 0x8, scoped, tag = 'scoped memory for tpu_custom_call.1']
    %89 = vsyncpa [#allocation3], 0
    %s90 = scalar_lea.sflag [#allocation3], 1
    %91 = vsyncpa %s90, 0
    %92 = vsyncpa [#allocation6], 0
    %s93 = scalar_lea.sflag [#allocation6], 1
    %94 = vsyncpa %s93, 0
    %95 = vsyncpa [#allocation9], 0
    %s96 = scalar_lea.sflag [#allocation9], 1
    %97 = vsyncpa %s96, 0
    %98 = vsyncpa [#allocation12], 0
    %99 = vsyncpa [#allocation15], 0
    %100 = vsyncpa [#allocation4], 0
    %s101 = scalar_lea.sflag [#allocation4], 1
    %102 = vsyncpa %s101, 0
    %103 = vsyncpa [#allocation18], 0
    %s104 = scalar_lea.sflag [#allocation18], 1
    %105 = vsyncpa %s104, 0
    loop: start=0, step=1, limit=4
    $region2: #{tpu_custom_call.1} parent=1 // loop_pre_header
      _
    $region3: #{tpu_custom_call.1} parent=1 // loop_header
      %s107 = sphi 0, %s111
      %p108 = scmp.ge.s32.totalorder %s107, 4
      %s117 = sphi 0, %s119
      %s120 = sphi 0, %s117
      %s121 = sphi 0, %s120
      %s137 = sphi 0, %s121
      %s143 = sphi 0, %s145
      %s146 = sphi 0, %s143
      %s147 = sphi 0, %s146
      %s163 = sphi 0, %s147
      %s169 = sphi 0, %s171
      %s172 = sphi 0, %s169
      %s173 = sphi 0, %s172
      %s189 = sphi 0, %s173
      %s195 = sphi 0, %s197
      %s198 = sphi 0, %s195
      %s199 = sphi 0, %s198
      %s215 = sphi 0, %s199
      %s219 = sphi 0, %s219
      %s221 = sphi 0, %s219
      %s222 = sphi 0, %s221
      %s236 = sphi 0, %s222
      %s240 = sphi 0, %s240
      %s242 = sphi 0, %s240
      %s243 = sphi 0, %s242
      %s257 = sphi 0, %s243
      %s261 = sphi 0, %s261
      %s263 = sphi 0, %s261
      %s264 = sphi 0, %s263
      %s278 = sphi 0, %s264
      %s282 = sphi 0, %s282
      %s284 = sphi 0, %s282
      %s285 = sphi 0, %s284
      %s299 = sphi 0, %s285
      %s303 = sphi 0, %s303
      %s305 = sphi 0, %s303
      %s306 = sphi 0, %s305
      %s320 = sphi 0, %s306
      %s324 = sphi 0, %s324
      %s326 = sphi 0, %s324
      %s327 = sphi 0, %s326
      %s341 = sphi 0, %s327
      %s345 = sphi 0, %s345
      %s347 = sphi 0, %s345
      %s348 = sphi 0, %s347
      %s362 = sphi 0, %s348
      %s366 = sphi 0, %s366
      %s368 = sphi 0, %s366
      %s369 = sphi 0, %s368
      %s383 = sphi 0, %s369
      %s387 = sphi 0, %s387
      %s389 = sphi 0, %s387
      %s390 = sphi 0, %s389
      %s404 = sphi 0, %s390
      %s408 = sphi 0, %s408
      %s410 = sphi 0, %s408
      %s411 = sphi 0, %s410
      %s425 = sphi 0, %s411
      %s429 = sphi 0, %s429
      %s431 = sphi 0, %s429
      %s432 = sphi 0, %s431
      %s446 = sphi 0, %s432
      %s450 = sphi 0, %s450
      %s452 = sphi 0, %s450
      %s453 = sphi 0, %s452
      %s467 = sphi 0, %s453
      %s471 = sphi 0, %s471
      %s473 = sphi 0, %s471
      %s474 = sphi 0, %s473
      %s488 = sphi 0, %s474
      %s492 = sphi 0, %s492
      %s494 = sphi 0, %s492
      %s495 = sphi 0, %s494
      %s509 = sphi 0, %s495
      %s513 = sphi 0, %s513
      %s515 = sphi 0, %s513
      %s516 = sphi 0, %s515
      %s530 = sphi 0, %s516
      %s534 = sphi 0, %s534
      %s536 = sphi 0, %s534
      %s537 = sphi 0, %s536
      %s551 = sphi 0, %s537
      %s555 = sphi 0, %s555
      %s557 = sphi 0, %s555
      %s558 = sphi 0, %s557
      %s572 = sphi 0, %s558
      %s576 = sphi 0, %s576
      %s578 = sphi 0, %s576
      %s579 = sphi 0, %s578
      %s593 = sphi 0, %s579
      %s597 = sphi 0, %s597
      %s599 = sphi 0, %s597
      %s600 = sphi 0, %s599
      %s614 = sphi 0, %s600
      %s618 = sphi 0, %s618
      %s620 = sphi 0, %s618
      %s621 = sphi 0, %s620
      %s635 = sphi 0, %s621
      %s639 = sphi 0, %s639
      %s641 = sphi 0, %s639
      %s642 = sphi 0, %s641
      %s656 = sphi 0, %s642
      %s660 = sphi 0, %s660
      %s662 = sphi 0, %s660
      %s663 = sphi 0, %s662
      %s677 = sphi 0, %s663
      %s681 = sphi 0, %s681
      %s683 = sphi 0, %s681
      %s684 = sphi 0, %s683
      %s698 = sphi 0, %s684
      %s702 = sphi 0, %s702
      %s704 = sphi 0, %s702
      %s705 = sphi 0, %s704
      %s719 = sphi 0, %s705
      %s723 = sphi 0, %s723
      %s725 = sphi 0, %s723
      %s726 = sphi 0, %s725
      %s740 = sphi 0, %s726
      %s744 = sphi 0, %s744
      %s746 = sphi 0, %s744
      %s747 = sphi 0, %s746
      %s761 = sphi 0, %s747
      %s765 = sphi 0, %s765
      %s767 = sphi 0, %s765
      %s768 = sphi 0, %s767
      %s782 = sphi 0, %s768
      %s786 = sphi 0, %s786
      %s788 = sphi 0, %s786
      %s789 = sphi 0, %s788
      %s803 = sphi 0, %s789
      %s807 = sphi 0, %s807
      %s809 = sphi 0, %s807
      %s810 = sphi 0, %s809
      %s824 = sphi 0, %s810
      %s828 = sphi 0, %s828
      %s830 = sphi 0, %s828
      %s831 = sphi 0, %s830
      %s845 = sphi 0, %s831
      %s849 = sphi 0, %s849
      %s851 = sphi 0, %s849
      %s852 = sphi 0, %s851
      %s866 = sphi 0, %s852
      %s870 = sphi 0, %s870
      %s872 = sphi 0, %s870
      %s873 = sphi 0, %s872
      %s887 = sphi 0, %s873
      %s891 = sphi 0, %s891
      %s893 = sphi 0, %s891
      %s894 = sphi 0, %s893
      %s908 = sphi 0, %s894
      %s912 = sphi 0, %s912
      %s914 = sphi 0, %s912
      %s915 = sphi 0, %s914
      %s929 = sphi 0, %s915
      %s933 = sphi 0, %s933
      %s935 = sphi 0, %s933
      %s936 = sphi 0, %s935
      %s950 = sphi 0, %s936
      %s954 = sphi 0, %s954
      %s956 = sphi 0, %s954
      %s957 = sphi 0, %s956
      %s971 = sphi 0, %s957
      %s977 = sphi 0, %s979
      %s980 = sphi 0, %s977
      %s981 = sphi 0, %s980
      %s997 = sphi 0, %s981
      %s1003 = sphi 0, %s1005
      %s1006 = sphi 0, %s1003
      %s1007 = sphi 0, %s1006
      %s1023 = sphi 0, %s1007
    $region4: #{tpu_custom_call.1} parent=1 // loop_header_branch
      %110 = sbr.rel (%p108) target = $region8
    $region5: #{tpu_custom_call.1} parent=1 // loop_body
      %s112 = ssub.s32 %s107, 1
      %s113 = ssub.s32 %s107, 2
      %s114 = sadd.s32 %s107, 1
      %s115 = ssub.s32 %s107, %s114
      %p116 = scmp.eq.s32.totalorder %s115, 0
      %s118 = sadd.s32 %s117, 1
      %s119 = scalar_select %p116, %s117, %s118
      %p122 = pneg %p116
      %p123 = scmp.eq.s32.totalorder %s107, 1
      %p124 = por %p122, %p123
      %p125 = scmp.ne.s32.totalorder %s117, %s120
      %p126 = scmp.eq.s32.totalorder %s107, 0
      %p127 = por %p125, %p126
      %p128 = scmp.ne.s32.totalorder %s117, %s120
      %p129 = scmp.eq.s32.totalorder %s112, 1
      %p130 = por %p128, %p129
      %p131 = scmp.ne.s32.totalorder %s120, %s121
      %p132 = scmp.eq.s32.totalorder %s112, 0
      %p133 = por %p131, %p132
      %p134 = scmp.ne.s32.totalorder %s120, %s121
      %p135 = scmp.eq.s32.totalorder %s113, 1
      %p136 = por %p134, %p135
      %p138 = scmp.ne.s32.totalorder %s121, %s137
      %p139 = scmp.eq.s32.totalorder %s113, 0
      %p140 = por %p138, %p139
      %s141 = ssub.s32 %s107, %s114
      %p142 = scmp.eq.s32.totalorder %s141, 0
      %s144 = sadd.s32 %s143, 1
      %s145 = scalar_select %p142, %s143, %s144
      %p148 = pneg %p142
      %p149 = scmp.eq.s32.totalorder %s107, 1
      %p150 = por %p148, %p149
      %p151 = scmp.ne.s32.totalorder %s143, %s146
      %p152 = scmp.eq.s32.totalorder %s107, 0
      %p153 = por %p151, %p152
      %p154 = scmp.ne.s32.totalorder %s143, %s146
      %p155 = scmp.eq.s32.totalorder %s112, 1
      %p156 = por %p154, %p155
      %p157 = scmp.ne.s32.totalorder %s146, %s147
      %p158 = scmp.eq.s32.totalorder %s112, 0
      %p159 = por %p157, %p158
      %p160 = scmp.ne.s32.totalorder %s146, %s147
      %p161 = scmp.eq.s32.totalorder %s113, 1
      %p162 = por %p160, %p161
      %p164 = scmp.ne.s32.totalorder %s147, %s163
      %p165 = scmp.eq.s32.totalorder %s113, 0
      %p166 = por %p164, %p165
      %s167 = ssub.s32 %s107, %s114
      %p168 = scmp.eq.s32.totalorder %s167, 0
      %s170 = sadd.s32 %s169, 1
      %s171 = scalar_select %p168, %s169, %s170
      %p174 = pneg %p168
      %p175 = scmp.eq.s32.totalorder %s107, 1
      %p176 = por %p174, %p175
      %p177 = scmp.ne.s32.totalorder %s169, %s172
      %p178 = scmp.eq.s32.totalorder %s107, 0
      %p179 = por %p177, %p178
      %p180 = scmp.ne.s32.totalorder %s169, %s172
      %p181 = scmp.eq.s32.totalorder %s112, 1
      %p182 = por %p180, %p181
      %p183 = scmp.ne.s32.totalorder %s172, %s173
      %p184 = scmp.eq.s32.totalorder %s112, 0
      %p185 = por %p183, %p184
      %p186 = scmp.ne.s32.totalorder %s172, %s173
      %p187 = scmp.eq.s32.totalorder %s113, 1
      %p188 = por %p186, %p187
      %p190 = scmp.ne.s32.totalorder %s173, %s189
      %p191 = scmp.eq.s32.totalorder %s113, 0
      %p192 = por %p190, %p191
      %s193 = ssub.s32 %s107, %s114
      %p194 = scmp.eq.s32.totalorder %s193, 0
      %s196 = sadd.s32 %s195, 1
      %s197 = scalar_select %p194, %s195, %s196
      %p200 = pneg %p194
      %p201 = scmp.eq.s32.totalorder %s107, 1
      %p202 = por %p200, %p201
      %p203 = scmp.ne.s32.totalorder %s195, %s198
      %p204 = scmp.eq.s32.totalorder %s107, 0
      %p205 = por %p203, %p204
      %p206 = scmp.ne.s32.totalorder %s195, %s198
      %p207 = scmp.eq.s32.totalorder %s112, 1
      %p208 = por %p206, %p207
      %p209 = scmp.ne.s32.totalorder %s198, %s199
      %p210 = scmp.eq.s32.totalorder %s112, 0
      %p211 = por %p209, %p210
      %p212 = scmp.ne.s32.totalorder %s198, %s199
      %p213 = scmp.eq.s32.totalorder %s113, 1
      %p214 = por %p212, %p213
      %p216 = scmp.ne.s32.totalorder %s199, %s215
      %p217 = scmp.eq.s32.totalorder %s113, 0
      %p218 = por %p216, %p217
      %s220 = sadd.s32 %s219, 1
      %p223 = scmp.eq.s32.totalorder %s107, 1
      %p224 = scmp.ne.s32.totalorder %s219, %s221
      %p225 = scmp.eq.s32.totalorder %s107, 0
      %p226 = por %p224, %p225
      %p227 = scmp.ne.s32.totalorder %s219, %s221
      %p228 = scmp.eq.s32.totalorder %s112, 1
      %p229 = por %p227, %p228
      %p230 = scmp.ne.s32.totalorder %s221, %s222
      %p231 = scmp.eq.s32.totalorder %s112, 0
      %p232 = por %p230, %p231
      %p233 = scmp.ne.s32.totalorder %s221, %s222
      %p234 = scmp.eq.s32.totalorder %s113, 1
      %p235 = por %p233, %p234
      %p237 = scmp.ne.s32.totalorder %s222, %s236
      %p238 = scmp.eq.s32.totalorder %s113, 0
      %p239 = por %p237, %p238
      %s241 = sadd.s32 %s240, 1
      %p244 = scmp.eq.s32.totalorder %s107, 1
      %p245 = scmp.ne.s32.totalorder %s240, %s242
      %p246 = scmp.eq.s32.totalorder %s107, 0
      %p247 = por %p245, %p246
      %p248 = scmp.ne.s32.totalorder %s240, %s242
      %p249 = scmp.eq.s32.totalorder %s112, 1
      %p250 = por %p248, %p249
      %p251 = scmp.ne.s32.totalorder %s242, %s243
      %p252 = scmp.eq.s32.totalorder %s112, 0
      %p253 = por %p251, %p252
      %p254 = scmp.ne.s32.totalorder %s242, %s243
      %p255 = scmp.eq.s32.totalorder %s113, 1
      %p256 = por %p254, %p255
      %p258 = scmp.ne.s32.totalorder %s243, %s257
      %p259 = scmp.eq.s32.totalorder %s113, 0
      %p260 = por %p258, %p259
      %s262 = sadd.s32 %s261, 1
      %p265 = scmp.eq.s32.totalorder %s107, 1
      %p266 = scmp.ne.s32.totalorder %s261, %s263
      %p267 = scmp.eq.s32.totalorder %s107, 0
      %p268 = por %p266, %p267
      %p269 = scmp.ne.s32.totalorder %s261, %s263
      %p270 = scmp.eq.s32.totalorder %s112, 1
      %p271 = por %p269, %p270
      %p272 = scmp.ne.s32.totalorder %s263, %s264
      %p273 = scmp.eq.s32.totalorder %s112, 0
      %p274 = por %p272, %p273
      %p275 = scmp.ne.s32.totalorder %s263, %s264
      %p276 = scmp.eq.s32.totalorder %s113, 1
      %p277 = por %p275, %p276
      %p279 = scmp.ne.s32.totalorder %s264, %s278
      %p280 = scmp.eq.s32.totalorder %s113, 0
      %p281 = por %p279, %p280
      %s283 = sadd.s32 %s282, 1
      %p286 = scmp.eq.s32.totalorder %s107, 1
      %p287 = scmp.ne.s32.totalorder %s282, %s284
      %p288 = scmp.eq.s32.totalorder %s107, 0
      %p289 = por %p287, %p288
      %p290 = scmp.ne.s32.totalorder %s282, %s284
      %p291 = scmp.eq.s32.totalorder %s112, 1
      %p292 = por %p290, %p291
      %p293 = scmp.ne.s32.totalorder %s284, %s285
      %p294 = scmp.eq.s32.totalorder %s112, 0
      %p295 = por %p293, %p294
      %p296 = scmp.ne.s32.totalorder %s284, %s285
      %p297 = scmp.eq.s32.totalorder %s113, 1
      %p298 = por %p296, %p297
      %p300 = scmp.ne.s32.totalorder %s285, %s299
      %p301 = scmp.eq.s32.totalorder %s113, 0
      %p302 = por %p300, %p301
      %s304 = sadd.s32 %s303, 1
      %p307 = scmp.eq.s32.totalorder %s107, 1
      %p308 = scmp.ne.s32.totalorder %s303, %s305
      %p309 = scmp.eq.s32.totalorder %s107, 0
      %p310 = por %p308, %p309
      %p311 = scmp.ne.s32.totalorder %s303, %s305
      %p312 = scmp.eq.s32.totalorder %s112, 1
      %p313 = por %p311, %p312
      %p314 = scmp.ne.s32.totalorder %s305, %s306
      %p315 = scmp.eq.s32.totalorder %s112, 0
      %p316 = por %p314, %p315
      %p317 = scmp.ne.s32.totalorder %s305, %s306
      %p318 = scmp.eq.s32.totalorder %s113, 1
      %p319 = por %p317, %p318
      %p321 = scmp.ne.s32.totalorder %s306, %s320
      %p322 = scmp.eq.s32.totalorder %s113, 0
      %p323 = por %p321, %p322
      %s325 = sadd.s32 %s324, 1
      %p328 = scmp.eq.s32.totalorder %s107, 1
      %p329 = scmp.ne.s32.totalorder %s324, %s326
      %p330 = scmp.eq.s32.totalorder %s107, 0
      %p331 = por %p329, %p330
      %p332 = scmp.ne.s32.totalorder %s324, %s326
      %p333 = scmp.eq.s32.totalorder %s112, 1
      %p334 = por %p332, %p333
      %p335 = scmp.ne.s32.totalorder %s326, %s327
      %p336 = scmp.eq.s32.totalorder %s112, 0
      %p337 = por %p335, %p336
      %p338 = scmp.ne.s32.totalorder %s326, %s327
      %p339 = scmp.eq.s32.totalorder %s113, 1
      %p340 = por %p338, %p339
      %p342 = scmp.ne.s32.totalorder %s327, %s341
      %p343 = scmp.eq.s32.totalorder %s113, 0
      %p344 = por %p342, %p343
      %s346 = sadd.s32 %s345, 1
      %p349 = scmp.eq.s32.totalorder %s107, 1
      %p350 = scmp.ne.s32.totalorder %s345, %s347
      %p351 = scmp.eq.s32.totalorder %s107, 0
      %p352 = por %p350, %p351
      %p353 = scmp.ne.s32.totalorder %s345, %s347
      %p354 = scmp.eq.s32.totalorder %s112, 1
      %p355 = por %p353, %p354
      %p356 = scmp.ne.s32.totalorder %s347, %s348
      %p357 = scmp.eq.s32.totalorder %s112, 0
      %p358 = por %p356, %p357
      %p359 = scmp.ne.s32.totalorder %s347, %s348
      %p360 = scmp.eq.s32.totalorder %s113, 1
      %p361 = por %p359, %p360
      %p363 = scmp.ne.s32.totalorder %s348, %s362
      %p364 = scmp.eq.s32.totalorder %s113, 0
      %p365 = por %p363, %p364
      %s367 = sadd.s32 %s366, 1
      %p370 = scmp.eq.s32.totalorder %s107, 1
      %p371 = scmp.ne.s32.totalorder %s366, %s368
      %p372 = scmp.eq.s32.totalorder %s107, 0
      %p373 = por %p371, %p372
      %p374 = scmp.ne.s32.totalorder %s366, %s368
      %p375 = scmp.eq.s32.totalorder %s112, 1
      %p376 = por %p374, %p375
      %p377 = scmp.ne.s32.totalorder %s368, %s369
      %p378 = scmp.eq.s32.totalorder %s112, 0
      %p379 = por %p377, %p378
      %p380 = scmp.ne.s32.totalorder %s368, %s369
      %p381 = scmp.eq.s32.totalorder %s113, 1
      %p382 = por %p380, %p381
      %p384 = scmp.ne.s32.totalorder %s369, %s383
      %p385 = scmp.eq.s32.totalorder %s113, 0
      %p386 = por %p384, %p385
      %s388 = sadd.s32 %s387, 1
      %p391 = scmp.eq.s32.totalorder %s107, 1
      %p392 = scmp.ne.s32.totalorder %s387, %s389
      %p393 = scmp.eq.s32.totalorder %s107, 0
      %p394 = por %p392, %p393
      %p395 = scmp.ne.s32.totalorder %s387, %s389
      %p396 = scmp.eq.s32.totalorder %s112, 1
      %p397 = por %p395, %p396
      %p398 = scmp.ne.s32.totalorder %s389, %s390
      %p399 = scmp.eq.s32.totalorder %s112, 0
      %p400 = por %p398, %p399
      %p401 = scmp.ne.s32.totalorder %s389, %s390
      %p402 = scmp.eq.s32.totalorder %s113, 1
      %p403 = por %p401, %p402
      %p405 = scmp.ne.s32.totalorder %s390, %s404
      %p406 = scmp.eq.s32.totalorder %s113, 0
      %p407 = por %p405, %p406
      %s409 = sadd.s32 %s408, 1
      %p412 = scmp.eq.s32.totalorder %s107, 1
      %p413 = scmp.ne.s32.totalorder %s408, %s410
      %p414 = scmp.eq.s32.totalorder %s107, 0
      %p415 = por %p413, %p414
      %p416 = scmp.ne.s32.totalorder %s408, %s410
      %p417 = scmp.eq.s32.totalorder %s112, 1
      %p418 = por %p416, %p417
      %p419 = scmp.ne.s32.totalorder %s410, %s411
      %p420 = scmp.eq.s32.totalorder %s112, 0
      %p421 = por %p419, %p420
      %p422 = scmp.ne.s32.totalorder %s410, %s411
      %p423 = scmp.eq.s32.totalorder %s113, 1
      %p424 = por %p422, %p423
      %p426 = scmp.ne.s32.totalorder %s411, %s425
      %p427 = scmp.eq.s32.totalorder %s113, 0
      %p428 = por %p426, %p427
      %s430 = sadd.s32 %s429, 1
      %p433 = scmp.eq.s32.totalorder %s107, 1
      %p434 = scmp.ne.s32.totalorder %s429, %s431
      %p435 = scmp.eq.s32.totalorder %s107, 0
      %p436 = por %p434, %p435
      %p437 = scmp.ne.s32.totalorder %s429, %s431
      %p438 = scmp.eq.s32.totalorder %s112, 1
      %p439 = por %p437, %p438
      %p440 = scmp.ne.s32.totalorder %s431, %s432
      %p441 = scmp.eq.s32.totalorder %s112, 0
      %p442 = por %p440, %p441
      %p443 = scmp.ne.s32.totalorder %s431, %s432
      %p444 = scmp.eq.s32.totalorder %s113, 1
      %p445 = por %p443, %p444
      %p447 = scmp.ne.s32.totalorder %s432, %s446
      %p448 = scmp.eq.s32.totalorder %s113, 0
      %p449 = por %p447, %p448
      %s451 = sadd.s32 %s450, 1
      %p454 = scmp.eq.s32.totalorder %s107, 1
      %p455 = scmp.ne.s32.totalorder %s450, %s452
      %p456 = scmp.eq.s32.totalorder %s107, 0
      %p457 = por %p455, %p456
      %p458 = scmp.ne.s32.totalorder %s450, %s452
      %p459 = scmp.eq.s32.totalorder %s112, 1
      %p460 = por %p458, %p459
      %p461 = scmp.ne.s32.totalorder %s452, %s453
      %p462 = scmp.eq.s32.totalorder %s112, 0
      %p463 = por %p461, %p462
      %p464 = scmp.ne.s32.totalorder %s452, %s453
      %p465 = scmp.eq.s32.totalorder %s113, 1
      %p466 = por %p464, %p465
      %p468 = scmp.ne.s32.totalorder %s453, %s467
      %p469 = scmp.eq.s32.totalorder %s113, 0
      %p470 = por %p468, %p469
      %s472 = sadd.s32 %s471, 1
      %p475 = scmp.eq.s32.totalorder %s107, 1
      %p476 = scmp.ne.s32.totalorder %s471, %s473
      %p477 = scmp.eq.s32.totalorder %s107, 0
      %p478 = por %p476, %p477
      %p479 = scmp.ne.s32.totalorder %s471, %s473
      %p480 = scmp.eq.s32.totalorder %s112, 1
      %p481 = por %p479, %p480
      %p482 = scmp.ne.s32.totalorder %s473, %s474
      %p483 = scmp.eq.s32.totalorder %s112, 0
      %p484 = por %p482, %p483
      %p485 = scmp.ne.s32.totalorder %s473, %s474
      %p486 = scmp.eq.s32.totalorder %s113, 1
      %p487 = por %p485, %p486
      %p489 = scmp.ne.s32.totalorder %s474, %s488
      %p490 = scmp.eq.s32.totalorder %s113, 0
      %p491 = por %p489, %p490
      %s493 = sadd.s32 %s492, 1
      %p496 = scmp.eq.s32.totalorder %s107, 1
      %p497 = scmp.ne.s32.totalorder %s492, %s494
      %p498 = scmp.eq.s32.totalorder %s107, 0
      %p499 = por %p497, %p498
      %p500 = scmp.ne.s32.totalorder %s492, %s494
      %p501 = scmp.eq.s32.totalorder %s112, 1
      %p502 = por %p500, %p501
      %p503 = scmp.ne.s32.totalorder %s494, %s495
      %p504 = scmp.eq.s32.totalorder %s112, 0
      %p505 = por %p503, %p504
      %p506 = scmp.ne.s32.totalorder %s494, %s495
      %p507 = scmp.eq.s32.totalorder %s113, 1
      %p508 = por %p506, %p507
      %p510 = scmp.ne.s32.totalorder %s495, %s509
      %p511 = scmp.eq.s32.totalorder %s113, 0
      %p512 = por %p510, %p511
      %s514 = sadd.s32 %s513, 1
      %p517 = scmp.eq.s32.totalorder %s107, 1
      %p518 = scmp.ne.s32.totalorder %s513, %s515
      %p519 = scmp.eq.s32.totalorder %s107, 0
      %p520 = por %p518, %p519
      %p521 = scmp.ne.s32.totalorder %s513, %s515
      %p522 = scmp.eq.s32.totalorder %s112, 1
      %p523 = por %p521, %p522
      %p524 = scmp.ne.s32.totalorder %s515, %s516
      %p525 = scmp.eq.s32.totalorder %s112, 0
      %p526 = por %p524, %p525
      %p527 = scmp.ne.s32.totalorder %s515, %s516
      %p528 = scmp.eq.s32.totalorder %s113, 1
      %p529 = por %p527, %p528
      %p531 = scmp.ne.s32.totalorder %s516, %s530
      %p532 = scmp.eq.s32.totalorder %s113, 0
      %p533 = por %p531, %p532
      %s535 = sadd.s32 %s534, 1
      %p538 = scmp.eq.s32.totalorder %s107, 1
      %p539 = scmp.ne.s32.totalorder %s534, %s536
      %p540 = scmp.eq.s32.totalorder %s107, 0
      %p541 = por %p539, %p540
      %p542 = scmp.ne.s32.totalorder %s534, %s536
      %p543 = scmp.eq.s32.totalorder %s112, 1
      %p544 = por %p542, %p543
      %p545 = scmp.ne.s32.totalorder %s536, %s537
      %p546 = scmp.eq.s32.totalorder %s112, 0
      %p547 = por %p545, %p546
      %p548 = scmp.ne.s32.totalorder %s536, %s537
      %p549 = scmp.eq.s32.totalorder %s113, 1
      %p550 = por %p548, %p549
      %p552 = scmp.ne.s32.totalorder %s537, %s551
      %p553 = scmp.eq.s32.totalorder %s113, 0
      %p554 = por %p552, %p553
      %s556 = sadd.s32 %s555, 1
      %p559 = scmp.eq.s32.totalorder %s107, 1
      %p560 = scmp.ne.s32.totalorder %s555, %s557
      %p561 = scmp.eq.s32.totalorder %s107, 0
      %p562 = por %p560, %p561
      %p563 = scmp.ne.s32.totalorder %s555, %s557
      %p564 = scmp.eq.s32.totalorder %s112, 1
      %p565 = por %p563, %p564
      %p566 = scmp.ne.s32.totalorder %s557, %s558
      %p567 = scmp.eq.s32.totalorder %s112, 0
      %p568 = por %p566, %p567
      %p569 = scmp.ne.s32.totalorder %s557, %s558
      %p570 = scmp.eq.s32.totalorder %s113, 1
      %p571 = por %p569, %p570
      %p573 = scmp.ne.s32.totalorder %s558, %s572
      %p574 = scmp.eq.s32.totalorder %s113, 0
      %p575 = por %p573, %p574
      %s577 = sadd.s32 %s576, 1
      %p580 = scmp.eq.s32.totalorder %s107, 1
      %p581 = scmp.ne.s32.totalorder %s576, %s578
      %p582 = scmp.eq.s32.totalorder %s107, 0
      %p583 = por %p581, %p582
      %p584 = scmp.ne.s32.totalorder %s576, %s578
      %p585 = scmp.eq.s32.totalorder %s112, 1
      %p586 = por %p584, %p585
      %p587 = scmp.ne.s32.totalorder %s578, %s579
      %p588 = scmp.eq.s32.totalorder %s112, 0
      %p589 = por %p587, %p588
      %p590 = scmp.ne.s32.totalorder %s578, %s579
      %p591 = scmp.eq.s32.totalorder %s113, 1
      %p592 = por %p590, %p591
      %p594 = scmp.ne.s32.totalorder %s579, %s593
      %p595 = scmp.eq.s32.totalorder %s113, 0
      %p596 = por %p594, %p595
      %s598 = sadd.s32 %s597, 1
      %p601 = scmp.eq.s32.totalorder %s107, 1
      %p602 = scmp.ne.s32.totalorder %s597, %s599
      %p603 = scmp.eq.s32.totalorder %s107, 0
      %p604 = por %p602, %p603
      %p605 = scmp.ne.s32.totalorder %s597, %s599
      %p606 = scmp.eq.s32.totalorder %s112, 1
      %p607 = por %p605, %p606
      %p608 = scmp.ne.s32.totalorder %s599, %s600
      %p609 = scmp.eq.s32.totalorder %s112, 0
      %p610 = por %p608, %p609
      %p611 = scmp.ne.s32.totalorder %s599, %s600
      %p612 = scmp.eq.s32.totalorder %s113, 1
      %p613 = por %p611, %p612
      %p615 = scmp.ne.s32.totalorder %s600, %s614
      %p616 = scmp.eq.s32.totalorder %s113, 0
      %p617 = por %p615, %p616
      %s619 = sadd.s32 %s618, 1
      %p622 = scmp.eq.s32.totalorder %s107, 1
      %p623 = scmp.ne.s32.totalorder %s618, %s620
      %p624 = scmp.eq.s32.totalorder %s107, 0
      %p625 = por %p623, %p624
      %p626 = scmp.ne.s32.totalorder %s618, %s620
      %p627 = scmp.eq.s32.totalorder %s112, 1
      %p628 = por %p626, %p627
      %p629 = scmp.ne.s32.totalorder %s620, %s621
      %p630 = scmp.eq.s32.totalorder %s112, 0
      %p631 = por %p629, %p630
      %p632 = scmp.ne.s32.totalorder %s620, %s621
      %p633 = scmp.eq.s32.totalorder %s113, 1
      %p634 = por %p632, %p633
      %p636 = scmp.ne.s32.totalorder %s621, %s635
      %p637 = scmp.eq.s32.totalorder %s113, 0
      %p638 = por %p636, %p637
      %s640 = sadd.s32 %s639, 1
      %p643 = scmp.eq.s32.totalorder %s107, 1
      %p644 = scmp.ne.s32.totalorder %s639, %s641
      %p645 = scmp.eq.s32.totalorder %s107, 0
      %p646 = por %p644, %p645
      %p647 = scmp.ne.s32.totalorder %s639, %s641
      %p648 = scmp.eq.s32.totalorder %s112, 1
      %p649 = por %p647, %p648
      %p650 = scmp.ne.s32.totalorder %s641, %s642
      %p651 = scmp.eq.s32.totalorder %s112, 0
      %p652 = por %p650, %p651
      %p653 = scmp.ne.s32.totalorder %s641, %s642
      %p654 = scmp.eq.s32.totalorder %s113, 1
      %p655 = por %p653, %p654
      %p657 = scmp.ne.s32.totalorder %s642, %s656
      %p658 = scmp.eq.s32.totalorder %s113, 0
      %p659 = por %p657, %p658
      %s661 = sadd.s32 %s660, 1
      %p664 = scmp.eq.s32.totalorder %s107, 1
      %p665 = scmp.ne.s32.totalorder %s660, %s662
      %p666 = scmp.eq.s32.totalorder %s107, 0
      %p667 = por %p665, %p666
      %p668 = scmp.ne.s32.totalorder %s660, %s662
      %p669 = scmp.eq.s32.totalorder %s112, 1
      %p670 = por %p668, %p669
      %p671 = scmp.ne.s32.totalorder %s662, %s663
      %p672 = scmp.eq.s32.totalorder %s112, 0
      %p673 = por %p671, %p672
      %p674 = scmp.ne.s32.totalorder %s662, %s663
      %p675 = scmp.eq.s32.totalorder %s113, 1
      %p676 = por %p674, %p675
      %p678 = scmp.ne.s32.totalorder %s663, %s677
      %p679 = scmp.eq.s32.totalorder %s113, 0
      %p680 = por %p678, %p679
      %s682 = sadd.s32 %s681, 1
      %p685 = scmp.eq.s32.totalorder %s107, 1
      %p686 = scmp.ne.s32.totalorder %s681, %s683
      %p687 = scmp.eq.s32.totalorder %s107, 0
      %p688 = por %p686, %p687
      %p689 = scmp.ne.s32.totalorder %s681, %s683
      %p690 = scmp.eq.s32.totalorder %s112, 1
      %p691 = por %p689, %p690
      %p692 = scmp.ne.s32.totalorder %s683, %s684
      %p693 = scmp.eq.s32.totalorder %s112, 0
      %p694 = por %p692, %p693
      %p695 = scmp.ne.s32.totalorder %s683, %s684
      %p696 = scmp.eq.s32.totalorder %s113, 1
      %p697 = por %p695, %p696
      %p699 = scmp.ne.s32.totalorder %s684, %s698
      %p700 = scmp.eq.s32.totalorder %s113, 0
      %p701 = por %p699, %p700
      %s703 = sadd.s32 %s702, 1
      %p706 = scmp.eq.s32.totalorder %s107, 1
      %p707 = scmp.ne.s32.totalorder %s702, %s704
      %p708 = scmp.eq.s32.totalorder %s107, 0
      %p709 = por %p707, %p708
      %p710 = scmp.ne.s32.totalorder %s702, %s704
      %p711 = scmp.eq.s32.totalorder %s112, 1
      %p712 = por %p710, %p711
      %p713 = scmp.ne.s32.totalorder %s704, %s705
      %p714 = scmp.eq.s32.totalorder %s112, 0
      %p715 = por %p713, %p714
      %p716 = scmp.ne.s32.totalorder %s704, %s705
      %p717 = scmp.eq.s32.totalorder %s113, 1
      %p718 = por %p716, %p717
      %p720 = scmp.ne.s32.totalorder %s705, %s719
      %p721 = scmp.eq.s32.totalorder %s113, 0
      %p722 = por %p720, %p721
      %s724 = sadd.s32 %s723, 1
      %p727 = scmp.eq.s32.totalorder %s107, 1
      %p728 = scmp.ne.s32.totalorder %s723, %s725
      %p729 = scmp.eq.s32.totalorder %s107, 0
      %p730 = por %p728, %p729
      %p731 = scmp.ne.s32.totalorder %s723, %s725
      %p732 = scmp.eq.s32.totalorder %s112, 1
      %p733 = por %p731, %p732
      %p734 = scmp.ne.s32.totalorder %s725, %s726
      %p735 = scmp.eq.s32.totalorder %s112, 0
      %p736 = por %p734, %p735
      %p737 = scmp.ne.s32.totalorder %s725, %s726
      %p738 = scmp.eq.s32.totalorder %s113, 1
      %p739 = por %p737, %p738
      %p741 = scmp.ne.s32.totalorder %s726, %s740
      %p742 = scmp.eq.s32.totalorder %s113, 0
      %p743 = por %p741, %p742
      %s745 = sadd.s32 %s744, 1
      %p748 = scmp.eq.s32.totalorder %s107, 1
      %p749 = scmp.ne.s32.totalorder %s744, %s746
      %p750 = scmp.eq.s32.totalorder %s107, 0
      %p751 = por %p749, %p750
      %p752 = scmp.ne.s32.totalorder %s744, %s746
      %p753 = scmp.eq.s32.totalorder %s112, 1
      %p754 = por %p752, %p753
      %p755 = scmp.ne.s32.totalorder %s746, %s747
      %p756 = scmp.eq.s32.totalorder %s112, 0
      %p757 = por %p755, %p756
      %p758 = scmp.ne.s32.totalorder %s746, %s747
      %p759 = scmp.eq.s32.totalorder %s113, 1
      %p760 = por %p758, %p759
      %p762 = scmp.ne.s32.totalorder %s747, %s761
      %p763 = scmp.eq.s32.totalorder %s113, 0
      %p764 = por %p762, %p763
      %s766 = sadd.s32 %s765, 1
      %p769 = scmp.eq.s32.totalorder %s107, 1
      %p770 = scmp.ne.s32.totalorder %s765, %s767
      %p771 = scmp.eq.s32.totalorder %s107, 0
      %p772 = por %p770, %p771
      %p773 = scmp.ne.s32.totalorder %s765, %s767
      %p774 = scmp.eq.s32.totalorder %s112, 1
      %p775 = por %p773, %p774
      %p776 = scmp.ne.s32.totalorder %s767, %s768
      %p777 = scmp.eq.s32.totalorder %s112, 0
      %p778 = por %p776, %p777
      %p779 = scmp.ne.s32.totalorder %s767, %s768
      %p780 = scmp.eq.s32.totalorder %s113, 1
      %p781 = por %p779, %p780
      %p783 = scmp.ne.s32.totalorder %s768, %s782
      %p784 = scmp.eq.s32.totalorder %s113, 0
      %p785 = por %p783, %p784
      %s787 = sadd.s32 %s786, 1
      %p790 = scmp.eq.s32.totalorder %s107, 1
      %p791 = scmp.ne.s32.totalorder %s786, %s788
      %p792 = scmp.eq.s32.totalorder %s107, 0
      %p793 = por %p791, %p792
      %p794 = scmp.ne.s32.totalorder %s786, %s788
      %p795 = scmp.eq.s32.totalorder %s112, 1
      %p796 = por %p794, %p795
      %p797 = scmp.ne.s32.totalorder %s788, %s789
      %p798 = scmp.eq.s32.totalorder %s112, 0
      %p799 = por %p797, %p798
      %p800 = scmp.ne.s32.totalorder %s788, %s789
      %p801 = scmp.eq.s32.totalorder %s113, 1
      %p802 = por %p800, %p801
      %p804 = scmp.ne.s32.totalorder %s789, %s803
      %p805 = scmp.eq.s32.totalorder %s113, 0
      %p806 = por %p804, %p805
      %s808 = sadd.s32 %s807, 1
      %p811 = scmp.eq.s32.totalorder %s107, 1
      %p812 = scmp.ne.s32.totalorder %s807, %s809
      %p813 = scmp.eq.s32.totalorder %s107, 0
      %p814 = por %p812, %p813
      %p815 = scmp.ne.s32.totalorder %s807, %s809
      %p816 = scmp.eq.s32.totalorder %s112, 1
      %p817 = por %p815, %p816
      %p818 = scmp.ne.s32.totalorder %s809, %s810
      %p819 = scmp.eq.s32.totalorder %s112, 0
      %p820 = por %p818, %p819
      %p821 = scmp.ne.s32.totalorder %s809, %s810
      %p822 = scmp.eq.s32.totalorder %s113, 1
      %p823 = por %p821, %p822
      %p825 = scmp.ne.s32.totalorder %s810, %s824
      %p826 = scmp.eq.s32.totalorder %s113, 0
      %p827 = por %p825, %p826
      %s829 = sadd.s32 %s828, 1
      %p832 = scmp.eq.s32.totalorder %s107, 1
      %p833 = scmp.ne.s32.totalorder %s828, %s830
      %p834 = scmp.eq.s32.totalorder %s107, 0
      %p835 = por %p833, %p834
      %p836 = scmp.ne.s32.totalorder %s828, %s830
      %p837 = scmp.eq.s32.totalorder %s112, 1
      %p838 = por %p836, %p837
      %p839 = scmp.ne.s32.totalorder %s830, %s831
      %p840 = scmp.eq.s32.totalorder %s112, 0
      %p841 = por %p839, %p840
      %p842 = scmp.ne.s32.totalorder %s830, %s831
      %p843 = scmp.eq.s32.totalorder %s113, 1
      %p844 = por %p842, %p843
      %p846 = scmp.ne.s32.totalorder %s831, %s845
      %p847 = scmp.eq.s32.totalorder %s113, 0
      %p848 = por %p846, %p847
      %s850 = sadd.s32 %s849, 1
      %p853 = scmp.eq.s32.totalorder %s107, 1
      %p854 = scmp.ne.s32.totalorder %s849, %s851
      %p855 = scmp.eq.s32.totalorder %s107, 0
      %p856 = por %p854, %p855
      %p857 = scmp.ne.s32.totalorder %s849, %s851
      %p858 = scmp.eq.s32.totalorder %s112, 1
      %p859 = por %p857, %p858
      %p860 = scmp.ne.s32.totalorder %s851, %s852
      %p861 = scmp.eq.s32.totalorder %s112, 0
      %p862 = por %p860, %p861
      %p863 = scmp.ne.s32.totalorder %s851, %s852
      %p864 = scmp.eq.s32.totalorder %s113, 1
      %p865 = por %p863, %p864
      %p867 = scmp.ne.s32.totalorder %s852, %s866
      %p868 = scmp.eq.s32.totalorder %s113, 0
      %p869 = por %p867, %p868
      %s871 = sadd.s32 %s870, 1
      %p874 = scmp.eq.s32.totalorder %s107, 1
      %p875 = scmp.ne.s32.totalorder %s870, %s872
      %p876 = scmp.eq.s32.totalorder %s107, 0
      %p877 = por %p875, %p876
      %p878 = scmp.ne.s32.totalorder %s870, %s872
      %p879 = scmp.eq.s32.totalorder %s112, 1
      %p880 = por %p878, %p879
      %p881 = scmp.ne.s32.totalorder %s872, %s873
      %p882 = scmp.eq.s32.totalorder %s112, 0
      %p883 = por %p881, %p882
      %p884 = scmp.ne.s32.totalorder %s872, %s873
      %p885 = scmp.eq.s32.totalorder %s113, 1
      %p886 = por %p884, %p885
      %p888 = scmp.ne.s32.totalorder %s873, %s887
      %p889 = scmp.eq.s32.totalorder %s113, 0
      %p890 = por %p888, %p889
      %s892 = sadd.s32 %s891, 1
      %p895 = scmp.eq.s32.totalorder %s107, 1
      %p896 = scmp.ne.s32.totalorder %s891, %s893
      %p897 = scmp.eq.s32.totalorder %s107, 0
      %p898 = por %p896, %p897
      %p899 = scmp.ne.s32.totalorder %s891, %s893
      %p900 = scmp.eq.s32.totalorder %s112, 1
      %p901 = por %p899, %p900
      %p902 = scmp.ne.s32.totalorder %s893, %s894
      %p903 = scmp.eq.s32.totalorder %s112, 0
      %p904 = por %p902, %p903
      %p905 = scmp.ne.s32.totalorder %s893, %s894
      %p906 = scmp.eq.s32.totalorder %s113, 1
      %p907 = por %p905, %p906
      %p909 = scmp.ne.s32.totalorder %s894, %s908
      %p910 = scmp.eq.s32.totalorder %s113, 0
      %p911 = por %p909, %p910
      %s913 = sadd.s32 %s912, 1
      %p916 = scmp.eq.s32.totalorder %s107, 1
      %p917 = scmp.ne.s32.totalorder %s912, %s914
      %p918 = scmp.eq.s32.totalorder %s107, 0
      %p919 = por %p917, %p918
      %p920 = scmp.ne.s32.totalorder %s912, %s914
      %p921 = scmp.eq.s32.totalorder %s112, 1
      %p922 = por %p920, %p921
      %p923 = scmp.ne.s32.totalorder %s914, %s915
      %p924 = scmp.eq.s32.totalorder %s112, 0
      %p925 = por %p923, %p924
      %p926 = scmp.ne.s32.totalorder %s914, %s915
      %p927 = scmp.eq.s32.totalorder %s113, 1
      %p928 = por %p926, %p927
      %p930 = scmp.ne.s32.totalorder %s915, %s929
      %p931 = scmp.eq.s32.totalorder %s113, 0
      %p932 = por %p930, %p931
      %s934 = sadd.s32 %s933, 1
      %p937 = scmp.eq.s32.totalorder %s107, 1
      %p938 = scmp.ne.s32.totalorder %s933, %s935
      %p939 = scmp.eq.s32.totalorder %s107, 0
      %p940 = por %p938, %p939
      %p941 = scmp.ne.s32.totalorder %s933, %s935
      %p942 = scmp.eq.s32.totalorder %s112, 1
      %p943 = por %p941, %p942
      %p944 = scmp.ne.s32.totalorder %s935, %s936
      %p945 = scmp.eq.s32.totalorder %s112, 0
      %p946 = por %p944, %p945
      %p947 = scmp.ne.s32.totalorder %s935, %s936
      %p948 = scmp.eq.s32.totalorder %s113, 1
      %p949 = por %p947, %p948
      %p951 = scmp.ne.s32.totalorder %s936, %s950
      %p952 = scmp.eq.s32.totalorder %s113, 0
      %p953 = por %p951, %p952
      %s955 = sadd.s32 %s954, 1
      %p958 = scmp.eq.s32.totalorder %s107, 1
      %p959 = scmp.ne.s32.totalorder %s954, %s956
      %p960 = scmp.eq.s32.totalorder %s107, 0
      %p961 = por %p959, %p960
      %p962 = scmp.ne.s32.totalorder %s954, %s956
      %p963 = scmp.eq.s32.totalorder %s112, 1
      %p964 = por %p962, %p963
      %p965 = scmp.ne.s32.totalorder %s956, %s957
      %p966 = scmp.eq.s32.totalorder %s112, 0
      %p967 = por %p965, %p966
      %p968 = scmp.ne.s32.totalorder %s956, %s957
      %p969 = scmp.eq.s32.totalorder %s113, 1
      %p970 = por %p968, %p969
      %p972 = scmp.ne.s32.totalorder %s957, %s971
      %p973 = scmp.eq.s32.totalorder %s113, 0
      %p974 = por %p972, %p973
      %s975 = ssub.s32 %s107, %s114
      %p976 = scmp.eq.s32.totalorder %s975, 0
      %s978 = sadd.s32 %s977, 1
      %s979 = scalar_select %p976, %s977, %s978
      %p982 = pneg %p976
      %p983 = scmp.eq.s32.totalorder %s107, 1
      %p984 = por %p982, %p983
      %p985 = scmp.ne.s32.totalorder %s977, %s980
      %p986 = scmp.eq.s32.totalorder %s107, 0
      %p987 = por %p985, %p986
      %p988 = scmp.ne.s32.totalorder %s977, %s980
      %p989 = scmp.eq.s32.totalorder %s112, 1
      %p990 = por %p988, %p989
      %p991 = scmp.ne.s32.totalorder %s980, %s981
      %p992 = scmp.eq.s32.totalorder %s112, 0
      %p993 = por %p991, %p992
      %p994 = scmp.ne.s32.totalorder %s980, %s981
      %p995 = scmp.eq.s32.totalorder %s113, 1
      %p996 = por %p994, %p995
      %p998 = scmp.ne.s32.totalorder %s981, %s997
      %p999 = scmp.eq.s32.totalorder %s113, 0
      %p1000 = por %p998, %p999
      %s1001 = ssub.s32 %s107, %s114
      %p1002 = scmp.eq.s32.totalorder %s1001, 0
      %s1004 = sadd.s32 %s1003, 1
      %s1005 = scalar_select %p1002, %s1003, %s1004
      %p1008 = pneg %p1002
      %p1009 = scmp.eq.s32.totalorder %s107, 1
      %p1010 = por %p1008, %p1009
      %p1011 = scmp.ne.s32.totalorder %s1003, %s1006
      %p1012 = scmp.eq.s32.totalorder %s107, 0
      %p1013 = por %p1011, %p1012
      %p1014 = scmp.ne.s32.totalorder %s1003, %s1006
      %p1015 = scmp.eq.s32.totalorder %s112, 1
      %p1016 = por %p1014, %p1015
      %p1017 = scmp.ne.s32.totalorder %s1006, %s1007
      %p1018 = scmp.eq.s32.totalorder %s112, 0
      %p1019 = por %p1017, %p1018
      %p1020 = scmp.ne.s32.totalorder %s1006, %s1007
      %p1021 = scmp.eq.s32.totalorder %s113, 1
      %p1022 = por %p1020, %p1021
      %p1024 = scmp.ne.s32.totalorder %s1007, %s1023
      %p1025 = scmp.eq.s32.totalorder %s113, 0
      %p1026 = por %p1024, %p1025
      %p1027 = scmp.le.s32.totalorder 1, %s107
      %p1028 = scmp.lt.s32.totalorder %s107, 3
      %p1029 = pnand %p1027, %p1028
      %p1030 = pneg %p1029
      // Predicated region
      $region9: #{tpu_custom_call.1} parent=5 // pred_check
        _
      $region10: #{tpu_custom_call.1} parent=5 // pred_check_branch
        %1032 = sbr.rel (%p1029) target = $region12
      $region11: #{tpu_custom_call.1} parent=5 // pred_region
        %s1033 = ssub.s32 %s107, 1
        // Predicated region
        $region13: #{tpu_custom_call.1} parent=11 // pred_check
          %p1034 = pneg %p232
        $region14: #{tpu_custom_call.1} parent=11 // pred_check_branch
          %1036 = sbr.rel (%p1034) target = $region16
        $region15: #{tpu_custom_call.1} parent=11 // pred_region
          _
        $region16: #{tpu_custom_call.1} parent=11 // pred_fallthru
          _
        // Predicated region
        $region17: #{tpu_custom_call.1} parent=11 // pred_check
          %p1037 = pneg %p253
        $region18: #{tpu_custom_call.1} parent=11 // pred_check_branch
          %1039 = sbr.rel (%p1037) target = $region20
        $region19: #{tpu_custom_call.1} parent=11 // pred_region
          %1041 = vsyncadd [#allocation9], 0
          %s1043 = sshll.u32 %s11, 4
          %s1044 = int_to_ptr.hbm [resolvable:$true] %s1043
          %s1045 = sshll.u32 [#allocation10], 4
          %s1046 = int_to_ptr.vmem [resolvable:$true] %s1045
          %1048 = dma.hbm_to_vmem [thread:$0]  %s1044, 16, %s1046, [#allocation9]
        $region20: #{tpu_custom_call.1} parent=11 // pred_fallthru
          _
        // Predicated region
        $region21: #{tpu_custom_call.1} parent=11 // pred_check
          %p1049 = pneg %p274
        $region22: #{tpu_custom_call.1} parent=11 // pred_check_branch
          %1051 = sbr.rel (%p1049) target = $region24
        $region23: #{tpu_custom_call.1} parent=11 // pred_region
          _
        $region24: #{tpu_custom_call.1} parent=11 // pred_fallthru
          _
        // Predicated region
        $region25: #{tpu_custom_call.1} parent=11 // pred_check
          %p1052 = pneg %p295
        $region26: #{tpu_custom_call.1} parent=11 // pred_check_branch
          %1054 = sbr.rel (%p1052) target = $region28
        $region27: #{tpu_custom_call.1} parent=11 // pred_region
          _
        $region28: #{tpu_custom_call.1} parent=11 // pred_fallthru
          _
        // Predicated region
        $region29: #{tpu_custom_call.1} parent=11 // pred_check
          %p1055 = pneg %p316
        $region30: #{tpu_custom_call.1} parent=11 // pred_check_branch
          %1057 = sbr.rel (%p1055) target = $region32
        $region31: #{tpu_custom_call.1} parent=11 // pred_region
          %1059 = vsyncadd [#allocation12], 0
          %s1060 = sshll.u32 %s17, 4
          %s1061 = int_to_ptr.hbm [resolvable:$true] %s1060
          %s1062 = sshll.u32 [#allocation11], 4
          %s1063 = int_to_ptr.vmem [resolvable:$true] %s1062
          %1068 = dma.hbm_to_vmem [thread:$0]  %s1061, 1024, %s1063, [#allocation12], 64, 64, 4
        $region32: #{tpu_custom_call.1} parent=11 // pred_fallthru
          _
        // Predicated region
        $region33: #{tpu_custom_call.1} parent=11 // pred_check
          %p1069 = pneg %p337
        $region34: #{tpu_custom_call.1} parent=11 // pred_check_branch
          %1071 = sbr.rel (%p1069) target = $region36
        $region35: #{tpu_custom_call.1} parent=11 // pred_region
          _
        $region36: #{tpu_custom_call.1} parent=11 // pred_fallthru
          _
        // Predicated region
        $region37: #{tpu_custom_call.1} parent=11 // pred_check
          %p1072 = pneg %p358
        $region38: #{tpu_custom_call.1} parent=11 // pred_check_branch
          %1074 = sbr.rel (%p1072) target = $region40
        $region39: #{tpu_custom_call.1} parent=11 // pred_region
          %1076 = vsyncadd [#allocation12], 0
          %s1077 = sshll.u32 %s21, 4
          %s1078 = int_to_ptr.hbm [resolvable:$true] %s1077
          %s1079 = sshll.u32 [#allocation13], 4
          %s1080 = int_to_ptr.vmem [resolvable:$true] %s1079
          %1085 = dma.hbm_to_vmem [thread:$0]  %s1078, 1024, %s1080, [#allocation12], 64, 64, 4
        $region40: #{tpu_custom_call.1} parent=11 // pred_fallthru
          _
        // Predicated region
        $region41: #{tpu_custom_call.1} parent=11 // pred_check
          %p1086 = pneg %p379
        $region42: #{tpu_custom_call.1} parent=11 // pred_check_branch
          %1088 = sbr.rel (%p1086) target = $region44
        $region43: #{tpu_custom_call.1} parent=11 // pred_region
          _
        $region44: #{tpu_custom_call.1} parent=11 // pred_fallthru
          _
        // Predicated region
        $region45: #{tpu_custom_call.1} parent=11 // pred_check
          %p1089 = pneg %p400
        $region46: #{tpu_custom_call.1} parent=11 // pred_check_branch
          %1091 = sbr.rel (%p1089) target = $region48
        $region47: #{tpu_custom_call.1} parent=11 // pred_region
          _
        $region48: #{tpu_custom_call.1} parent=11 // pred_fallthru
          _
        // Predicated region
        $region49: #{tpu_custom_call.1} parent=11 // pred_check
          %p1092 = pneg %p421
        $region50: #{tpu_custom_call.1} parent=11 // pred_check_branch
          %1094 = sbr.rel (%p1092) target = $region52
        $region51: #{tpu_custom_call.1} parent=11 // pred_region
          _
        $region52: #{tpu_custom_call.1} parent=11 // pred_fallthru
          _
        // Predicated region
        $region53: #{tpu_custom_call.1} parent=11 // pred_check
          %p1095 = pneg %p442
        $region54: #{tpu_custom_call.1} parent=11 // pred_check_branch
          %1097 = sbr.rel (%p1095) target = $region56
        $region55: #{tpu_custom_call.1} parent=11 // pred_region
          _
        $region56: #{tpu_custom_call.1} parent=11 // pred_fallthru
          _
        // Predicated region
        $region57: #{tpu_custom_call.1} parent=11 // pred_check
          %p1098 = pneg %p463
        $region58: #{tpu_custom_call.1} parent=11 // pred_check_branch
          %1100 = sbr.rel (%p1098) target = $region60
        $region59: #{tpu_custom_call.1} parent=11 // pred_region
          _
        $region60: #{tpu_custom_call.1} parent=11 // pred_fallthru
          _
        // Predicated region
        $region61: #{tpu_custom_call.1} parent=11 // pred_check
          %p1101 = pneg %p484
        $region62: #{tpu_custom_call.1} parent=11 // pred_check_branch
          %1103 = sbr.rel (%p1101) target = $region64
        $region63: #{tpu_custom_call.1} parent=11 // pred_region
          _
        $region64: #{tpu_custom_call.1} parent=11 // pred_fallthru
          _
        // Predicated region
        $region65: #{tpu_custom_call.1} parent=11 // pred_check
          %p1104 = pneg %p505
        $region66: #{tpu_custom_call.1} parent=11 // pred_check_branch
          %1106 = sbr.rel (%p1104) target = $region68
        $region67: #{tpu_custom_call.1} parent=11 // pred_region
          _
        $region68: #{tpu_custom_call.1} parent=11 // pred_fallthru
          _
        // Predicated region
        $region69: #{tpu_custom_call.1} parent=11 // pred_check
          %p1107 = pneg %p526
        $region70: #{tpu_custom_call.1} parent=11 // pred_check_branch
          %1109 = sbr.rel (%p1107) target = $region72
        $region71: #{tpu_custom_call.1} parent=11 // pred_region
          _
        $region72: #{tpu_custom_call.1} parent=11 // pred_fallthru
          _
        // Predicated region
        $region73: #{tpu_custom_call.1} parent=11 // pred_check
          %p1110 = pneg %p547
        $region74: #{tpu_custom_call.1} parent=11 // pred_check_branch
          %1112 = sbr.rel (%p1110) target = $region76
        $region75: #{tpu_custom_call.1} parent=11 // pred_region
          _
        $region76: #{tpu_custom_call.1} parent=11 // pred_fallthru
          _
        // Predicated region
        $region77: #{tpu_custom_call.1} parent=11 // pred_check
          %p1113 = pneg %p568
        $region78: #{tpu_custom_call.1} parent=11 // pred_check_branch
          %1115 = sbr.rel (%p1113) target = $region80
        $region79: #{tpu_custom_call.1} parent=11 // pred_region
          _
        $region80: #{tpu_custom_call.1} parent=11 // pred_fallthru
          _
        // Predicated region
        $region81: #{tpu_custom_call.1} parent=11 // pred_check
          %p1116 = pneg %p589
        $region82: #{tpu_custom_call.1} parent=11 // pred_check_branch
          %1118 = sbr.rel (%p1116) target = $region84
        $region83: #{tpu_custom_call.1} parent=11 // pred_region
          _
        $region84: #{tpu_custom_call.1} parent=11 // pred_fallthru
          _
        // Predicated region
        $region85: #{tpu_custom_call.1} parent=11 // pred_check
          %p1119 = pneg %p610
        $region86: #{tpu_custom_call.1} parent=11 // pred_check_branch
          %1121 = sbr.rel (%p1119) target = $region88
        $region87: #{tpu_custom_call.1} parent=11 // pred_region
          _
        $region88: #{tpu_custom_call.1} parent=11 // pred_fallthru
          _
        // Predicated region
        $region89: #{tpu_custom_call.1} parent=11 // pred_check
          %p1122 = pneg %p631
        $region90: #{tpu_custom_call.1} parent=11 // pred_check_branch
          %1124 = sbr.rel (%p1122) target = $region92
        $region91: #{tpu_custom_call.1} parent=11 // pred_region
          _
        $region92: #{tpu_custom_call.1} parent=11 // pred_fallthru
          _
        // Predicated region
        $region93: #{tpu_custom_call.1} parent=11 // pred_check
          %p1125 = pneg %p652
        $region94: #{tpu_custom_call.1} parent=11 // pred_check_branch
          %1127 = sbr.rel (%p1125) target = $region96
        $region95: #{tpu_custom_call.1} parent=11 // pred_region
          _
        $region96: #{tpu_custom_call.1} parent=11 // pred_fallthru
          _
        // Predicated region
        $region97: #{tpu_custom_call.1} parent=11 // pred_check
          %p1128 = pneg %p673
        $region98: #{tpu_custom_call.1} parent=11 // pred_check_branch
          %1130 = sbr.rel (%p1128) target = $region100
        $region99: #{tpu_custom_call.1} parent=11 // pred_region
          _
        $region100: #{tpu_custom_call.1} parent=11 // pred_fallthru
          _
        // Predicated region
        $region101: #{tpu_custom_call.1} parent=11 // pred_check
          %p1131 = pneg %p694
        $region102: #{tpu_custom_call.1} parent=11 // pred_check_branch
          %1133 = sbr.rel (%p1131) target = $region104
        $region103: #{tpu_custom_call.1} parent=11 // pred_region
          %1135 = vsyncadd [#allocation15], 0
          %s1136 = sshll.u32 %s53, 4
          %s1137 = int_to_ptr.hbm [resolvable:$true] %s1136
          %s1138 = sshll.u32 [#allocation14], 4
          %s1139 = int_to_ptr.vmem [resolvable:$true] %s1138
          %1144 = dma.hbm_to_vmem [thread:$0]  %s1137, 512, %s1139, [#allocation15], 64, 64, 4
        $region104: #{tpu_custom_call.1} parent=11 // pred_fallthru
          _
        // Predicated region
        $region105: #{tpu_custom_call.1} parent=11 // pred_check
          %p1145 = pneg %p715
        $region106: #{tpu_custom_call.1} parent=11 // pred_check_branch
          %1147 = sbr.rel (%p1145) target = $region108
        $region107: #{tpu_custom_call.1} parent=11 // pred_region
          _
        $region108: #{tpu_custom_call.1} parent=11 // pred_fallthru
          _
        // Predicated region
        $region109: #{tpu_custom_call.1} parent=11 // pred_check
          %p1148 = pneg %p736
        $region110: #{tpu_custom_call.1} parent=11 // pred_check_branch
          %1150 = sbr.rel (%p1148) target = $region112
        $region111: #{tpu_custom_call.1} parent=11 // pred_region
          _
        $region112: #{tpu_custom_call.1} parent=11 // pred_fallthru
          _
        // Predicated region
        $region113: #{tpu_custom_call.1} parent=11 // pred_check
          %p1151 = pneg %p757
        $region114: #{tpu_custom_call.1} parent=11 // pred_check_branch
          %1153 = sbr.rel (%p1151) target = $region116
        $region115: #{tpu_custom_call.1} parent=11 // pred_region
          _
        $region116: #{tpu_custom_call.1} parent=11 // pred_fallthru
          _
        // Predicated region
        $region117: #{tpu_custom_call.1} parent=11 // pred_check
          %p1154 = pneg %p778
        $region118: #{tpu_custom_call.1} parent=11 // pred_check_branch
          %1156 = sbr.rel (%p1154) target = $region120
        $region119: #{tpu_custom_call.1} parent=11 // pred_region
          _
        $region120: #{tpu_custom_call.1} parent=11 // pred_fallthru
          _
        // Predicated region
        $region121: #{tpu_custom_call.1} parent=11 // pred_check
          %p1157 = pneg %p799
        $region122: #{tpu_custom_call.1} parent=11 // pred_check_branch
          %1159 = sbr.rel (%p1157) target = $region124
        $region123: #{tpu_custom_call.1} parent=11 // pred_region
          _
        $region124: #{tpu_custom_call.1} parent=11 // pred_fallthru
          _
        // Predicated region
        $region125: #{tpu_custom_call.1} parent=11 // pred_check
          %p1160 = pneg %p820
        $region126: #{tpu_custom_call.1} parent=11 // pred_check_branch
          %1162 = sbr.rel (%p1160) target = $region128
        $region127: #{tpu_custom_call.1} parent=11 // pred_region
          _
        $region128: #{tpu_custom_call.1} parent=11 // pred_fallthru
          _
        // Predicated region
        $region129: #{tpu_custom_call.1} parent=11 // pred_check
          %p1163 = pneg %p841
        $region130: #{tpu_custom_call.1} parent=11 // pred_check_branch
          %1165 = sbr.rel (%p1163) target = $region132
        $region131: #{tpu_custom_call.1} parent=11 // pred_region
          _
        $region132: #{tpu_custom_call.1} parent=11 // pred_fallthru
          _
        // Predicated region
        $region133: #{tpu_custom_call.1} parent=11 // pred_check
          %p1166 = pneg %p862
        $region134: #{tpu_custom_call.1} parent=11 // pred_check_branch
          %1168 = sbr.rel (%p1166) target = $region136
        $region135: #{tpu_custom_call.1} parent=11 // pred_region
          _
        $region136: #{tpu_custom_call.1} parent=11 // pred_fallthru
          _
        // Predicated region
        $region137: #{tpu_custom_call.1} parent=11 // pred_check
          %p1169 = pneg %p883
        $region138: #{tpu_custom_call.1} parent=11 // pred_check_branch
          %1171 = sbr.rel (%p1169) target = $region140
        $region139: #{tpu_custom_call.1} parent=11 // pred_region
          _
        $region140: #{tpu_custom_call.1} parent=11 // pred_fallthru
          _
        // Predicated region
        $region141: #{tpu_custom_call.1} parent=11 // pred_check
          %p1172 = pneg %p904
        $region142: #{tpu_custom_call.1} parent=11 // pred_check_branch
          %1174 = sbr.rel (%p1172) target = $region144
        $region143: #{tpu_custom_call.1} parent=11 // pred_region
          _
        $region144: #{tpu_custom_call.1} parent=11 // pred_fallthru
          _
        // Predicated region
        $region145: #{tpu_custom_call.1} parent=11 // pred_check
          %p1175 = pneg %p925
        $region146: #{tpu_custom_call.1} parent=11 // pred_check_branch
          %1177 = sbr.rel (%p1175) target = $region148
        $region147: #{tpu_custom_call.1} parent=11 // pred_region
          _
        $region148: #{tpu_custom_call.1} parent=11 // pred_fallthru
          _
        // Predicated region
        $region149: #{tpu_custom_call.1} parent=11 // pred_check
          %p1178 = pneg %p946
        $region150: #{tpu_custom_call.1} parent=11 // pred_check_branch
          %1180 = sbr.rel (%p1178) target = $region152
        $region151: #{tpu_custom_call.1} parent=11 // pred_region
          _
        $region152: #{tpu_custom_call.1} parent=11 // pred_fallthru
          _
        // Predicated region
        $region153: #{tpu_custom_call.1} parent=11 // pred_check
          %p1181 = pneg %p967
        $region154: #{tpu_custom_call.1} parent=11 // pred_check_branch
          %1183 = sbr.rel (%p1181) target = $region156
        $region155: #{tpu_custom_call.1} parent=11 // pred_region
          _
        $region156: #{tpu_custom_call.1} parent=11 // pred_fallthru
          _
      $region12: #{tpu_custom_call.1} parent=5 // pred_fallthru
        _
      %p1184 = scmp.lt.s32.totalorder %s107, 2
      // Predicated region
      $region157: #{tpu_custom_call.1} parent=5 // pred_check
        %p1185 = pneg %p1184
      $region158: #{tpu_custom_call.1} parent=5 // pred_check_branch
        %1187 = sbr.rel (%p1185) target = $region160
      $region159: #{tpu_custom_call.1} parent=5 // pred_region
        // Predicated region
        $region161: #{tpu_custom_call.1} parent=159 // pred_check
          %p1188 = pneg %p127
        $region162: #{tpu_custom_call.1} parent=159 // pred_check_branch
          %1190 = sbr.rel (%p1188) target = $region164
        $region163: #{tpu_custom_call.1} parent=159 // pred_region
          %s1191 = sand.u32 %s117, 1
          %s1192 = scalar_lea.sflag [#allocation3], %s1191
          %s1193 = sand.u32 %s117, 1
          %s1194 = smul.addr %s1193, 8
          %s1195 = scalar_lea.vmem [#allocation2], %s1194
          %1197 = vsyncadd %s1192, 0
          %s1198 = smul.addr %s107, 8
          %s1199 = scalar_lea.hbm %s1, %s1198
          %s1201 = sshll.u32 %s1199, 4
          %s1202 = int_to_ptr.hbm [resolvable:$true] %s1201
          %s1203 = sshll.u32 %s1195, 4
          %s1204 = int_to_ptr.vmem [resolvable:$true] %s1203
          %1206 = dma.hbm_to_vmem [thread:$0]  %s1202, 128, %s1204, %s1192
        $region164: #{tpu_custom_call.1} parent=159 // pred_fallthru
          _
        // Predicated region
        $region165: #{tpu_custom_call.1} parent=159 // pred_check
          %p1207 = pneg %p153
        $region166: #{tpu_custom_call.1} parent=159 // pred_check_branch
          %1209 = sbr.rel (%p1207) target = $region168
        $region167: #{tpu_custom_call.1} parent=159 // pred_region
          %s1210 = sand.u32 %s107, 1
          %s1211 = scalar_lea.sflag [#allocation6], %s1210
          %s1212 = sand.u32 %s143, 1
          %s1213 = smul.addr %s1212, 128
          %s1214 = scalar_lea.vmem [#allocation5], %s1213
          %1216 = vsyncadd %s1211, 0
          %s1217 = smul.addr %s107, 16
          %s1218 = smul.addr %s1217, 8
          %s1219 = scalar_lea.hbm %s3, %s1218
          %s1220 = sshll.u32 %s1219, 4
          %s1221 = int_to_ptr.hbm [resolvable:$true] %s1220
          %s1222 = sshll.u32 %s1214, 4
          %s1223 = int_to_ptr.vmem [resolvable:$true] %s1222
          %1228 = dma.hbm_to_vmem [thread:$0]  %s1221, 2048, %s1223, %s1211, 128, 128, 8
        $region168: #{tpu_custom_call.1} parent=159 // pred_fallthru
          _
        // Predicated region
        $region169: #{tpu_custom_call.1} parent=159 // pred_check
          %p1229 = pneg %p179
        $region170: #{tpu_custom_call.1} parent=159 // pred_check_branch
          %1231 = sbr.rel (%p1229) target = $region172
        $region171: #{tpu_custom_call.1} parent=159 // pred_region
          %s1232 = sand.u32 %s107, 1
          %s1233 = scalar_lea.sflag [#allocation6], %s1232
          %s1234 = sand.u32 %s169, 1
          %s1235 = smul.addr %s1234, 8
          %s1236 = scalar_lea.vmem [#allocation7], %s1235
          %1238 = vsyncadd %s1233, 0
          %s1239 = smul.addr %s107, 8
          %s1240 = scalar_lea.hbm %s5, %s1239
          %s1242 = sshll.u32 %s1240, 4
          %s1243 = int_to_ptr.hbm [resolvable:$true] %s1242
          %s1244 = sshll.u32 %s1236, 4
          %s1245 = int_to_ptr.vmem [resolvable:$true] %s1244
          %1247 = dma.hbm_to_vmem [thread:$0]  %s1243, 128, %s1245, %s1233
        $region172: #{tpu_custom_call.1} parent=159 // pred_fallthru
          _
        // Predicated region
        $region173: #{tpu_custom_call.1} parent=159 // pred_check
          %p1248 = pneg %p205
        $region174: #{tpu_custom_call.1} parent=159 // pred_check_branch
          %1250 = sbr.rel (%p1248) target = $region176
        $region175: #{tpu_custom_call.1} parent=159 // pred_region
          %s1251 = sand.u32 %s107, 1
          %s1252 = scalar_lea.sflag [#allocation9], %s1251
          %s1253 = sand.u32 %s195, 1
          %s1254 = smul.addr %s1253, 128
          %s1255 = scalar_lea.vmem [#allocation8], %s1254
          %1257 = vsyncadd %s1252, 0
          %s1258 = smul.addr %s107, 16
          %s1259 = smul.addr %s1258, 8
          %s1260 = scalar_lea.hbm %s7, %s1259
          %s1261 = sshll.u32 %s1260, 4
          %s1262 = int_to_ptr.hbm [resolvable:$true] %s1261
          %s1263 = sshll.u32 %s1255, 4
          %s1264 = int_to_ptr.vmem [resolvable:$true] %s1263
          %1269 = dma.hbm_to_vmem [thread:$0]  %s1262, 2048, %s1264, %s1252, 128, 128, 8
        $region176: #{tpu_custom_call.1} parent=159 // pred_fallthru
          _
      $region160: #{tpu_custom_call.1} parent=5 // pred_fallthru
        _
      %p1270 = scmp.le.s32.totalorder 1, %s107
      %p1271 = scmp.lt.s32.totalorder %s107, 3
      %p1272 = pnand %p1270, %p1271
      %p1273 = pneg %p1272
      // Predicated region
      $region177: #{tpu_custom_call.1} parent=5 // pred_check
        _
      $region178: #{tpu_custom_call.1} parent=5 // pred_check_branch
        %1275 = sbr.rel (%p1272) target = $region180
      $region179: #{tpu_custom_call.1} parent=5 // pred_region
        %s1276 = ssub.s32 %s107, 1
        %s1277 = sand.u32 %s120, 1
        %s1278 = scalar_lea.sflag [#allocation3], %s1277
        %s1279 = sand.u32 %s120, 1
        %s1280 = smul.addr %s1279, 8
        %s1281 = scalar_lea.vmem [#allocation2], %s1280
        // Predicated region
        $region181: #{tpu_custom_call.1} parent=179 // pred_check
          %p1282 = pneg %p133
        $region182: #{tpu_custom_call.1} parent=179 // pred_check_branch
          %1284 = sbr.rel (%p1282) target = $region184
        $region183: #{tpu_custom_call.1} parent=179 // pred_region
          %1286 = dma.done %s1278, 128
        $region184: #{tpu_custom_call.1} parent=179 // pred_fallthru
          _
        %s1287 = sand.u32 %s112, 1
        %s1288 = scalar_lea.sflag [#allocation6], %s1287
        %s1289 = sand.u32 %s146, 1
        %s1290 = smul.addr %s1289, 128
        %s1291 = scalar_lea.vmem [#allocation5], %s1290
        // Predicated region
        $region185: #{tpu_custom_call.1} parent=179 // pred_check
          %p1292 = pneg %p159
        $region186: #{tpu_custom_call.1} parent=179 // pred_check_branch
          %1294 = sbr.rel (%p1292) target = $region188
        $region187: #{tpu_custom_call.1} parent=179 // pred_region
          %1296 = dma.done %s1288, 2048
        $region188: #{tpu_custom_call.1} parent=179 // pred_fallthru
          _
        %s1297 = sand.u32 %s112, 1
        %s1298 = scalar_lea.sflag [#allocation6], %s1297
        %s1299 = sand.u32 %s172, 1
        %s1300 = smul.addr %s1299, 8
        %s1301 = scalar_lea.vmem [#allocation7], %s1300
        // Predicated region
        $region189: #{tpu_custom_call.1} parent=179 // pred_check
          %p1302 = pneg %p185
        $region190: #{tpu_custom_call.1} parent=179 // pred_check_branch
          %1304 = sbr.rel (%p1302) target = $region192
        $region191: #{tpu_custom_call.1} parent=179 // pred_region
          %1306 = dma.done %s1298, 128
        $region192: #{tpu_custom_call.1} parent=179 // pred_fallthru
          _
        %s1307 = sand.u32 %s112, 1
        %s1308 = scalar_lea.sflag [#allocation9], %s1307
        %s1309 = sand.u32 %s198, 1
        %s1310 = smul.addr %s1309, 128
        %s1311 = scalar_lea.vmem [#allocation8], %s1310
        // Predicated region
        $region193: #{tpu_custom_call.1} parent=179 // pred_check
          %p1312 = pneg %p211
        $region194: #{tpu_custom_call.1} parent=179 // pred_check_branch
          %1314 = sbr.rel (%p1312) target = $region196
        $region195: #{tpu_custom_call.1} parent=179 // pred_region
          %1316 = dma.done %s1308, 2048
        $region196: #{tpu_custom_call.1} parent=179 // pred_fallthru
          _
        // Predicated region
        $region197: #{tpu_custom_call.1} parent=179 // pred_check
          %p1317 = pneg %p253
        $region198: #{tpu_custom_call.1} parent=179 // pred_check_branch
          %1319 = sbr.rel (%p1317) target = $region200
        $region199: #{tpu_custom_call.1} parent=179 // pred_region
          %1321 = dma.done [#allocation9], 16
        $region200: #{tpu_custom_call.1} parent=179 // pred_fallthru
          _
        // Predicated region
        $region201: #{tpu_custom_call.1} parent=179 // pred_check
          %p1322 = pneg %p316
        $region202: #{tpu_custom_call.1} parent=179 // pred_check_branch
          %1324 = sbr.rel (%p1322) target = $region204
        $region203: #{tpu_custom_call.1} parent=179 // pred_region
          %1326 = dma.done [#allocation12], 1024
        $region204: #{tpu_custom_call.1} parent=179 // pred_fallthru
          _
        // Predicated region
        $region205: #{tpu_custom_call.1} parent=179 // pred_check
          %p1327 = pneg %p358
        $region206: #{tpu_custom_call.1} parent=179 // pred_check_branch
          %1329 = sbr.rel (%p1327) target = $region208
        $region207: #{tpu_custom_call.1} parent=179 // pred_region
          %1331 = dma.done [#allocation12], 1024
        $region208: #{tpu_custom_call.1} parent=179 // pred_fallthru
          _
        // Predicated region
        $region209: #{tpu_custom_call.1} parent=179 // pred_check
          %p1332 = pneg %p694
        $region210: #{tpu_custom_call.1} parent=179 // pred_check_branch
          %1334 = sbr.rel (%p1332) target = $region212
        $region211: #{tpu_custom_call.1} parent=179 // pred_region
          %1336 = dma.done [#allocation15], 512
        $region212: #{tpu_custom_call.1} parent=179 // pred_fallthru
          _
        %s1337 = sand.u32 %s120, 1
        %s1338 = scalar_lea.sflag [#allocation3], %s1337
        %s1339 = sand.u32 %s120, 1
        %s1340 = smul.addr %s1339, 8
        %s1341 = scalar_lea.vmem [#allocation2], %s1340
        %p1342 = pneg %p133
        %p1343 = pneg %p130
        %s1344 = sand.u32 %s112, 1
        %s1345 = scalar_lea.sflag [#allocation6], %s1344
        %s1346 = sand.u32 %s146, 1
        %s1347 = smul.addr %s1346, 128
        %s1348 = scalar_lea.vmem [#allocation5], %s1347
        %p1349 = pneg %p159
        %p1350 = pneg %p156
        %s1351 = sand.u32 %s112, 1
        %s1352 = scalar_lea.sflag [#allocation6], %s1351
        %s1353 = sand.u32 %s172, 1
        %s1354 = smul.addr %s1353, 8
        %s1355 = scalar_lea.vmem [#allocation7], %s1354
        %p1356 = pneg %p185
        %p1357 = pneg %p182
        %s1358 = sand.u32 %s112, 1
        %s1359 = scalar_lea.sflag [#allocation9], %s1358
        %s1360 = sand.u32 %s198, 1
        %s1361 = smul.addr %s1360, 128
        %s1362 = scalar_lea.vmem [#allocation8], %s1361
        %p1363 = pneg %p211
        %p1364 = pneg %p208
        %p1365 = pneg %p232
        %p1366 = pneg %p229
        %p1367 = pneg %p253
        %p1368 = pneg %p250
        %p1369 = pneg %p274
        %p1370 = pneg %p271
        %p1371 = pneg %p295
        %p1372 = pneg %p292
        %p1373 = pneg %p316
        %p1374 = pneg %p313
        %p1375 = pneg %p337
        %p1376 = pneg %p334
        %p1377 = pneg %p358
        %p1378 = pneg %p355
        %p1379 = pneg %p379
        %p1380 = pneg %p376
        %p1381 = pneg %p400
        %p1382 = pneg %p397
        %p1383 = pneg %p421
        %p1384 = pneg %p418
        %p1385 = pneg %p442
        %p1386 = pneg %p439
        %p1387 = pneg %p463
        %p1388 = pneg %p460
        %p1389 = pneg %p484
        %p1390 = pneg %p481
        %p1391 = pneg %p505
        %p1392 = pneg %p502
        %p1393 = pneg %p526
        %p1394 = pneg %p523
        %p1395 = pneg %p547
        %p1396 = pneg %p544
        %p1397 = pneg %p568
        %p1398 = pneg %p565
        %p1399 = pneg %p589
        %p1400 = pneg %p586
        %p1401 = pneg %p610
        %p1402 = pneg %p607
        %p1403 = pneg %p631
        %p1404 = pneg %p628
        %p1405 = pneg %p652
        %p1406 = pneg %p649
        %p1407 = pneg %p673
        %p1408 = pneg %p670
        %p1409 = pneg %p694
        %p1410 = pneg %p691
        %p1411 = pneg %p715
        %p1412 = pneg %p712
        %p1413 = pneg %p736
        %p1414 = pneg %p733
        %p1415 = pneg %p757
        %p1416 = pneg %p754
        %p1417 = pneg %p778
        %p1418 = pneg %p775
        %p1419 = pneg %p799
        %p1420 = pneg %p796
        %p1421 = pneg %p820
        %p1422 = pneg %p817
        %p1423 = pneg %p841
        %p1424 = pneg %p838
        %p1425 = pneg %p862
        %p1426 = pneg %p859
        %p1427 = pneg %p883
        %p1428 = pneg %p880
        %p1429 = pneg %p904
        %p1430 = pneg %p901
        %p1431 = pneg %p925
        %p1432 = pneg %p922
        %p1433 = pneg %p946
        %p1434 = pneg %p943
        %p1435 = pneg %p967
        %p1436 = pneg %p964
        %p1437 = pneg %p993
        %p1438 = pneg %p990
        %s1439 = sand.u32 %s980, 1
        %s1440 = scalar_lea.sflag [#allocation4], %s1439
        %s1441 = sand.u32 %s980, 1
        %s1442 = smul.addr %s1441, 8
        %s1443 = scalar_lea.vmem [#allocation16], %s1442
        %p1444 = pneg %p1019
        %p1445 = pneg %p1016
        %s1446 = sand.u32 %s1006, 1
        %s1447 = scalar_lea.sflag [#allocation18], %s1446
        %s1448 = sand.u32 %s1006, 1
        %s1449 = smul.addr %s1448, 128
        %s1450 = scalar_lea.vmem [#allocation17], %s1449
        %v1452 = vld [vmem:[%s1281] sm:$0xff]
        %v1453 = vld [vmem:[%s1291] sm:$0xff]
        %v1454 = vld [vmem:[%s1291 + $0x8] sm:$0xff]
        %v1455 = vld [vmem:[%s1291 + $0x10] sm:$0xff]
        %v1456 = vld [vmem:[%s1291 + $0x18] sm:$0xff]
        %v1457 = vld [vmem:[%s1291 + $0x20] sm:$0xff]
        %v1458 = vld [vmem:[%s1291 + $0x28] sm:$0xff]
        %v1459 = vld [vmem:[%s1291 + $0x30] sm:$0xff]
        %v1460 = vld [vmem:[%s1291 + $0x38] sm:$0xff]
        %v1461 = vld [vmem:[%s1291 + $0x40] sm:$0xff]
        %v1462 = vld [vmem:[%s1291 + $0x48] sm:$0xff]
        %v1463 = vld [vmem:[%s1291 + $0x50] sm:$0xff]
        %v1464 = vld [vmem:[%s1291 + $0x58] sm:$0xff]
        %v1465 = vld [vmem:[%s1291 + $0x60] sm:$0xff]
        %v1466 = vld [vmem:[%s1291 + $0x68] sm:$0xff]
        %v1467 = vld [vmem:[%s1291 + $0x70] sm:$0xff]
        %v1468 = vld [vmem:[%s1291 + $0x78] sm:$0xff]
        %v1469 = vld [vmem:[%s1301] sm:$0xff]
        %v1470 = vld [vmem:[%s1311] sm:$0xff]
        %v1471 = vld [vmem:[%s1311 + $0x8] sm:$0xff]
        %v1472 = vld [vmem:[%s1311 + $0x10] sm:$0xff]
        %v1473 = vld [vmem:[%s1311 + $0x18] sm:$0xff]
        %v1474 = vld [vmem:[%s1311 + $0x20] sm:$0xff]
        %v1475 = vld [vmem:[%s1311 + $0x28] sm:$0xff]
        %v1476 = vld [vmem:[%s1311 + $0x30] sm:$0xff]
        %v1477 = vld [vmem:[%s1311 + $0x38] sm:$0xff]
        %v1478 = vld [vmem:[%s1311 + $0x40] sm:$0xff]
        %v1479 = vld [vmem:[%s1311 + $0x48] sm:$0xff]
        %v1480 = vld [vmem:[%s1311 + $0x50] sm:$0xff]
        %v1481 = vld [vmem:[%s1311 + $0x58] sm:$0xff]
        %v1482 = vld [vmem:[%s1311 + $0x60] sm:$0xff]
        %v1483 = vld [vmem:[%s1311 + $0x68] sm:$0xff]
        %v1484 = vld [vmem:[%s1311 + $0x70] sm:$0xff]
        %v1485 = vld [vmem:[%s1311 + $0x78] sm:$0xff]
        %v1486 = vadd.f32 %v1452, %v1469
        %v1487 = vld [vmem:[%s9] sm:$0xf]
        %v1488 = vld [vmem:[%s9 + $0x4] sm:$0xf]
        %v1489 = vld [vmem:[%s9 + $0x8] sm:$0xf]
        %v1490 = vld [vmem:[%s9 + $0xc] sm:$0xf]
        %v1491 = vld [vmem:[%s9 + $0x10] sm:$0xf]
        %v1492 = vld [vmem:[%s9 + $0x14] sm:$0xf]
        %v1493 = vld [vmem:[%s9 + $0x18] sm:$0xf]
        %v1494 = vld [vmem:[%s9 + $0x1c] sm:$0xf]
        %v1495 = vld [vmem:[%s9 + $0x20] sm:$0xf]
        %v1496 = vld [vmem:[%s9 + $0x24] sm:$0xf]
        %v1497 = vld [vmem:[%s9 + $0x28] sm:$0xf]
        %v1498 = vld [vmem:[%s9 + $0x2c] sm:$0xf]
        %v1499 = vld [vmem:[%s9 + $0x30] sm:$0xf]
        %v1500 = vld [vmem:[%s9 + $0x34] sm:$0xf]
        %v1501 = vld [vmem:[%s9 + $0x38] sm:$0xf]
        %v1502 = vld [vmem:[%s9 + $0x3c] sm:$0xf]
        %v1503 = vld [vmem:[#allocation10] sm:$0x1]
        %v1504 = vld [vmem:[%s13] sm:$0xf]
        %v1505 = vld [vmem:[%s13 + $0x4] sm:$0xf]
        %v1506 = vld [vmem:[%s13 + $0x8] sm:$0xf]
        %v1507 = vld [vmem:[%s13 + $0xc] sm:$0xf]
        %v1508 = vld [vmem:[%s13 + $0x10] sm:$0xf]
        %v1509 = vld [vmem:[%s13 + $0x14] sm:$0xf]
        %v1510 = vld [vmem:[%s13 + $0x18] sm:$0xf]
        %v1511 = vld [vmem:[%s13 + $0x1c] sm:$0xf]
        %v1512 = vld [vmem:[%s13 + $0x20] sm:$0xf]
        %v1513 = vld [vmem:[%s13 + $0x24] sm:$0xf]
        %v1514 = vld [vmem:[%s13 + $0x28] sm:$0xf]
        %v1515 = vld [vmem:[%s13 + $0x2c] sm:$0xf]
        %v1516 = vld [vmem:[%s13 + $0x30] sm:$0xf]
        %v1517 = vld [vmem:[%s13 + $0x34] sm:$0xf]
        %v1518 = vld [vmem:[%s13 + $0x38] sm:$0xf]
        %v1519 = vld [vmem:[%s13 + $0x3c] sm:$0xf]
        %v1520 = vld [vmem:[%s15] sm:$0x1]
        %v1521 = vld [vmem:[#allocation11] sm:$0xf]
        %v1522 = vld [vmem:[#allocation11 + $0x4] sm:$0xf]
        %v1523 = vld [vmem:[#allocation11 + $0x8] sm:$0xf]
        %v1524 = vld [vmem:[#allocation11 + $0xc] sm:$0xf]
        %v1525 = vld [vmem:[#allocation11 + $0x10] sm:$0xf]
        %v1526 = vld [vmem:[#allocation11 + $0x14] sm:$0xf]
        %v1527 = vld [vmem:[#allocation11 + $0x18] sm:$0xf]
        %v1528 = vld [vmem:[#allocation11 + $0x1c] sm:$0xf]
        %v1529 = vld [vmem:[#allocation11 + $0x20] sm:$0xf]
        %v1530 = vld [vmem:[#allocation11 + $0x24] sm:$0xf]
        %v1531 = vld [vmem:[#allocation11 + $0x28] sm:$0xf]
        %v1532 = vld [vmem:[#allocation11 + $0x2c] sm:$0xf]
        %v1533 = vld [vmem:[#allocation11 + $0x30] sm:$0xf]
        %v1534 = vld [vmem:[#allocation11 + $0x34] sm:$0xf]
        %v1535 = vld [vmem:[#allocation11 + $0x38] sm:$0xf]
        %v1536 = vld [vmem:[#allocation11 + $0x3c] sm:$0xf]
        %v1537 = vld [vmem:[%s19] sm:$0x1]
        %v1538 = vld [vmem:[#allocation13] sm:$0xf]
        %v1539 = vld [vmem:[#allocation13 + $0x4] sm:$0xf]
        %v1540 = vld [vmem:[#allocation13 + $0x8] sm:$0xf]
        %v1541 = vld [vmem:[#allocation13 + $0xc] sm:$0xf]
        %v1542 = vld [vmem:[#allocation13 + $0x10] sm:$0xf]
        %v1543 = vld [vmem:[#allocation13 + $0x14] sm:$0xf]
        %v1544 = vld [vmem:[#allocation13 + $0x18] sm:$0xf]
        %v1545 = vld [vmem:[#allocation13 + $0x1c] sm:$0xf]
        %v1546 = vld [vmem:[#allocation13 + $0x20] sm:$0xf]
        %v1547 = vld [vmem:[#allocation13 + $0x24] sm:$0xf]
        %v1548 = vld [vmem:[#allocation13 + $0x28] sm:$0xf]
        %v1549 = vld [vmem:[#allocation13 + $0x2c] sm:$0xf]
        %v1550 = vld [vmem:[#allocation13 + $0x30] sm:$0xf]
        %v1551 = vld [vmem:[#allocation13 + $0x34] sm:$0xf]
        %v1552 = vld [vmem:[#allocation13 + $0x38] sm:$0xf]
        %v1553 = vld [vmem:[#allocation13 + $0x3c] sm:$0xf]
        %v1554 = vld [vmem:[%s23] sm:$0x1]
        %v1555 = vpack.c.bf16 %v1486, %v1486
        %v1557 = vperm.slane %v1503, 0
        %v1575 = vunpack.c.l.b16 %v1487
        %v1576 = vunpack.c.l.b16 %v1488
        %v1577 = vunpack.c.l.b16 %v1489
        %v1578 = vunpack.c.l.b16 %v1490
        %v1579 = vunpack.c.l.b16 %v1491
        %v1580 = vunpack.c.l.b16 %v1492
        %v1581 = vunpack.c.l.b16 %v1493
        %v1582 = vunpack.c.l.b16 %v1494
        %v1583 = vunpack.c.l.b16 %v1495
        %v1584 = vunpack.c.l.b16 %v1496
        %v1585 = vunpack.c.l.b16 %v1497
        %v1586 = vunpack.c.l.b16 %v1498
        %v1587 = vunpack.c.l.b16 %v1499
        %v1588 = vunpack.c.l.b16 %v1500
        %v1589 = vunpack.c.l.b16 %v1501
        %v1590 = vunpack.c.l.b16 %v1502
        %v1591 = vpack.c.b16 %v1576, %v1575
        %v1592 = vpack.c.b16 %v1578, %v1577
        %v1593 = vpack.c.b16 %v1580, %v1579
        %v1594 = vpack.c.b16 %v1582, %v1581
        %v1595 = vpack.c.b16 %v1584, %v1583
        %v1596 = vpack.c.b16 %v1586, %v1585
        %v1597 = vpack.c.b16 %v1588, %v1587
        %v1598 = vpack.c.b16 %v1590, %v1589
        %1607 = vmatpush.bf16.msra.mxu0 %v1598
        %1608 = vmatpush.bf16.msra.mxu0 %v1597
        %1609 = vmatpush.bf16.msra.mxu0 %v1596
        %1610 = vmatpush.bf16.msra.mxu0 %v1595
        %1611 = vmatpush.bf16.msra.mxu0 %v1594
        %1612 = vmatpush.bf16.msra.mxu0 %v1593
        %1613 = vmatpush.bf16.msra.mxu0 %v1592
        %1614 = vmatpush.bf16.msra.mxu0 %v1591
        %1615 = vmatmul.bf16.gmra.mxu0 %v1555
        %v1616 = vpop.f32.mrf.mxu0
        %v1617 = vadd.f32 %v1557, %v1616
        %v1618 = vpop.f32.mrf.mxu0
        %1619 = vdwg.mxu0
        %v1621 = vperm.slane %v1520, 0
        %v1639 = vunpack.c.l.b16 %v1504
        %v1640 = vunpack.c.l.b16 %v1505
        %v1641 = vunpack.c.l.b16 %v1506
        %v1642 = vunpack.c.l.b16 %v1507
        %v1643 = vunpack.c.l.b16 %v1508
        %v1644 = vunpack.c.l.b16 %v1509
        %v1645 = vunpack.c.l.b16 %v1510
        %v1646 = vunpack.c.l.b16 %v1511
        %v1647 = vunpack.c.l.b16 %v1512
        %v1648 = vunpack.c.l.b16 %v1513
        %v1649 = vunpack.c.l.b16 %v1514
        %v1650 = vunpack.c.l.b16 %v1515
        %v1651 = vunpack.c.l.b16 %v1516
        %v1652 = vunpack.c.l.b16 %v1517
        %v1653 = vunpack.c.l.b16 %v1518
        %v1654 = vunpack.c.l.b16 %v1519
        %v1655 = vpack.c.b16 %v1640, %v1639
        %v1656 = vpack.c.b16 %v1642, %v1641
        %v1657 = vpack.c.b16 %v1644, %v1643
        %v1658 = vpack.c.b16 %v1646, %v1645
        %v1659 = vpack.c.b16 %v1648, %v1647
        %v1660 = vpack.c.b16 %v1650, %v1649
        %v1661 = vpack.c.b16 %v1652, %v1651
        %v1662 = vpack.c.b16 %v1654, %v1653
        %1671 = vmatpush.bf16.msra.mxu0 %v1662
        %1672 = vmatpush.bf16.msra.mxu0 %v1661
        %1673 = vmatpush.bf16.msra.mxu0 %v1660
        %1674 = vmatpush.bf16.msra.mxu0 %v1659
        %1675 = vmatpush.bf16.msra.mxu0 %v1658
        %1676 = vmatpush.bf16.msra.mxu0 %v1657
        %1677 = vmatpush.bf16.msra.mxu0 %v1656
        %1678 = vmatpush.bf16.msra.mxu0 %v1655
        %1679 = vmatmul.bf16.gmra.mxu0 %v1555
        %v1680 = vpop.f32.mrf.mxu0
        %v1681 = vadd.f32 %v1621, %v1680
        %v1682 = vpop.f32.mrf.mxu0
        %1683 = vdwg.mxu0
        %v1684 = vpack.c.bf16 %v1452, %v1452
        %v1686 = vperm.slane %v1537, 0
        %v1704 = vunpack.c.l.b16 %v1521
        %v1705 = vunpack.c.l.b16 %v1522
        %v1706 = vunpack.c.l.b16 %v1523
        %v1707 = vunpack.c.l.b16 %v1524
        %v1708 = vunpack.c.l.b16 %v1525
        %v1709 = vunpack.c.l.b16 %v1526
        %v1710 = vunpack.c.l.b16 %v1527
        %v1711 = vunpack.c.l.b16 %v1528
        %v1712 = vunpack.c.l.b16 %v1529
        %v1713 = vunpack.c.l.b16 %v1530
        %v1714 = vunpack.c.l.b16 %v1531
        %v1715 = vunpack.c.l.b16 %v1532
        %v1716 = vunpack.c.l.b16 %v1533
        %v1717 = vunpack.c.l.b16 %v1534
        %v1718 = vunpack.c.l.b16 %v1535
        %v1719 = vunpack.c.l.b16 %v1536
        %v1720 = vpack.c.b16 %v1705, %v1704
        %v1721 = vpack.c.b16 %v1707, %v1706
        %v1722 = vpack.c.b16 %v1709, %v1708
        %v1723 = vpack.c.b16 %v1711, %v1710
        %v1724 = vpack.c.b16 %v1713, %v1712
        %v1725 = vpack.c.b16 %v1715, %v1714
        %v1726 = vpack.c.b16 %v1717, %v1716
        %v1727 = vpack.c.b16 %v1719, %v1718
        %1736 = vmatpush.bf16.msra.mxu0 %v1727
        %1737 = vmatpush.bf16.msra.mxu0 %v1726
        %1738 = vmatpush.bf16.msra.mxu0 %v1725
        %1739 = vmatpush.bf16.msra.mxu0 %v1724
        %1740 = vmatpush.bf16.msra.mxu0 %v1723
        %1741 = vmatpush.bf16.msra.mxu0 %v1722
        %1742 = vmatpush.bf16.msra.mxu0 %v1721
        %1743 = vmatpush.bf16.msra.mxu0 %v1720
        %1744 = vmatmul.bf16.gmra.mxu0 %v1684
        %v1745 = vpop.f32.mrf.mxu0
        %v1746 = vadd.f32 %v1686, %v1745
        %v1747 = vpop.f32.mrf.mxu0
        %1748 = vdwg.mxu0
        %v1749 = vmul.f32 %v1617, 0.17677669
        %v1750 = vpack.c.bf16 %v1749, %v1749
        %v1751 = vpack.c.bf16 %v1681, %v1681
        %v1752 = vpack.c.bf16 %v1746, %v1746
        %vm1753 = vcmask 261120
        %v1755 = vsel %vm1753, %v1750, 0
        %v1758 = vsel %vm1753, %v1751, 0
        %1760 = vmatpush.bf16.xpose.msra.mxu0 0
        %1761 = vmatpush.bf16.xpose.msra.mxu0 0
        %1762 = vmatpush.bf16.xpose.msra.mxu0 0
        %1763 = vmatpush.bf16.xpose.msra.mxu0 0
        %1764 = vmatpush.bf16.xpose.msra.mxu0 0
        %1765 = vmatpush.bf16.xpose.msra.mxu0 0
        %1766 = vmatpush.bf16.xpose.msra.mxu0 0
        %1767 = vmatpush.bf16.xpose.msra.mxu0 %v1758
        %1768 = vmatmul.bf16.gmra.mxu0 %v1755
        %v1769 = vpop.f32.mrf.mxu0
        %v1770 = vadd.f32 0.0, %v1769
        %v1771 = vpop.f32.mrf.mxu0
        %1772 = vdwg.mxu0
        %vm1773 = vcmask 64512
        %v1774 = vsel %vm1773, %v1770, -inf
        %1775 = vmax.xlane.f32.xlu0 %v1774
        %v1776 = vpop.xlane.xlu0 %1775
        %v1777 = vsub.f32 %v1770, %v1776
        %v1778 = vmul.f32 %v1777, 1.442695
        %v1779 = vpow.pop %v1778
        %v1780 = vsel %vm1773, %v1779, 0.0
        %1781 = vadd.xlane.f32.xlu0 %v1780
        %v1782 = vpop.xlane.xlu0 %1781
        %v1783 = vrcp.pop %v1782
        %v1784 = vmul.f32 %v1779, %v1783
        %v1785 = vpack.c.bf16 %v1784, %v1784
        %v1787 = vsel %vm1773, %v1785, 0
        %vm1789 = vcmask 1043456
        %v1791 = vsel %vm1789, %v1752, 0
        %1793 = vmatpush.bf16.msra.mxu0 0
        %1794 = vmatpush.bf16.msra.mxu0 0
        %1795 = vmatpush.bf16.msra.mxu0 0
        %1796 = vmatpush.bf16.msra.mxu0 0
        %1797 = vmatpush.bf16.msra.mxu0 0
        %1798 = vmatpush.bf16.msra.mxu0 0
        %1799 = vmatpush.bf16.msra.mxu0 0
        %1800 = vmatpush.bf16.msra.mxu0 %v1791
        %1801 = vmatmul.bf16.gmra.mxu0 %v1787
        %v1802 = vpop.f32.mrf.mxu0
        %v1803 = vadd.f32 0.0, %v1802
        %v1804 = vpop.f32.mrf.mxu0
        %1805 = vdwg.mxu0
        %v1806 = vpack.c.bf16 %v1803, %v1803
        %v1808 = vunpack.c.l.b16 %v1750
        %v1809 = vpack.c.b16 %v1808, %v1808
        %1810 = vrot.lane.b32.xlu0 %v1809, 96
        %v1811 = vpop.permute.xlu0 %1810
        %v1813 = vunpack.c.l.b16 %v1751
        %v1814 = vpack.c.b16 %v1813, %v1813
        %1815 = vrot.lane.b32.xlu0 %v1814, 96
        %v1816 = vpop.permute.xlu0 %1815
        %v1818 = vsel %vm1753, %v1811, 0
        %v1821 = vsel %vm1753, %v1816, 0
        %1823 = vmatpush.bf16.xpose.msra.mxu0 0
        %1824 = vmatpush.bf16.xpose.msra.mxu0 0
        %1825 = vmatpush.bf16.xpose.msra.mxu0 0
        %1826 = vmatpush.bf16.xpose.msra.mxu0 0
        %1827 = vmatpush.bf16.xpose.msra.mxu0 0
        %1828 = vmatpush.bf16.xpose.msra.mxu0 0
        %1829 = vmatpush.bf16.xpose.msra.mxu0 0
        %1830 = vmatpush.bf16.xpose.msra.mxu0 %v1821
        %1831 = vmatmul.bf16.gmra.mxu0 %v1818
        %v1832 = vpop.f32.mrf.mxu0
        %v1833 = vadd.f32 0.0, %v1832
        %v1834 = vpop.f32.mrf.mxu0
        %1835 = vdwg.mxu0
        %v1836 = vsel %vm1773, %v1833, -inf
        %1837 = vmax.xlane.f32.xlu0 %v1836
        %v1838 = vpop.xlane.xlu0 %1837
        %v1839 = vsub.f32 %v1833, %v1838
        %v1840 = vmul.f32 %v1839, 1.442695
        %v1841 = vpow.pop %v1840
        %v1842 = vsel %vm1773, %v1841, 0.0
        %1843 = vadd.xlane.f32.xlu0 %v1842
        %v1844 = vpop.xlane.xlu0 %1843
        %v1845 = vrcp.pop %v1844
        %v1846 = vmul.f32 %v1841, %v1845
        %v1847 = vpack.c.bf16 %v1846, %v1846
        %v1849 = vunpack.c.l.b16 %v1752
        %v1850 = vpack.c.b16 %v1849, %v1849
        %1851 = vrot.lane.b32.xlu0 %v1850, 96
        %v1852 = vpop.permute.xlu0 %1851
        %v1854 = vsel %vm1773, %v1847, 0
        %v1857 = vsel %vm1789, %v1852, 0
        %1859 = vmatpush.bf16.msra.mxu0 0
        %1860 = vmatpush.bf16.msra.mxu0 0
        %1861 = vmatpush.bf16.msra.mxu0 0
        %1862 = vmatpush.bf16.msra.mxu0 0
        %1863 = vmatpush.bf16.msra.mxu0 0
        %1864 = vmatpush.bf16.msra.mxu0 0
        %1865 = vmatpush.bf16.msra.mxu0 0
        %1866 = vmatpush.bf16.msra.mxu0 %v1857
        %1867 = vmatmul.bf16.gmra.mxu0 %v1854
        %v1868 = vpop.f32.mrf.mxu0
        %v1869 = vadd.f32 0.0, %v1868
        %v1870 = vpop.f32.mrf.mxu0
        %1871 = vdwg.mxu0
        %v1872 = vpack.c.bf16 %v1869, %v1869
        %v1877 = vunpack.c.l.b16 %v1542
        %v1878 = vunpack.c.l.b16 %v1543
        %v1879 = vunpack.c.l.b16 %v1544
        %v1880 = vunpack.c.l.b16 %v1545
        %v1881 = vpack.c.b16 %v1878, %v1877
        %v1882 = vpack.c.b16 %v1880, %v1879
        %v1886 = vsel %vm1753, %v1872, 0
        %1888 = vmatpush.bf16.msra.mxu0 0
        %1889 = vmatpush.bf16.msra.mxu0 0
        %1890 = vmatpush.bf16.msra.mxu0 0
        %1891 = vmatpush.bf16.msra.mxu0 0
        %1892 = vmatpush.bf16.msra.mxu0 0
        %1893 = vmatpush.bf16.msra.mxu0 0
        %1894 = vmatpush.bf16.msra.mxu0 %v1882
        %1895 = vmatpush.bf16.msra.mxu0 %v1881
        %1896 = vmatmul.bf16.gmra.mxu0 %v1886
        %v1897 = vpop.f32.mrf.mxu0
        %v1898 = vadd.f32 0.0, %v1897
        %v1899 = vpop.f32.mrf.mxu0
        %1900 = vdwg.mxu0
        %v1905 = vunpack.c.l.b16 %v1538
        %v1906 = vunpack.c.l.b16 %v1539
        %v1907 = vunpack.c.l.b16 %v1540
        %v1908 = vunpack.c.l.b16 %v1541
        %v1909 = vpack.c.b16 %v1906, %v1905
        %v1910 = vpack.c.b16 %v1908, %v1907
        %v1914 = vsel %vm1753, %v1806, 0
        %1916 = vmatpush.bf16.msra.mxu0 0
        %1917 = vmatpush.bf16.msra.mxu0 0
        %1918 = vmatpush.bf16.msra.mxu0 0
        %1919 = vmatpush.bf16.msra.mxu0 0
        %1920 = vmatpush.bf16.msra.mxu0 0
        %1921 = vmatpush.bf16.msra.mxu0 0
        %1922 = vmatpush.bf16.msra.mxu0 %v1910
        %1923 = vmatpush.bf16.msra.mxu0 %v1909
        %1924 = vmatmul.bf16.gmra.mxu0 %v1914
        %v1925 = vpop.f32.mrf.mxu0
        %v1926 = vadd.f32 %v1898, %v1925
        %v1927 = vpop.f32.mrf.mxu0
        %1928 = vdwg.mxu0
        %1929 = vrot.lane.b32.xlu0 %v1809, 64
        %v1930 = vpop.permute.xlu0 %1929
        %1931 = vrot.lane.b32.xlu0 %v1814, 64
        %v1932 = vpop.permute.xlu0 %1931
        %v1934 = vsel %vm1753, %v1930, 0
        %v1937 = vsel %vm1753, %v1932, 0
        %1939 = vmatpush.bf16.xpose.msra.mxu0 0
        %1940 = vmatpush.bf16.xpose.msra.mxu0 0
        %1941 = vmatpush.bf16.xpose.msra.mxu0 0
        %1942 = vmatpush.bf16.xpose.msra.mxu0 0
        %1943 = vmatpush.bf16.xpose.msra.mxu0 0
        %1944 = vmatpush.bf16.xpose.msra.mxu0 0
        %1945 = vmatpush.bf16.xpose.msra.mxu0 0
        %1946 = vmatpush.bf16.xpose.msra.mxu0 %v1937
        %1947 = vmatmul.bf16.gmra.mxu0 %v1934
        %v1948 = vpop.f32.mrf.mxu0
        %v1949 = vadd.f32 0.0, %v1948
        %v1950 = vpop.f32.mrf.mxu0
        %1951 = vdwg.mxu0
        %v1952 = vsel %vm1773, %v1949, -inf
        %1953 = vmax.xlane.f32.xlu0 %v1952
        %v1954 = vpop.xlane.xlu0 %1953
        %v1955 = vsub.f32 %v1949, %v1954
        %v1956 = vmul.f32 %v1955, 1.442695
        %v1957 = vpow.pop %v1956
        %v1958 = vsel %vm1773, %v1957, 0.0
        %1959 = vadd.xlane.f32.xlu0 %v1958
        %v1960 = vpop.xlane.xlu0 %1959
        %v1961 = vrcp.pop %v1960
        %v1962 = vmul.f32 %v1957, %v1961
        %v1963 = vpack.c.bf16 %v1962, %v1962
        %1964 = vrot.lane.b32.xlu0 %v1850, 64
        %v1965 = vpop.permute.xlu0 %1964
        %v1967 = vsel %vm1773, %v1963, 0
        %v1970 = vsel %vm1789, %v1965, 0
        %1972 = vmatpush.bf16.msra.mxu0 0
        %1973 = vmatpush.bf16.msra.mxu0 0
        %1974 = vmatpush.bf16.msra.mxu0 0
        %1975 = vmatpush.bf16.msra.mxu0 0
        %1976 = vmatpush.bf16.msra.mxu0 0
        %1977 = vmatpush.bf16.msra.mxu0 0
        %1978 = vmatpush.bf16.msra.mxu0 0
        %1979 = vmatpush.bf16.msra.mxu0 %v1970
        %1980 = vmatmul.bf16.gmra.mxu0 %v1967
        %v1981 = vpop.f32.mrf.mxu0
        %v1982 = vadd.f32 0.0, %v1981
        %v1983 = vpop.f32.mrf.mxu0
        %1984 = vdwg.mxu0
        %v1985 = vpack.c.bf16 %v1982, %v1982
        %v1990 = vunpack.c.l.b16 %v1546
        %v1991 = vunpack.c.l.b16 %v1547
        %v1992 = vunpack.c.l.b16 %v1548
        %v1993 = vunpack.c.l.b16 %v1549
        %v1994 = vpack.c.b16 %v1991, %v1990
        %v1995 = vpack.c.b16 %v1993, %v1992
        %v1999 = vsel %vm1753, %v1985, 0
        %2001 = vmatpush.bf16.msra.mxu0 0
        %2002 = vmatpush.bf16.msra.mxu0 0
        %2003 = vmatpush.bf16.msra.mxu0 0
        %2004 = vmatpush.bf16.msra.mxu0 0
        %2005 = vmatpush.bf16.msra.mxu0 0
        %2006 = vmatpush.bf16.msra.mxu0 0
        %2007 = vmatpush.bf16.msra.mxu0 %v1995
        %2008 = vmatpush.bf16.msra.mxu0 %v1994
        %2009 = vmatmul.bf16.gmra.mxu0 %v1999
        %v2010 = vpop.f32.mrf.mxu0
        %v2011 = vadd.f32 0.0, %v2010
        %v2012 = vpop.f32.mrf.mxu0
        %2013 = vdwg.mxu0
        %v2014 = vadd.f32 %v1926, %v2011
        %2015 = vrot.lane.b32.xlu0 %v1809, 32
        %v2016 = vpop.permute.xlu0 %2015
        %2017 = vrot.lane.b32.xlu0 %v1814, 32
        %v2018 = vpop.permute.xlu0 %2017
        %v2020 = vsel %vm1753, %v2016, 0
        %v2023 = vsel %vm1753, %v2018, 0
        %2025 = vmatpush.bf16.xpose.msra.mxu0 0
        %2026 = vmatpush.bf16.xpose.msra.mxu0 0
        %2027 = vmatpush.bf16.xpose.msra.mxu0 0
        %2028 = vmatpush.bf16.xpose.msra.mxu0 0
        %2029 = vmatpush.bf16.xpose.msra.mxu0 0
        %2030 = vmatpush.bf16.xpose.msra.mxu0 0
        %2031 = vmatpush.bf16.xpose.msra.mxu0 0
        %2032 = vmatpush.bf16.xpose.msra.mxu0 %v2023
        %2033 = vmatmul.bf16.gmra.mxu0 %v2020
        %v2034 = vpop.f32.mrf.mxu0
        %v2035 = vadd.f32 0.0, %v2034
        %v2036 = vpop.f32.mrf.mxu0
        %2037 = vdwg.mxu0
        %v2038 = vsel %vm1773, %v2035, -inf
        %2039 = vmax.xlane.f32.xlu0 %v2038
        %v2040 = vpop.xlane.xlu0 %2039
        %v2041 = vsub.f32 %v2035, %v2040
        %v2042 = vmul.f32 %v2041, 1.442695
        %v2043 = vpow.pop %v2042
        %v2044 = vsel %vm1773, %v2043, 0.0
        %2045 = vadd.xlane.f32.xlu0 %v2044
        %v2046 = vpop.xlane.xlu0 %2045
        %v2047 = vrcp.pop %v2046
        %v2048 = vmul.f32 %v2043, %v2047
        %v2049 = vpack.c.bf16 %v2048, %v2048
        %2050 = vrot.lane.b32.xlu0 %v1850, 32
        %v2051 = vpop.permute.xlu0 %2050
        %v2053 = vsel %vm1773, %v2049, 0
        %v2056 = vsel %vm1789, %v2051, 0
        %2058 = vmatpush.bf16.msra.mxu0 0
        %2059 = vmatpush.bf16.msra.mxu0 0
        %2060 = vmatpush.bf16.msra.mxu0 0
        %2061 = vmatpush.bf16.msra.mxu0 0
        %2062 = vmatpush.bf16.msra.mxu0 0
        %2063 = vmatpush.bf16.msra.mxu0 0
        %2064 = vmatpush.bf16.msra.mxu0 0
        %2065 = vmatpush.bf16.msra.mxu0 %v2056
        %2066 = vmatmul.bf16.gmra.mxu0 %v2053
        %v2067 = vpop.f32.mrf.mxu0
        %v2068 = vadd.f32 0.0, %v2067
        %v2069 = vpop.f32.mrf.mxu0
        %2070 = vdwg.mxu0
        %v2071 = vpack.c.bf16 %v2068, %v2068
        %v2076 = vunpack.c.l.b16 %v1550
        %v2077 = vunpack.c.l.b16 %v1551
        %v2078 = vunpack.c.l.b16 %v1552
        %v2079 = vunpack.c.l.b16 %v1553
        %v2080 = vpack.c.b16 %v2077, %v2076
        %v2081 = vpack.c.b16 %v2079, %v2078
        %v2085 = vsel %vm1753, %v2071, 0
        %2087 = vmatpush.bf16.msra.mxu0 0
        %2088 = vmatpush.bf16.msra.mxu0 0
        %2089 = vmatpush.bf16.msra.mxu0 0
        %2090 = vmatpush.bf16.msra.mxu0 0
        %2091 = vmatpush.bf16.msra.mxu0 0
        %2092 = vmatpush.bf16.msra.mxu0 0
        %2093 = vmatpush.bf16.msra.mxu0 %v2081
        %2094 = vmatpush.bf16.msra.mxu0 %v2080
        %2095 = vmatmul.bf16.gmra.mxu0 %v2085
        %v2096 = vpop.f32.mrf.mxu0
        %v2097 = vadd.f32 0.0, %v2096
        %v2098 = vpop.f32.mrf.mxu0
        %2099 = vdwg.mxu0
        %v2100 = vadd.f32 %v2014, %v2097
        %v2102 = vperm.slane %v1554, 0
        %v2104 = vadd.f32 %v2100, %v2102
        %v2105 = vadd.f32 %v1452, %v2104
        %v2106 = vld [vmem:[%s65] sm:$0x1]
        %v2107 = vld [vmem:[%s67] sm:$0x1]
        %2108 = vadd.xlane.f32.xlu0 %v2105
        %v2109 = vpop.xlane.xlu0 %2108
        %v2110 = vrcp.pop 128.0
        %v2111 = vmul.f32 128.0, %v2110
        %v2112 = vsub.f32 1.0, %v2111
        %v2113 = vmul.f32 %v2110, %v2112
        %v2114 = vadd.f32 %v2110, %v2113
        %vm2115 = vweird.f32 %v2110
        %v2116 = vsel %vm2115, %v2110, %v2114
        %v2117 = vmul.f32 %v2109, %v2116
        %v2118 = vsub.f32 %v2105, %v2117
        %v2119 = vmul.f32 %v2118, %v2118
        %2120 = vadd.xlane.f32.xlu0 %v2119
        %v2121 = vpop.xlane.xlu0 %2120
        %v2122 = vmul.f32 %v2121, %v2116
        %v2123 = vadd.f32 %v2122, 1e-05
        %v2124 = vrsqrt.pop %v2123
        %v2125 = vmul.f32 %v2124, %v2123
        %v2126 = vmul.f32 %v2125, %v2124
        %v2127 = vmul.f32 0.5, %v2126
        %v2128 = vsub.f32 1.5, %v2127
        %v2129 = vmul.f32 %v2124, %v2128
        %vm2130 = vweird.f32 %v2123
        %vm2131 = vweird.f32 %v2124
        %vm2132 = vmor %vm2130, %vm2131
        %v2133 = vsel %vm2132, %v2124, %v2129
        %v2134 = vmul.f32 %v2118, %v2133
        %v2136 = vperm.slane %v2106, 0
        %v2138 = vmul.f32 %v2134, %v2136
        %v2140 = vperm.slane %v2107, 0
        %v2142 = vadd.f32 %v2138, %v2140
        %v2143 = vadd.f32 %v1453, %v1470
        %v2144 = vadd.f32 %v1454, %v1471
        %v2145 = vadd.f32 %v1455, %v1472
        %v2146 = vadd.f32 %v1456, %v1473
        %v2147 = vadd.f32 %v1457, %v1474
        %v2148 = vadd.f32 %v1458, %v1475
        %v2149 = vadd.f32 %v1459, %v1476
        %v2150 = vadd.f32 %v1460, %v1477
        %v2151 = vadd.f32 %v1461, %v1478
        %v2152 = vadd.f32 %v1462, %v1479
        %v2153 = vadd.f32 %v1463, %v1480
        %v2154 = vadd.f32 %v1464, %v1481
        %v2155 = vadd.f32 %v1465, %v1482
        %v2156 = vadd.f32 %v1466, %v1483
        %v2157 = vadd.f32 %v1467, %v1484
        %v2158 = vadd.f32 %v1468, %v1485
        %v2159 = vadd.f32 %v2142, %v1469
        %v2160 = vld [vmem:[%s25] sm:$0xf]
        %v2161 = vld [vmem:[%s25 + $0x4] sm:$0xf]
        %v2162 = vld [vmem:[%s25 + $0x8] sm:$0xf]
        %v2163 = vld [vmem:[%s25 + $0xc] sm:$0xf]
        %v2164 = vld [vmem:[%s25 + $0x10] sm:$0xf]
        %v2165 = vld [vmem:[%s25 + $0x14] sm:$0xf]
        %v2166 = vld [vmem:[%s25 + $0x18] sm:$0xf]
        %v2167 = vld [vmem:[%s25 + $0x1c] sm:$0xf]
        %v2168 = vld [vmem:[%s25 + $0x20] sm:$0xf]
        %v2169 = vld [vmem:[%s25 + $0x24] sm:$0xf]
        %v2170 = vld [vmem:[%s25 + $0x28] sm:$0xf]
        %v2171 = vld [vmem:[%s25 + $0x2c] sm:$0xf]
        %v2172 = vld [vmem:[%s25 + $0x30] sm:$0xf]
        %v2173 = vld [vmem:[%s25 + $0x34] sm:$0xf]
        %v2174 = vld [vmem:[%s25 + $0x38] sm:$0xf]
        %v2175 = vld [vmem:[%s25 + $0x3c] sm:$0xf]
        %v2176 = vld [vmem:[%s27] sm:$0x1]
        %v2177 = vld [vmem:[%s29] sm:$0xf]
        %v2178 = vld [vmem:[%s29 + $0x4] sm:$0xf]
        %v2179 = vld [vmem:[%s29 + $0x8] sm:$0xf]
        %v2180 = vld [vmem:[%s29 + $0xc] sm:$0xf]
        %v2181 = vld [vmem:[%s29 + $0x10] sm:$0xf]
        %v2182 = vld [vmem:[%s29 + $0x14] sm:$0xf]
        %v2183 = vld [vmem:[%s29 + $0x18] sm:$0xf]
        %v2184 = vld [vmem:[%s29 + $0x1c] sm:$0xf]
        %v2185 = vld [vmem:[%s29 + $0x20] sm:$0xf]
        %v2186 = vld [vmem:[%s29 + $0x24] sm:$0xf]
        %v2187 = vld [vmem:[%s29 + $0x28] sm:$0xf]
        %v2188 = vld [vmem:[%s29 + $0x2c] sm:$0xf]
        %v2189 = vld [vmem:[%s29 + $0x30] sm:$0xf]
        %v2190 = vld [vmem:[%s29 + $0x34] sm:$0xf]
        %v2191 = vld [vmem:[%s29 + $0x38] sm:$0xf]
        %v2192 = vld [vmem:[%s29 + $0x3c] sm:$0xf]
        %v2193 = vld [vmem:[%s31] sm:$0x1]
        %v2194 = vld [vmem:[%s33] sm:$0xf]
        %v2195 = vld [vmem:[%s33 + $0x4] sm:$0xf]
        %v2196 = vld [vmem:[%s33 + $0x8] sm:$0xf]
        %v2197 = vld [vmem:[%s33 + $0xc] sm:$0xf]
        %v2198 = vld [vmem:[%s33 + $0x10] sm:$0xf]
        %v2199 = vld [vmem:[%s33 + $0x14] sm:$0xf]
        %v2200 = vld [vmem:[%s33 + $0x18] sm:$0xf]
        %v2201 = vld [vmem:[%s33 + $0x1c] sm:$0xf]
        %v2202 = vld [vmem:[%s33 + $0x20] sm:$0xf]
        %v2203 = vld [vmem:[%s33 + $0x24] sm:$0xf]
        %v2204 = vld [vmem:[%s33 + $0x28] sm:$0xf]
        %v2205 = vld [vmem:[%s33 + $0x2c] sm:$0xf]
        %v2206 = vld [vmem:[%s33 + $0x30] sm:$0xf]
        %v2207 = vld [vmem:[%s33 + $0x34] sm:$0xf]
        %v2208 = vld [vmem:[%s33 + $0x38] sm:$0xf]
        %v2209 = vld [vmem:[%s33 + $0x3c] sm:$0xf]
        %v2210 = vld [vmem:[%s35] sm:$0x1]
        %v2211 = vld [vmem:[%s37] sm:$0xf]
        %v2212 = vld [vmem:[%s37 + $0x4] sm:$0xf]
        %v2213 = vld [vmem:[%s37 + $0x8] sm:$0xf]
        %v2214 = vld [vmem:[%s37 + $0xc] sm:$0xf]
        %v2215 = vld [vmem:[%s37 + $0x10] sm:$0xf]
        %v2216 = vld [vmem:[%s37 + $0x14] sm:$0xf]
        %v2217 = vld [vmem:[%s37 + $0x18] sm:$0xf]
        %v2218 = vld [vmem:[%s37 + $0x1c] sm:$0xf]
        %v2219 = vld [vmem:[%s39] sm:$0x1]
        %v2220 = vpack.c.bf16 %v2159, %v2159
        %v2222 = vperm.slane %v2176, 0
        %v2240 = vunpack.c.l.b16 %v2160
        %v2241 = vunpack.c.l.b16 %v2161
        %v2242 = vunpack.c.l.b16 %v2162
        %v2243 = vunpack.c.l.b16 %v2163
        %v2244 = vunpack.c.l.b16 %v2164
        %v2245 = vunpack.c.l.b16 %v2165
        %v2246 = vunpack.c.l.b16 %v2166
        %v2247 = vunpack.c.l.b16 %v2167
        %v2248 = vunpack.c.l.b16 %v2168
        %v2249 = vunpack.c.l.b16 %v2169
        %v2250 = vunpack.c.l.b16 %v2170
        %v2251 = vunpack.c.l.b16 %v2171
        %v2252 = vunpack.c.l.b16 %v2172
        %v2253 = vunpack.c.l.b16 %v2173
        %v2254 = vunpack.c.l.b16 %v2174
        %v2255 = vunpack.c.l.b16 %v2175
        %v2256 = vpack.c.b16 %v2241, %v2240
        %v2257 = vpack.c.b16 %v2243, %v2242
        %v2258 = vpack.c.b16 %v2245, %v2244
        %v2259 = vpack.c.b16 %v2247, %v2246
        %v2260 = vpack.c.b16 %v2249, %v2248
        %v2261 = vpack.c.b16 %v2251, %v2250
        %v2262 = vpack.c.b16 %v2253, %v2252
        %v2263 = vpack.c.b16 %v2255, %v2254
        %2272 = vmatpush.bf16.msra.mxu0 %v2263
        %2273 = vmatpush.bf16.msra.mxu0 %v2262
        %2274 = vmatpush.bf16.msra.mxu0 %v2261
        %2275 = vmatpush.bf16.msra.mxu0 %v2260
        %2276 = vmatpush.bf16.msra.mxu0 %v2259
        %2277 = vmatpush.bf16.msra.mxu0 %v2258
        %2278 = vmatpush.bf16.msra.mxu0 %v2257
        %2279 = vmatpush.bf16.msra.mxu0 %v2256
        %2280 = vmatmul.bf16.gmra.mxu0 %v2220
        %v2281 = vpop.f32.mrf.mxu0
        %v2282 = vadd.f32 %v2222, %v2281
        %v2283 = vpop.f32.mrf.mxu0
        %2284 = vdwg.mxu0
        %v2285 = vpack.c.bf16 %v2144, %v2143
        %v2286 = vpack.c.bf16 %v2146, %v2145
        %v2287 = vpack.c.bf16 %v2148, %v2147
        %v2288 = vpack.c.bf16 %v2150, %v2149
        %v2289 = vpack.c.bf16 %v2152, %v2151
        %v2290 = vpack.c.bf16 %v2154, %v2153
        %v2291 = vpack.c.bf16 %v2156, %v2155
        %v2292 = vpack.c.bf16 %v2158, %v2157
        %v2294 = vperm.slane %v2193, 0
        %v2312 = vunpack.c.l.b16 %v2177
        %v2313 = vunpack.c.l.b16 %v2178
        %v2314 = vunpack.c.l.b16 %v2179
        %v2315 = vunpack.c.l.b16 %v2180
        %v2316 = vunpack.c.l.b16 %v2181
        %v2317 = vunpack.c.l.b16 %v2182
        %v2318 = vunpack.c.l.b16 %v2183
        %v2319 = vunpack.c.l.b16 %v2184
        %v2320 = vunpack.c.l.b16 %v2185
        %v2321 = vunpack.c.l.b16 %v2186
        %v2322 = vunpack.c.l.b16 %v2187
        %v2323 = vunpack.c.l.b16 %v2188
        %v2324 = vunpack.c.l.b16 %v2189
        %v2325 = vunpack.c.l.b16 %v2190
        %v2326 = vunpack.c.l.b16 %v2191
        %v2327 = vunpack.c.l.b16 %v2192
        %v2328 = vpack.c.b16 %v2313, %v2312
        %v2329 = vpack.c.b16 %v2315, %v2314
        %v2330 = vpack.c.b16 %v2317, %v2316
        %v2331 = vpack.c.b16 %v2319, %v2318
        %v2332 = vpack.c.b16 %v2321, %v2320
        %v2333 = vpack.c.b16 %v2323, %v2322
        %v2334 = vpack.c.b16 %v2325, %v2324
        %v2335 = vpack.c.b16 %v2327, %v2326
        %2344 = vmatpush.bf16.msra.mxu0 %v2335
        %2345 = vmatpush.bf16.msra.mxu0 %v2334
        %2346 = vmatpush.bf16.msra.mxu0 %v2333
        %2347 = vmatpush.bf16.msra.mxu0 %v2332
        %2348 = vmatpush.bf16.msra.mxu0 %v2331
        %2349 = vmatpush.bf16.msra.mxu0 %v2330
        %2350 = vmatpush.bf16.msra.mxu0 %v2329
        %2351 = vmatpush.bf16.msra.mxu0 %v2328
        %2352 = vmatmul.bf16.gmra.mxu0 %v2285
        %v2353 = vpop.f32.mrf.mxu0
        %v2354 = vadd.f32 %v2294, %v2353
        %v2355 = vpop.f32.mrf.mxu0
        %v2356 = vadd.f32 %v2294, %v2355
        %2357 = vmatmul.bf16.gmra.mxu0 %v2286
        %v2358 = vpop.f32.mrf.mxu0
        %v2359 = vadd.f32 %v2294, %v2358
        %v2360 = vpop.f32.mrf.mxu0
        %v2361 = vadd.f32 %v2294, %v2360
        %2362 = vmatmul.bf16.gmra.mxu0 %v2287
        %v2363 = vpop.f32.mrf.mxu0
        %v2364 = vadd.f32 %v2294, %v2363
        %v2365 = vpop.f32.mrf.mxu0
        %v2366 = vadd.f32 %v2294, %v2365
        %2367 = vmatmul.bf16.gmra.mxu0 %v2288
        %v2368 = vpop.f32.mrf.mxu0
        %v2369 = vadd.f32 %v2294, %v2368
        %v2370 = vpop.f32.mrf.mxu0
        %v2371 = vadd.f32 %v2294, %v2370
        %2372 = vmatmul.bf16.gmra.mxu0 %v2289
        %v2373 = vpop.f32.mrf.mxu0
        %v2374 = vadd.f32 %v2294, %v2373
        %v2375 = vpop.f32.mrf.mxu0
        %v2376 = vadd.f32 %v2294, %v2375
        %2377 = vmatmul.bf16.gmra.mxu0 %v2290
        %v2378 = vpop.f32.mrf.mxu0
        %v2379 = vadd.f32 %v2294, %v2378
        %v2380 = vpop.f32.mrf.mxu0
        %v2381 = vadd.f32 %v2294, %v2380
        %2382 = vmatmul.bf16.gmra.mxu0 %v2291
        %v2383 = vpop.f32.mrf.mxu0
        %v2384 = vadd.f32 %v2294, %v2383
        %v2385 = vpop.f32.mrf.mxu0
        %v2386 = vadd.f32 %v2294, %v2385
        %2387 = vmatmul.bf16.gmra.mxu0 %v2292
        %v2388 = vpop.f32.mrf.mxu0
        %v2389 = vadd.f32 %v2294, %v2388
        %v2390 = vpop.f32.mrf.mxu0
        %v2391 = vadd.f32 %v2294, %v2390
        %2392 = vdwg.mxu0
        %v2393 = vpack.c.bf16 %v1454, %v1453
        %v2394 = vpack.c.bf16 %v1456, %v1455
        %v2395 = vpack.c.bf16 %v1458, %v1457
        %v2396 = vpack.c.bf16 %v1460, %v1459
        %v2397 = vpack.c.bf16 %v1462, %v1461
        %v2398 = vpack.c.bf16 %v1464, %v1463
        %v2399 = vpack.c.bf16 %v1466, %v1465
        %v2400 = vpack.c.bf16 %v1468, %v1467
        %v2402 = vperm.slane %v2210, 0
        %v2420 = vunpack.c.l.b16 %v2194
        %v2421 = vunpack.c.l.b16 %v2195
        %v2422 = vunpack.c.l.b16 %v2196
        %v2423 = vunpack.c.l.b16 %v2197
        %v2424 = vunpack.c.l.b16 %v2198
        %v2425 = vunpack.c.l.b16 %v2199
        %v2426 = vunpack.c.l.b16 %v2200
        %v2427 = vunpack.c.l.b16 %v2201
        %v2428 = vunpack.c.l.b16 %v2202
        %v2429 = vunpack.c.l.b16 %v2203
        %v2430 = vunpack.c.l.b16 %v2204
        %v2431 = vunpack.c.l.b16 %v2205
        %v2432 = vunpack.c.l.b16 %v2206
        %v2433 = vunpack.c.l.b16 %v2207
        %v2434 = vunpack.c.l.b16 %v2208
        %v2435 = vunpack.c.l.b16 %v2209
        %v2436 = vpack.c.b16 %v2421, %v2420
        %v2437 = vpack.c.b16 %v2423, %v2422
        %v2438 = vpack.c.b16 %v2425, %v2424
        %v2439 = vpack.c.b16 %v2427, %v2426
        %v2440 = vpack.c.b16 %v2429, %v2428
        %v2441 = vpack.c.b16 %v2431, %v2430
        %v2442 = vpack.c.b16 %v2433, %v2432
        %v2443 = vpack.c.b16 %v2435, %v2434
        %2452 = vmatpush.bf16.msra.mxu0 %v2443
        %2453 = vmatpush.bf16.msra.mxu0 %v2442
        %2454 = vmatpush.bf16.msra.mxu0 %v2441
        %2455 = vmatpush.bf16.msra.mxu0 %v2440
        %2456 = vmatpush.bf16.msra.mxu0 %v2439
        %2457 = vmatpush.bf16.msra.mxu0 %v2438
        %2458 = vmatpush.bf16.msra.mxu0 %v2437
        %2459 = vmatpush.bf16.msra.mxu0 %v2436
        %2460 = vmatmul.bf16.gmra.mxu0 %v2393
        %v2461 = vpop.f32.mrf.mxu0
        %v2462 = vadd.f32 %v2402, %v2461
        %v2463 = vpop.f32.mrf.mxu0
        %v2464 = vadd.f32 %v2402, %v2463
        %2465 = vmatmul.bf16.gmra.mxu0 %v2394
        %v2466 = vpop.f32.mrf.mxu0
        %v2467 = vadd.f32 %v2402, %v2466
        %v2468 = vpop.f32.mrf.mxu0
        %v2469 = vadd.f32 %v2402, %v2468
        %2470 = vmatmul.bf16.gmra.mxu0 %v2395
        %v2471 = vpop.f32.mrf.mxu0
        %v2472 = vadd.f32 %v2402, %v2471
        %v2473 = vpop.f32.mrf.mxu0
        %v2474 = vadd.f32 %v2402, %v2473
        %2475 = vmatmul.bf16.gmra.mxu0 %v2396
        %v2476 = vpop.f32.mrf.mxu0
        %v2477 = vadd.f32 %v2402, %v2476
        %v2478 = vpop.f32.mrf.mxu0
        %v2479 = vadd.f32 %v2402, %v2478
        %2480 = vmatmul.bf16.gmra.mxu0 %v2397
        %v2481 = vpop.f32.mrf.mxu0
        %v2482 = vadd.f32 %v2402, %v2481
        %v2483 = vpop.f32.mrf.mxu0
        %v2484 = vadd.f32 %v2402, %v2483
        %2485 = vmatmul.bf16.gmra.mxu0 %v2398
        %v2486 = vpop.f32.mrf.mxu0
        %v2487 = vadd.f32 %v2402, %v2486
        %v2488 = vpop.f32.mrf.mxu0
        %v2489 = vadd.f32 %v2402, %v2488
        %2490 = vmatmul.bf16.gmra.mxu0 %v2399
        %v2491 = vpop.f32.mrf.mxu0
        %v2492 = vadd.f32 %v2402, %v2491
        %v2493 = vpop.f32.mrf.mxu0
        %v2494 = vadd.f32 %v2402, %v2493
        %2495 = vmatmul.bf16.gmra.mxu0 %v2400
        %v2496 = vpop.f32.mrf.mxu0
        %v2497 = vadd.f32 %v2402, %v2496
        %v2498 = vpop.f32.mrf.mxu0
        %v2499 = vadd.f32 %v2402, %v2498
        %2500 = vdwg.mxu0
        %v2501 = vmul.f32 %v2282, 0.25
        %v2502 = vpack.c.bf16 %v2501, %v2501
        %v2503 = vpack.c.bf16 %v2354, %v2354
        %v2504 = vpack.c.bf16 %v2356, %v2356
        %v2505 = vpack.c.bf16 %v2359, %v2359
        %v2506 = vpack.c.bf16 %v2361, %v2361
        %v2507 = vpack.c.bf16 %v2364, %v2364
        %v2508 = vpack.c.bf16 %v2366, %v2366
        %v2509 = vpack.c.bf16 %v2369, %v2369
        %v2510 = vpack.c.bf16 %v2371, %v2371
        %v2511 = vpack.c.bf16 %v2374, %v2374
        %v2512 = vpack.c.bf16 %v2376, %v2376
        %v2513 = vpack.c.bf16 %v2379, %v2379
        %v2514 = vpack.c.bf16 %v2381, %v2381
        %v2515 = vpack.c.bf16 %v2384, %v2384
        %v2516 = vpack.c.bf16 %v2386, %v2386
        %v2517 = vpack.c.bf16 %v2389, %v2389
        %v2518 = vpack.c.bf16 %v2391, %v2391
        %v2519 = vpack.c.bf16 %v2462, %v2462
        %v2520 = vpack.c.bf16 %v2464, %v2464
        %v2521 = vpack.c.bf16 %v2467, %v2467
        %v2522 = vpack.c.bf16 %v2469, %v2469
        %v2523 = vpack.c.bf16 %v2472, %v2472
        %v2524 = vpack.c.bf16 %v2474, %v2474
        %v2525 = vpack.c.bf16 %v2477, %v2477
        %v2526 = vpack.c.bf16 %v2479, %v2479
        %v2527 = vpack.c.bf16 %v2482, %v2482
        %v2528 = vpack.c.bf16 %v2484, %v2484
        %v2529 = vpack.c.bf16 %v2487, %v2487
        %v2530 = vpack.c.bf16 %v2489, %v2489
        %v2531 = vpack.c.bf16 %v2492, %v2492
        %v2532 = vpack.c.bf16 %v2494, %v2494
        %v2533 = vpack.c.bf16 %v2497, %v2497
        %v2534 = vpack.c.bf16 %v2499, %v2499
        %v2551 = vunpack.c.l.b16 %v2503
        %v2552 = vunpack.c.l.b16 %v2504
        %v2553 = vunpack.c.l.b16 %v2505
        %v2554 = vunpack.c.l.b16 %v2506
        %v2555 = vunpack.c.l.b16 %v2507
        %v2556 = vunpack.c.l.b16 %v2508
        %v2557 = vunpack.c.l.b16 %v2509
        %v2558 = vunpack.c.l.b16 %v2510
        %v2559 = vunpack.c.l.b16 %v2511
        %v2560 = vunpack.c.l.b16 %v2512
        %v2561 = vunpack.c.l.b16 %v2513
        %v2562 = vunpack.c.l.b16 %v2514
        %v2563 = vunpack.c.l.b16 %v2515
        %v2564 = vunpack.c.l.b16 %v2516
        %v2565 = vunpack.c.l.b16 %v2517
        %v2566 = vunpack.c.l.b16 %v2518
        %v2567 = vpack.c.b16 %v2552, %v2551
        %v2568 = vpack.c.b16 %v2554, %v2553
        %v2569 = vpack.c.b16 %v2556, %v2555
        %v2570 = vpack.c.b16 %v2558, %v2557
        %v2571 = vpack.c.b16 %v2560, %v2559
        %v2572 = vpack.c.b16 %v2562, %v2561
        %v2573 = vpack.c.b16 %v2564, %v2563
        %v2574 = vpack.c.b16 %v2566, %v2565
        %vm2575 = vcmask 130048
        %v2577 = vsel %vm2575, %v2502, 0
        %v2580 = vsel %vm2575, %v2567, 0
        %v2583 = vsel %vm2575, %v2568, 0
        %v2586 = vsel %vm2575, %v2569, 0
        %v2589 = vsel %vm2575, %v2570, 0
        %v2592 = vsel %vm2575, %v2571, 0
        %v2595 = vsel %vm2575, %v2572, 0
        %v2598 = vsel %vm2575, %v2573, 0
        %v2601 = vsel %vm2575, %v2574, 0
        %2603 = vmatpush.bf16.xpose.msra.mxu0 %v2601
        %2604 = vmatpush.bf16.xpose.msra.mxu0 %v2598
        %2605 = vmatpush.bf16.xpose.msra.mxu0 %v2595
        %2606 = vmatpush.bf16.xpose.msra.mxu0 %v2592
        %2607 = vmatpush.bf16.xpose.msra.mxu0 %v2589
        %2608 = vmatpush.bf16.xpose.msra.mxu0 %v2586
        %2609 = vmatpush.bf16.xpose.msra.mxu0 %v2583
        %2610 = vmatpush.bf16.xpose.msra.mxu0 %v2580
        %2611 = vmatmul.bf16.gmra.mxu0 %v2577
        %v2612 = vpop.f32.mrf.mxu0
        %v2613 = vadd.f32 0.0, %v2612
        %v2614 = vpop.f32.mrf.mxu0
        %2615 = vdwg.mxu0
        %2616 = vmax.xlane.f32.xlu0 %v2613
        %v2617 = vpop.xlane.xlu0 %2616
        %v2618 = vsub.f32 %v2613, %v2617
        %v2619 = vmul.f32 %v2618, 1.442695
        %v2620 = vpow.pop %v2619
        %2621 = vadd.xlane.f32.xlu0 %v2620
        %v2622 = vpop.xlane.xlu0 %2621
        %v2623 = vrcp.pop %v2622
        %v2624 = vmul.f32 %v2620, %v2623
        %v2625 = vpack.c.bf16 %v2624, %v2624
        %v2642 = vunpack.c.l.b16 %v2519
        %v2643 = vunpack.c.l.b16 %v2520
        %v2644 = vunpack.c.l.b16 %v2521
        %v2645 = vunpack.c.l.b16 %v2522
        %v2646 = vunpack.c.l.b16 %v2523
        %v2647 = vunpack.c.l.b16 %v2524
        %v2648 = vunpack.c.l.b16 %v2525
        %v2649 = vunpack.c.l.b16 %v2526
        %v2650 = vunpack.c.l.b16 %v2527
        %v2651 = vunpack.c.l.b16 %v2528
        %v2652 = vunpack.c.l.b16 %v2529
        %v2653 = vunpack.c.l.b16 %v2530
        %v2654 = vunpack.c.l.b16 %v2531
        %v2655 = vunpack.c.l.b16 %v2532
        %v2656 = vunpack.c.l.b16 %v2533
        %v2657 = vunpack.c.l.b16 %v2534
        %v2658 = vpack.c.b16 %v2643, %v2642
        %v2659 = vpack.c.b16 %v2645, %v2644
        %v2660 = vpack.c.b16 %v2647, %v2646
        %v2661 = vpack.c.b16 %v2649, %v2648
        %v2662 = vpack.c.b16 %v2651, %v2650
        %v2663 = vpack.c.b16 %v2653, %v2652
        %v2664 = vpack.c.b16 %v2655, %v2654
        %v2665 = vpack.c.b16 %v2657, %v2656
        %2674 = vmatpush.bf16.msra.mxu0 %v2665
        %2675 = vmatpush.bf16.msra.mxu0 %v2664
        %2676 = vmatpush.bf16.msra.mxu0 %v2663
        %2677 = vmatpush.bf16.msra.mxu0 %v2662
        %2678 = vmatpush.bf16.msra.mxu0 %v2661
        %2679 = vmatpush.bf16.msra.mxu0 %v2660
        %2680 = vmatpush.bf16.msra.mxu0 %v2659
        %2681 = vmatpush.bf16.msra.mxu0 %v2658
        %2682 = vmatmul.bf16.gmra.mxu0 %v2625
        %v2683 = vpop.f32.mrf.mxu0
        %v2684 = vadd.f32 0.0, %v2683
        %v2685 = vpop.f32.mrf.mxu0
        %2686 = vdwg.mxu0
        %v2687 = vpack.c.bf16 %v2684, %v2684
        %v2689 = vunpack.c.l.b16 %v2502
        %v2690 = vpack.c.b16 %v2689, %v2689
        %2691 = vrot.lane.b32.xlu0 %v2690, 112
        %v2692 = vpop.permute.xlu0 %2691
        %2693 = vrot.lane.b32.xlu0 %v2567, 112
        %v2694 = vpop.permute.xlu0 %2693
        %2695 = vrot.lane.b32.xlu0 %v2568, 112
        %v2696 = vpop.permute.xlu0 %2695
        %2697 = vrot.lane.b32.xlu0 %v2569, 112
        %v2698 = vpop.permute.xlu0 %2697
        %2699 = vrot.lane.b32.xlu0 %v2570, 112
        %v2700 = vpop.permute.xlu0 %2699
        %2701 = vrot.lane.b32.xlu0 %v2571, 112
        %v2702 = vpop.permute.xlu0 %2701
        %2703 = vrot.lane.b32.xlu0 %v2572, 112
        %v2704 = vpop.permute.xlu0 %2703
        %2705 = vrot.lane.b32.xlu0 %v2573, 112
        %v2706 = vpop.permute.xlu0 %2705
        %2707 = vrot.lane.b32.xlu0 %v2574, 112
        %v2708 = vpop.permute.xlu0 %2707
        %v2710 = vsel %vm2575, %v2692, 0
        %v2713 = vsel %vm2575, %v2694, 0
        %v2716 = vsel %vm2575, %v2696, 0
        %v2719 = vsel %vm2575, %v2698, 0
        %v2722 = vsel %vm2575, %v2700, 0
        %v2725 = vsel %vm2575, %v2702, 0
        %v2728 = vsel %vm2575, %v2704, 0
        %v2731 = vsel %vm2575, %v2706, 0
        %v2734 = vsel %vm2575, %v2708, 0
        %2736 = vmatpush.bf16.xpose.msra.mxu0 %v2734
        %2737 = vmatpush.bf16.xpose.msra.mxu0 %v2731
        %2738 = vmatpush.bf16.xpose.msra.mxu0 %v2728
        %2739 = vmatpush.bf16.xpose.msra.mxu0 %v2725
        %2740 = vmatpush.bf16.xpose.msra.mxu0 %v2722
        %2741 = vmatpush.bf16.xpose.msra.mxu0 %v2719
        %2742 = vmatpush.bf16.xpose.msra.mxu0 %v2716
        %2743 = vmatpush.bf16.xpose.msra.mxu0 %v2713
        %2744 = vmatmul.bf16.gmra.mxu0 %v2710
        %v2745 = vpop.f32.mrf.mxu0
        %v2746 = vadd.f32 0.0, %v2745
        %v2747 = vpop.f32.mrf.mxu0
        %2748 = vdwg.mxu0
        %2749 = vmax.xlane.f32.xlu0 %v2746
        %v2750 = vpop.xlane.xlu0 %2749
        %v2751 = vsub.f32 %v2746, %v2750
        %v2752 = vmul.f32 %v2751, 1.442695
        %v2753 = vpow.pop %v2752
        %2754 = vadd.xlane.f32.xlu0 %v2753
        %v2755 = vpop.xlane.xlu0 %2754
        %v2756 = vrcp.pop %v2755
        %v2757 = vmul.f32 %v2753, %v2756
        %v2758 = vpack.c.bf16 %v2757, %v2757
        %2759 = vrot.lane.b32.xlu0 %v2658, 112
        %v2760 = vpop.permute.xlu0 %2759
        %2761 = vrot.lane.b32.xlu0 %v2659, 112
        %v2762 = vpop.permute.xlu0 %2761
        %2763 = vrot.lane.b32.xlu0 %v2660, 112
        %v2764 = vpop.permute.xlu0 %2763
        %2765 = vrot.lane.b32.xlu0 %v2661, 112
        %v2766 = vpop.permute.xlu0 %2765
        %2767 = vrot.lane.b32.xlu0 %v2662, 112
        %v2768 = vpop.permute.xlu0 %2767
        %2769 = vrot.lane.b32.xlu0 %v2663, 112
        %v2770 = vpop.permute.xlu0 %2769
        %2771 = vrot.lane.b32.xlu0 %v2664, 112
        %v2772 = vpop.permute.xlu0 %2771
        %2773 = vrot.lane.b32.xlu0 %v2665, 112
        %v2774 = vpop.permute.xlu0 %2773
        %2783 = vmatpush.bf16.msra.mxu0 %v2774
        %2784 = vmatpush.bf16.msra.mxu0 %v2772
        %2785 = vmatpush.bf16.msra.mxu0 %v2770
        %2786 = vmatpush.bf16.msra.mxu0 %v2768
        %2787 = vmatpush.bf16.msra.mxu0 %v2766
        %2788 = vmatpush.bf16.msra.mxu0 %v2764
        %2789 = vmatpush.bf16.msra.mxu0 %v2762
        %2790 = vmatpush.bf16.msra.mxu0 %v2760
        %2791 = vmatmul.bf16.gmra.mxu0 %v2758
        %v2792 = vpop.f32.mrf.mxu0
        %v2793 = vadd.f32 0.0, %v2792
        %v2794 = vpop.f32.mrf.mxu0
        %2795 = vdwg.mxu0
        %v2796 = vpack.c.bf16 %v2793, %v2793
        %v2799 = vunpack.c.l.b16 %v2213
        %v2800 = vunpack.c.l.b16 %v2214
        %v2801 = vpack.c.b16 %v2800, %v2799
        %v2804 = vsel %vm2575, %v2796, 0
        %2806 = vmatpush.bf16.msra.mxu0 0
        %2807 = vmatpush.bf16.msra.mxu0 0
        %2808 = vmatpush.bf16.msra.mxu0 0
        %2809 = vmatpush.bf16.msra.mxu0 0
        %2810 = vmatpush.bf16.msra.mxu0 0
        %2811 = vmatpush.bf16.msra.mxu0 0
        %2812 = vmatpush.bf16.msra.mxu0 0
        %2813 = vmatpush.bf16.msra.mxu0 %v2801
        %2814 = vmatmul.bf16.gmra.mxu0 %v2804
        %v2815 = vpop.f32.mrf.mxu0
        %v2816 = vadd.f32 0.0, %v2815
        %v2817 = vpop.f32.mrf.mxu0
        %2818 = vdwg.mxu0
        %v2821 = vunpack.c.l.b16 %v2211
        %v2822 = vunpack.c.l.b16 %v2212
        %v2823 = vpack.c.b16 %v2822, %v2821
        %v2826 = vsel %vm2575, %v2687, 0
        %2828 = vmatpush.bf16.msra.mxu0 0
        %2829 = vmatpush.bf16.msra.mxu0 0
        %2830 = vmatpush.bf16.msra.mxu0 0
        %2831 = vmatpush.bf16.msra.mxu0 0
        %2832 = vmatpush.bf16.msra.mxu0 0
        %2833 = vmatpush.bf16.msra.mxu0 0
        %2834 = vmatpush.bf16.msra.mxu0 0
        %2835 = vmatpush.bf16.msra.mxu0 %v2823
        %2836 = vmatmul.bf16.gmra.mxu0 %v2826
        %v2837 = vpop.f32.mrf.mxu0
        %v2838 = vadd.f32 %v2816, %v2837
        %v2839 = vpop.f32.mrf.mxu0
        %2840 = vdwg.mxu0
        %2841 = vrot.lane.b32.xlu0 %v2690, 96
        %v2842 = vpop.permute.xlu0 %2841
        %2843 = vrot.lane.b32.xlu0 %v2567, 96
        %v2844 = vpop.permute.xlu0 %2843
        %2845 = vrot.lane.b32.xlu0 %v2568, 96
        %v2846 = vpop.permute.xlu0 %2845
        %2847 = vrot.lane.b32.xlu0 %v2569, 96
        %v2848 = vpop.permute.xlu0 %2847
        %2849 = vrot.lane.b32.xlu0 %v2570, 96
        %v2850 = vpop.permute.xlu0 %2849
        %2851 = vrot.lane.b32.xlu0 %v2571, 96
        %v2852 = vpop.permute.xlu0 %2851
        %2853 = vrot.lane.b32.xlu0 %v2572, 96
        %v2854 = vpop.permute.xlu0 %2853
        %2855 = vrot.lane.b32.xlu0 %v2573, 96
        %v2856 = vpop.permute.xlu0 %2855
        %2857 = vrot.lane.b32.xlu0 %v2574, 96
        %v2858 = vpop.permute.xlu0 %2857
        %v2860 = vsel %vm2575, %v2842, 0
        %v2863 = vsel %vm2575, %v2844, 0
        %v2866 = vsel %vm2575, %v2846, 0
        %v2869 = vsel %vm2575, %v2848, 0
        %v2872 = vsel %vm2575, %v2850, 0
        %v2875 = vsel %vm2575, %v2852, 0
        %v2878 = vsel %vm2575, %v2854, 0
        %v2881 = vsel %vm2575, %v2856, 0
        %v2884 = vsel %vm2575, %v2858, 0
        %2886 = vmatpush.bf16.xpose.msra.mxu0 %v2884
        %2887 = vmatpush.bf16.xpose.msra.mxu0 %v2881
        %2888 = vmatpush.bf16.xpose.msra.mxu0 %v2878
        %2889 = vmatpush.bf16.xpose.msra.mxu0 %v2875
        %2890 = vmatpush.bf16.xpose.msra.mxu0 %v2872
        %2891 = vmatpush.bf16.xpose.msra.mxu0 %v2869
        %2892 = vmatpush.bf16.xpose.msra.mxu0 %v2866
        %2893 = vmatpush.bf16.xpose.msra.mxu0 %v2863
        %2894 = vmatmul.bf16.gmra.mxu0 %v2860
        %v2895 = vpop.f32.mrf.mxu0
        %v2896 = vadd.f32 0.0, %v2895
        %v2897 = vpop.f32.mrf.mxu0
        %2898 = vdwg.mxu0
        %2899 = vmax.xlane.f32.xlu0 %v2896
        %v2900 = vpop.xlane.xlu0 %2899
        %v2901 = vsub.f32 %v2896, %v2900
        %v2902 = vmul.f32 %v2901, 1.442695
        %v2903 = vpow.pop %v2902
        %2904 = vadd.xlane.f32.xlu0 %v2903
        %v2905 = vpop.xlane.xlu0 %2904
        %v2906 = vrcp.pop %v2905
        %v2907 = vmul.f32 %v2903, %v2906
        %v2908 = vpack.c.bf16 %v2907, %v2907
        %2909 = vrot.lane.b32.xlu0 %v2658, 96
        %v2910 = vpop.permute.xlu0 %2909
        %2911 = vrot.lane.b32.xlu0 %v2659, 96
        %v2912 = vpop.permute.xlu0 %2911
        %2913 = vrot.lane.b32.xlu0 %v2660, 96
        %v2914 = vpop.permute.xlu0 %2913
        %2915 = vrot.lane.b32.xlu0 %v2661, 96
        %v2916 = vpop.permute.xlu0 %2915
        %2917 = vrot.lane.b32.xlu0 %v2662, 96
        %v2918 = vpop.permute.xlu0 %2917
        %2919 = vrot.lane.b32.xlu0 %v2663, 96
        %v2920 = vpop.permute.xlu0 %2919
        %2921 = vrot.lane.b32.xlu0 %v2664, 96
        %v2922 = vpop.permute.xlu0 %2921
        %2923 = vrot.lane.b32.xlu0 %v2665, 96
        %v2924 = vpop.permute.xlu0 %2923
        %2933 = vmatpush.bf16.msra.mxu0 %v2924
        %2934 = vmatpush.bf16.msra.mxu0 %v2922
        %2935 = vmatpush.bf16.msra.mxu0 %v2920
        %2936 = vmatpush.bf16.msra.mxu0 %v2918
        %2937 = vmatpush.bf16.msra.mxu0 %v2916
        %2938 = vmatpush.bf16.msra.mxu0 %v2914
        %2939 = vmatpush.bf16.msra.mxu0 %v2912
        %2940 = vmatpush.bf16.msra.mxu0 %v2910
        %2941 = vmatmul.bf16.gmra.mxu0 %v2908
        %v2942 = vpop.f32.mrf.mxu0
        %v2943 = vadd.f32 0.0, %v2942
        %v2944 = vpop.f32.mrf.mxu0
        %2945 = vdwg.mxu0
        %v2946 = vpack.c.bf16 %v2943, %v2943
        %v2949 = vunpack.c.l.b16 %v2215
        %v2950 = vunpack.c.l.b16 %v2216
        %v2951 = vpack.c.b16 %v2950, %v2949
        %v2954 = vsel %vm2575, %v2946, 0
        %2956 = vmatpush.bf16.msra.mxu0 0
        %2957 = vmatpush.bf16.msra.mxu0 0
        %2958 = vmatpush.bf16.msra.mxu0 0
        %2959 = vmatpush.bf16.msra.mxu0 0
        %2960 = vmatpush.bf16.msra.mxu0 0
        %2961 = vmatpush.bf16.msra.mxu0 0
        %2962 = vmatpush.bf16.msra.mxu0 0
        %2963 = vmatpush.bf16.msra.mxu0 %v2951
        %2964 = vmatmul.bf16.gmra.mxu0 %v2954
        %v2965 = vpop.f32.mrf.mxu0
        %v2966 = vadd.f32 0.0, %v2965
        %v2967 = vpop.f32.mrf.mxu0
        %2968 = vdwg.mxu0
        %v2969 = vadd.f32 %v2838, %v2966
        %2970 = vrot.lane.b32.xlu0 %v2690, 80
        %v2971 = vpop.permute.xlu0 %2970
        %2972 = vrot.lane.b32.xlu0 %v2567, 80
        %v2973 = vpop.permute.xlu0 %2972
        %2974 = vrot.lane.b32.xlu0 %v2568, 80
        %v2975 = vpop.permute.xlu0 %2974
        %2976 = vrot.lane.b32.xlu0 %v2569, 80
        %v2977 = vpop.permute.xlu0 %2976
        %2978 = vrot.lane.b32.xlu0 %v2570, 80
        %v2979 = vpop.permute.xlu0 %2978
        %2980 = vrot.lane.b32.xlu0 %v2571, 80
        %v2981 = vpop.permute.xlu0 %2980
        %2982 = vrot.lane.b32.xlu0 %v2572, 80
        %v2983 = vpop.permute.xlu0 %2982
        %2984 = vrot.lane.b32.xlu0 %v2573, 80
        %v2985 = vpop.permute.xlu0 %2984
        %2986 = vrot.lane.b32.xlu0 %v2574, 80
        %v2987 = vpop.permute.xlu0 %2986
        %v2989 = vsel %vm2575, %v2971, 0
        %v2992 = vsel %vm2575, %v2973, 0
        %v2995 = vsel %vm2575, %v2975, 0
        %v2998 = vsel %vm2575, %v2977, 0
        %v3001 = vsel %vm2575, %v2979, 0
        %v3004 = vsel %vm2575, %v2981, 0
        %v3007 = vsel %vm2575, %v2983, 0
        %v3010 = vsel %vm2575, %v2985, 0
        %v3013 = vsel %vm2575, %v2987, 0
        %3015 = vmatpush.bf16.xpose.msra.mxu0 %v3013
        %3016 = vmatpush.bf16.xpose.msra.mxu0 %v3010
        %3017 = vmatpush.bf16.xpose.msra.mxu0 %v3007
        %3018 = vmatpush.bf16.xpose.msra.mxu0 %v3004
        %3019 = vmatpush.bf16.xpose.msra.mxu0 %v3001
        %3020 = vmatpush.bf16.xpose.msra.mxu0 %v2998
        %3021 = vmatpush.bf16.xpose.msra.mxu0 %v2995
        %3022 = vmatpush.bf16.xpose.msra.mxu0 %v2992
        %3023 = vmatmul.bf16.gmra.mxu0 %v2989
        %v3024 = vpop.f32.mrf.mxu0
        %v3025 = vadd.f32 0.0, %v3024
        %v3026 = vpop.f32.mrf.mxu0
        %3027 = vdwg.mxu0
        %3028 = vmax.xlane.f32.xlu0 %v3025
        %v3029 = vpop.xlane.xlu0 %3028
        %v3030 = vsub.f32 %v3025, %v3029
        %v3031 = vmul.f32 %v3030, 1.442695
        %v3032 = vpow.pop %v3031
        %3033 = vadd.xlane.f32.xlu0 %v3032
        %v3034 = vpop.xlane.xlu0 %3033
        %v3035 = vrcp.pop %v3034
        %v3036 = vmul.f32 %v3032, %v3035
        %v3037 = vpack.c.bf16 %v3036, %v3036
        %3038 = vrot.lane.b32.xlu0 %v2658, 80
        %v3039 = vpop.permute.xlu0 %3038
        %3040 = vrot.lane.b32.xlu0 %v2659, 80
        %v3041 = vpop.permute.xlu0 %3040
        %3042 = vrot.lane.b32.xlu0 %v2660, 80
        %v3043 = vpop.permute.xlu0 %3042
        %3044 = vrot.lane.b32.xlu0 %v2661, 80
        %v3045 = vpop.permute.xlu0 %3044
        %3046 = vrot.lane.b32.xlu0 %v2662, 80
        %v3047 = vpop.permute.xlu0 %3046
        %3048 = vrot.lane.b32.xlu0 %v2663, 80
        %v3049 = vpop.permute.xlu0 %3048
        %3050 = vrot.lane.b32.xlu0 %v2664, 80
        %v3051 = vpop.permute.xlu0 %3050
        %3052 = vrot.lane.b32.xlu0 %v2665, 80
        %v3053 = vpop.permute.xlu0 %3052
        %3062 = vmatpush.bf16.msra.mxu0 %v3053
        %3063 = vmatpush.bf16.msra.mxu0 %v3051
        %3064 = vmatpush.bf16.msra.mxu0 %v3049
        %3065 = vmatpush.bf16.msra.mxu0 %v3047
        %3066 = vmatpush.bf16.msra.mxu0 %v3045
        %3067 = vmatpush.bf16.msra.mxu0 %v3043
        %3068 = vmatpush.bf16.msra.mxu0 %v3041
        %3069 = vmatpush.bf16.msra.mxu0 %v3039
        %3070 = vmatmul.bf16.gmra.mxu0 %v3037
        %v3071 = vpop.f32.mrf.mxu0
        %v3072 = vadd.f32 0.0, %v3071
        %v3073 = vpop.f32.mrf.mxu0
        %3074 = vdwg.mxu0
        %v3075 = vpack.c.bf16 %v3072, %v3072
        %v3078 = vunpack.c.l.b16 %v2217
        %v3079 = vunpack.c.l.b16 %v2218
        %v3080 = vpack.c.b16 %v3079, %v3078
        %v3083 = vsel %vm2575, %v3075, 0
        %3085 = vmatpush.bf16.msra.mxu0 0
        %3086 = vmatpush.bf16.msra.mxu0 0
        %3087 = vmatpush.bf16.msra.mxu0 0
        %3088 = vmatpush.bf16.msra.mxu0 0
        %3089 = vmatpush.bf16.msra.mxu0 0
        %3090 = vmatpush.bf16.msra.mxu0 0
        %3091 = vmatpush.bf16.msra.mxu0 0
        %3092 = vmatpush.bf16.msra.mxu0 %v3080
        %3093 = vmatmul.bf16.gmra.mxu0 %v3083
        %v3094 = vpop.f32.mrf.mxu0
        %v3095 = vadd.f32 0.0, %v3094
        %v3096 = vpop.f32.mrf.mxu0
        %3097 = vdwg.mxu0
        %v3098 = vadd.f32 %v2969, %v3095
        %v3100 = vperm.slane %v2219, 0
        %v3102 = vadd.f32 %v3098, %v3100
        %v3103 = vadd.f32 %v2142, %v3102
        %v3104 = vld [vmem:[%s69] sm:$0x1]
        %v3105 = vld [vmem:[%s71] sm:$0x1]
        %3106 = vadd.xlane.f32.xlu0 %v3103
        %v3107 = vpop.xlane.xlu0 %3106
        %v3108 = vmul.f32 %v3107, %v2116
        %v3109 = vsub.f32 %v3103, %v3108
        %v3110 = vmul.f32 %v3109, %v3109
        %3111 = vadd.xlane.f32.xlu0 %v3110
        %v3112 = vpop.xlane.xlu0 %3111
        %v3113 = vmul.f32 %v3112, %v2116
        %v3114 = vadd.f32 %v3113, 1e-05
        %v3115 = vrsqrt.pop %v3114
        %v3116 = vmul.f32 %v3115, %v3114
        %v3117 = vmul.f32 %v3116, %v3115
        %v3118 = vmul.f32 0.5, %v3117
        %v3119 = vsub.f32 1.5, %v3118
        %v3120 = vmul.f32 %v3115, %v3119
        %vm3121 = vweird.f32 %v3114
        %vm3122 = vweird.f32 %v3115
        %vm3123 = vmor %vm3121, %vm3122
        %v3124 = vsel %vm3123, %v3115, %v3120
        %v3125 = vmul.f32 %v3109, %v3124
        %v3127 = vperm.slane %v3104, 0
        %v3129 = vmul.f32 %v3125, %v3127
        %v3131 = vperm.slane %v3105, 0
        %v3133 = vadd.f32 %v3129, %v3131
        %v3134 = vpack.c.bf16 %v3133, %v3133
        %v3135 = vld [vmem:[%s57] sm:$0xff]
        %v3136 = vld [vmem:[%s57 + $0x8] sm:$0xff]
        %v3137 = vld [vmem:[%s57 + $0x10] sm:$0xff]
        %v3138 = vld [vmem:[%s57 + $0x18] sm:$0xff]
        %v3139 = vld [vmem:[%s57 + $0x20] sm:$0xff]
        %v3140 = vld [vmem:[%s57 + $0x28] sm:$0xff]
        %v3141 = vld [vmem:[%s57 + $0x30] sm:$0xff]
        %v3142 = vld [vmem:[%s57 + $0x38] sm:$0xff]
        %v3143 = vld [vmem:[%s57 + $0x40] sm:$0xff]
        %v3144 = vld [vmem:[%s57 + $0x48] sm:$0xff]
        %v3145 = vld [vmem:[%s57 + $0x50] sm:$0xff]
        %v3146 = vld [vmem:[%s57 + $0x58] sm:$0xff]
        %v3147 = vld [vmem:[%s57 + $0x60] sm:$0xff]
        %v3148 = vld [vmem:[%s57 + $0x68] sm:$0xff]
        %v3149 = vld [vmem:[%s57 + $0x70] sm:$0xff]
        %v3150 = vld [vmem:[%s57 + $0x78] sm:$0xff]
        %v3151 = vld [vmem:[%s59] sm:$0x3]
        %v3153 = vperm.slane %v3151, 0
        %v3154 = vperm.slane %v3151, 1
        %v3173 = vunpack.c.l.b16 %v3135
        %v3174 = vunpack.c.h.b16 %v3135
        %v3175 = vunpack.c.l.b16 %v3136
        %v3176 = vunpack.c.h.b16 %v3136
        %v3177 = vunpack.c.l.b16 %v3137
        %v3178 = vunpack.c.h.b16 %v3137
        %v3179 = vunpack.c.l.b16 %v3138
        %v3180 = vunpack.c.h.b16 %v3138
        %v3181 = vunpack.c.l.b16 %v3139
        %v3182 = vunpack.c.h.b16 %v3139
        %v3183 = vunpack.c.l.b16 %v3140
        %v3184 = vunpack.c.h.b16 %v3140
        %v3185 = vunpack.c.l.b16 %v3141
        %v3186 = vunpack.c.h.b16 %v3141
        %v3187 = vunpack.c.l.b16 %v3142
        %v3188 = vunpack.c.h.b16 %v3142
        %v3189 = vunpack.c.l.b16 %v3143
        %v3190 = vunpack.c.h.b16 %v3143
        %v3191 = vunpack.c.l.b16 %v3144
        %v3192 = vunpack.c.h.b16 %v3144
        %v3193 = vunpack.c.l.b16 %v3145
        %v3194 = vunpack.c.h.b16 %v3145
        %v3195 = vunpack.c.l.b16 %v3146
        %v3196 = vunpack.c.h.b16 %v3146
        %v3197 = vunpack.c.l.b16 %v3147
        %v3198 = vunpack.c.h.b16 %v3147
        %v3199 = vunpack.c.l.b16 %v3148
        %v3200 = vunpack.c.h.b16 %v3148
        %v3201 = vunpack.c.l.b16 %v3149
        %v3202 = vunpack.c.h.b16 %v3149
        %v3203 = vunpack.c.l.b16 %v3150
        %v3204 = vunpack.c.h.b16 %v3150
        %v3205 = vpack.c.b16 %v3175, %v3173
        %v3206 = vpack.c.b16 %v3176, %v3174
        %v3207 = vpack.c.b16 %v3179, %v3177
        %v3208 = vpack.c.b16 %v3180, %v3178
        %v3209 = vpack.c.b16 %v3183, %v3181
        %v3210 = vpack.c.b16 %v3184, %v3182
        %v3211 = vpack.c.b16 %v3187, %v3185
        %v3212 = vpack.c.b16 %v3188, %v3186
        %v3213 = vpack.c.b16 %v3191, %v3189
        %v3214 = vpack.c.b16 %v3192, %v3190
        %v3215 = vpack.c.b16 %v3195, %v3193
        %v3216 = vpack.c.b16 %v3196, %v3194
        %v3217 = vpack.c.b16 %v3199, %v3197
        %v3218 = vpack.c.b16 %v3200, %v3198
        %v3219 = vpack.c.b16 %v3203, %v3201
        %v3220 = vpack.c.b16 %v3204, %v3202
        %3237 = vmatpush.bf16.msra.mxu0 %v3219
        %3238 = vmatpush.bf16.msra.mxu0 %v3217
        %3239 = vmatpush.bf16.msra.mxu0 %v3215
        %3240 = vmatpush.bf16.msra.mxu0 %v3213
        %3241 = vmatpush.bf16.msra.mxu0 %v3211
        %3242 = vmatpush.bf16.msra.mxu0 %v3209
        %3243 = vmatpush.bf16.msra.mxu0 %v3207
        %3244 = vmatpush.bf16.msra.mxu0 %v3205
        %3245 = vmatmul.bf16.gmra.mxu0 %v3134
        %v3246 = vpop.f32.mrf.mxu0
        %v3247 = vadd.f32 %v3153, %v3246
        %v3248 = vpop.f32.mrf.mxu0
        %3249 = vdwg.mxu0
        %3250 = vmatpush.bf16.msra.mxu0 %v3220
        %3251 = vmatpush.bf16.msra.mxu0 %v3218
        %3252 = vmatpush.bf16.msra.mxu0 %v3216
        %3253 = vmatpush.bf16.msra.mxu0 %v3214
        %3254 = vmatpush.bf16.msra.mxu0 %v3212
        %3255 = vmatpush.bf16.msra.mxu0 %v3210
        %3256 = vmatpush.bf16.msra.mxu0 %v3208
        %3257 = vmatpush.bf16.msra.mxu0 %v3206
        %3258 = vmatmul.bf16.gmra.mxu0 %v3134
        %v3259 = vpop.f32.mrf.mxu0
        %v3260 = vadd.f32 %v3154, %v3259
        %v3261 = vpop.f32.mrf.mxu0
        %3262 = vdwg.mxu0
        %v3263 = vmax.f32 %v3247, 0.0
        %v3264 = vmax.f32 %v3260, 0.0
        %v3265 = vpack.c.bf16 %v3263, %v3263
        %v3266 = vpack.c.bf16 %v3264, %v3264
        %v3267 = vld [vmem:[%s61] sm:$0xf]
        %v3268 = vld [vmem:[%s61 + $0x4] sm:$0xf]
        %v3269 = vld [vmem:[%s61 + $0x8] sm:$0xf]
        %v3270 = vld [vmem:[%s61 + $0xc] sm:$0xf]
        %v3271 = vld [vmem:[%s61 + $0x10] sm:$0xf]
        %v3272 = vld [vmem:[%s61 + $0x14] sm:$0xf]
        %v3273 = vld [vmem:[%s61 + $0x18] sm:$0xf]
        %v3274 = vld [vmem:[%s61 + $0x1c] sm:$0xf]
        %v3275 = vld [vmem:[%s61 + $0x20] sm:$0xf]
        %v3276 = vld [vmem:[%s61 + $0x24] sm:$0xf]
        %v3277 = vld [vmem:[%s61 + $0x28] sm:$0xf]
        %v3278 = vld [vmem:[%s61 + $0x2c] sm:$0xf]
        %v3279 = vld [vmem:[%s61 + $0x30] sm:$0xf]
        %v3280 = vld [vmem:[%s61 + $0x34] sm:$0xf]
        %v3281 = vld [vmem:[%s61 + $0x38] sm:$0xf]
        %v3282 = vld [vmem:[%s61 + $0x3c] sm:$0xf]
        %v3283 = vld [vmem:[%s61 + $0x40] sm:$0xf]
        %v3284 = vld [vmem:[%s61 + $0x44] sm:$0xf]
        %v3285 = vld [vmem:[%s61 + $0x48] sm:$0xf]
        %v3286 = vld [vmem:[%s61 + $0x4c] sm:$0xf]
        %v3287 = vld [vmem:[%s61 + $0x50] sm:$0xf]
        %v3288 = vld [vmem:[%s61 + $0x54] sm:$0xf]
        %v3289 = vld [vmem:[%s61 + $0x58] sm:$0xf]
        %v3290 = vld [vmem:[%s61 + $0x5c] sm:$0xf]
        %v3291 = vld [vmem:[%s61 + $0x60] sm:$0xf]
        %v3292 = vld [vmem:[%s61 + $0x64] sm:$0xf]
        %v3293 = vld [vmem:[%s61 + $0x68] sm:$0xf]
        %v3294 = vld [vmem:[%s61 + $0x6c] sm:$0xf]
        %v3295 = vld [vmem:[%s61 + $0x70] sm:$0xf]
        %v3296 = vld [vmem:[%s61 + $0x74] sm:$0xf]
        %v3297 = vld [vmem:[%s61 + $0x78] sm:$0xf]
        %v3298 = vld [vmem:[%s61 + $0x7c] sm:$0xf]
        %v3299 = vld [vmem:[%s63] sm:$0x1]
        %v3301 = vperm.slane %v3299, 0
        %v3335 = vunpack.c.l.b16 %v3267
        %v3336 = vunpack.c.l.b16 %v3268
        %v3337 = vunpack.c.l.b16 %v3269
        %v3338 = vunpack.c.l.b16 %v3270
        %v3339 = vunpack.c.l.b16 %v3271
        %v3340 = vunpack.c.l.b16 %v3272
        %v3341 = vunpack.c.l.b16 %v3273
        %v3342 = vunpack.c.l.b16 %v3274
        %v3343 = vunpack.c.l.b16 %v3275
        %v3344 = vunpack.c.l.b16 %v3276
        %v3345 = vunpack.c.l.b16 %v3277
        %v3346 = vunpack.c.l.b16 %v3278
        %v3347 = vunpack.c.l.b16 %v3279
        %v3348 = vunpack.c.l.b16 %v3280
        %v3349 = vunpack.c.l.b16 %v3281
        %v3350 = vunpack.c.l.b16 %v3282
        %v3351 = vunpack.c.l.b16 %v3283
        %v3352 = vunpack.c.l.b16 %v3284
        %v3353 = vunpack.c.l.b16 %v3285
        %v3354 = vunpack.c.l.b16 %v3286
        %v3355 = vunpack.c.l.b16 %v3287
        %v3356 = vunpack.c.l.b16 %v3288
        %v3357 = vunpack.c.l.b16 %v3289
        %v3358 = vunpack.c.l.b16 %v3290
        %v3359 = vunpack.c.l.b16 %v3291
        %v3360 = vunpack.c.l.b16 %v3292
        %v3361 = vunpack.c.l.b16 %v3293
        %v3362 = vunpack.c.l.b16 %v3294
        %v3363 = vunpack.c.l.b16 %v3295
        %v3364 = vunpack.c.l.b16 %v3296
        %v3365 = vunpack.c.l.b16 %v3297
        %v3366 = vunpack.c.l.b16 %v3298
        %v3367 = vpack.c.b16 %v3336, %v3335
        %v3368 = vpack.c.b16 %v3338, %v3337
        %v3369 = vpack.c.b16 %v3340, %v3339
        %v3370 = vpack.c.b16 %v3342, %v3341
        %v3371 = vpack.c.b16 %v3344, %v3343
        %v3372 = vpack.c.b16 %v3346, %v3345
        %v3373 = vpack.c.b16 %v3348, %v3347
        %v3374 = vpack.c.b16 %v3350, %v3349
        %v3375 = vpack.c.b16 %v3352, %v3351
        %v3376 = vpack.c.b16 %v3354, %v3353
        %v3377 = vpack.c.b16 %v3356, %v3355
        %v3378 = vpack.c.b16 %v3358, %v3357
        %v3379 = vpack.c.b16 %v3360, %v3359
        %v3380 = vpack.c.b16 %v3362, %v3361
        %v3381 = vpack.c.b16 %v3364, %v3363
        %v3382 = vpack.c.b16 %v3366, %v3365
        %3399 = vmatpush.bf16.msra.mxu0 %v3374
        %3400 = vmatpush.bf16.msra.mxu0 %v3373
        %3401 = vmatpush.bf16.msra.mxu0 %v3372
        %3402 = vmatpush.bf16.msra.mxu0 %v3371
        %3403 = vmatpush.bf16.msra.mxu0 %v3370
        %3404 = vmatpush.bf16.msra.mxu0 %v3369
        %3405 = vmatpush.bf16.msra.mxu0 %v3368
        %3406 = vmatpush.bf16.msra.mxu0 %v3367
        %3407 = vmatmul.bf16.gmra.mxu0 %v3265
        %v3408 = vpop.f32.mrf.mxu0
        %v3409 = vadd.f32 %v3301, %v3408
        %v3410 = vpop.f32.mrf.mxu0
        %3411 = vdwg.mxu0
        %3412 = vmatpush.bf16.msra.mxu0 %v3382
        %3413 = vmatpush.bf16.msra.mxu0 %v3381
        %3414 = vmatpush.bf16.msra.mxu0 %v3380
        %3415 = vmatpush.bf16.msra.mxu0 %v3379
        %3416 = vmatpush.bf16.msra.mxu0 %v3378
        %3417 = vmatpush.bf16.msra.mxu0 %v3377
        %3418 = vmatpush.bf16.msra.mxu0 %v3376
        %3419 = vmatpush.bf16.msra.mxu0 %v3375
        %3420 = vmatmul.bf16.gmra.mxu0 %v3266
        %v3421 = vpop.f32.mrf.mxu0
        %v3422 = vadd.f32 %v3409, %v3421
        %v3423 = vpop.f32.mrf.mxu0
        %3424 = vdwg.mxu0
        %v3425 = vadd.f32 %v3133, %v3422
        %v3426 = vld [vmem:[%s73] sm:$0x1]
        %v3427 = vld [vmem:[%s75] sm:$0x1]
        %3428 = vadd.xlane.f32.xlu0 %v3425
        %v3429 = vpop.xlane.xlu0 %3428
        %v3430 = vmul.f32 %v3429, %v2116
        %v3431 = vsub.f32 %v3425, %v3430
        %v3432 = vmul.f32 %v3431, %v3431
        %3433 = vadd.xlane.f32.xlu0 %v3432
        %v3434 = vpop.xlane.xlu0 %3433
        %v3435 = vmul.f32 %v3434, %v2116
        %v3436 = vadd.f32 %v3435, 1e-05
        %v3437 = vrsqrt.pop %v3436
        %v3438 = vmul.f32 %v3437, %v3436
        %v3439 = vmul.f32 %v3438, %v3437
        %v3440 = vmul.f32 0.5, %v3439
        %v3441 = vsub.f32 1.5, %v3440
        %v3442 = vmul.f32 %v3437, %v3441
        %vm3443 = vweird.f32 %v3436
        %vm3444 = vweird.f32 %v3437
        %vm3445 = vmor %vm3443, %vm3444
        %v3446 = vsel %vm3445, %v3437, %v3442
        %v3447 = vmul.f32 %v3431, %v3446
        %v3449 = vperm.slane %v3426, 0
        %v3451 = vmul.f32 %v3447, %v3449
        %v3453 = vperm.slane %v3427, 0
        %v3455 = vadd.f32 %v3451, %v3453
        %v3456 = vadd.f32 %v3455, %v1469
        %v3457 = vld [vmem:[%s41] sm:$0xf]
        %v3458 = vld [vmem:[%s41 + $0x4] sm:$0xf]
        %v3459 = vld [vmem:[%s41 + $0x8] sm:$0xf]
        %v3460 = vld [vmem:[%s41 + $0xc] sm:$0xf]
        %v3461 = vld [vmem:[%s41 + $0x10] sm:$0xf]
        %v3462 = vld [vmem:[%s41 + $0x14] sm:$0xf]
        %v3463 = vld [vmem:[%s41 + $0x18] sm:$0xf]
        %v3464 = vld [vmem:[%s41 + $0x1c] sm:$0xf]
        %v3465 = vld [vmem:[%s41 + $0x20] sm:$0xf]
        %v3466 = vld [vmem:[%s41 + $0x24] sm:$0xf]
        %v3467 = vld [vmem:[%s41 + $0x28] sm:$0xf]
        %v3468 = vld [vmem:[%s41 + $0x2c] sm:$0xf]
        %v3469 = vld [vmem:[%s41 + $0x30] sm:$0xf]
        %v3470 = vld [vmem:[%s41 + $0x34] sm:$0xf]
        %v3471 = vld [vmem:[%s41 + $0x38] sm:$0xf]
        %v3472 = vld [vmem:[%s41 + $0x3c] sm:$0xf]
        %v3473 = vld [vmem:[%s43] sm:$0x1]
        %v3474 = vld [vmem:[%s45] sm:$0xf]
        %v3475 = vld [vmem:[%s45 + $0x4] sm:$0xf]
        %v3476 = vld [vmem:[%s45 + $0x8] sm:$0xf]
        %v3477 = vld [vmem:[%s45 + $0xc] sm:$0xf]
        %v3478 = vld [vmem:[%s45 + $0x10] sm:$0xf]
        %v3479 = vld [vmem:[%s45 + $0x14] sm:$0xf]
        %v3480 = vld [vmem:[%s45 + $0x18] sm:$0xf]
        %v3481 = vld [vmem:[%s45 + $0x1c] sm:$0xf]
        %v3482 = vld [vmem:[%s45 + $0x20] sm:$0xf]
        %v3483 = vld [vmem:[%s45 + $0x24] sm:$0xf]
        %v3484 = vld [vmem:[%s45 + $0x28] sm:$0xf]
        %v3485 = vld [vmem:[%s45 + $0x2c] sm:$0xf]
        %v3486 = vld [vmem:[%s45 + $0x30] sm:$0xf]
        %v3487 = vld [vmem:[%s45 + $0x34] sm:$0xf]
        %v3488 = vld [vmem:[%s45 + $0x38] sm:$0xf]
        %v3489 = vld [vmem:[%s45 + $0x3c] sm:$0xf]
        %v3490 = vld [vmem:[%s47] sm:$0x1]
        %v3491 = vld [vmem:[%s49] sm:$0xf]
        %v3492 = vld [vmem:[%s49 + $0x4] sm:$0xf]
        %v3493 = vld [vmem:[%s49 + $0x8] sm:$0xf]
        %v3494 = vld [vmem:[%s49 + $0xc] sm:$0xf]
        %v3495 = vld [vmem:[%s49 + $0x10] sm:$0xf]
        %v3496 = vld [vmem:[%s49 + $0x14] sm:$0xf]
        %v3497 = vld [vmem:[%s49 + $0x18] sm:$0xf]
        %v3498 = vld [vmem:[%s49 + $0x1c] sm:$0xf]
        %v3499 = vld [vmem:[%s49 + $0x20] sm:$0xf]
        %v3500 = vld [vmem:[%s49 + $0x24] sm:$0xf]
        %v3501 = vld [vmem:[%s49 + $0x28] sm:$0xf]
        %v3502 = vld [vmem:[%s49 + $0x2c] sm:$0xf]
        %v3503 = vld [vmem:[%s49 + $0x30] sm:$0xf]
        %v3504 = vld [vmem:[%s49 + $0x34] sm:$0xf]
        %v3505 = vld [vmem:[%s49 + $0x38] sm:$0xf]
        %v3506 = vld [vmem:[%s49 + $0x3c] sm:$0xf]
        %v3507 = vld [vmem:[%s51] sm:$0x1]
        %v3508 = vld [vmem:[#allocation14] sm:$0xf]
        %v3509 = vld [vmem:[#allocation14 + $0x4] sm:$0xf]
        %v3510 = vld [vmem:[#allocation14 + $0x8] sm:$0xf]
        %v3511 = vld [vmem:[#allocation14 + $0xc] sm:$0xf]
        %v3512 = vld [vmem:[#allocation14 + $0x10] sm:$0xf]
        %v3513 = vld [vmem:[#allocation14 + $0x14] sm:$0xf]
        %v3514 = vld [vmem:[#allocation14 + $0x18] sm:$0xf]
        %v3515 = vld [vmem:[#allocation14 + $0x1c] sm:$0xf]
        %v3516 = vld [vmem:[%s55] sm:$0x1]
        %v3518 = vperm.slane %v3473, 0
        %v3536 = vunpack.c.l.b16 %v3457
        %v3537 = vunpack.c.l.b16 %v3458
        %v3538 = vunpack.c.l.b16 %v3459
        %v3539 = vunpack.c.l.b16 %v3460
        %v3540 = vunpack.c.l.b16 %v3461
        %v3541 = vunpack.c.l.b16 %v3462
        %v3542 = vunpack.c.l.b16 %v3463
        %v3543 = vunpack.c.l.b16 %v3464
        %v3544 = vunpack.c.l.b16 %v3465
        %v3545 = vunpack.c.l.b16 %v3466
        %v3546 = vunpack.c.l.b16 %v3467
        %v3547 = vunpack.c.l.b16 %v3468
        %v3548 = vunpack.c.l.b16 %v3469
        %v3549 = vunpack.c.l.b16 %v3470
        %v3550 = vunpack.c.l.b16 %v3471
        %v3551 = vunpack.c.l.b16 %v3472
        %v3552 = vpack.c.b16 %v3537, %v3536
        %v3553 = vpack.c.b16 %v3539, %v3538
        %v3554 = vpack.c.b16 %v3541, %v3540
        %v3555 = vpack.c.b16 %v3543, %v3542
        %v3556 = vpack.c.b16 %v3545, %v3544
        %v3557 = vpack.c.b16 %v3547, %v3546
        %v3558 = vpack.c.b16 %v3549, %v3548
        %v3559 = vpack.c.b16 %v3551, %v3550
        %3568 = vmatpush.bf16.msra.mxu0 %v3559
        %3569 = vmatpush.bf16.msra.mxu0 %v3558
        %3570 = vmatpush.bf16.msra.mxu0 %v3557
        %3571 = vmatpush.bf16.msra.mxu0 %v3556
        %3572 = vmatpush.bf16.msra.mxu0 %v3555
        %3573 = vmatpush.bf16.msra.mxu0 %v3554
        %3574 = vmatpush.bf16.msra.mxu0 %v3553
        %3575 = vmatpush.bf16.msra.mxu0 %v3552
        %3576 = vmatmul.bf16.gmra.mxu0 %v2285
        %v3577 = vpop.f32.mrf.mxu0
        %v3578 = vadd.f32 %v3518, %v3577
        %v3579 = vpop.f32.mrf.mxu0
        %v3580 = vadd.f32 %v3518, %v3579
        %3581 = vmatmul.bf16.gmra.mxu0 %v2286
        %v3582 = vpop.f32.mrf.mxu0
        %v3583 = vadd.f32 %v3518, %v3582
        %v3584 = vpop.f32.mrf.mxu0
        %v3585 = vadd.f32 %v3518, %v3584
        %3586 = vmatmul.bf16.gmra.mxu0 %v2287
        %v3587 = vpop.f32.mrf.mxu0
        %v3588 = vadd.f32 %v3518, %v3587
        %v3589 = vpop.f32.mrf.mxu0
        %v3590 = vadd.f32 %v3518, %v3589
        %3591 = vmatmul.bf16.gmra.mxu0 %v2288
        %v3592 = vpop.f32.mrf.mxu0
        %v3593 = vadd.f32 %v3518, %v3592
        %v3594 = vpop.f32.mrf.mxu0
        %v3595 = vadd.f32 %v3518, %v3594
        %3596 = vmatmul.bf16.gmra.mxu0 %v2289
        %v3597 = vpop.f32.mrf.mxu0
        %v3598 = vadd.f32 %v3518, %v3597
        %v3599 = vpop.f32.mrf.mxu0
        %v3600 = vadd.f32 %v3518, %v3599
        %3601 = vmatmul.bf16.gmra.mxu0 %v2290
        %v3602 = vpop.f32.mrf.mxu0
        %v3603 = vadd.f32 %v3518, %v3602
        %v3604 = vpop.f32.mrf.mxu0
        %v3605 = vadd.f32 %v3518, %v3604
        %3606 = vmatmul.bf16.gmra.mxu0 %v2291
        %v3607 = vpop.f32.mrf.mxu0
        %v3608 = vadd.f32 %v3518, %v3607
        %v3609 = vpop.f32.mrf.mxu0
        %v3610 = vadd.f32 %v3518, %v3609
        %3611 = vmatmul.bf16.gmra.mxu0 %v2292
        %v3612 = vpop.f32.mrf.mxu0
        %v3613 = vadd.f32 %v3518, %v3612
        %v3614 = vpop.f32.mrf.mxu0
        %v3615 = vadd.f32 %v3518, %v3614
        %3616 = vdwg.mxu0
        %v3617 = vpack.c.bf16 %v3456, %v3456
        %v3619 = vperm.slane %v3490, 0
        %v3637 = vunpack.c.l.b16 %v3474
        %v3638 = vunpack.c.l.b16 %v3475
        %v3639 = vunpack.c.l.b16 %v3476
        %v3640 = vunpack.c.l.b16 %v3477
        %v3641 = vunpack.c.l.b16 %v3478
        %v3642 = vunpack.c.l.b16 %v3479
        %v3643 = vunpack.c.l.b16 %v3480
        %v3644 = vunpack.c.l.b16 %v3481
        %v3645 = vunpack.c.l.b16 %v3482
        %v3646 = vunpack.c.l.b16 %v3483
        %v3647 = vunpack.c.l.b16 %v3484
        %v3648 = vunpack.c.l.b16 %v3485
        %v3649 = vunpack.c.l.b16 %v3486
        %v3650 = vunpack.c.l.b16 %v3487
        %v3651 = vunpack.c.l.b16 %v3488
        %v3652 = vunpack.c.l.b16 %v3489
        %v3653 = vpack.c.b16 %v3638, %v3637
        %v3654 = vpack.c.b16 %v3640, %v3639
        %v3655 = vpack.c.b16 %v3642, %v3641
        %v3656 = vpack.c.b16 %v3644, %v3643
        %v3657 = vpack.c.b16 %v3646, %v3645
        %v3658 = vpack.c.b16 %v3648, %v3647
        %v3659 = vpack.c.b16 %v3650, %v3649
        %v3660 = vpack.c.b16 %v3652, %v3651
        %3669 = vmatpush.bf16.msra.mxu0 %v3660
        %3670 = vmatpush.bf16.msra.mxu0 %v3659
        %3671 = vmatpush.bf16.msra.mxu0 %v3658
        %3672 = vmatpush.bf16.msra.mxu0 %v3657
        %3673 = vmatpush.bf16.msra.mxu0 %v3656
        %3674 = vmatpush.bf16.msra.mxu0 %v3655
        %3675 = vmatpush.bf16.msra.mxu0 %v3654
        %3676 = vmatpush.bf16.msra.mxu0 %v3653
        %3677 = vmatmul.bf16.gmra.mxu0 %v3617
        %v3678 = vpop.f32.mrf.mxu0
        %v3679 = vadd.f32 %v3619, %v3678
        %v3680 = vpop.f32.mrf.mxu0
        %3681 = vdwg.mxu0
        %v3682 = vpack.c.bf16 %v3455, %v3455
        %v3684 = vperm.slane %v3507, 0
        %v3702 = vunpack.c.l.b16 %v3491
        %v3703 = vunpack.c.l.b16 %v3492
        %v3704 = vunpack.c.l.b16 %v3493
        %v3705 = vunpack.c.l.b16 %v3494
        %v3706 = vunpack.c.l.b16 %v3495
        %v3707 = vunpack.c.l.b16 %v3496
        %v3708 = vunpack.c.l.b16 %v3497
        %v3709 = vunpack.c.l.b16 %v3498
        %v3710 = vunpack.c.l.b16 %v3499
        %v3711 = vunpack.c.l.b16 %v3500
        %v3712 = vunpack.c.l.b16 %v3501
        %v3713 = vunpack.c.l.b16 %v3502
        %v3714 = vunpack.c.l.b16 %v3503
        %v3715 = vunpack.c.l.b16 %v3504
        %v3716 = vunpack.c.l.b16 %v3505
        %v3717 = vunpack.c.l.b16 %v3506
        %v3718 = vpack.c.b16 %v3703, %v3702
        %v3719 = vpack.c.b16 %v3705, %v3704
        %v3720 = vpack.c.b16 %v3707, %v3706
        %v3721 = vpack.c.b16 %v3709, %v3708
        %v3722 = vpack.c.b16 %v3711, %v3710
        %v3723 = vpack.c.b16 %v3713, %v3712
        %v3724 = vpack.c.b16 %v3715, %v3714
        %v3725 = vpack.c.b16 %v3717, %v3716
        %3734 = vmatpush.bf16.msra.mxu0 %v3725
        %3735 = vmatpush.bf16.msra.mxu0 %v3724
        %3736 = vmatpush.bf16.msra.mxu0 %v3723
        %3737 = vmatpush.bf16.msra.mxu0 %v3722
        %3738 = vmatpush.bf16.msra.mxu0 %v3721
        %3739 = vmatpush.bf16.msra.mxu0 %v3720
        %3740 = vmatpush.bf16.msra.mxu0 %v3719
        %3741 = vmatpush.bf16.msra.mxu0 %v3718
        %3742 = vmatmul.bf16.gmra.mxu0 %v3682
        %v3743 = vpop.f32.mrf.mxu0
        %v3744 = vadd.f32 %v3684, %v3743
        %v3745 = vpop.f32.mrf.mxu0
        %3746 = vdwg.mxu0
        %v3747 = vmul.f32 %v3578, 0.25
        %v3748 = vmul.f32 %v3580, 0.25
        %v3749 = vmul.f32 %v3583, 0.25
        %v3750 = vmul.f32 %v3585, 0.25
        %v3751 = vmul.f32 %v3588, 0.25
        %v3752 = vmul.f32 %v3590, 0.25
        %v3753 = vmul.f32 %v3593, 0.25
        %v3754 = vmul.f32 %v3595, 0.25
        %v3755 = vmul.f32 %v3598, 0.25
        %v3756 = vmul.f32 %v3600, 0.25
        %v3757 = vmul.f32 %v3603, 0.25
        %v3758 = vmul.f32 %v3605, 0.25
        %v3759 = vmul.f32 %v3608, 0.25
        %v3760 = vmul.f32 %v3610, 0.25
        %v3761 = vmul.f32 %v3613, 0.25
        %v3762 = vmul.f32 %v3615, 0.25
        %v3763 = vpack.c.bf16 %v3747, %v3747
        %v3764 = vpack.c.bf16 %v3748, %v3748
        %v3765 = vpack.c.bf16 %v3749, %v3749
        %v3766 = vpack.c.bf16 %v3750, %v3750
        %v3767 = vpack.c.bf16 %v3751, %v3751
        %v3768 = vpack.c.bf16 %v3752, %v3752
        %v3769 = vpack.c.bf16 %v3753, %v3753
        %v3770 = vpack.c.bf16 %v3754, %v3754
        %v3771 = vpack.c.bf16 %v3755, %v3755
        %v3772 = vpack.c.bf16 %v3756, %v3756
        %v3773 = vpack.c.bf16 %v3757, %v3757
        %v3774 = vpack.c.bf16 %v3758, %v3758
        %v3775 = vpack.c.bf16 %v3759, %v3759
        %v3776 = vpack.c.bf16 %v3760, %v3760
        %v3777 = vpack.c.bf16 %v3761, %v3761
        %v3778 = vpack.c.bf16 %v3762, %v3762
        %v3779 = vpack.c.bf16 %v3679, %v3679
        %v3780 = vpack.c.bf16 %v3744, %v3744
        %v3797 = vunpack.c.l.b16 %v3763
        %v3798 = vunpack.c.l.b16 %v3764
        %v3799 = vunpack.c.l.b16 %v3765
        %v3800 = vunpack.c.l.b16 %v3766
        %v3801 = vunpack.c.l.b16 %v3767
        %v3802 = vunpack.c.l.b16 %v3768
        %v3803 = vunpack.c.l.b16 %v3769
        %v3804 = vunpack.c.l.b16 %v3770
        %v3805 = vunpack.c.l.b16 %v3771
        %v3806 = vunpack.c.l.b16 %v3772
        %v3807 = vunpack.c.l.b16 %v3773
        %v3808 = vunpack.c.l.b16 %v3774
        %v3809 = vunpack.c.l.b16 %v3775
        %v3810 = vunpack.c.l.b16 %v3776
        %v3811 = vunpack.c.l.b16 %v3777
        %v3812 = vunpack.c.l.b16 %v3778
        %v3813 = vpack.c.b16 %v3798, %v3797
        %v3814 = vpack.c.b16 %v3800, %v3799
        %v3815 = vpack.c.b16 %v3802, %v3801
        %v3816 = vpack.c.b16 %v3804, %v3803
        %v3817 = vpack.c.b16 %v3806, %v3805
        %v3818 = vpack.c.b16 %v3808, %v3807
        %v3819 = vpack.c.b16 %v3810, %v3809
        %v3820 = vpack.c.b16 %v3812, %v3811
        %v3822 = vsel %vm2575, %v3813, 0
        %v3825 = vsel %vm2575, %v3814, 0
        %v3828 = vsel %vm2575, %v3815, 0
        %v3831 = vsel %vm2575, %v3816, 0
        %v3834 = vsel %vm2575, %v3817, 0
        %v3837 = vsel %vm2575, %v3818, 0
        %v3840 = vsel %vm2575, %v3819, 0
        %v3843 = vsel %vm2575, %v3820, 0
        %v3846 = vsel %vm2575, %v3779, 0
        %3848 = vmatpush.bf16.xpose.msra.mxu0 0
        %3849 = vmatpush.bf16.xpose.msra.mxu0 0
        %3850 = vmatpush.bf16.xpose.msra.mxu0 0
        %3851 = vmatpush.bf16.xpose.msra.mxu0 0
        %3852 = vmatpush.bf16.xpose.msra.mxu0 0
        %3853 = vmatpush.bf16.xpose.msra.mxu0 0
        %3854 = vmatpush.bf16.xpose.msra.mxu0 0
        %3855 = vmatpush.bf16.xpose.msra.mxu0 %v3846
        %3856 = vmatmul.bf16.gmra.mxu0 %v3822
        %v3857 = vpop.f32.mrf.mxu0
        %v3858 = vadd.f32 0.0, %v3857
        %v3859 = vpop.f32.mrf.mxu0
        %v3860 = vadd.f32 0.0, %v3859
        %3861 = vmatmul.bf16.gmra.mxu0 %v3825
        %v3862 = vpop.f32.mrf.mxu0
        %v3863 = vadd.f32 0.0, %v3862
        %v3864 = vpop.f32.mrf.mxu0
        %v3865 = vadd.f32 0.0, %v3864
        %3866 = vmatmul.bf16.gmra.mxu0 %v3828
        %v3867 = vpop.f32.mrf.mxu0
        %v3868 = vadd.f32 0.0, %v3867
        %v3869 = vpop.f32.mrf.mxu0
        %v3870 = vadd.f32 0.0, %v3869
        %3871 = vmatmul.bf16.gmra.mxu0 %v3831
        %v3872 = vpop.f32.mrf.mxu0
        %v3873 = vadd.f32 0.0, %v3872
        %v3874 = vpop.f32.mrf.mxu0
        %v3875 = vadd.f32 0.0, %v3874
        %3876 = vmatmul.bf16.gmra.mxu0 %v3834
        %v3877 = vpop.f32.mrf.mxu0
        %v3878 = vadd.f32 0.0, %v3877
        %v3879 = vpop.f32.mrf.mxu0
        %v3880 = vadd.f32 0.0, %v3879
        %3881 = vmatmul.bf16.gmra.mxu0 %v3837
        %v3882 = vpop.f32.mrf.mxu0
        %v3883 = vadd.f32 0.0, %v3882
        %v3884 = vpop.f32.mrf.mxu0
        %v3885 = vadd.f32 0.0, %v3884
        %3886 = vmatmul.bf16.gmra.mxu0 %v3840
        %v3887 = vpop.f32.mrf.mxu0
        %v3888 = vadd.f32 0.0, %v3887
        %v3889 = vpop.f32.mrf.mxu0
        %v3890 = vadd.f32 0.0, %v3889
        %3891 = vmatmul.bf16.gmra.mxu0 %v3843
        %v3892 = vpop.f32.mrf.mxu0
        %v3893 = vadd.f32 0.0, %v3892
        %v3894 = vpop.f32.mrf.mxu0
        %v3895 = vadd.f32 0.0, %v3894
        %3896 = vdwg.mxu0
        %v3897 = vsel %vm1773, %v3858, -inf
        %3898 = vmax.xlane.f32.xlu0 %v3897
        %v3899 = vpop.xlane.xlu0 %3898
        %v3900 = vsel %vm1773, %v3860, -inf
        %3901 = vmax.xlane.f32.xlu0 %v3900
        %v3902 = vpop.xlane.xlu0 %3901
        %v3903 = vsel %vm1773, %v3863, -inf
        %3904 = vmax.xlane.f32.xlu0 %v3903
        %v3905 = vpop.xlane.xlu0 %3904
        %v3906 = vsel %vm1773, %v3865, -inf
        %3907 = vmax.xlane.f32.xlu0 %v3906
        %v3908 = vpop.xlane.xlu0 %3907
        %v3909 = vsel %vm1773, %v3868, -inf
        %3910 = vmax.xlane.f32.xlu0 %v3909
        %v3911 = vpop.xlane.xlu0 %3910
        %v3912 = vsel %vm1773, %v3870, -inf
        %3913 = vmax.xlane.f32.xlu0 %v3912
        %v3914 = vpop.xlane.xlu0 %3913
        %v3915 = vsel %vm1773, %v3873, -inf
        %3916 = vmax.xlane.f32.xlu0 %v3915
        %v3917 = vpop.xlane.xlu0 %3916
        %v3918 = vsel %vm1773, %v3875, -inf
        %3919 = vmax.xlane.f32.xlu0 %v3918
        %v3920 = vpop.xlane.xlu0 %3919
        %v3921 = vsel %vm1773, %v3878, -inf
        %3922 = vmax.xlane.f32.xlu0 %v3921
        %v3923 = vpop.xlane.xlu0 %3922
        %v3924 = vsel %vm1773, %v3880, -inf
        %3925 = vmax.xlane.f32.xlu0 %v3924
        %v3926 = vpop.xlane.xlu0 %3925
        %v3927 = vsel %vm1773, %v3883, -inf
        %3928 = vmax.xlane.f32.xlu0 %v3927
        %v3929 = vpop.xlane.xlu0 %3928
        %v3930 = vsel %vm1773, %v3885, -inf
        %3931 = vmax.xlane.f32.xlu0 %v3930
        %v3932 = vpop.xlane.xlu0 %3931
        %v3933 = vsel %vm1773, %v3888, -inf
        %3934 = vmax.xlane.f32.xlu0 %v3933
        %v3935 = vpop.xlane.xlu0 %3934
        %v3936 = vsel %vm1773, %v3890, -inf
        %3937 = vmax.xlane.f32.xlu0 %v3936
        %v3938 = vpop.xlane.xlu0 %3937
        %v3939 = vsel %vm1773, %v3893, -inf
        %3940 = vmax.xlane.f32.xlu0 %v3939
        %v3941 = vpop.xlane.xlu0 %3940
        %v3942 = vsel %vm1773, %v3895, -inf
        %3943 = vmax.xlane.f32.xlu0 %v3942
        %v3944 = vpop.xlane.xlu0 %3943
        %v3945 = vsub.f32 %v3858, %v3899
        %v3946 = vsub.f32 %v3860, %v3902
        %v3947 = vsub.f32 %v3863, %v3905
        %v3948 = vsub.f32 %v3865, %v3908
        %v3949 = vsub.f32 %v3868, %v3911
        %v3950 = vsub.f32 %v3870, %v3914
        %v3951 = vsub.f32 %v3873, %v3917
        %v3952 = vsub.f32 %v3875, %v3920
        %v3953 = vsub.f32 %v3878, %v3923
        %v3954 = vsub.f32 %v3880, %v3926
        %v3955 = vsub.f32 %v3883, %v3929
        %v3956 = vsub.f32 %v3885, %v3932
        %v3957 = vsub.f32 %v3888, %v3935
        %v3958 = vsub.f32 %v3890, %v3938
        %v3959 = vsub.f32 %v3893, %v3941
        %v3960 = vsub.f32 %v3895, %v3944
        %v3961 = vmul.f32 %v3945, 1.442695
        %v3962 = vpow.pop %v3961
        %v3963 = vmul.f32 %v3946, 1.442695
        %v3964 = vpow.pop %v3963
        %v3965 = vmul.f32 %v3947, 1.442695
        %v3966 = vpow.pop %v3965
        %v3967 = vmul.f32 %v3948, 1.442695
        %v3968 = vpow.pop %v3967
        %v3969 = vmul.f32 %v3949, 1.442695
        %v3970 = vpow.pop %v3969
        %v3971 = vmul.f32 %v3950, 1.442695
        %v3972 = vpow.pop %v3971
        %v3973 = vmul.f32 %v3951, 1.442695
        %v3974 = vpow.pop %v3973
        %v3975 = vmul.f32 %v3952, 1.442695
        %v3976 = vpow.pop %v3975
        %v3977 = vmul.f32 %v3953, 1.442695
        %v3978 = vpow.pop %v3977
        %v3979 = vmul.f32 %v3954, 1.442695
        %v3980 = vpow.pop %v3979
        %v3981 = vmul.f32 %v3955, 1.442695
        %v3982 = vpow.pop %v3981
        %v3983 = vmul.f32 %v3956, 1.442695
        %v3984 = vpow.pop %v3983
        %v3985 = vmul.f32 %v3957, 1.442695
        %v3986 = vpow.pop %v3985
        %v3987 = vmul.f32 %v3958, 1.442695
        %v3988 = vpow.pop %v3987
        %v3989 = vmul.f32 %v3959, 1.442695
        %v3990 = vpow.pop %v3989
        %v3991 = vmul.f32 %v3960, 1.442695
        %v3992 = vpow.pop %v3991
        %v3993 = vsel %vm1773, %v3962, 0.0
        %3994 = vadd.xlane.f32.xlu0 %v3993
        %v3995 = vpop.xlane.xlu0 %3994
        %v3996 = vsel %vm1773, %v3964, 0.0
        %3997 = vadd.xlane.f32.xlu0 %v3996
        %v3998 = vpop.xlane.xlu0 %3997
        %v3999 = vsel %vm1773, %v3966, 0.0
        %4000 = vadd.xlane.f32.xlu0 %v3999
        %v4001 = vpop.xlane.xlu0 %4000
        %v4002 = vsel %vm1773, %v3968, 0.0
        %4003 = vadd.xlane.f32.xlu0 %v4002
        %v4004 = vpop.xlane.xlu0 %4003
        %v4005 = vsel %vm1773, %v3970, 0.0
        %4006 = vadd.xlane.f32.xlu0 %v4005
        %v4007 = vpop.xlane.xlu0 %4006
        %v4008 = vsel %vm1773, %v3972, 0.0
        %4009 = vadd.xlane.f32.xlu0 %v4008
        %v4010 = vpop.xlane.xlu0 %4009
        %v4011 = vsel %vm1773, %v3974, 0.0
        %4012 = vadd.xlane.f32.xlu0 %v4011
        %v4013 = vpop.xlane.xlu0 %4012
        %v4014 = vsel %vm1773, %v3976, 0.0
        %4015 = vadd.xlane.f32.xlu0 %v4014
        %v4016 = vpop.xlane.xlu0 %4015
        %v4017 = vsel %vm1773, %v3978, 0.0
        %4018 = vadd.xlane.f32.xlu0 %v4017
        %v4019 = vpop.xlane.xlu0 %4018
        %v4020 = vsel %vm1773, %v3980, 0.0
        %4021 = vadd.xlane.f32.xlu0 %v4020
        %v4022 = vpop.xlane.xlu0 %4021
        %v4023 = vsel %vm1773, %v3982, 0.0
        %4024 = vadd.xlane.f32.xlu0 %v4023
        %v4025 = vpop.xlane.xlu0 %4024
        %v4026 = vsel %vm1773, %v3984, 0.0
        %4027 = vadd.xlane.f32.xlu0 %v4026
        %v4028 = vpop.xlane.xlu0 %4027
        %v4029 = vsel %vm1773, %v3986, 0.0
        %4030 = vadd.xlane.f32.xlu0 %v4029
        %v4031 = vpop.xlane.xlu0 %4030
        %v4032 = vsel %vm1773, %v3988, 0.0
        %4033 = vadd.xlane.f32.xlu0 %v4032
        %v4034 = vpop.xlane.xlu0 %4033
        %v4035 = vsel %vm1773, %v3990, 0.0
        %4036 = vadd.xlane.f32.xlu0 %v4035
        %v4037 = vpop.xlane.xlu0 %4036
        %v4038 = vsel %vm1773, %v3992, 0.0
        %4039 = vadd.xlane.f32.xlu0 %v4038
        %v4040 = vpop.xlane.xlu0 %4039
        %v4041 = vrcp.pop %v3995
        %v4042 = vrcp.pop %v3998
        %v4043 = vrcp.pop %v4001
        %v4044 = vrcp.pop %v4004
        %v4045 = vrcp.pop %v4007
        %v4046 = vrcp.pop %v4010
        %v4047 = vrcp.pop %v4013
        %v4048 = vrcp.pop %v4016
        %v4049 = vrcp.pop %v4019
        %v4050 = vrcp.pop %v4022
        %v4051 = vrcp.pop %v4025
        %v4052 = vrcp.pop %v4028
        %v4053 = vrcp.pop %v4031
        %v4054 = vrcp.pop %v4034
        %v4055 = vrcp.pop %v4037
        %v4056 = vrcp.pop %v4040
        %v4057 = vmul.f32 %v3962, %v4041
        %v4058 = vmul.f32 %v3964, %v4042
        %v4059 = vmul.f32 %v3966, %v4043
        %v4060 = vmul.f32 %v3968, %v4044
        %v4061 = vmul.f32 %v3970, %v4045
        %v4062 = vmul.f32 %v3972, %v4046
        %v4063 = vmul.f32 %v3974, %v4047
        %v4064 = vmul.f32 %v3976, %v4048
        %v4065 = vmul.f32 %v3978, %v4049
        %v4066 = vmul.f32 %v3980, %v4050
        %v4067 = vmul.f32 %v3982, %v4051
        %v4068 = vmul.f32 %v3984, %v4052
        %v4069 = vmul.f32 %v3986, %v4053
        %v4070 = vmul.f32 %v3988, %v4054
        %v4071 = vmul.f32 %v3990, %v4055
        %v4072 = vmul.f32 %v3992, %v4056
        %v4073 = vpack.c.bf16 %v4058, %v4057
        %v4074 = vpack.c.bf16 %v4060, %v4059
        %v4075 = vpack.c.bf16 %v4062, %v4061
        %v4076 = vpack.c.bf16 %v4064, %v4063
        %v4077 = vpack.c.bf16 %v4066, %v4065
        %v4078 = vpack.c.bf16 %v4068, %v4067
        %v4079 = vpack.c.bf16 %v4070, %v4069
        %v4080 = vpack.c.bf16 %v4072, %v4071
        %v4082 = vsel %vm1773, %v4073, 0
        %v4085 = vsel %vm1773, %v4074, 0
        %v4088 = vsel %vm1773, %v4075, 0
        %v4091 = vsel %vm1773, %v4076, 0
        %v4094 = vsel %vm1773, %v4077, 0
        %v4097 = vsel %vm1773, %v4078, 0
        %v4100 = vsel %vm1773, %v4079, 0
        %v4103 = vsel %vm1773, %v4080, 0
        %v4106 = vsel %vm1789, %v3780, 0
        %4108 = vmatpush.bf16.msra.mxu0 0
        %4109 = vmatpush.bf16.msra.mxu0 0
        %4110 = vmatpush.bf16.msra.mxu0 0
        %4111 = vmatpush.bf16.msra.mxu0 0
        %4112 = vmatpush.bf16.msra.mxu0 0
        %4113 = vmatpush.bf16.msra.mxu0 0
        %4114 = vmatpush.bf16.msra.mxu0 0
        %4115 = vmatpush.bf16.msra.mxu0 %v4106
        %4116 = vmatmul.bf16.gmra.mxu0 %v4082
        %v4117 = vpop.f32.mrf.mxu0
        %v4118 = vadd.f32 0.0, %v4117
        %v4119 = vpop.f32.mrf.mxu0
        %v4120 = vadd.f32 0.0, %v4119
        %4121 = vmatmul.bf16.gmra.mxu0 %v4085
        %v4122 = vpop.f32.mrf.mxu0
        %v4123 = vadd.f32 0.0, %v4122
        %v4124 = vpop.f32.mrf.mxu0
        %v4125 = vadd.f32 0.0, %v4124
        %4126 = vmatmul.bf16.gmra.mxu0 %v4088
        %v4127 = vpop.f32.mrf.mxu0
        %v4128 = vadd.f32 0.0, %v4127
        %v4129 = vpop.f32.mrf.mxu0
        %v4130 = vadd.f32 0.0, %v4129
        %4131 = vmatmul.bf16.gmra.mxu0 %v4091
        %v4132 = vpop.f32.mrf.mxu0
        %v4133 = vadd.f32 0.0, %v4132
        %v4134 = vpop.f32.mrf.mxu0
        %v4135 = vadd.f32 0.0, %v4134
        %4136 = vmatmul.bf16.gmra.mxu0 %v4094
        %v4137 = vpop.f32.mrf.mxu0
        %v4138 = vadd.f32 0.0, %v4137
        %v4139 = vpop.f32.mrf.mxu0
        %v4140 = vadd.f32 0.0, %v4139
        %4141 = vmatmul.bf16.gmra.mxu0 %v4097
        %v4142 = vpop.f32.mrf.mxu0
        %v4143 = vadd.f32 0.0, %v4142
        %v4144 = vpop.f32.mrf.mxu0
        %v4145 = vadd.f32 0.0, %v4144
        %4146 = vmatmul.bf16.gmra.mxu0 %v4100
        %v4147 = vpop.f32.mrf.mxu0
        %v4148 = vadd.f32 0.0, %v4147
        %v4149 = vpop.f32.mrf.mxu0
        %v4150 = vadd.f32 0.0, %v4149
        %4151 = vmatmul.bf16.gmra.mxu0 %v4103
        %v4152 = vpop.f32.mrf.mxu0
        %v4153 = vadd.f32 0.0, %v4152
        %v4154 = vpop.f32.mrf.mxu0
        %v4155 = vadd.f32 0.0, %v4154
        %4156 = vdwg.mxu0
        %v4157 = vpack.c.bf16 %v4120, %v4118
        %v4158 = vpack.c.bf16 %v4125, %v4123
        %v4159 = vpack.c.bf16 %v4130, %v4128
        %v4160 = vpack.c.bf16 %v4135, %v4133
        %v4161 = vpack.c.bf16 %v4140, %v4138
        %v4162 = vpack.c.bf16 %v4145, %v4143
        %v4163 = vpack.c.bf16 %v4150, %v4148
        %v4164 = vpack.c.bf16 %v4155, %v4153
        %4165 = vrot.lane.b32.xlu0 %v3813, 112
        %v4166 = vpop.permute.xlu0 %4165
        %4167 = vrot.lane.b32.xlu0 %v3814, 112
        %v4168 = vpop.permute.xlu0 %4167
        %4169 = vrot.lane.b32.xlu0 %v3815, 112
        %v4170 = vpop.permute.xlu0 %4169
        %4171 = vrot.lane.b32.xlu0 %v3816, 112
        %v4172 = vpop.permute.xlu0 %4171
        %4173 = vrot.lane.b32.xlu0 %v3817, 112
        %v4174 = vpop.permute.xlu0 %4173
        %4175 = vrot.lane.b32.xlu0 %v3818, 112
        %v4176 = vpop.permute.xlu0 %4175
        %4177 = vrot.lane.b32.xlu0 %v3819, 112
        %v4178 = vpop.permute.xlu0 %4177
        %4179 = vrot.lane.b32.xlu0 %v3820, 112
        %v4180 = vpop.permute.xlu0 %4179
        %v4182 = vunpack.c.l.b16 %v3779
        %v4183 = vpack.c.b16 %v4182, %v4182
        %4184 = vrot.lane.b32.xlu0 %v4183, 112
        %v4185 = vpop.permute.xlu0 %4184
        %v4187 = vsel %vm2575, %v4166, 0
        %v4190 = vsel %vm2575, %v4168, 0
        %v4193 = vsel %vm2575, %v4170, 0
        %v4196 = vsel %vm2575, %v4172, 0
        %v4199 = vsel %vm2575, %v4174, 0
        %v4202 = vsel %vm2575, %v4176, 0
        %v4205 = vsel %vm2575, %v4178, 0
        %v4208 = vsel %vm2575, %v4180, 0
        %v4211 = vsel %vm2575, %v4185, 0
        %4213 = vmatpush.bf16.xpose.msra.mxu0 0
        %4214 = vmatpush.bf16.xpose.msra.mxu0 0
        %4215 = vmatpush.bf16.xpose.msra.mxu0 0
        %4216 = vmatpush.bf16.xpose.msra.mxu0 0
        %4217 = vmatpush.bf16.xpose.msra.mxu0 0
        %4218 = vmatpush.bf16.xpose.msra.mxu0 0
        %4219 = vmatpush.bf16.xpose.msra.mxu0 0
        %4220 = vmatpush.bf16.xpose.msra.mxu0 %v4211
        %4221 = vmatmul.bf16.gmra.mxu0 %v4187
        %v4222 = vpop.f32.mrf.mxu0
        %v4223 = vadd.f32 0.0, %v4222
        %v4224 = vpop.f32.mrf.mxu0
        %v4225 = vadd.f32 0.0, %v4224
        %4226 = vmatmul.bf16.gmra.mxu0 %v4190
        %v4227 = vpop.f32.mrf.mxu0
        %v4228 = vadd.f32 0.0, %v4227
        %v4229 = vpop.f32.mrf.mxu0
        %v4230 = vadd.f32 0.0, %v4229
        %4231 = vmatmul.bf16.gmra.mxu0 %v4193
        %v4232 = vpop.f32.mrf.mxu0
        %v4233 = vadd.f32 0.0, %v4232
        %v4234 = vpop.f32.mrf.mxu0
        %v4235 = vadd.f32 0.0, %v4234
        %4236 = vmatmul.bf16.gmra.mxu0 %v4196
        %v4237 = vpop.f32.mrf.mxu0
        %v4238 = vadd.f32 0.0, %v4237
        %v4239 = vpop.f32.mrf.mxu0
        %v4240 = vadd.f32 0.0, %v4239
        %4241 = vmatmul.bf16.gmra.mxu0 %v4199
        %v4242 = vpop.f32.mrf.mxu0
        %v4243 = vadd.f32 0.0, %v4242
        %v4244 = vpop.f32.mrf.mxu0
        %v4245 = vadd.f32 0.0, %v4244
        %4246 = vmatmul.bf16.gmra.mxu0 %v4202
        %v4247 = vpop.f32.mrf.mxu0
        %v4248 = vadd.f32 0.0, %v4247
        %v4249 = vpop.f32.mrf.mxu0
        %v4250 = vadd.f32 0.0, %v4249
        %4251 = vmatmul.bf16.gmra.mxu0 %v4205
        %v4252 = vpop.f32.mrf.mxu0
        %v4253 = vadd.f32 0.0, %v4252
        %v4254 = vpop.f32.mrf.mxu0
        %v4255 = vadd.f32 0.0, %v4254
        %4256 = vmatmul.bf16.gmra.mxu0 %v4208
        %v4257 = vpop.f32.mrf.mxu0
        %v4258 = vadd.f32 0.0, %v4257
        %v4259 = vpop.f32.mrf.mxu0
        %v4260 = vadd.f32 0.0, %v4259
        %4261 = vdwg.mxu0
        %v4262 = vsel %vm1773, %v4223, -inf
        %4263 = vmax.xlane.f32.xlu0 %v4262
        %v4264 = vpop.xlane.xlu0 %4263
        %v4265 = vsel %vm1773, %v4225, -inf
        %4266 = vmax.xlane.f32.xlu0 %v4265
        %v4267 = vpop.xlane.xlu0 %4266
        %v4268 = vsel %vm1773, %v4228, -inf
        %4269 = vmax.xlane.f32.xlu0 %v4268
        %v4270 = vpop.xlane.xlu0 %4269
        %v4271 = vsel %vm1773, %v4230, -inf
        %4272 = vmax.xlane.f32.xlu0 %v4271
        %v4273 = vpop.xlane.xlu0 %4272
        %v4274 = vsel %vm1773, %v4233, -inf
        %4275 = vmax.xlane.f32.xlu0 %v4274
        %v4276 = vpop.xlane.xlu0 %4275
        %v4277 = vsel %vm1773, %v4235, -inf
        %4278 = vmax.xlane.f32.xlu0 %v4277
        %v4279 = vpop.xlane.xlu0 %4278
        %v4280 = vsel %vm1773, %v4238, -inf
        %4281 = vmax.xlane.f32.xlu0 %v4280
        %v4282 = vpop.xlane.xlu0 %4281
        %v4283 = vsel %vm1773, %v4240, -inf
        %4284 = vmax.xlane.f32.xlu0 %v4283
        %v4285 = vpop.xlane.xlu0 %4284
        %v4286 = vsel %vm1773, %v4243, -inf
        %4287 = vmax.xlane.f32.xlu0 %v4286
        %v4288 = vpop.xlane.xlu0 %4287
        %v4289 = vsel %vm1773, %v4245, -inf
        %4290 = vmax.xlane.f32.xlu0 %v4289
        %v4291 = vpop.xlane.xlu0 %4290
        %v4292 = vsel %vm1773, %v4248, -inf
        %4293 = vmax.xlane.f32.xlu0 %v4292
        %v4294 = vpop.xlane.xlu0 %4293
        %v4295 = vsel %vm1773, %v4250, -inf
        %4296 = vmax.xlane.f32.xlu0 %v4295
        %v4297 = vpop.xlane.xlu0 %4296
        %v4298 = vsel %vm1773, %v4253, -inf
        %4299 = vmax.xlane.f32.xlu0 %v4298
        %v4300 = vpop.xlane.xlu0 %4299
        %v4301 = vsel %vm1773, %v4255, -inf
        %4302 = vmax.xlane.f32.xlu0 %v4301
        %v4303 = vpop.xlane.xlu0 %4302
        %v4304 = vsel %vm1773, %v4258, -inf
        %4305 = vmax.xlane.f32.xlu0 %v4304
        %v4306 = vpop.xlane.xlu0 %4305
        %v4307 = vsel %vm1773, %v4260, -inf
        %4308 = vmax.xlane.f32.xlu0 %v4307
        %v4309 = vpop.xlane.xlu0 %4308
        %v4310 = vsub.f32 %v4223, %v4264
        %v4311 = vsub.f32 %v4225, %v4267
        %v4312 = vsub.f32 %v4228, %v4270
        %v4313 = vsub.f32 %v4230, %v4273
        %v4314 = vsub.f32 %v4233, %v4276
        %v4315 = vsub.f32 %v4235, %v4279
        %v4316 = vsub.f32 %v4238, %v4282
        %v4317 = vsub.f32 %v4240, %v4285
        %v4318 = vsub.f32 %v4243, %v4288
        %v4319 = vsub.f32 %v4245, %v4291
        %v4320 = vsub.f32 %v4248, %v4294
        %v4321 = vsub.f32 %v4250, %v4297
        %v4322 = vsub.f32 %v4253, %v4300
        %v4323 = vsub.f32 %v4255, %v4303
        %v4324 = vsub.f32 %v4258, %v4306
        %v4325 = vsub.f32 %v4260, %v4309
        %v4326 = vmul.f32 %v4310, 1.442695
        %v4327 = vpow.pop %v4326
        %v4328 = vmul.f32 %v4311, 1.442695
        %v4329 = vpow.pop %v4328
        %v4330 = vmul.f32 %v4312, 1.442695
        %v4331 = vpow.pop %v4330
        %v4332 = vmul.f32 %v4313, 1.442695
        %v4333 = vpow.pop %v4332
        %v4334 = vmul.f32 %v4314, 1.442695
        %v4335 = vpow.pop %v4334
        %v4336 = vmul.f32 %v4315, 1.442695
        %v4337 = vpow.pop %v4336
        %v4338 = vmul.f32 %v4316, 1.442695
        %v4339 = vpow.pop %v4338
        %v4340 = vmul.f32 %v4317, 1.442695
        %v4341 = vpow.pop %v4340
        %v4342 = vmul.f32 %v4318, 1.442695
        %v4343 = vpow.pop %v4342
        %v4344 = vmul.f32 %v4319, 1.442695
        %v4345 = vpow.pop %v4344
        %v4346 = vmul.f32 %v4320, 1.442695
        %v4347 = vpow.pop %v4346
        %v4348 = vmul.f32 %v4321, 1.442695
        %v4349 = vpow.pop %v4348
        %v4350 = vmul.f32 %v4322, 1.442695
        %v4351 = vpow.pop %v4350
        %v4352 = vmul.f32 %v4323, 1.442695
        %v4353 = vpow.pop %v4352
        %v4354 = vmul.f32 %v4324, 1.442695
        %v4355 = vpow.pop %v4354
        %v4356 = vmul.f32 %v4325, 1.442695
        %v4357 = vpow.pop %v4356
        %v4358 = vsel %vm1773, %v4327, 0.0
        %4359 = vadd.xlane.f32.xlu0 %v4358
        %v4360 = vpop.xlane.xlu0 %4359
        %v4361 = vsel %vm1773, %v4329, 0.0
        %4362 = vadd.xlane.f32.xlu0 %v4361
        %v4363 = vpop.xlane.xlu0 %4362
        %v4364 = vsel %vm1773, %v4331, 0.0
        %4365 = vadd.xlane.f32.xlu0 %v4364
        %v4366 = vpop.xlane.xlu0 %4365
        %v4367 = vsel %vm1773, %v4333, 0.0
        %4368 = vadd.xlane.f32.xlu0 %v4367
        %v4369 = vpop.xlane.xlu0 %4368
        %v4370 = vsel %vm1773, %v4335, 0.0
        %4371 = vadd.xlane.f32.xlu0 %v4370
        %v4372 = vpop.xlane.xlu0 %4371
        %v4373 = vsel %vm1773, %v4337, 0.0
        %4374 = vadd.xlane.f32.xlu0 %v4373
        %v4375 = vpop.xlane.xlu0 %4374
        %v4376 = vsel %vm1773, %v4339, 0.0
        %4377 = vadd.xlane.f32.xlu0 %v4376
        %v4378 = vpop.xlane.xlu0 %4377
        %v4379 = vsel %vm1773, %v4341, 0.0
        %4380 = vadd.xlane.f32.xlu0 %v4379
        %v4381 = vpop.xlane.xlu0 %4380
        %v4382 = vsel %vm1773, %v4343, 0.0
        %4383 = vadd.xlane.f32.xlu0 %v4382
        %v4384 = vpop.xlane.xlu0 %4383
        %v4385 = vsel %vm1773, %v4345, 0.0
        %4386 = vadd.xlane.f32.xlu0 %v4385
        %v4387 = vpop.xlane.xlu0 %4386
        %v4388 = vsel %vm1773, %v4347, 0.0
        %4389 = vadd.xlane.f32.xlu0 %v4388
        %v4390 = vpop.xlane.xlu0 %4389
        %v4391 = vsel %vm1773, %v4349, 0.0
        %4392 = vadd.xlane.f32.xlu0 %v4391
        %v4393 = vpop.xlane.xlu0 %4392
        %v4394 = vsel %vm1773, %v4351, 0.0
        %4395 = vadd.xlane.f32.xlu0 %v4394
        %v4396 = vpop.xlane.xlu0 %4395
        %v4397 = vsel %vm1773, %v4353, 0.0
        %4398 = vadd.xlane.f32.xlu0 %v4397
        %v4399 = vpop.xlane.xlu0 %4398
        %v4400 = vsel %vm1773, %v4355, 0.0
        %4401 = vadd.xlane.f32.xlu0 %v4400
        %v4402 = vpop.xlane.xlu0 %4401
        %v4403 = vsel %vm1773, %v4357, 0.0
        %4404 = vadd.xlane.f32.xlu0 %v4403
        %v4405 = vpop.xlane.xlu0 %4404
        %v4406 = vrcp.pop %v4360
        %v4407 = vrcp.pop %v4363
        %v4408 = vrcp.pop %v4366
        %v4409 = vrcp.pop %v4369
        %v4410 = vrcp.pop %v4372
        %v4411 = vrcp.pop %v4375
        %v4412 = vrcp.pop %v4378
        %v4413 = vrcp.pop %v4381
        %v4414 = vrcp.pop %v4384
        %v4415 = vrcp.pop %v4387
        %v4416 = vrcp.pop %v4390
        %v4417 = vrcp.pop %v4393
        %v4418 = vrcp.pop %v4396
        %v4419 = vrcp.pop %v4399
        %v4420 = vrcp.pop %v4402
        %v4421 = vrcp.pop %v4405
        %v4422 = vmul.f32 %v4327, %v4406
        %v4423 = vmul.f32 %v4329, %v4407
        %v4424 = vmul.f32 %v4331, %v4408
        %v4425 = vmul.f32 %v4333, %v4409
        %v4426 = vmul.f32 %v4335, %v4410
        %v4427 = vmul.f32 %v4337, %v4411
        %v4428 = vmul.f32 %v4339, %v4412
        %v4429 = vmul.f32 %v4341, %v4413
        %v4430 = vmul.f32 %v4343, %v4414
        %v4431 = vmul.f32 %v4345, %v4415
        %v4432 = vmul.f32 %v4347, %v4416
        %v4433 = vmul.f32 %v4349, %v4417
        %v4434 = vmul.f32 %v4351, %v4418
        %v4435 = vmul.f32 %v4353, %v4419
        %v4436 = vmul.f32 %v4355, %v4420
        %v4437 = vmul.f32 %v4357, %v4421
        %v4438 = vpack.c.bf16 %v4423, %v4422
        %v4439 = vpack.c.bf16 %v4425, %v4424
        %v4440 = vpack.c.bf16 %v4427, %v4426
        %v4441 = vpack.c.bf16 %v4429, %v4428
        %v4442 = vpack.c.bf16 %v4431, %v4430
        %v4443 = vpack.c.bf16 %v4433, %v4432
        %v4444 = vpack.c.bf16 %v4435, %v4434
        %v4445 = vpack.c.bf16 %v4437, %v4436
        %v4447 = vunpack.c.l.b16 %v3780
        %v4448 = vpack.c.b16 %v4447, %v4447
        %4449 = vrot.lane.b32.xlu0 %v4448, 112
        %v4450 = vpop.permute.xlu0 %4449
        %v4452 = vsel %vm1773, %v4438, 0
        %v4455 = vsel %vm1773, %v4439, 0
        %v4458 = vsel %vm1773, %v4440, 0
        %v4461 = vsel %vm1773, %v4441, 0
        %v4464 = vsel %vm1773, %v4442, 0
        %v4467 = vsel %vm1773, %v4443, 0
        %v4470 = vsel %vm1773, %v4444, 0
        %v4473 = vsel %vm1773, %v4445, 0
        %v4476 = vsel %vm1789, %v4450, 0
        %4478 = vmatpush.bf16.msra.mxu0 0
        %4479 = vmatpush.bf16.msra.mxu0 0
        %4480 = vmatpush.bf16.msra.mxu0 0
        %4481 = vmatpush.bf16.msra.mxu0 0
        %4482 = vmatpush.bf16.msra.mxu0 0
        %4483 = vmatpush.bf16.msra.mxu0 0
        %4484 = vmatpush.bf16.msra.mxu0 0
        %4485 = vmatpush.bf16.msra.mxu0 %v4476
        %4486 = vmatmul.bf16.gmra.mxu0 %v4452
        %v4487 = vpop.f32.mrf.mxu0
        %v4488 = vadd.f32 0.0, %v4487
        %v4489 = vpop.f32.mrf.mxu0
        %v4490 = vadd.f32 0.0, %v4489
        %4491 = vmatmul.bf16.gmra.mxu0 %v4455
        %v4492 = vpop.f32.mrf.mxu0
        %v4493 = vadd.f32 0.0, %v4492
        %v4494 = vpop.f32.mrf.mxu0
        %v4495 = vadd.f32 0.0, %v4494
        %4496 = vmatmul.bf16.gmra.mxu0 %v4458
        %v4497 = vpop.f32.mrf.mxu0
        %v4498 = vadd.f32 0.0, %v4497
        %v4499 = vpop.f32.mrf.mxu0
        %v4500 = vadd.f32 0.0, %v4499
        %4501 = vmatmul.bf16.gmra.mxu0 %v4461
        %v4502 = vpop.f32.mrf.mxu0
        %v4503 = vadd.f32 0.0, %v4502
        %v4504 = vpop.f32.mrf.mxu0
        %v4505 = vadd.f32 0.0, %v4504
        %4506 = vmatmul.bf16.gmra.mxu0 %v4464
        %v4507 = vpop.f32.mrf.mxu0
        %v4508 = vadd.f32 0.0, %v4507
        %v4509 = vpop.f32.mrf.mxu0
        %v4510 = vadd.f32 0.0, %v4509
        %4511 = vmatmul.bf16.gmra.mxu0 %v4467
        %v4512 = vpop.f32.mrf.mxu0
        %v4513 = vadd.f32 0.0, %v4512
        %v4514 = vpop.f32.mrf.mxu0
        %v4515 = vadd.f32 0.0, %v4514
        %4516 = vmatmul.bf16.gmra.mxu0 %v4470
        %v4517 = vpop.f32.mrf.mxu0
        %v4518 = vadd.f32 0.0, %v4517
        %v4519 = vpop.f32.mrf.mxu0
        %v4520 = vadd.f32 0.0, %v4519
        %4521 = vmatmul.bf16.gmra.mxu0 %v4473
        %v4522 = vpop.f32.mrf.mxu0
        %v4523 = vadd.f32 0.0, %v4522
        %v4524 = vpop.f32.mrf.mxu0
        %v4525 = vadd.f32 0.0, %v4524
        %4526 = vdwg.mxu0
        %v4527 = vpack.c.bf16 %v4490, %v4488
        %v4528 = vpack.c.bf16 %v4495, %v4493
        %v4529 = vpack.c.bf16 %v4500, %v4498
        %v4530 = vpack.c.bf16 %v4505, %v4503
        %v4531 = vpack.c.bf16 %v4510, %v4508
        %v4532 = vpack.c.bf16 %v4515, %v4513
        %v4533 = vpack.c.bf16 %v4520, %v4518
        %v4534 = vpack.c.bf16 %v4525, %v4523
        %v4537 = vunpack.c.l.b16 %v3510
        %v4538 = vunpack.c.l.b16 %v3511
        %v4539 = vpack.c.b16 %v4538, %v4537
        %v4542 = vsel %vm2575, %v4527, 0
        %v4545 = vsel %vm2575, %v4528, 0
        %v4548 = vsel %vm2575, %v4529, 0
        %v4551 = vsel %vm2575, %v4530, 0
        %v4554 = vsel %vm2575, %v4531, 0
        %v4557 = vsel %vm2575, %v4532, 0
        %v4560 = vsel %vm2575, %v4533, 0
        %v4563 = vsel %vm2575, %v4534, 0
        %4565 = vmatpush.bf16.msra.mxu0 0
        %4566 = vmatpush.bf16.msra.mxu0 0
        %4567 = vmatpush.bf16.msra.mxu0 0
        %4568 = vmatpush.bf16.msra.mxu0 0
        %4569 = vmatpush.bf16.msra.mxu0 0
        %4570 = vmatpush.bf16.msra.mxu0 0
        %4571 = vmatpush.bf16.msra.mxu0 0
        %4572 = vmatpush.bf16.msra.mxu0 %v4539
        %4573 = vmatmul.bf16.gmra.mxu0 %v4542
        %v4574 = vpop.f32.mrf.mxu0
        %v4575 = vadd.f32 0.0, %v4574
        %v4576 = vpop.f32.mrf.mxu0
        %v4577 = vadd.f32 0.0, %v4576
        %4578 = vmatmul.bf16.gmra.mxu0 %v4545
        %v4579 = vpop.f32.mrf.mxu0
        %v4580 = vadd.f32 0.0, %v4579
        %v4581 = vpop.f32.mrf.mxu0
        %v4582 = vadd.f32 0.0, %v4581
        %4583 = vmatmul.bf16.gmra.mxu0 %v4548
        %v4584 = vpop.f32.mrf.mxu0
        %v4585 = vadd.f32 0.0, %v4584
        %v4586 = vpop.f32.mrf.mxu0
        %v4587 = vadd.f32 0.0, %v4586
        %4588 = vmatmul.bf16.gmra.mxu0 %v4551
        %v4589 = vpop.f32.mrf.mxu0
        %v4590 = vadd.f32 0.0, %v4589
        %v4591 = vpop.f32.mrf.mxu0
        %v4592 = vadd.f32 0.0, %v4591
        %4593 = vmatmul.bf16.gmra.mxu0 %v4554
        %v4594 = vpop.f32.mrf.mxu0
        %v4595 = vadd.f32 0.0, %v4594
        %v4596 = vpop.f32.mrf.mxu0
        %v4597 = vadd.f32 0.0, %v4596
        %4598 = vmatmul.bf16.gmra.mxu0 %v4557
        %v4599 = vpop.f32.mrf.mxu0
        %v4600 = vadd.f32 0.0, %v4599
        %v4601 = vpop.f32.mrf.mxu0
        %v4602 = vadd.f32 0.0, %v4601
        %4603 = vmatmul.bf16.gmra.mxu0 %v4560
        %v4604 = vpop.f32.mrf.mxu0
        %v4605 = vadd.f32 0.0, %v4604
        %v4606 = vpop.f32.mrf.mxu0
        %v4607 = vadd.f32 0.0, %v4606
        %4608 = vmatmul.bf16.gmra.mxu0 %v4563
        %v4609 = vpop.f32.mrf.mxu0
        %v4610 = vadd.f32 0.0, %v4609
        %v4611 = vpop.f32.mrf.mxu0
        %v4612 = vadd.f32 0.0, %v4611
        %4613 = vdwg.mxu0
        %v4616 = vunpack.c.l.b16 %v3508
        %v4617 = vunpack.c.l.b16 %v3509
        %v4618 = vpack.c.b16 %v4617, %v4616
        %v4621 = vsel %vm2575, %v4157, 0
        %v4624 = vsel %vm2575, %v4158, 0
        %v4627 = vsel %vm2575, %v4159, 0
        %v4630 = vsel %vm2575, %v4160, 0
        %v4633 = vsel %vm2575, %v4161, 0
        %v4636 = vsel %vm2575, %v4162, 0
        %v4639 = vsel %vm2575, %v4163, 0
        %v4642 = vsel %vm2575, %v4164, 0
        %4644 = vmatpush.bf16.msra.mxu0 0
        %4645 = vmatpush.bf16.msra.mxu0 0
        %4646 = vmatpush.bf16.msra.mxu0 0
        %4647 = vmatpush.bf16.msra.mxu0 0
        %4648 = vmatpush.bf16.msra.mxu0 0
        %4649 = vmatpush.bf16.msra.mxu0 0
        %4650 = vmatpush.bf16.msra.mxu0 0
        %4651 = vmatpush.bf16.msra.mxu0 %v4618
        %4652 = vmatmul.bf16.gmra.mxu0 %v4621
        %v4653 = vpop.f32.mrf.mxu0
        %v4654 = vadd.f32 %v4575, %v4653
        %v4655 = vpop.f32.mrf.mxu0
        %v4656 = vadd.f32 %v4577, %v4655
        %4657 = vmatmul.bf16.gmra.mxu0 %v4624
        %v4658 = vpop.f32.mrf.mxu0
        %v4659 = vadd.f32 %v4580, %v4658
        %v4660 = vpop.f32.mrf.mxu0
        %v4661 = vadd.f32 %v4582, %v4660
        %4662 = vmatmul.bf16.gmra.mxu0 %v4627
        %v4663 = vpop.f32.mrf.mxu0
        %v4664 = vadd.f32 %v4585, %v4663
        %v4665 = vpop.f32.mrf.mxu0
        %v4666 = vadd.f32 %v4587, %v4665
        %4667 = vmatmul.bf16.gmra.mxu0 %v4630
        %v4668 = vpop.f32.mrf.mxu0
        %v4669 = vadd.f32 %v4590, %v4668
        %v4670 = vpop.f32.mrf.mxu0
        %v4671 = vadd.f32 %v4592, %v4670
        %4672 = vmatmul.bf16.gmra.mxu0 %v4633
        %v4673 = vpop.f32.mrf.mxu0
        %v4674 = vadd.f32 %v4595, %v4673
        %v4675 = vpop.f32.mrf.mxu0
        %v4676 = vadd.f32 %v4597, %v4675
        %4677 = vmatmul.bf16.gmra.mxu0 %v4636
        %v4678 = vpop.f32.mrf.mxu0
        %v4679 = vadd.f32 %v4600, %v4678
        %v4680 = vpop.f32.mrf.mxu0
        %v4681 = vadd.f32 %v4602, %v4680
        %4682 = vmatmul.bf16.gmra.mxu0 %v4639
        %v4683 = vpop.f32.mrf.mxu0
        %v4684 = vadd.f32 %v4605, %v4683
        %v4685 = vpop.f32.mrf.mxu0
        %v4686 = vadd.f32 %v4607, %v4685
        %4687 = vmatmul.bf16.gmra.mxu0 %v4642
        %v4688 = vpop.f32.mrf.mxu0
        %v4689 = vadd.f32 %v4610, %v4688
        %v4690 = vpop.f32.mrf.mxu0
        %v4691 = vadd.f32 %v4612, %v4690
        %4692 = vdwg.mxu0
        %4693 = vrot.lane.b32.xlu0 %v3813, 96
        %v4694 = vpop.permute.xlu0 %4693
        %4695 = vrot.lane.b32.xlu0 %v3814, 96
        %v4696 = vpop.permute.xlu0 %4695
        %4697 = vrot.lane.b32.xlu0 %v3815, 96
        %v4698 = vpop.permute.xlu0 %4697
        %4699 = vrot.lane.b32.xlu0 %v3816, 96
        %v4700 = vpop.permute.xlu0 %4699
        %4701 = vrot.lane.b32.xlu0 %v3817, 96
        %v4702 = vpop.permute.xlu0 %4701
        %4703 = vrot.lane.b32.xlu0 %v3818, 96
        %v4704 = vpop.permute.xlu0 %4703
        %4705 = vrot.lane.b32.xlu0 %v3819, 96
        %v4706 = vpop.permute.xlu0 %4705
        %4707 = vrot.lane.b32.xlu0 %v3820, 96
        %v4708 = vpop.permute.xlu0 %4707
        %4709 = vrot.lane.b32.xlu0 %v4183, 96
        %v4710 = vpop.permute.xlu0 %4709
        %v4712 = vsel %vm2575, %v4694, 0
        %v4715 = vsel %vm2575, %v4696, 0
        %v4718 = vsel %vm2575, %v4698, 0
        %v4721 = vsel %vm2575, %v4700, 0
        %v4724 = vsel %vm2575, %v4702, 0
        %v4727 = vsel %vm2575, %v4704, 0
        %v4730 = vsel %vm2575, %v4706, 0
        %v4733 = vsel %vm2575, %v4708, 0
        %v4736 = vsel %vm2575, %v4710, 0
        %4738 = vmatpush.bf16.xpose.msra.mxu0 0
        %4739 = vmatpush.bf16.xpose.msra.mxu0 0
        %4740 = vmatpush.bf16.xpose.msra.mxu0 0
        %4741 = vmatpush.bf16.xpose.msra.mxu0 0
        %4742 = vmatpush.bf16.xpose.msra.mxu0 0
        %4743 = vmatpush.bf16.xpose.msra.mxu0 0
        %4744 = vmatpush.bf16.xpose.msra.mxu0 0
        %4745 = vmatpush.bf16.xpose.msra.mxu0 %v4736
        %4746 = vmatmul.bf16.gmra.mxu0 %v4712
        %v4747 = vpop.f32.mrf.mxu0
        %v4748 = vadd.f32 0.0, %v4747
        %v4749 = vpop.f32.mrf.mxu0
        %v4750 = vadd.f32 0.0, %v4749
        %4751 = vmatmul.bf16.gmra.mxu0 %v4715
        %v4752 = vpop.f32.mrf.mxu0
        %v4753 = vadd.f32 0.0, %v4752
        %v4754 = vpop.f32.mrf.mxu0
        %v4755 = vadd.f32 0.0, %v4754
        %4756 = vmatmul.bf16.gmra.mxu0 %v4718
        %v4757 = vpop.f32.mrf.mxu0
        %v4758 = vadd.f32 0.0, %v4757
        %v4759 = vpop.f32.mrf.mxu0
        %v4760 = vadd.f32 0.0, %v4759
        %4761 = vmatmul.bf16.gmra.mxu0 %v4721
        %v4762 = vpop.f32.mrf.mxu0
        %v4763 = vadd.f32 0.0, %v4762
        %v4764 = vpop.f32.mrf.mxu0
        %v4765 = vadd.f32 0.0, %v4764
        %4766 = vmatmul.bf16.gmra.mxu0 %v4724
        %v4767 = vpop.f32.mrf.mxu0
        %v4768 = vadd.f32 0.0, %v4767
        %v4769 = vpop.f32.mrf.mxu0
        %v4770 = vadd.f32 0.0, %v4769
        %4771 = vmatmul.bf16.gmra.mxu0 %v4727
        %v4772 = vpop.f32.mrf.mxu0
        %v4773 = vadd.f32 0.0, %v4772
        %v4774 = vpop.f32.mrf.mxu0
        %v4775 = vadd.f32 0.0, %v4774
        %4776 = vmatmul.bf16.gmra.mxu0 %v4730
        %v4777 = vpop.f32.mrf.mxu0
        %v4778 = vadd.f32 0.0, %v4777
        %v4779 = vpop.f32.mrf.mxu0
        %v4780 = vadd.f32 0.0, %v4779
        %4781 = vmatmul.bf16.gmra.mxu0 %v4733
        %v4782 = vpop.f32.mrf.mxu0
        %v4783 = vadd.f32 0.0, %v4782
        %v4784 = vpop.f32.mrf.mxu0
        %v4785 = vadd.f32 0.0, %v4784
        %4786 = vdwg.mxu0
        %v4787 = vsel %vm1773, %v4748, -inf
        %4788 = vmax.xlane.f32.xlu0 %v4787
        %v4789 = vpop.xlane.xlu0 %4788
        %v4790 = vsel %vm1773, %v4750, -inf
        %4791 = vmax.xlane.f32.xlu0 %v4790
        %v4792 = vpop.xlane.xlu0 %4791
        %v4793 = vsel %vm1773, %v4753, -inf
        %4794 = vmax.xlane.f32.xlu0 %v4793
        %v4795 = vpop.xlane.xlu0 %4794
        %v4796 = vsel %vm1773, %v4755, -inf
        %4797 = vmax.xlane.f32.xlu0 %v4796
        %v4798 = vpop.xlane.xlu0 %4797
        %v4799 = vsel %vm1773, %v4758, -inf
        %4800 = vmax.xlane.f32.xlu0 %v4799
        %v4801 = vpop.xlane.xlu0 %4800
        %v4802 = vsel %vm1773, %v4760, -inf
        %4803 = vmax.xlane.f32.xlu0 %v4802
        %v4804 = vpop.xlane.xlu0 %4803
        %v4805 = vsel %vm1773, %v4763, -inf
        %4806 = vmax.xlane.f32.xlu0 %v4805
        %v4807 = vpop.xlane.xlu0 %4806
        %v4808 = vsel %vm1773, %v4765, -inf
        %4809 = vmax.xlane.f32.xlu0 %v4808
        %v4810 = vpop.xlane.xlu0 %4809
        %v4811 = vsel %vm1773, %v4768, -inf
        %4812 = vmax.xlane.f32.xlu0 %v4811
        %v4813 = vpop.xlane.xlu0 %4812
        %v4814 = vsel %vm1773, %v4770, -inf
        %4815 = vmax.xlane.f32.xlu0 %v4814
        %v4816 = vpop.xlane.xlu0 %4815
        %v4817 = vsel %vm1773, %v4773, -inf
        %4818 = vmax.xlane.f32.xlu0 %v4817
        %v4819 = vpop.xlane.xlu0 %4818
        %v4820 = vsel %vm1773, %v4775, -inf
        %4821 = vmax.xlane.f32.xlu0 %v4820
        %v4822 = vpop.xlane.xlu0 %4821
        %v4823 = vsel %vm1773, %v4778, -inf
        %4824 = vmax.xlane.f32.xlu0 %v4823
        %v4825 = vpop.xlane.xlu0 %4824
        %v4826 = vsel %vm1773, %v4780, -inf
        %4827 = vmax.xlane.f32.xlu0 %v4826
        %v4828 = vpop.xlane.xlu0 %4827
        %v4829 = vsel %vm1773, %v4783, -inf
        %4830 = vmax.xlane.f32.xlu0 %v4829
        %v4831 = vpop.xlane.xlu0 %4830
        %v4832 = vsel %vm1773, %v4785, -inf
        %4833 = vmax.xlane.f32.xlu0 %v4832
        %v4834 = vpop.xlane.xlu0 %4833
        %v4835 = vsub.f32 %v4748, %v4789
        %v4836 = vsub.f32 %v4750, %v4792
        %v4837 = vsub.f32 %v4753, %v4795
        %v4838 = vsub.f32 %v4755, %v4798
        %v4839 = vsub.f32 %v4758, %v4801
        %v4840 = vsub.f32 %v4760, %v4804
        %v4841 = vsub.f32 %v4763, %v4807
        %v4842 = vsub.f32 %v4765, %v4810
        %v4843 = vsub.f32 %v4768, %v4813
        %v4844 = vsub.f32 %v4770, %v4816
        %v4845 = vsub.f32 %v4773, %v4819
        %v4846 = vsub.f32 %v4775, %v4822
        %v4847 = vsub.f32 %v4778, %v4825
        %v4848 = vsub.f32 %v4780, %v4828
        %v4849 = vsub.f32 %v4783, %v4831
        %v4850 = vsub.f32 %v4785, %v4834
        %v4851 = vmul.f32 %v4835, 1.442695
        %v4852 = vpow.pop %v4851
        %v4853 = vmul.f32 %v4836, 1.442695
        %v4854 = vpow.pop %v4853
        %v4855 = vmul.f32 %v4837, 1.442695
        %v4856 = vpow.pop %v4855
        %v4857 = vmul.f32 %v4838, 1.442695
        %v4858 = vpow.pop %v4857
        %v4859 = vmul.f32 %v4839, 1.442695
        %v4860 = vpow.pop %v4859
        %v4861 = vmul.f32 %v4840, 1.442695
        %v4862 = vpow.pop %v4861
        %v4863 = vmul.f32 %v4841, 1.442695
        %v4864 = vpow.pop %v4863
        %v4865 = vmul.f32 %v4842, 1.442695
        %v4866 = vpow.pop %v4865
        %v4867 = vmul.f32 %v4843, 1.442695
        %v4868 = vpow.pop %v4867
        %v4869 = vmul.f32 %v4844, 1.442695
        %v4870 = vpow.pop %v4869
        %v4871 = vmul.f32 %v4845, 1.442695
        %v4872 = vpow.pop %v4871
        %v4873 = vmul.f32 %v4846, 1.442695
        %v4874 = vpow.pop %v4873
        %v4875 = vmul.f32 %v4847, 1.442695
        %v4876 = vpow.pop %v4875
        %v4877 = vmul.f32 %v4848, 1.442695
        %v4878 = vpow.pop %v4877
        %v4879 = vmul.f32 %v4849, 1.442695
        %v4880 = vpow.pop %v4879
        %v4881 = vmul.f32 %v4850, 1.442695
        %v4882 = vpow.pop %v4881
        %v4883 = vsel %vm1773, %v4852, 0.0
        %4884 = vadd.xlane.f32.xlu0 %v4883
        %v4885 = vpop.xlane.xlu0 %4884
        %v4886 = vsel %vm1773, %v4854, 0.0
        %4887 = vadd.xlane.f32.xlu0 %v4886
        %v4888 = vpop.xlane.xlu0 %4887
        %v4889 = vsel %vm1773, %v4856, 0.0
        %4890 = vadd.xlane.f32.xlu0 %v4889
        %v4891 = vpop.xlane.xlu0 %4890
        %v4892 = vsel %vm1773, %v4858, 0.0
        %4893 = vadd.xlane.f32.xlu0 %v4892
        %v4894 = vpop.xlane.xlu0 %4893
        %v4895 = vsel %vm1773, %v4860, 0.0
        %4896 = vadd.xlane.f32.xlu0 %v4895
        %v4897 = vpop.xlane.xlu0 %4896
        %v4898 = vsel %vm1773, %v4862, 0.0
        %4899 = vadd.xlane.f32.xlu0 %v4898
        %v4900 = vpop.xlane.xlu0 %4899
        %v4901 = vsel %vm1773, %v4864, 0.0
        %4902 = vadd.xlane.f32.xlu0 %v4901
        %v4903 = vpop.xlane.xlu0 %4902
        %v4904 = vsel %vm1773, %v4866, 0.0
        %4905 = vadd.xlane.f32.xlu0 %v4904
        %v4906 = vpop.xlane.xlu0 %4905
        %v4907 = vsel %vm1773, %v4868, 0.0
        %4908 = vadd.xlane.f32.xlu0 %v4907
        %v4909 = vpop.xlane.xlu0 %4908
        %v4910 = vsel %vm1773, %v4870, 0.0
        %4911 = vadd.xlane.f32.xlu0 %v4910
        %v4912 = vpop.xlane.xlu0 %4911
        %v4913 = vsel %vm1773, %v4872, 0.0
        %4914 = vadd.xlane.f32.xlu0 %v4913
        %v4915 = vpop.xlane.xlu0 %4914
        %v4916 = vsel %vm1773, %v4874, 0.0
        %4917 = vadd.xlane.f32.xlu0 %v4916
        %v4918 = vpop.xlane.xlu0 %4917
        %v4919 = vsel %vm1773, %v4876, 0.0
        %4920 = vadd.xlane.f32.xlu0 %v4919
        %v4921 = vpop.xlane.xlu0 %4920
        %v4922 = vsel %vm1773, %v4878, 0.0
        %4923 = vadd.xlane.f32.xlu0 %v4922
        %v4924 = vpop.xlane.xlu0 %4923
        %v4925 = vsel %vm1773, %v4880, 0.0
        %4926 = vadd.xlane.f32.xlu0 %v4925
        %v4927 = vpop.xlane.xlu0 %4926
        %v4928 = vsel %vm1773, %v4882, 0.0
        %4929 = vadd.xlane.f32.xlu0 %v4928
        %v4930 = vpop.xlane.xlu0 %4929
        %v4931 = vrcp.pop %v4885
        %v4932 = vrcp.pop %v4888
        %v4933 = vrcp.pop %v4891
        %v4934 = vrcp.pop %v4894
        %v4935 = vrcp.pop %v4897
        %v4936 = vrcp.pop %v4900
        %v4937 = vrcp.pop %v4903
        %v4938 = vrcp.pop %v4906
        %v4939 = vrcp.pop %v4909
        %v4940 = vrcp.pop %v4912
        %v4941 = vrcp.pop %v4915
        %v4942 = vrcp.pop %v4918
        %v4943 = vrcp.pop %v4921
        %v4944 = vrcp.pop %v4924
        %v4945 = vrcp.pop %v4927
        %v4946 = vrcp.pop %v4930
        %v4947 = vmul.f32 %v4852, %v4931
        %v4948 = vmul.f32 %v4854, %v4932
        %v4949 = vmul.f32 %v4856, %v4933
        %v4950 = vmul.f32 %v4858, %v4934
        %v4951 = vmul.f32 %v4860, %v4935
        %v4952 = vmul.f32 %v4862, %v4936
        %v4953 = vmul.f32 %v4864, %v4937
        %v4954 = vmul.f32 %v4866, %v4938
        %v4955 = vmul.f32 %v4868, %v4939
        %v4956 = vmul.f32 %v4870, %v4940
        %v4957 = vmul.f32 %v4872, %v4941
        %v4958 = vmul.f32 %v4874, %v4942
        %v4959 = vmul.f32 %v4876, %v4943
        %v4960 = vmul.f32 %v4878, %v4944
        %v4961 = vmul.f32 %v4880, %v4945
        %v4962 = vmul.f32 %v4882, %v4946
        %v4963 = vpack.c.bf16 %v4948, %v4947
        %v4964 = vpack.c.bf16 %v4950, %v4949
        %v4965 = vpack.c.bf16 %v4952, %v4951
        %v4966 = vpack.c.bf16 %v4954, %v4953
        %v4967 = vpack.c.bf16 %v4956, %v4955
        %v4968 = vpack.c.bf16 %v4958, %v4957
        %v4969 = vpack.c.bf16 %v4960, %v4959
        %v4970 = vpack.c.bf16 %v4962, %v4961
        %4971 = vrot.lane.b32.xlu0 %v4448, 96
        %v4972 = vpop.permute.xlu0 %4971
        %v4974 = vsel %vm1773, %v4963, 0
        %v4977 = vsel %vm1773, %v4964, 0
        %v4980 = vsel %vm1773, %v4965, 0
        %v4983 = vsel %vm1773, %v4966, 0
        %v4986 = vsel %vm1773, %v4967, 0
        %v4989 = vsel %vm1773, %v4968, 0
        %v4992 = vsel %vm1773, %v4969, 0
        %v4995 = vsel %vm1773, %v4970, 0
        %v4998 = vsel %vm1789, %v4972, 0
        %5000 = vmatpush.bf16.msra.mxu0 0
        %5001 = vmatpush.bf16.msra.mxu0 0
        %5002 = vmatpush.bf16.msra.mxu0 0
        %5003 = vmatpush.bf16.msra.mxu0 0
        %5004 = vmatpush.bf16.msra.mxu0 0
        %5005 = vmatpush.bf16.msra.mxu0 0
        %5006 = vmatpush.bf16.msra.mxu0 0
        %5007 = vmatpush.bf16.msra.mxu0 %v4998
        %5008 = vmatmul.bf16.gmra.mxu0 %v4974
        %v5009 = vpop.f32.mrf.mxu0
        %v5010 = vadd.f32 0.0, %v5009
        %v5011 = vpop.f32.mrf.mxu0
        %v5012 = vadd.f32 0.0, %v5011
        %5013 = vmatmul.bf16.gmra.mxu0 %v4977
        %v5014 = vpop.f32.mrf.mxu0
        %v5015 = vadd.f32 0.0, %v5014
        %v5016 = vpop.f32.mrf.mxu0
        %v5017 = vadd.f32 0.0, %v5016
        %5018 = vmatmul.bf16.gmra.mxu0 %v4980
        %v5019 = vpop.f32.mrf.mxu0
        %v5020 = vadd.f32 0.0, %v5019
        %v5021 = vpop.f32.mrf.mxu0
        %v5022 = vadd.f32 0.0, %v5021
        %5023 = vmatmul.bf16.gmra.mxu0 %v4983
        %v5024 = vpop.f32.mrf.mxu0
        %v5025 = vadd.f32 0.0, %v5024
        %v5026 = vpop.f32.mrf.mxu0
        %v5027 = vadd.f32 0.0, %v5026
        %5028 = vmatmul.bf16.gmra.mxu0 %v4986
        %v5029 = vpop.f32.mrf.mxu0
        %v5030 = vadd.f32 0.0, %v5029
        %v5031 = vpop.f32.mrf.mxu0
        %v5032 = vadd.f32 0.0, %v5031
        %5033 = vmatmul.bf16.gmra.mxu0 %v4989
        %v5034 = vpop.f32.mrf.mxu0
        %v5035 = vadd.f32 0.0, %v5034
        %v5036 = vpop.f32.mrf.mxu0
        %v5037 = vadd.f32 0.0, %v5036
        %5038 = vmatmul.bf16.gmra.mxu0 %v4992
        %v5039 = vpop.f32.mrf.mxu0
        %v5040 = vadd.f32 0.0, %v5039
        %v5041 = vpop.f32.mrf.mxu0
        %v5042 = vadd.f32 0.0, %v5041
        %5043 = vmatmul.bf16.gmra.mxu0 %v4995
        %v5044 = vpop.f32.mrf.mxu0
        %v5045 = vadd.f32 0.0, %v5044
        %v5046 = vpop.f32.mrf.mxu0
        %v5047 = vadd.f32 0.0, %v5046
        %5048 = vdwg.mxu0
        %v5049 = vpack.c.bf16 %v5012, %v5010
        %v5050 = vpack.c.bf16 %v5017, %v5015
        %v5051 = vpack.c.bf16 %v5022, %v5020
        %v5052 = vpack.c.bf16 %v5027, %v5025
        %v5053 = vpack.c.bf16 %v5032, %v5030
        %v5054 = vpack.c.bf16 %v5037, %v5035
        %v5055 = vpack.c.bf16 %v5042, %v5040
        %v5056 = vpack.c.bf16 %v5047, %v5045
        %v5059 = vunpack.c.l.b16 %v3512
        %v5060 = vunpack.c.l.b16 %v3513
        %v5061 = vpack.c.b16 %v5060, %v5059
        %v5064 = vsel %vm2575, %v5049, 0
        %v5067 = vsel %vm2575, %v5050, 0
        %v5070 = vsel %vm2575, %v5051, 0
        %v5073 = vsel %vm2575, %v5052, 0
        %v5076 = vsel %vm2575, %v5053, 0
        %v5079 = vsel %vm2575, %v5054, 0
        %v5082 = vsel %vm2575, %v5055, 0
        %v5085 = vsel %vm2575, %v5056, 0
        %5087 = vmatpush.bf16.msra.mxu0 0
        %5088 = vmatpush.bf16.msra.mxu0 0
        %5089 = vmatpush.bf16.msra.mxu0 0
        %5090 = vmatpush.bf16.msra.mxu0 0
        %5091 = vmatpush.bf16.msra.mxu0 0
        %5092 = vmatpush.bf16.msra.mxu0 0
        %5093 = vmatpush.bf16.msra.mxu0 0
        %5094 = vmatpush.bf16.msra.mxu0 %v5061
        %5095 = vmatmul.bf16.gmra.mxu0 %v5064
        %v5096 = vpop.f32.mrf.mxu0
        %v5097 = vadd.f32 0.0, %v5096
        %v5098 = vpop.f32.mrf.mxu0
        %v5099 = vadd.f32 0.0, %v5098
        %5100 = vmatmul.bf16.gmra.mxu0 %v5067
        %v5101 = vpop.f32.mrf.mxu0
        %v5102 = vadd.f32 0.0, %v5101
        %v5103 = vpop.f32.mrf.mxu0
        %v5104 = vadd.f32 0.0, %v5103
        %5105 = vmatmul.bf16.gmra.mxu0 %v5070
        %v5106 = vpop.f32.mrf.mxu0
        %v5107 = vadd.f32 0.0, %v5106
        %v5108 = vpop.f32.mrf.mxu0
        %v5109 = vadd.f32 0.0, %v5108
        %5110 = vmatmul.bf16.gmra.mxu0 %v5073
        %v5111 = vpop.f32.mrf.mxu0
        %v5112 = vadd.f32 0.0, %v5111
        %v5113 = vpop.f32.mrf.mxu0
        %v5114 = vadd.f32 0.0, %v5113
        %5115 = vmatmul.bf16.gmra.mxu0 %v5076
        %v5116 = vpop.f32.mrf.mxu0
        %v5117 = vadd.f32 0.0, %v5116
        %v5118 = vpop.f32.mrf.mxu0
        %v5119 = vadd.f32 0.0, %v5118
        %5120 = vmatmul.bf16.gmra.mxu0 %v5079
        %v5121 = vpop.f32.mrf.mxu0
        %v5122 = vadd.f32 0.0, %v5121
        %v5123 = vpop.f32.mrf.mxu0
        %v5124 = vadd.f32 0.0, %v5123
        %5125 = vmatmul.bf16.gmra.mxu0 %v5082
        %v5126 = vpop.f32.mrf.mxu0
        %v5127 = vadd.f32 0.0, %v5126
        %v5128 = vpop.f32.mrf.mxu0
        %v5129 = vadd.f32 0.0, %v5128
        %5130 = vmatmul.bf16.gmra.mxu0 %v5085
        %v5131 = vpop.f32.mrf.mxu0
        %v5132 = vadd.f32 0.0, %v5131
        %v5133 = vpop.f32.mrf.mxu0
        %v5134 = vadd.f32 0.0, %v5133
        %5135 = vdwg.mxu0
        %v5136 = vadd.f32 %v4654, %v5097
        %v5137 = vadd.f32 %v4656, %v5099
        %v5138 = vadd.f32 %v4659, %v5102
        %v5139 = vadd.f32 %v4661, %v5104
        %v5140 = vadd.f32 %v4664, %v5107
        %v5141 = vadd.f32 %v4666, %v5109
        %v5142 = vadd.f32 %v4669, %v5112
        %v5143 = vadd.f32 %v4671, %v5114
        %v5144 = vadd.f32 %v4674, %v5117
        %v5145 = vadd.f32 %v4676, %v5119
        %v5146 = vadd.f32 %v4679, %v5122
        %v5147 = vadd.f32 %v4681, %v5124
        %v5148 = vadd.f32 %v4684, %v5127
        %v5149 = vadd.f32 %v4686, %v5129
        %v5150 = vadd.f32 %v4689, %v5132
        %v5151 = vadd.f32 %v4691, %v5134
        %5152 = vrot.lane.b32.xlu0 %v3813, 80
        %v5153 = vpop.permute.xlu0 %5152
        %5154 = vrot.lane.b32.xlu0 %v3814, 80
        %v5155 = vpop.permute.xlu0 %5154
        %5156 = vrot.lane.b32.xlu0 %v3815, 80
        %v5157 = vpop.permute.xlu0 %5156
        %5158 = vrot.lane.b32.xlu0 %v3816, 80
        %v5159 = vpop.permute.xlu0 %5158
        %5160 = vrot.lane.b32.xlu0 %v3817, 80
        %v5161 = vpop.permute.xlu0 %5160
        %5162 = vrot.lane.b32.xlu0 %v3818, 80
        %v5163 = vpop.permute.xlu0 %5162
        %5164 = vrot.lane.b32.xlu0 %v3819, 80
        %v5165 = vpop.permute.xlu0 %5164
        %5166 = vrot.lane.b32.xlu0 %v3820, 80
        %v5167 = vpop.permute.xlu0 %5166
        %5168 = vrot.lane.b32.xlu0 %v4183, 80
        %v5169 = vpop.permute.xlu0 %5168
        %v5171 = vsel %vm2575, %v5153, 0
        %v5174 = vsel %vm2575, %v5155, 0
        %v5177 = vsel %vm2575, %v5157, 0
        %v5180 = vsel %vm2575, %v5159, 0
        %v5183 = vsel %vm2575, %v5161, 0
        %v5186 = vsel %vm2575, %v5163, 0
        %v5189 = vsel %vm2575, %v5165, 0
        %v5192 = vsel %vm2575, %v5167, 0
        %v5195 = vsel %vm2575, %v5169, 0
        %5197 = vmatpush.bf16.xpose.msra.mxu0 0
        %5198 = vmatpush.bf16.xpose.msra.mxu0 0
        %5199 = vmatpush.bf16.xpose.msra.mxu0 0
        %5200 = vmatpush.bf16.xpose.msra.mxu0 0
        %5201 = vmatpush.bf16.xpose.msra.mxu0 0
        %5202 = vmatpush.bf16.xpose.msra.mxu0 0
        %5203 = vmatpush.bf16.xpose.msra.mxu0 0
        %5204 = vmatpush.bf16.xpose.msra.mxu0 %v5195
        %5205 = vmatmul.bf16.gmra.mxu0 %v5171
        %v5206 = vpop.f32.mrf.mxu0
        %v5207 = vadd.f32 0.0, %v5206
        %v5208 = vpop.f32.mrf.mxu0
        %v5209 = vadd.f32 0.0, %v5208
        %5210 = vmatmul.bf16.gmra.mxu0 %v5174
        %v5211 = vpop.f32.mrf.mxu0
        %v5212 = vadd.f32 0.0, %v5211
        %v5213 = vpop.f32.mrf.mxu0
        %v5214 = vadd.f32 0.0, %v5213
        %5215 = vmatmul.bf16.gmra.mxu0 %v5177
        %v5216 = vpop.f32.mrf.mxu0
        %v5217 = vadd.f32 0.0, %v5216
        %v5218 = vpop.f32.mrf.mxu0
        %v5219 = vadd.f32 0.0, %v5218
        %5220 = vmatmul.bf16.gmra.mxu0 %v5180
        %v5221 = vpop.f32.mrf.mxu0
        %v5222 = vadd.f32 0.0, %v5221
        %v5223 = vpop.f32.mrf.mxu0
        %v5224 = vadd.f32 0.0, %v5223
        %5225 = vmatmul.bf16.gmra.mxu0 %v5183
        %v5226 = vpop.f32.mrf.mxu0
        %v5227 = vadd.f32 0.0, %v5226
        %v5228 = vpop.f32.mrf.mxu0
        %v5229 = vadd.f32 0.0, %v5228
        %5230 = vmatmul.bf16.gmra.mxu0 %v5186
        %v5231 = vpop.f32.mrf.mxu0
        %v5232 = vadd.f32 0.0, %v5231
        %v5233 = vpop.f32.mrf.mxu0
        %v5234 = vadd.f32 0.0, %v5233
        %5235 = vmatmul.bf16.gmra.mxu0 %v5189
        %v5236 = vpop.f32.mrf.mxu0
        %v5237 = vadd.f32 0.0, %v5236
        %v5238 = vpop.f32.mrf.mxu0
        %v5239 = vadd.f32 0.0, %v5238
        %5240 = vmatmul.bf16.gmra.mxu0 %v5192
        %v5241 = vpop.f32.mrf.mxu0
        %v5242 = vadd.f32 0.0, %v5241
        %v5243 = vpop.f32.mrf.mxu0
        %v5244 = vadd.f32 0.0, %v5243
        %5245 = vdwg.mxu0
        %v5246 = vsel %vm1773, %v5207, -inf
        %5247 = vmax.xlane.f32.xlu0 %v5246
        %v5248 = vpop.xlane.xlu0 %5247
        %v5249 = vsel %vm1773, %v5209, -inf
        %5250 = vmax.xlane.f32.xlu0 %v5249
        %v5251 = vpop.xlane.xlu0 %5250
        %v5252 = vsel %vm1773, %v5212, -inf
        %5253 = vmax.xlane.f32.xlu0 %v5252
        %v5254 = vpop.xlane.xlu0 %5253
        %v5255 = vsel %vm1773, %v5214, -inf
        %5256 = vmax.xlane.f32.xlu0 %v5255
        %v5257 = vpop.xlane.xlu0 %5256
        %v5258 = vsel %vm1773, %v5217, -inf
        %5259 = vmax.xlane.f32.xlu0 %v5258
        %v5260 = vpop.xlane.xlu0 %5259
        %v5261 = vsel %vm1773, %v5219, -inf
        %5262 = vmax.xlane.f32.xlu0 %v5261
        %v5263 = vpop.xlane.xlu0 %5262
        %v5264 = vsel %vm1773, %v5222, -inf
        %5265 = vmax.xlane.f32.xlu0 %v5264
        %v5266 = vpop.xlane.xlu0 %5265
        %v5267 = vsel %vm1773, %v5224, -inf
        %5268 = vmax.xlane.f32.xlu0 %v5267
        %v5269 = vpop.xlane.xlu0 %5268
        %v5270 = vsel %vm1773, %v5227, -inf
        %5271 = vmax.xlane.f32.xlu0 %v5270
        %v5272 = vpop.xlane.xlu0 %5271
        %v5273 = vsel %vm1773, %v5229, -inf
        %5274 = vmax.xlane.f32.xlu0 %v5273
        %v5275 = vpop.xlane.xlu0 %5274
        %v5276 = vsel %vm1773, %v5232, -inf
        %5277 = vmax.xlane.f32.xlu0 %v5276
        %v5278 = vpop.xlane.xlu0 %5277
        %v5279 = vsel %vm1773, %v5234, -inf
        %5280 = vmax.xlane.f32.xlu0 %v5279
        %v5281 = vpop.xlane.xlu0 %5280
        %v5282 = vsel %vm1773, %v5237, -inf
        %5283 = vmax.xlane.f32.xlu0 %v5282
        %v5284 = vpop.xlane.xlu0 %5283
        %v5285 = vsel %vm1773, %v5239, -inf
        %5286 = vmax.xlane.f32.xlu0 %v5285
        %v5287 = vpop.xlane.xlu0 %5286
        %v5288 = vsel %vm1773, %v5242, -inf
        %5289 = vmax.xlane.f32.xlu0 %v5288
        %v5290 = vpop.xlane.xlu0 %5289
        %v5291 = vsel %vm1773, %v5244, -inf
        %5292 = vmax.xlane.f32.xlu0 %v5291
        %v5293 = vpop.xlane.xlu0 %5292
        %v5294 = vsub.f32 %v5207, %v5248
        %v5295 = vsub.f32 %v5209, %v5251
        %v5296 = vsub.f32 %v5212, %v5254
        %v5297 = vsub.f32 %v5214, %v5257
        %v5298 = vsub.f32 %v5217, %v5260
        %v5299 = vsub.f32 %v5219, %v5263
        %v5300 = vsub.f32 %v5222, %v5266
        %v5301 = vsub.f32 %v5224, %v5269
        %v5302 = vsub.f32 %v5227, %v5272
        %v5303 = vsub.f32 %v5229, %v5275
        %v5304 = vsub.f32 %v5232, %v5278
        %v5305 = vsub.f32 %v5234, %v5281
        %v5306 = vsub.f32 %v5237, %v5284
        %v5307 = vsub.f32 %v5239, %v5287
        %v5308 = vsub.f32 %v5242, %v5290
        %v5309 = vsub.f32 %v5244, %v5293
        %v5310 = vmul.f32 %v5294, 1.442695
        %v5311 = vpow.pop %v5310
        %v5312 = vmul.f32 %v5295, 1.442695
        %v5313 = vpow.pop %v5312
        %v5314 = vmul.f32 %v5296, 1.442695
        %v5315 = vpow.pop %v5314
        %v5316 = vmul.f32 %v5297, 1.442695
        %v5317 = vpow.pop %v5316
        %v5318 = vmul.f32 %v5298, 1.442695
        %v5319 = vpow.pop %v5318
        %v5320 = vmul.f32 %v5299, 1.442695
        %v5321 = vpow.pop %v5320
        %v5322 = vmul.f32 %v5300, 1.442695
        %v5323 = vpow.pop %v5322
        %v5324 = vmul.f32 %v5301, 1.442695
        %v5325 = vpow.pop %v5324
        %v5326 = vmul.f32 %v5302, 1.442695
        %v5327 = vpow.pop %v5326
        %v5328 = vmul.f32 %v5303, 1.442695
        %v5329 = vpow.pop %v5328
        %v5330 = vmul.f32 %v5304, 1.442695
        %v5331 = vpow.pop %v5330
        %v5332 = vmul.f32 %v5305, 1.442695
        %v5333 = vpow.pop %v5332
        %v5334 = vmul.f32 %v5306, 1.442695
        %v5335 = vpow.pop %v5334
        %v5336 = vmul.f32 %v5307, 1.442695
        %v5337 = vpow.pop %v5336
        %v5338 = vmul.f32 %v5308, 1.442695
        %v5339 = vpow.pop %v5338
        %v5340 = vmul.f32 %v5309, 1.442695
        %v5341 = vpow.pop %v5340
        %v5342 = vsel %vm1773, %v5311, 0.0
        %5343 = vadd.xlane.f32.xlu0 %v5342
        %v5344 = vpop.xlane.xlu0 %5343
        %v5345 = vsel %vm1773, %v5313, 0.0
        %5346 = vadd.xlane.f32.xlu0 %v5345
        %v5347 = vpop.xlane.xlu0 %5346
        %v5348 = vsel %vm1773, %v5315, 0.0
        %5349 = vadd.xlane.f32.xlu0 %v5348
        %v5350 = vpop.xlane.xlu0 %5349
        %v5351 = vsel %vm1773, %v5317, 0.0
        %5352 = vadd.xlane.f32.xlu0 %v5351
        %v5353 = vpop.xlane.xlu0 %5352
        %v5354 = vsel %vm1773, %v5319, 0.0
        %5355 = vadd.xlane.f32.xlu0 %v5354
        %v5356 = vpop.xlane.xlu0 %5355
        %v5357 = vsel %vm1773, %v5321, 0.0
        %5358 = vadd.xlane.f32.xlu0 %v5357
        %v5359 = vpop.xlane.xlu0 %5358
        %v5360 = vsel %vm1773, %v5323, 0.0
        %5361 = vadd.xlane.f32.xlu0 %v5360
        %v5362 = vpop.xlane.xlu0 %5361
        %v5363 = vsel %vm1773, %v5325, 0.0
        %5364 = vadd.xlane.f32.xlu0 %v5363
        %v5365 = vpop.xlane.xlu0 %5364
        %v5366 = vsel %vm1773, %v5327, 0.0
        %5367 = vadd.xlane.f32.xlu0 %v5366
        %v5368 = vpop.xlane.xlu0 %5367
        %v5369 = vsel %vm1773, %v5329, 0.0
        %5370 = vadd.xlane.f32.xlu0 %v5369
        %v5371 = vpop.xlane.xlu0 %5370
        %v5372 = vsel %vm1773, %v5331, 0.0
        %5373 = vadd.xlane.f32.xlu0 %v5372
        %v5374 = vpop.xlane.xlu0 %5373
        %v5375 = vsel %vm1773, %v5333, 0.0
        %5376 = vadd.xlane.f32.xlu0 %v5375
        %v5377 = vpop.xlane.xlu0 %5376
        %v5378 = vsel %vm1773, %v5335, 0.0
        %5379 = vadd.xlane.f32.xlu0 %v5378
        %v5380 = vpop.xlane.xlu0 %5379
        %v5381 = vsel %vm1773, %v5337, 0.0
        %5382 = vadd.xlane.f32.xlu0 %v5381
        %v5383 = vpop.xlane.xlu0 %5382
        %v5384 = vsel %vm1773, %v5339, 0.0
        %5385 = vadd.xlane.f32.xlu0 %v5384
        %v5386 = vpop.xlane.xlu0 %5385
        %v5387 = vsel %vm1773, %v5341, 0.0
        %5388 = vadd.xlane.f32.xlu0 %v5387
        %v5389 = vpop.xlane.xlu0 %5388
        %v5390 = vrcp.pop %v5344
        %v5391 = vrcp.pop %v5347
        %v5392 = vrcp.pop %v5350
        %v5393 = vrcp.pop %v5353
        %v5394 = vrcp.pop %v5356
        %v5395 = vrcp.pop %v5359
        %v5396 = vrcp.pop %v5362
        %v5397 = vrcp.pop %v5365
        %v5398 = vrcp.pop %v5368
        %v5399 = vrcp.pop %v5371
        %v5400 = vrcp.pop %v5374
        %v5401 = vrcp.pop %v5377
        %v5402 = vrcp.pop %v5380
        %v5403 = vrcp.pop %v5383
        %v5404 = vrcp.pop %v5386
        %v5405 = vrcp.pop %v5389
        %v5406 = vmul.f32 %v5311, %v5390
        %v5407 = vmul.f32 %v5313, %v5391
        %v5408 = vmul.f32 %v5315, %v5392
        %v5409 = vmul.f32 %v5317, %v5393
        %v5410 = vmul.f32 %v5319, %v5394
        %v5411 = vmul.f32 %v5321, %v5395
        %v5412 = vmul.f32 %v5323, %v5396
        %v5413 = vmul.f32 %v5325, %v5397
        %v5414 = vmul.f32 %v5327, %v5398
        %v5415 = vmul.f32 %v5329, %v5399
        %v5416 = vmul.f32 %v5331, %v5400
        %v5417 = vmul.f32 %v5333, %v5401
        %v5418 = vmul.f32 %v5335, %v5402
        %v5419 = vmul.f32 %v5337, %v5403
        %v5420 = vmul.f32 %v5339, %v5404
        %v5421 = vmul.f32 %v5341, %v5405
        %v5422 = vpack.c.bf16 %v5407, %v5406
        %v5423 = vpack.c.bf16 %v5409, %v5408
        %v5424 = vpack.c.bf16 %v5411, %v5410
        %v5425 = vpack.c.bf16 %v5413, %v5412
        %v5426 = vpack.c.bf16 %v5415, %v5414
        %v5427 = vpack.c.bf16 %v5417, %v5416
        %v5428 = vpack.c.bf16 %v5419, %v5418
        %v5429 = vpack.c.bf16 %v5421, %v5420
        %5430 = vrot.lane.b32.xlu0 %v4448, 80
        %v5431 = vpop.permute.xlu0 %5430
        %v5433 = vsel %vm1773, %v5422, 0
        %v5436 = vsel %vm1773, %v5423, 0
        %v5439 = vsel %vm1773, %v5424, 0
        %v5442 = vsel %vm1773, %v5425, 0
        %v5445 = vsel %vm1773, %v5426, 0
        %v5448 = vsel %vm1773, %v5427, 0
        %v5451 = vsel %vm1773, %v5428, 0
        %v5454 = vsel %vm1773, %v5429, 0
        %v5457 = vsel %vm1789, %v5431, 0
        %5459 = vmatpush.bf16.msra.mxu0 0
        %5460 = vmatpush.bf16.msra.mxu0 0
        %5461 = vmatpush.bf16.msra.mxu0 0
        %5462 = vmatpush.bf16.msra.mxu0 0
        %5463 = vmatpush.bf16.msra.mxu0 0
        %5464 = vmatpush.bf16.msra.mxu0 0
        %5465 = vmatpush.bf16.msra.mxu0 0
        %5466 = vmatpush.bf16.msra.mxu0 %v5457
        %5467 = vmatmul.bf16.gmra.mxu0 %v5433
        %v5468 = vpop.f32.mrf.mxu0
        %v5469 = vadd.f32 0.0, %v5468
        %v5470 = vpop.f32.mrf.mxu0
        %v5471 = vadd.f32 0.0, %v5470
        %5472 = vmatmul.bf16.gmra.mxu0 %v5436
        %v5473 = vpop.f32.mrf.mxu0
        %v5474 = vadd.f32 0.0, %v5473
        %v5475 = vpop.f32.mrf.mxu0
        %v5476 = vadd.f32 0.0, %v5475
        %5477 = vmatmul.bf16.gmra.mxu0 %v5439
        %v5478 = vpop.f32.mrf.mxu0
        %v5479 = vadd.f32 0.0, %v5478
        %v5480 = vpop.f32.mrf.mxu0
        %v5481 = vadd.f32 0.0, %v5480
        %5482 = vmatmul.bf16.gmra.mxu0 %v5442
        %v5483 = vpop.f32.mrf.mxu0
        %v5484 = vadd.f32 0.0, %v5483
        %v5485 = vpop.f32.mrf.mxu0
        %v5486 = vadd.f32 0.0, %v5485
        %5487 = vmatmul.bf16.gmra.mxu0 %v5445
        %v5488 = vpop.f32.mrf.mxu0
        %v5489 = vadd.f32 0.0, %v5488
        %v5490 = vpop.f32.mrf.mxu0
        %v5491 = vadd.f32 0.0, %v5490
        %5492 = vmatmul.bf16.gmra.mxu0 %v5448
        %v5493 = vpop.f32.mrf.mxu0
        %v5494 = vadd.f32 0.0, %v5493
        %v5495 = vpop.f32.mrf.mxu0
        %v5496 = vadd.f32 0.0, %v5495
        %5497 = vmatmul.bf16.gmra.mxu0 %v5451
        %v5498 = vpop.f32.mrf.mxu0
        %v5499 = vadd.f32 0.0, %v5498
        %v5500 = vpop.f32.mrf.mxu0
        %v5501 = vadd.f32 0.0, %v5500
        %5502 = vmatmul.bf16.gmra.mxu0 %v5454
        %v5503 = vpop.f32.mrf.mxu0
        %v5504 = vadd.f32 0.0, %v5503
        %v5505 = vpop.f32.mrf.mxu0
        %v5506 = vadd.f32 0.0, %v5505
        %5507 = vdwg.mxu0
        %v5508 = vpack.c.bf16 %v5471, %v5469
        %v5509 = vpack.c.bf16 %v5476, %v5474
        %v5510 = vpack.c.bf16 %v5481, %v5479
        %v5511 = vpack.c.bf16 %v5486, %v5484
        %v5512 = vpack.c.bf16 %v5491, %v5489
        %v5513 = vpack.c.bf16 %v5496, %v5494
        %v5514 = vpack.c.bf16 %v5501, %v5499
        %v5515 = vpack.c.bf16 %v5506, %v5504
        %v5518 = vunpack.c.l.b16 %v3514
        %v5519 = vunpack.c.l.b16 %v3515
        %v5520 = vpack.c.b16 %v5519, %v5518
        %v5523 = vsel %vm2575, %v5508, 0
        %v5526 = vsel %vm2575, %v5509, 0
        %v5529 = vsel %vm2575, %v5510, 0
        %v5532 = vsel %vm2575, %v5511, 0
        %v5535 = vsel %vm2575, %v5512, 0
        %v5538 = vsel %vm2575, %v5513, 0
        %v5541 = vsel %vm2575, %v5514, 0
        %v5544 = vsel %vm2575, %v5515, 0
        %5546 = vmatpush.bf16.msra.mxu0 0
        %5547 = vmatpush.bf16.msra.mxu0 0
        %5548 = vmatpush.bf16.msra.mxu0 0
        %5549 = vmatpush.bf16.msra.mxu0 0
        %5550 = vmatpush.bf16.msra.mxu0 0
        %5551 = vmatpush.bf16.msra.mxu0 0
        %5552 = vmatpush.bf16.msra.mxu0 0
        %5553 = vmatpush.bf16.msra.mxu0 %v5520
        %5554 = vmatmul.bf16.gmra.mxu0 %v5523
        %v5555 = vpop.f32.mrf.mxu0
        %v5556 = vadd.f32 0.0, %v5555
        %v5557 = vpop.f32.mrf.mxu0
        %v5558 = vadd.f32 0.0, %v5557
        %5559 = vmatmul.bf16.gmra.mxu0 %v5526
        %v5560 = vpop.f32.mrf.mxu0
        %v5561 = vadd.f32 0.0, %v5560
        %v5562 = vpop.f32.mrf.mxu0
        %v5563 = vadd.f32 0.0, %v5562
        %5564 = vmatmul.bf16.gmra.mxu0 %v5529
        %v5565 = vpop.f32.mrf.mxu0
        %v5566 = vadd.f32 0.0, %v5565
        %v5567 = vpop.f32.mrf.mxu0
        %v5568 = vadd.f32 0.0, %v5567
        %5569 = vmatmul.bf16.gmra.mxu0 %v5532
        %v5570 = vpop.f32.mrf.mxu0
        %v5571 = vadd.f32 0.0, %v5570
        %v5572 = vpop.f32.mrf.mxu0
        %v5573 = vadd.f32 0.0, %v5572
        %5574 = vmatmul.bf16.gmra.mxu0 %v5535
        %v5575 = vpop.f32.mrf.mxu0
        %v5576 = vadd.f32 0.0, %v5575
        %v5577 = vpop.f32.mrf.mxu0
        %v5578 = vadd.f32 0.0, %v5577
        %5579 = vmatmul.bf16.gmra.mxu0 %v5538
        %v5580 = vpop.f32.mrf.mxu0
        %v5581 = vadd.f32 0.0, %v5580
        %v5582 = vpop.f32.mrf.mxu0
        %v5583 = vadd.f32 0.0, %v5582
        %5584 = vmatmul.bf16.gmra.mxu0 %v5541
        %v5585 = vpop.f32.mrf.mxu0
        %v5586 = vadd.f32 0.0, %v5585
        %v5587 = vpop.f32.mrf.mxu0
        %v5588 = vadd.f32 0.0, %v5587
        %5589 = vmatmul.bf16.gmra.mxu0 %v5544
        %v5590 = vpop.f32.mrf.mxu0
        %v5591 = vadd.f32 0.0, %v5590
        %v5592 = vpop.f32.mrf.mxu0
        %v5593 = vadd.f32 0.0, %v5592
        %5594 = vdwg.mxu0
        %v5595 = vadd.f32 %v5136, %v5556
        %v5596 = vadd.f32 %v5137, %v5558
        %v5597 = vadd.f32 %v5138, %v5561
        %v5598 = vadd.f32 %v5139, %v5563
        %v5599 = vadd.f32 %v5140, %v5566
        %v5600 = vadd.f32 %v5141, %v5568
        %v5601 = vadd.f32 %v5142, %v5571
        %v5602 = vadd.f32 %v5143, %v5573
        %v5603 = vadd.f32 %v5144, %v5576
        %v5604 = vadd.f32 %v5145, %v5578
        %v5605 = vadd.f32 %v5146, %v5581
        %v5606 = vadd.f32 %v5147, %v5583
        %v5607 = vadd.f32 %v5148, %v5586
        %v5608 = vadd.f32 %v5149, %v5588
        %v5609 = vadd.f32 %v5150, %v5591
        %v5610 = vadd.f32 %v5151, %v5593
        %v5612 = vperm.slane %v3516, 0
        %v5614 = vadd.f32 %v5595, %v5612
        %v5615 = vadd.f32 %v5596, %v5612
        %v5616 = vadd.f32 %v5597, %v5612
        %v5617 = vadd.f32 %v5598, %v5612
        %v5618 = vadd.f32 %v5599, %v5612
        %v5619 = vadd.f32 %v5600, %v5612
        %v5620 = vadd.f32 %v5601, %v5612
        %v5621 = vadd.f32 %v5602, %v5612
        %v5622 = vadd.f32 %v5603, %v5612
        %v5623 = vadd.f32 %v5604, %v5612
        %v5624 = vadd.f32 %v5605, %v5612
        %v5625 = vadd.f32 %v5606, %v5612
        %v5626 = vadd.f32 %v5607, %v5612
        %v5627 = vadd.f32 %v5608, %v5612
        %v5628 = vadd.f32 %v5609, %v5612
        %v5629 = vadd.f32 %v5610, %v5612
        %v5630 = vadd.f32 %v1453, %v5614
        %v5631 = vadd.f32 %v1454, %v5615
        %v5632 = vadd.f32 %v1455, %v5616
        %v5633 = vadd.f32 %v1456, %v5617
        %v5634 = vadd.f32 %v1457, %v5618
        %v5635 = vadd.f32 %v1458, %v5619
        %v5636 = vadd.f32 %v1459, %v5620
        %v5637 = vadd.f32 %v1460, %v5621
        %v5638 = vadd.f32 %v1461, %v5622
        %v5639 = vadd.f32 %v1462, %v5623
        %v5640 = vadd.f32 %v1463, %v5624
        %v5641 = vadd.f32 %v1464, %v5625
        %v5642 = vadd.f32 %v1465, %v5626
        %v5643 = vadd.f32 %v1466, %v5627
        %v5644 = vadd.f32 %v1467, %v5628
        %v5645 = vadd.f32 %v1468, %v5629
        %v5646 = vld [vmem:[%s77] sm:$0x1]
        %v5647 = vld [vmem:[%s79] sm:$0x1]
        %5648 = vadd.xlane.f32.xlu0 %v5630
        %v5649 = vpop.xlane.xlu0 %5648
        %5650 = vadd.xlane.f32.xlu0 %v5631
        %v5651 = vpop.xlane.xlu0 %5650
        %5652 = vadd.xlane.f32.xlu0 %v5632
        %v5653 = vpop.xlane.xlu0 %5652
        %5654 = vadd.xlane.f32.xlu0 %v5633
        %v5655 = vpop.xlane.xlu0 %5654
        %5656 = vadd.xlane.f32.xlu0 %v5634
        %v5657 = vpop.xlane.xlu0 %5656
        %5658 = vadd.xlane.f32.xlu0 %v5635
        %v5659 = vpop.xlane.xlu0 %5658
        %5660 = vadd.xlane.f32.xlu0 %v5636
        %v5661 = vpop.xlane.xlu0 %5660
        %5662 = vadd.xlane.f32.xlu0 %v5637
        %v5663 = vpop.xlane.xlu0 %5662
        %5664 = vadd.xlane.f32.xlu0 %v5638
        %v5665 = vpop.xlane.xlu0 %5664
        %5666 = vadd.xlane.f32.xlu0 %v5639
        %v5667 = vpop.xlane.xlu0 %5666
        %5668 = vadd.xlane.f32.xlu0 %v5640
        %v5669 = vpop.xlane.xlu0 %5668
        %5670 = vadd.xlane.f32.xlu0 %v5641
        %v5671 = vpop.xlane.xlu0 %5670
        %5672 = vadd.xlane.f32.xlu0 %v5642
        %v5673 = vpop.xlane.xlu0 %5672
        %5674 = vadd.xlane.f32.xlu0 %v5643
        %v5675 = vpop.xlane.xlu0 %5674
        %5676 = vadd.xlane.f32.xlu0 %v5644
        %v5677 = vpop.xlane.xlu0 %5676
        %5678 = vadd.xlane.f32.xlu0 %v5645
        %v5679 = vpop.xlane.xlu0 %5678
        %v5680 = vmul.f32 %v5649, %v2116
        %v5681 = vmul.f32 %v5651, %v2116
        %v5682 = vmul.f32 %v5653, %v2116
        %v5683 = vmul.f32 %v5655, %v2116
        %v5684 = vmul.f32 %v5657, %v2116
        %v5685 = vmul.f32 %v5659, %v2116
        %v5686 = vmul.f32 %v5661, %v2116
        %v5687 = vmul.f32 %v5663, %v2116
        %v5688 = vmul.f32 %v5665, %v2116
        %v5689 = vmul.f32 %v5667, %v2116
        %v5690 = vmul.f32 %v5669, %v2116
        %v5691 = vmul.f32 %v5671, %v2116
        %v5692 = vmul.f32 %v5673, %v2116
        %v5693 = vmul.f32 %v5675, %v2116
        %v5694 = vmul.f32 %v5677, %v2116
        %v5695 = vmul.f32 %v5679, %v2116
        %v5696 = vsub.f32 %v5630, %v5680
        %v5697 = vsub.f32 %v5631, %v5681
        %v5698 = vsub.f32 %v5632, %v5682
        %v5699 = vsub.f32 %v5633, %v5683
        %v5700 = vsub.f32 %v5634, %v5684
        %v5701 = vsub.f32 %v5635, %v5685
        %v5702 = vsub.f32 %v5636, %v5686
        %v5703 = vsub.f32 %v5637, %v5687
        %v5704 = vsub.f32 %v5638, %v5688
        %v5705 = vsub.f32 %v5639, %v5689
        %v5706 = vsub.f32 %v5640, %v5690
        %v5707 = vsub.f32 %v5641, %v5691
        %v5708 = vsub.f32 %v5642, %v5692
        %v5709 = vsub.f32 %v5643, %v5693
        %v5710 = vsub.f32 %v5644, %v5694
        %v5711 = vsub.f32 %v5645, %v5695
        %v5712 = vmul.f32 %v5696, %v5696
        %v5713 = vmul.f32 %v5697, %v5697
        %v5714 = vmul.f32 %v5698, %v5698
        %v5715 = vmul.f32 %v5699, %v5699
        %v5716 = vmul.f32 %v5700, %v5700
        %v5717 = vmul.f32 %v5701, %v5701
        %v5718 = vmul.f32 %v5702, %v5702
        %v5719 = vmul.f32 %v5703, %v5703
        %v5720 = vmul.f32 %v5704, %v5704
        %v5721 = vmul.f32 %v5705, %v5705
        %v5722 = vmul.f32 %v5706, %v5706
        %v5723 = vmul.f32 %v5707, %v5707
        %v5724 = vmul.f32 %v5708, %v5708
        %v5725 = vmul.f32 %v5709, %v5709
        %v5726 = vmul.f32 %v5710, %v5710
        %v5727 = vmul.f32 %v5711, %v5711
        %5728 = vadd.xlane.f32.xlu0 %v5712
        %v5729 = vpop.xlane.xlu0 %5728
        %5730 = vadd.xlane.f32.xlu0 %v5713
        %v5731 = vpop.xlane.xlu0 %5730
        %5732 = vadd.xlane.f32.xlu0 %v5714
        %v5733 = vpop.xlane.xlu0 %5732
        %5734 = vadd.xlane.f32.xlu0 %v5715
        %v5735 = vpop.xlane.xlu0 %5734
        %5736 = vadd.xlane.f32.xlu0 %v5716
        %v5737 = vpop.xlane.xlu0 %5736
        %5738 = vadd.xlane.f32.xlu0 %v5717
        %v5739 = vpop.xlane.xlu0 %5738
        %5740 = vadd.xlane.f32.xlu0 %v5718
        %v5741 = vpop.xlane.xlu0 %5740
        %5742 = vadd.xlane.f32.xlu0 %v5719
        %v5743 = vpop.xlane.xlu0 %5742
        %5744 = vadd.xlane.f32.xlu0 %v5720
        %v5745 = vpop.xlane.xlu0 %5744
        %5746 = vadd.xlane.f32.xlu0 %v5721
        %v5747 = vpop.xlane.xlu0 %5746
        %5748 = vadd.xlane.f32.xlu0 %v5722
        %v5749 = vpop.xlane.xlu0 %5748
        %5750 = vadd.xlane.f32.xlu0 %v5723
        %v5751 = vpop.xlane.xlu0 %5750
        %5752 = vadd.xlane.f32.xlu0 %v5724
        %v5753 = vpop.xlane.xlu0 %5752
        %5754 = vadd.xlane.f32.xlu0 %v5725
        %v5755 = vpop.xlane.xlu0 %5754
        %5756 = vadd.xlane.f32.xlu0 %v5726
        %v5757 = vpop.xlane.xlu0 %5756
        %5758 = vadd.xlane.f32.xlu0 %v5727
        %v5759 = vpop.xlane.xlu0 %5758
        %v5760 = vmul.f32 %v5729, %v2116
        %v5761 = vmul.f32 %v5731, %v2116
        %v5762 = vmul.f32 %v5733, %v2116
        %v5763 = vmul.f32 %v5735, %v2116
        %v5764 = vmul.f32 %v5737, %v2116
        %v5765 = vmul.f32 %v5739, %v2116
        %v5766 = vmul.f32 %v5741, %v2116
        %v5767 = vmul.f32 %v5743, %v2116
        %v5768 = vmul.f32 %v5745, %v2116
        %v5769 = vmul.f32 %v5747, %v2116
        %v5770 = vmul.f32 %v5749, %v2116
        %v5771 = vmul.f32 %v5751, %v2116
        %v5772 = vmul.f32 %v5753, %v2116
        %v5773 = vmul.f32 %v5755, %v2116
        %v5774 = vmul.f32 %v5757, %v2116
        %v5775 = vmul.f32 %v5759, %v2116
        %v5776 = vadd.f32 %v5760, 1e-05
        %v5777 = vadd.f32 %v5761, 1e-05
        %v5778 = vadd.f32 %v5762, 1e-05
        %v5779 = vadd.f32 %v5763, 1e-05
        %v5780 = vadd.f32 %v5764, 1e-05
        %v5781 = vadd.f32 %v5765, 1e-05
        %v5782 = vadd.f32 %v5766, 1e-05
        %v5783 = vadd.f32 %v5767, 1e-05
        %v5784 = vadd.f32 %v5768, 1e-05
        %v5785 = vadd.f32 %v5769, 1e-05
        %v5786 = vadd.f32 %v5770, 1e-05
        %v5787 = vadd.f32 %v5771, 1e-05
        %v5788 = vadd.f32 %v5772, 1e-05
        %v5789 = vadd.f32 %v5773, 1e-05
        %v5790 = vadd.f32 %v5774, 1e-05
        %v5791 = vadd.f32 %v5775, 1e-05
        %v5792 = vrsqrt.pop %v5776
        %v5793 = vmul.f32 %v5792, %v5776
        %v5794 = vmul.f32 %v5793, %v5792
        %v5795 = vmul.f32 0.5, %v5794
        %v5796 = vsub.f32 1.5, %v5795
        %v5797 = vmul.f32 %v5792, %v5796
        %vm5798 = vweird.f32 %v5776
        %vm5799 = vweird.f32 %v5792
        %vm5800 = vmor %vm5798, %vm5799
        %v5801 = vsel %vm5800, %v5792, %v5797
        %v5802 = vrsqrt.pop %v5777
        %v5803 = vmul.f32 %v5802, %v5777
        %v5804 = vmul.f32 %v5803, %v5802
        %v5805 = vmul.f32 0.5, %v5804
        %v5806 = vsub.f32 1.5, %v5805
        %v5807 = vmul.f32 %v5802, %v5806
        %vm5808 = vweird.f32 %v5777
        %vm5809 = vweird.f32 %v5802
        %vm5810 = vmor %vm5808, %vm5809
        %v5811 = vsel %vm5810, %v5802, %v5807
        %v5812 = vrsqrt.pop %v5778
        %v5813 = vmul.f32 %v5812, %v5778
        %v5814 = vmul.f32 %v5813, %v5812
        %v5815 = vmul.f32 0.5, %v5814
        %v5816 = vsub.f32 1.5, %v5815
        %v5817 = vmul.f32 %v5812, %v5816
        %vm5818 = vweird.f32 %v5778
        %vm5819 = vweird.f32 %v5812
        %vm5820 = vmor %vm5818, %vm5819
        %v5821 = vsel %vm5820, %v5812, %v5817
        %v5822 = vrsqrt.pop %v5779
        %v5823 = vmul.f32 %v5822, %v5779
        %v5824 = vmul.f32 %v5823, %v5822
        %v5825 = vmul.f32 0.5, %v5824
        %v5826 = vsub.f32 1.5, %v5825
        %v5827 = vmul.f32 %v5822, %v5826
        %vm5828 = vweird.f32 %v5779
        %vm5829 = vweird.f32 %v5822
        %vm5830 = vmor %vm5828, %vm5829
        %v5831 = vsel %vm5830, %v5822, %v5827
        %v5832 = vrsqrt.pop %v5780
        %v5833 = vmul.f32 %v5832, %v5780
        %v5834 = vmul.f32 %v5833, %v5832
        %v5835 = vmul.f32 0.5, %v5834
        %v5836 = vsub.f32 1.5, %v5835
        %v5837 = vmul.f32 %v5832, %v5836
        %vm5838 = vweird.f32 %v5780
        %vm5839 = vweird.f32 %v5832
        %vm5840 = vmor %vm5838, %vm5839
        %v5841 = vsel %vm5840, %v5832, %v5837
        %v5842 = vrsqrt.pop %v5781
        %v5843 = vmul.f32 %v5842, %v5781
        %v5844 = vmul.f32 %v5843, %v5842
        %v5845 = vmul.f32 0.5, %v5844
        %v5846 = vsub.f32 1.5, %v5845
        %v5847 = vmul.f32 %v5842, %v5846
        %vm5848 = vweird.f32 %v5781
        %vm5849 = vweird.f32 %v5842
        %vm5850 = vmor %vm5848, %vm5849
        %v5851 = vsel %vm5850, %v5842, %v5847
        %v5852 = vrsqrt.pop %v5782
        %v5853 = vmul.f32 %v5852, %v5782
        %v5854 = vmul.f32 %v5853, %v5852
        %v5855 = vmul.f32 0.5, %v5854
        %v5856 = vsub.f32 1.5, %v5855
        %v5857 = vmul.f32 %v5852, %v5856
        %vm5858 = vweird.f32 %v5782
        %vm5859 = vweird.f32 %v5852
        %vm5860 = vmor %vm5858, %vm5859
        %v5861 = vsel %vm5860, %v5852, %v5857
        %v5862 = vrsqrt.pop %v5783
        %v5863 = vmul.f32 %v5862, %v5783
        %v5864 = vmul.f32 %v5863, %v5862
        %v5865 = vmul.f32 0.5, %v5864
        %v5866 = vsub.f32 1.5, %v5865
        %v5867 = vmul.f32 %v5862, %v5866
        %vm5868 = vweird.f32 %v5783
        %vm5869 = vweird.f32 %v5862
        %vm5870 = vmor %vm5868, %vm5869
        %v5871 = vsel %vm5870, %v5862, %v5867
        %v5872 = vrsqrt.pop %v5784
        %v5873 = vmul.f32 %v5872, %v5784
        %v5874 = vmul.f32 %v5873, %v5872
        %v5875 = vmul.f32 0.5, %v5874
        %v5876 = vsub.f32 1.5, %v5875
        %v5877 = vmul.f32 %v5872, %v5876
        %vm5878 = vweird.f32 %v5784
        %vm5879 = vweird.f32 %v5872
        %vm5880 = vmor %vm5878, %vm5879
        %v5881 = vsel %vm5880, %v5872, %v5877
        %v5882 = vrsqrt.pop %v5785
        %v5883 = vmul.f32 %v5882, %v5785
        %v5884 = vmul.f32 %v5883, %v5882
        %v5885 = vmul.f32 0.5, %v5884
        %v5886 = vsub.f32 1.5, %v5885
        %v5887 = vmul.f32 %v5882, %v5886
        %vm5888 = vweird.f32 %v5785
        %vm5889 = vweird.f32 %v5882
        %vm5890 = vmor %vm5888, %vm5889
        %v5891 = vsel %vm5890, %v5882, %v5887
        %v5892 = vrsqrt.pop %v5786
        %v5893 = vmul.f32 %v5892, %v5786
        %v5894 = vmul.f32 %v5893, %v5892
        %v5895 = vmul.f32 0.5, %v5894
        %v5896 = vsub.f32 1.5, %v5895
        %v5897 = vmul.f32 %v5892, %v5896
        %vm5898 = vweird.f32 %v5786
        %vm5899 = vweird.f32 %v5892
        %vm5900 = vmor %vm5898, %vm5899
        %v5901 = vsel %vm5900, %v5892, %v5897
        %v5902 = vrsqrt.pop %v5787
        %v5903 = vmul.f32 %v5902, %v5787
        %v5904 = vmul.f32 %v5903, %v5902
        %v5905 = vmul.f32 0.5, %v5904
        %v5906 = vsub.f32 1.5, %v5905
        %v5907 = vmul.f32 %v5902, %v5906
        %vm5908 = vweird.f32 %v5787
        %vm5909 = vweird.f32 %v5902
        %vm5910 = vmor %vm5908, %vm5909
        %v5911 = vsel %vm5910, %v5902, %v5907
        %v5912 = vrsqrt.pop %v5788
        %v5913 = vmul.f32 %v5912, %v5788
        %v5914 = vmul.f32 %v5913, %v5912
        %v5915 = vmul.f32 0.5, %v5914
        %v5916 = vsub.f32 1.5, %v5915
        %v5917 = vmul.f32 %v5912, %v5916
        %vm5918 = vweird.f32 %v5788
        %vm5919 = vweird.f32 %v5912
        %vm5920 = vmor %vm5918, %vm5919
        %v5921 = vsel %vm5920, %v5912, %v5917
        %v5922 = vrsqrt.pop %v5789
        %v5923 = vmul.f32 %v5922, %v5789
        %v5924 = vmul.f32 %v5923, %v5922
        %v5925 = vmul.f32 0.5, %v5924
        %v5926 = vsub.f32 1.5, %v5925
        %v5927 = vmul.f32 %v5922, %v5926
        %vm5928 = vweird.f32 %v5789
        %vm5929 = vweird.f32 %v5922
        %vm5930 = vmor %vm5928, %vm5929
        %v5931 = vsel %vm5930, %v5922, %v5927
        %v5932 = vrsqrt.pop %v5790
        %v5933 = vmul.f32 %v5932, %v5790
        %v5934 = vmul.f32 %v5933, %v5932
        %v5935 = vmul.f32 0.5, %v5934
        %v5936 = vsub.f32 1.5, %v5935
        %v5937 = vmul.f32 %v5932, %v5936
        %vm5938 = vweird.f32 %v5790
        %vm5939 = vweird.f32 %v5932
        %vm5940 = vmor %vm5938, %vm5939
        %v5941 = vsel %vm5940, %v5932, %v5937
        %v5942 = vrsqrt.pop %v5791
        %v5943 = vmul.f32 %v5942, %v5791
        %v5944 = vmul.f32 %v5943, %v5942
        %v5945 = vmul.f32 0.5, %v5944
        %v5946 = vsub.f32 1.5, %v5945
        %v5947 = vmul.f32 %v5942, %v5946
        %vm5948 = vweird.f32 %v5791
        %vm5949 = vweird.f32 %v5942
        %vm5950 = vmor %vm5948, %vm5949
        %v5951 = vsel %vm5950, %v5942, %v5947
        %v5952 = vmul.f32 %v5696, %v5801
        %v5953 = vmul.f32 %v5697, %v5811
        %v5954 = vmul.f32 %v5698, %v5821
        %v5955 = vmul.f32 %v5699, %v5831
        %v5956 = vmul.f32 %v5700, %v5841
        %v5957 = vmul.f32 %v5701, %v5851
        %v5958 = vmul.f32 %v5702, %v5861
        %v5959 = vmul.f32 %v5703, %v5871
        %v5960 = vmul.f32 %v5704, %v5881
        %v5961 = vmul.f32 %v5705, %v5891
        %v5962 = vmul.f32 %v5706, %v5901
        %v5963 = vmul.f32 %v5707, %v5911
        %v5964 = vmul.f32 %v5708, %v5921
        %v5965 = vmul.f32 %v5709, %v5931
        %v5966 = vmul.f32 %v5710, %v5941
        %v5967 = vmul.f32 %v5711, %v5951
        %v5969 = vperm.slane %v5646, 0
        %v5971 = vmul.f32 %v5952, %v5969
        %v5972 = vmul.f32 %v5953, %v5969
        %v5973 = vmul.f32 %v5954, %v5969
        %v5974 = vmul.f32 %v5955, %v5969
        %v5975 = vmul.f32 %v5956, %v5969
        %v5976 = vmul.f32 %v5957, %v5969
        %v5977 = vmul.f32 %v5958, %v5969
        %v5978 = vmul.f32 %v5959, %v5969
        %v5979 = vmul.f32 %v5960, %v5969
        %v5980 = vmul.f32 %v5961, %v5969
        %v5981 = vmul.f32 %v5962, %v5969
        %v5982 = vmul.f32 %v5963, %v5969
        %v5983 = vmul.f32 %v5964, %v5969
        %v5984 = vmul.f32 %v5965, %v5969
        %v5985 = vmul.f32 %v5966, %v5969
        %v5986 = vmul.f32 %v5967, %v5969
        %v5988 = vperm.slane %v5647, 0
        %v5990 = vadd.f32 %v5971, %v5988
        %v5991 = vadd.f32 %v5972, %v5988
        %v5992 = vadd.f32 %v5973, %v5988
        %v5993 = vadd.f32 %v5974, %v5988
        %v5994 = vadd.f32 %v5975, %v5988
        %v5995 = vadd.f32 %v5976, %v5988
        %v5996 = vadd.f32 %v5977, %v5988
        %v5997 = vadd.f32 %v5978, %v5988
        %v5998 = vadd.f32 %v5979, %v5988
        %v5999 = vadd.f32 %v5980, %v5988
        %v6000 = vadd.f32 %v5981, %v5988
        %v6001 = vadd.f32 %v5982, %v5988
        %v6002 = vadd.f32 %v5983, %v5988
        %v6003 = vadd.f32 %v5984, %v5988
        %v6004 = vadd.f32 %v5985, %v5988
        %v6005 = vadd.f32 %v5986, %v5988
        %6006 = vst [vmem:[%s1443] sm:$0xff] %v3455
        %6007 = vst [vmem:[%s1450] sm:$0xff] %v5990
        %6008 = vst [vmem:[%s1450 + $0x8] sm:$0xff] %v5991
        %6009 = vst [vmem:[%s1450 + $0x10] sm:$0xff] %v5992
        %6010 = vst [vmem:[%s1450 + $0x18] sm:$0xff] %v5993
        %6011 = vst [vmem:[%s1450 + $0x20] sm:$0xff] %v5994
        %6012 = vst [vmem:[%s1450 + $0x28] sm:$0xff] %v5995
        %6013 = vst [vmem:[%s1450 + $0x30] sm:$0xff] %v5996
        %6014 = vst [vmem:[%s1450 + $0x38] sm:$0xff] %v5997
        %6015 = vst [vmem:[%s1450 + $0x40] sm:$0xff] %v5998
        %6016 = vst [vmem:[%s1450 + $0x48] sm:$0xff] %v5999
        %6017 = vst [vmem:[%s1450 + $0x50] sm:$0xff] %v6000
        %6018 = vst [vmem:[%s1450 + $0x58] sm:$0xff] %v6001
        %6019 = vst [vmem:[%s1450 + $0x60] sm:$0xff] %v6002
        %6020 = vst [vmem:[%s1450 + $0x68] sm:$0xff] %v6003
        %6021 = vst [vmem:[%s1450 + $0x70] sm:$0xff] %v6004
        %6022 = vst [vmem:[%s1450 + $0x78] sm:$0xff] %v6005
        %s6023 = sand.u32 %s980, 1
        %s6024 = scalar_lea.sflag [#allocation4], %s6023
        %s6025 = sand.u32 %s980, 1
        %s6026 = smul.addr %s6025, 8
        %s6027 = scalar_lea.vmem [#allocation16], %s6026
        %s6028 = sand.u32 %s1006, 1
        %s6029 = scalar_lea.sflag [#allocation18], %s6028
        %s6030 = sand.u32 %s1006, 1
        %s6031 = smul.addr %s6030, 128
        %s6032 = scalar_lea.vmem [#allocation17], %s6031
        // Predicated region
        $region213: #{tpu_custom_call.1} parent=179 // pred_check
          %p6033 = pneg %p990
        $region214: #{tpu_custom_call.1} parent=179 // pred_check_branch
          %6035 = sbr.rel (%p6033) target = $region216
        $region215: #{tpu_custom_call.1} parent=179 // pred_region
          %6037 = vsyncadd %s6024, 0
          %s6038 = smul.addr %s112, 8
          %s6039 = scalar_lea.hbm %s81, %s6038
          %s6041 = sshll.u32 %s6027, 4
          %s6042 = int_to_ptr.vmem [resolvable:$true] %s6041
          %s6043 = sshll.u32 %s6039, 4
          %s6044 = int_to_ptr.hbm [resolvable:$true] %s6043
          %6046 = dma.vmem_to_hbm [thread:$0]  %s6042, 128, %s6044, %s6024
        $region216: #{tpu_custom_call.1} parent=179 // pred_fallthru
          _
        // Predicated region
        $region217: #{tpu_custom_call.1} parent=179 // pred_check
          %p6047 = pneg %p1016
        $region218: #{tpu_custom_call.1} parent=179 // pred_check_branch
          %6049 = sbr.rel (%p6047) target = $region220
        $region219: #{tpu_custom_call.1} parent=179 // pred_region
          %6051 = vsyncadd %s6029, 0
          %s6052 = smul.addr %s112, 16
          %s6053 = smul.addr %s6052, 8
          %s6054 = scalar_lea.hbm %s83, %s6053
          %s6055 = sshll.u32 %s6032, 4
          %s6056 = int_to_ptr.vmem [resolvable:$true] %s6055
          %s6057 = sshll.u32 %s6054, 4
          %s6058 = int_to_ptr.hbm [resolvable:$true] %s6057
          %6063 = dma.vmem_to_hbm [thread:$0]  %s6056, 2048, %s6058, %s6029, 128, 128, 8
        $region220: #{tpu_custom_call.1} parent=179 // pred_fallthru
          _
      $region180: #{tpu_custom_call.1} parent=5 // pred_fallthru
        _
      %p6064 = scmp.le.s32.totalorder 2, %s107
      // Predicated region
      $region221: #{tpu_custom_call.1} parent=5 // pred_check
        %p6065 = pneg %p6064
      $region222: #{tpu_custom_call.1} parent=5 // pred_check_branch
        %6067 = sbr.rel (%p6065) target = $region224
      $region223: #{tpu_custom_call.1} parent=5 // pred_region
        %s6068 = ssub.s32 %s107, 2
        // Predicated region
        $region225: #{tpu_custom_call.1} parent=223 // pred_check
          %p6069 = pneg %p996
        $region226: #{tpu_custom_call.1} parent=223 // pred_check_branch
          %6071 = sbr.rel (%p6069) target = $region228
        $region227: #{tpu_custom_call.1} parent=223 // pred_region
          %s6072 = sand.u32 %s981, 1
          %s6073 = scalar_lea.sflag [#allocation4], %s6072
          %s6074 = sand.u32 %s981, 1
          %s6075 = smul.addr %s6074, 8
          %s6076 = scalar_lea.vmem [#allocation16], %s6075
          %6078 = dma.done %s6073, 128
        $region228: #{tpu_custom_call.1} parent=223 // pred_fallthru
          _
        // Predicated region
        $region229: #{tpu_custom_call.1} parent=223 // pred_check
          %p6079 = pneg %p1022
        $region230: #{tpu_custom_call.1} parent=223 // pred_check_branch
          %6081 = sbr.rel (%p6079) target = $region232
        $region231: #{tpu_custom_call.1} parent=223 // pred_region
          %s6082 = sand.u32 %s1007, 1
          %s6083 = scalar_lea.sflag [#allocation18], %s6082
          %s6084 = sand.u32 %s1007, 1
          %s6085 = smul.addr %s6084, 128
          %s6086 = scalar_lea.vmem [#allocation17], %s6085
          %6088 = dma.done %s6083, 2048
        $region232: #{tpu_custom_call.1} parent=223 // pred_fallthru
          _
      $region224: #{tpu_custom_call.1} parent=5 // pred_fallthru
        _
    $region6: #{tpu_custom_call.1} parent=1 // loop_footer
      %s111 = sadd.s32 1, %s107
    $region7: #{tpu_custom_call.1} parent=1 // loop_footer_branch
      %106 = sbr.rel target = $region3
    $region8: #{tpu_custom_call.1} parent=1 // loop_exit
      _
    %6089 = vsyncpa [#allocation3], 1
    %s6090 = scalar_lea.sflag [#allocation3], 1
    %6091 = vsyncpa %s6090, 1
    %6092 = vsyncpa [#allocation6], 1
    %s6093 = scalar_lea.sflag [#allocation6], 1
    %6094 = vsyncpa %s6093, 1
    %6095 = vsyncpa [#allocation9], 1
    %s6096 = scalar_lea.sflag [#allocation9], 1
    %6097 = vsyncpa %s6096, 1
    %6098 = vsyncpa [#allocation12], 1
    %6099 = vsyncpa [#allocation15], 1
    %6100 = vsyncpa [#allocation4], 1
    %s6101 = scalar_lea.sflag [#allocation4], 1
    %6102 = vsyncpa %s6101, 1
    %6103 = vsyncpa [#allocation18], 1
    %s6104 = scalar_lea.sflag [#allocation18], 1
    %6105 = vsyncpa %s6104, 1

</llo_original>
